<compile_context>
chip_gen: v6e
topology: v6e:2x2x1
jax: 0.10.0
libtpu: 0.0.40
codegen_flags: <defaults>
</compile_context>

<pallas_src>
import functools

import jax
import jax.numpy as jnp
from jax.experimental import pallas as pl
from jax.experimental.pallas import tpu as pltpu

# ---- synthetic stand-in for models/vae_gan.py `config` ----
KERNEL_SIZE = 5
PADDING = 2
STRIDE = 2                      # config.stride   (EncoderBlock convs)
STRIDE_GAN = 1                  # config.stride_gan (first discriminator conv)
DISCRIM_CHANNELS = (32, 64, 128, 128)   # config.discrim_channels
FC_INPUT_GAN = 2                # spatial size after the conv stack (16 -> 16 -> 8 -> 4 -> 2)
FC_OUTPUT_GAN = 64              # config.fc_output_gan
RECON_LEVEL = 3                 # recon_level
BN_EPS = 1e-5                   # PyTorch BatchNorm default eps
CONV0_PACK = 4                  # pack 4 conv0 output rows into one 128-lane row


# ----------------------------- Pallas kernels -----------------------------

def _gemm_bias_act_kernel(x_ref, w_ref, b_ref, o_ref, *, activation):
    """o = act(x @ w + b); bf16 MXU matmul, f32 accumulate, fused VPU epilogue."""
    acc = jnp.dot(x_ref[...], w_ref[...], preferred_element_type=jnp.float32)
    acc = acc + b_ref[...]
    if activation == "relu":
        acc = jnp.maximum(acc, 0.0)
    o_ref[...] = acc.astype(o_ref.dtype)


def pallas_gemm_bias_act(x, w, b, activation=None, out_dtype=jnp.float32, m_tile=None):
    """GEMM + bias + optional ReLU. Optionally tiled over M (row-parallel)."""
    M, K = x.shape
    K2, N = w.shape
    assert K == K2
    b = b.reshape(1, N).astype(jnp.float32)
    if m_tile is None or M % m_tile != 0:
        m_tile = M
    kern = functools.partial(_gemm_bias_act_kernel, activation=activation)
    return pl.pallas_call(
        kern,
        out_shape=jax.ShapeDtypeStruct((M, N), out_dtype),
        grid=(M // m_tile,),
        in_specs=[pl.BlockSpec((m_tile, K), lambda i: (i, 0)),
                  pl.BlockSpec((K, N), lambda i: (0, 0)),      # weight stays resident
                  pl.BlockSpec((1, N), lambda i: (0, 0))],
        out_specs=pl.BlockSpec((m_tile, N), lambda i: (i, 0)),
        compiler_params=pltpu.CompilerParams(dimension_semantics=("parallel",)),
    )(x, w, b)


def _gemm_bn_relu_kernel(x_ref, w_ref, g_ref, b_ref, o_ref):
    """Fused conv-as-GEMM + training-mode BatchNorm (biased batch var) + ReLU."""
    acc = jnp.dot(x_ref[...], w_ref[...], preferred_element_type=jnp.float32)
    mean = jnp.mean(acc, axis=0, keepdims=True)
    var = jnp.mean(jnp.square(acc - mean), axis=0, keepdims=True)
    y = (acc - mean) * jax.lax.rsqrt(var + BN_EPS) * g_ref[...] + b_ref[...]
    o_ref[...] = jnp.maximum(y, 0.0).astype(o_ref.dtype)


def pallas_gemm_bn_relu(x, w, gamma, beta, out_dtype=jnp.bfloat16):
    """Single-block (BN needs whole-batch row stats); everything stays in VMEM."""
    M, K = x.shape
    K2, N = w.shape
    assert K == K2
    gamma = gamma.reshape(1, N).astype(jnp.float32)
    beta = beta.reshape(1, N).astype(jnp.float32)
    return pl.pallas_call(
        _gemm_bn_relu_kernel,
        out_shape=jax.ShapeDtypeStruct((M, N), out_dtype),
        grid=(1,),
        in_specs=[pl.BlockSpec((M, K), lambda i: (0, 0)),
                  pl.BlockSpec((K, N), lambda i: (0, 0)),
                  pl.BlockSpec((1, N), lambda i: (0, 0)),
                  pl.BlockSpec((1, N), lambda i: (0, 0))],
        out_specs=pl.BlockSpec((M, N), lambda i: (0, 0)),
    )(x, w, gamma, beta)


def _fc_head_kernel(x_ref, w1_ref, g_ref, b_ref, w2_ref, b2_ref, o_ref):
    """fc1 (no bias) -> BatchNorm1d -> ReLU -> fc2 (+bias) -> sigmoid, fully fused."""
    h = jnp.dot(x_ref[...], w1_ref[...], preferred_element_type=jnp.float32)
    mean = jnp.mean(h, axis=0, keepdims=True)
    var = jnp.mean(jnp.square(h - mean), axis=0, keepdims=True)
    h = (h - mean) * jax.lax.rsqrt(var + BN_EPS) * g_ref[...] + b_ref[...]
    h = jnp.maximum(h, 0.0)
    logits = jnp.dot(h.astype(w2_ref.dtype), w2_ref[...],
                     preferred_element_type=jnp.float32) + b2_ref[...]
    o_ref[...] = jax.nn.sigmoid(logits).astype(o_ref.dtype)


def pallas_fc_head(x, w1, gamma, beta, w2, b2):
    M, K = x.shape
    _, N1 = w1.shape
    _, N2 = w2.shape
    gamma = gamma.reshape(1, N1).astype(jnp.float32)
    beta = beta.reshape(1, N1).astype(jnp.float32)
    b2 = b2.reshape(1, N2).astype(jnp.float32)
    return pl.pallas_call(
        _fc_head_kernel,
        out_shape=jax.ShapeDtypeStruct((M, N2), jnp.float32),
        grid=(1,),
        in_specs=[pl.BlockSpec((M, K), lambda i: (0, 0)),
                  pl.BlockSpec((K, N1), lambda i: (0, 0)),
                  pl.BlockSpec((1, N1), lambda i: (0, 0)),
                  pl.BlockSpec((1, N1), lambda i: (0, 0)),
                  pl.BlockSpec((N1, N2), lambda i: (0, 0)),
                  pl.BlockSpec((1, N2), lambda i: (0, 0))],
        out_specs=pl.BlockSpec((M, N2), lambda i: (0, 0)),
    )(x.astype(jnp.bfloat16), w1, gamma, beta, w2, b2)


# ----------------------------- conv = im2col + Pallas GEMM -----------------------------

def _im2col(x_nhwc, kh, kw, stride, pad):
    """Host-side (XLA) patch extraction; rows ordered (n, ho, wo), K ordered (kh, kw, cin)."""
    N, H, W, C = x_nhwc.shape
    xp = jnp.pad(x_nhwc, ((0, 0), (pad, pad), (pad, pad), (0, 0)))
    Ho = (H + 2 * pad - kh) // stride + 1
    Wo = (W + 2 * pad - kw) // stride + 1
    cols = []
    for i in range(kh):
        for j in range(kw):
            cols.append(xp[:, i:i + stride * Ho:stride, j:j + stride * Wo:stride, :])
    patches = jnp.stack(cols, axis=3)                       # (N, Ho, Wo, KH*KW, C)
    return patches.reshape(N * Ho * Wo, kh * kw * C), (N, Ho, Wo)


# ----------------------------- parameters -----------------------------

def init_params(key):
    """Torch-layout parameters (same structure as the nn.Module)."""
    keys = jax.random.split(key, 8)

    def w(k, shape, scale=0.05):
        return (scale * jax.random.normal(k, shape)).astype(jnp.float32)

    c0, c1, c2, c3 = DISCRIM_CHANNELS
    p = {}
    p["conv0_w"] = w(keys[0], (c0, 3, KERNEL_SIZE, KERNEL_SIZE))
    p["conv0_b"] = w(keys[1], (c0,))
    p["conv1_w"] = w(keys[2], (c1, c0, KERNEL_SIZE, KERNEL_SIZE))
    p["bn1_g"], p["bn1_b"] = jnp.ones((c1,), jnp.float32), jnp.zeros((c1,), jnp.float32)
    p["conv2_w"] = w(keys[3], (c2, c1, KERNEL_SIZE, KERNEL_SIZE))
    p["bn2_g"], p["bn2_b"] = jnp.ones((c2,), jnp.float32), jnp.zeros((c2,), jnp.float32)
    p["conv3_w"] = w(keys[4], (c3, c2, KERNEL_SIZE, KERNEL_SIZE))
    p["bn3_g"], p["bn3_b"] = jnp.ones((c3,), jnp.float32), jnp.zeros((c3,), jnp.float32)
    fc_in = FC_INPUT_GAN * FC_INPUT_GAN * c3
    p["fc1_w"] = w(keys[5], (FC_OUTPUT_GAN, fc_in))          # torch layout (out, in)
    p["bn_fc_g"] = jnp.ones((FC_OUTPUT_GAN,), jnp.float32)
    p["bn_fc_b"] = jnp.zeros((FC_OUTPUT_GAN,), jnp.float32)
    p["fc2_w"] = w(keys[6], (1, FC_OUTPUT_GAN))
    p["fc2_b"] = w(keys[7], (1,))
    return p


def prepare_params(p):
    """One-time conversion to kernel-ready (reordered, bf16) weights."""
    def conv_wmat(wt):       # (Cout, Cin, KH, KW) -> (KH*KW*Cin, Cout), matches im2col order
        Cout, Cin, KH, KW = wt.shape
        return jnp.transpose(wt, (2, 3, 1, 0)).reshape(KH * KW * Cin, Cout)

    c0, c1, c2, c3 = DISCRIM_CHANNELS
    kp = {}

    # conv0: lane-dense packing — replicate the (75, 32) weight block-diagonally so the
    # GEMM output is (M/4, 128) full-lane rows instead of a (M, 32) masked-store tile.
    w0 = conv_wmat(p["conv0_w"])                             # (75, 32)
    K0, N0 = w0.shape
    wp = jnp.zeros((CONV0_PACK * K0, CONV0_PACK * N0), jnp.float32)
    for r in range(CONV0_PACK):
        wp = wp.at[r * K0:(r + 1) * K0, r * N0:(r + 1) * N0].set(w0)
    kp["conv0_wp"] = wp.astype(jnp.bfloat16)
    kp["conv0_bp"] = jnp.tile(p["conv0_b"], CONV0_PACK).astype(jnp.float32)

    kp["conv1_w"] = conv_wmat(p["conv1_w"]).astype(jnp.bfloat16)
    kp["conv2_w"] = conv_wmat(p["conv2_w"]).astype(jnp.bfloat16)
    kp["conv3_w"] = conv_wmat(p["conv3_w"]).astype(jnp.bfloat16)
    for name in ("bn1", "bn2", "bn3", "bn_fc"):
        kp[name + "_g"] = p[name + "_g"].astype(jnp.float32)
        kp[name + "_b"] = p[name + "_b"].astype(jnp.float32)

    # fc1: torch weight is (out, in) with `in` ordered (c, h, w) (NCHW .view flatten).
    # Re-order the input dim to NHWC flatten order (h, w, c) so the runtime transpose
    # before the FC head disappears.
    s = FC_INPUT_GAN
    w1 = p["fc1_w"].T.reshape(c3, s, s, FC_OUTPUT_GAN)       # (c, h, w, out)
    w1 = jnp.transpose(w1, (1, 2, 0, 3)).reshape(s * s * c3, FC_OUTPUT_GAN)
    kp["fc1_w"] = w1.astype(jnp.bfloat16)
    kp["fc2_w"] = p["fc2_w"].T.astype(jnp.bfloat16)          # (64, 1)
    kp["fc2_b"] = p["fc2_b"].astype(jnp.float32)
    return kp


# ----------------------------- Discriminator forward -----------------------------

@functools.partial(jax.jit, static_argnames=("mode",))
def discriminator_forward(kparams, ten_orig, ten_predicted, ten_sampled, mode="REC"):
    # torch.cat((orig, predicted, sampled), 0) -- inputs are NCHW
    ten = jnp.concatenate((ten_orig, ten_predicted, ten_sampled), axis=0)
    x = jnp.transpose(ten, (0, 2, 3, 1)).astype(jnp.bfloat16)   # NCHW -> NHWC, bf16

    # conv[0]: Conv(3 -> 32, stride_gan) + bias + ReLU, lane-packed GEMM, M-parallel grid.
    cols, (N, Ho, Wo) = _im2col(x, KERNEL_SIZE, KERNEL_SIZE, STRIDE_GAN, PADDING)
    M, K = cols.shape
    cols_p = cols.reshape(M // CONV0_PACK, CONV0_PACK * K)      # free row-major repack
    out_p = pallas_gemm_bias_act(cols_p, kparams["conv0_wp"], kparams["conv0_bp"],
                                 activation="relu", out_dtype=jnp.bfloat16, m_tile=96)
    x = out_p.reshape(N, Ho, Wo, DISCRIM_CHANNELS[0])           # free row-major unpack

    # conv[1], conv[2]: EncoderBlock = fused conv-GEMM + BatchNorm(batch stats) + ReLU.
    for li in (1, 2):
        cols, (N, Ho, Wo) = _im2col(x, KERNEL_SIZE, KERNEL_SIZE, STRIDE, PADDING)
        out = pallas_gemm_bn_relu(cols, kparams[f"conv{li}_w"],
                                  kparams[f"bn{li}_g"], kparams[f"bn{li}_b"])
        x = out.reshape(N, Ho, Wo, DISCRIM_CHANNELS[li])

    cols, (N, Ho, Wo) = _im2col(x, KERNEL_SIZE, KERNEL_SIZE, STRIDE, PADDING)

    if mode == "REC":
        # i == recon_level (3): return the pre-BN conv output, flattened NCHW-style.
        zero_b = jnp.zeros((DISCRIM_CHANNELS[3],), jnp.float32)
        conv_out = pallas_gemm_bias_act(cols, kparams["conv3_w"], zero_b,
                                        activation=None, out_dtype=jnp.float32)
        conv_out = conv_out.reshape(N, Ho, Wo, DISCRIM_CHANNELS[3])
        conv_out_nchw = jnp.transpose(conv_out, (0, 3, 1, 2))
        return conv_out_nchw.reshape(N, -1)

    # GAN mode: last EncoderBlock, flatten (NHWC order; fc1 weight pre-permuted), FC head.
    out = pallas_gemm_bn_relu(cols, kparams["conv3_w"],
                              kparams["bn3_g"], kparams["bn3_b"])
    flat = out.reshape(N, Ho * Wo * DISCRIM_CHANNELS[3])
    return pallas_fc_head(flat, kparams["fc1_w"], kparams["bn_fc_g"], kparams["bn_fc_b"],
                          kparams["fc2_w"], kparams["fc2_b"])


# ----------------------------- main -----------------------------

if __name__ == "__main__":
    key = jax.random.PRNGKey(0)
    kp, k1, k2, k3 = jax.random.split(key, 4)
    params = prepare_params(init_params(kp))

    B, C, H, W = 2, 3, 16, 16
    ten_orig = jax.random.normal(k1, (B, C, H, W), jnp.float32)
    ten_pred = jax.random.normal(k2, (B, C, H, W), jnp.float32)
    ten_samp = jax.random.normal(k3, (B, C, H, W), jnp.float32)

    rec = discriminator_forward(params, ten_orig, ten_pred, ten_samp, mode="REC")
    gan = discriminator_forward(params, ten_orig, ten_pred, ten_samp, mode="GAN")
    rec, gan = jax.block_until_ready((rec, gan))

    assert rec.shape == (3 * B, DISCRIM_CHANNELS[3] * FC_INPUT_GAN * FC_INPUT_GAN)
    assert gan.shape == (3 * B, 1)
    assert bool(jnp.all(jnp.isfinite(rec))) and bool(jnp.all(jnp.isfinite(gan)))
    assert bool(jnp.all((gan >= 0.0) & (gan <= 1.0)))
    print("KERNEL_OK")
</pallas_src>

<mosaic_0001>
module attributes {stable_mosaic.version = 11 : i64} {
  func.func @_gemm_bias_act_kernel(%arg0: i32, %arg1: memref<96x300xbf16, #tpu.memory_space<vmem>>, %arg2: memref<300x128xbf16, #tpu.memory_space<vmem>>, %arg3: memref<1x128xf32, #tpu.memory_space<vmem>>, %arg4: memref<96x128xbf16, #tpu.memory_space<vmem>>) attributes {dimension_semantics = [#tpu.dimension_semantics<parallel>], iteration_bounds = array<i64: 4>, scalar_prefetch = 0 : i64, scratch_operands = 0 : i64, tpu.core_type = #tpu.core_type<tc>, window_params = [{transform_indices = @transform_0, window_bounds = array<i64: 96, 300>}, {pipeline_mode = #tpu.pipeline_mode<synchronous>, transform_indices = @transform_1, window_bounds = array<i64: 300, 128>}, {pipeline_mode = #tpu.pipeline_mode<synchronous>, transform_indices = @transform_2, window_bounds = array<i64: 1, 128>}, {transform_indices = @transform_3, window_bounds = array<i64: 96, 128>}]} {
    %c0 = arith.constant 0 : index
    %c0_0 = arith.constant 0 : index
    %0 = vector.load %arg1[%c0, %c0_0] : memref<96x300xbf16, #tpu.memory_space<vmem>>, vector<96x300xbf16>
    %c0_1 = arith.constant 0 : index
    %c0_2 = arith.constant 0 : index
    %1 = vector.load %arg2[%c0_1, %c0_2] : memref<300x128xbf16, #tpu.memory_space<vmem>>, vector<300x128xbf16>
    %cst = arith.constant dense<0.000000e+00> : vector<96x128xf32>
    %2 = tpu.matmul %0, %1, %cst {dimension_numbers = #tpu.dot_dimension_numbers<[1], [0], [0], [1], [0, 0, 1, 1], [], []>} : vector<96x300xbf16>, vector<300x128xbf16>, vector<96x128xf32> -> vector<96x128xf32>
    %c0_3 = arith.constant 0 : index
    %c0_4 = arith.constant 0 : index
    %3 = vector.load %arg3[%c0_3, %c0_4] : memref<1x128xf32, #tpu.memory_space<vmem>>, vector<1x128xf32>
    %4 = vector.broadcast %3 : vector<1x128xf32> to vector<96x128xf32>
    %5 = arith.addf %2, %4 : vector<96x128xf32>
    %cst_5 = arith.constant 0.000000e+00 : f32
    %6 = vector.broadcast %cst_5 : f32 to vector<96x128xf32>
    %7 = arith.maximumf %5, %6 : vector<96x128xf32>
    %8 = arith.truncf %7 : vector<96x128xf32> to vector<96x128xbf16>
    %c0_6 = arith.constant 0 : index
    %c0_7 = arith.constant 0 : index
    %9 = vector.load %arg4[%c0_6, %c0_7] : memref<96x128xbf16, #tpu.memory_space<vmem>>, vector<96x128xbf16>
    tpu.vector_store %arg4[%c0_6, %c0_7], %8 {strides = array<i32>} : memref<96x128xbf16, #tpu.memory_space<vmem>>, vector<96x128xbf16>,
    return
  }
  func.func @transform_0(%arg0: i32) -> (i32, i32) {
    %c0_i32 = arith.constant 0 : i32
    %c0_i32_0 = arith.constant 0 : i32
    return %arg0, %c0_i32 : i32, i32
  }
  func.func @transform_1(%arg0: i32) -> (i32, i32) {
    %c0_i32 = arith.constant 0 : i32
    %c0_i32_0 = arith.constant 0 : i32
    %c0_i32_1 = arith.constant 0 : i32
    return %c0_i32, %c0_i32_0 : i32, i32
  }
  func.func @transform_2(%arg0: i32) -> (i32, i32) {
    %c0_i32 = arith.constant 0 : i32
    %c0_i32_0 = arith.constant 0 : i32
    %c0_i32_1 = arith.constant 0 : i32
    return %c0_i32, %c0_i32_0 : i32, i32
  }
  func.func @transform_3(%arg0: i32) -> (i32, i32) {
    %c0_i32 = arith.constant 0 : i32
    %c0_i32_0 = arith.constant 0 : i32
    return %arg0, %c0_i32 : i32, i32
  }
}

module attributes {stable_mosaic.version = 11 : i64} {
  func.func @_gemm_bn_relu_kernel(%arg0: i32, %arg1: memref<384x800xbf16, #tpu.memory_space<vmem>>, %arg2: memref<800x64xbf16, #tpu.memory_space<vmem>>, %arg3: memref<1x64xf32, #tpu.memory_space<vmem>>, %arg4: memref<1x64xf32, #tpu.memory_space<vmem>>, %arg5: memref<384x64xbf16, #tpu.memory_space<vmem>>) attributes {dimension_semantics = [#tpu.dimension_semantics<arbitrary>], iteration_bounds = array<i64: 1>, scalar_prefetch = 0 : i64, scratch_operands = 0 : i64, tpu.core_type = #tpu.core_type<tc>, window_params = [{pipeline_mode = #tpu.pipeline_mode<synchronous>, transform_indices = @transform_0, window_bounds = array<i64: 384, 800>}, {pipeline_mode = #tpu.pipeline_mode<synchronous>, transform_indices = @transform_1, window_bounds = array<i64: 800, 64>}, {pipeline_mode = #tpu.pipeline_mode<synchronous>, transform_indices = @transform_2, window_bounds = array<i64: 1, 64>}, {pipeline_mode = #tpu.pipeline_mode<synchronous>, transform_indices = @transform_3, window_bounds = array<i64: 1, 64>}, {pipeline_mode = #tpu.pipeline_mode<synchronous>, transform_indices = @transform_4, window_bounds = array<i64: 384, 64>}]} {
    %c0 = arith.constant 0 : index
    %c0_0 = arith.constant 0 : index
    %0 = vector.load %arg1[%c0, %c0_0] : memref<384x800xbf16, #tpu.memory_space<vmem>>, vector<384x800xbf16>
    %c0_1 = arith.constant 0 : index
    %c0_2 = arith.constant 0 : index
    %1 = vector.load %arg2[%c0_1, %c0_2] : memref<800x64xbf16, #tpu.memory_space<vmem>>, vector<800x64xbf16>
    %cst = arith.constant dense<0.000000e+00> : vector<384x64xf32>
    %2 = tpu.matmul %0, %1, %cst {dimension_numbers = #tpu.dot_dimension_numbers<[1], [0], [0], [1], [0, 0, 1, 1], [], []>} : vector<384x800xbf16>, vector<800x64xbf16>, vector<384x64xf32> -> vector<384x64xf32>
    %cst_3 = arith.constant dense<0.000000e+00> : vector<64xf32>
    %3 = vector.multi_reduction <add>, %2, %cst_3 [0] : vector<384x64xf32> to vector<64xf32>
    %4 = vector.shape_cast %3 : vector<64xf32> to vector<1x64xf32>
    %cst_4 = arith.constant 3.840000e+02 : f32
    %5 = vector.broadcast %cst_4 : f32 to vector<1x64xf32>
    %6 = arith.divf %4, %5 : vector<1x64xf32>
    %7 = vector.broadcast %6 : vector<1x64xf32> to vector<384x64xf32>
    %8 = arith.subf %2, %7 : vector<384x64xf32>
    %9 = arith.mulf %8, %8 : vector<384x64xf32>
    %cst_5 = arith.constant dense<0.000000e+00> : vector<64xf32>
    %10 = vector.multi_reduction <add>, %9, %cst_5 [0] : vector<384x64xf32> to vector<64xf32>
    %11 = vector.shape_cast %10 : vector<64xf32> to vector<1x64xf32>
    %cst_6 = arith.constant 3.840000e+02 : f32
    %12 = vector.broadcast %cst_6 : f32 to vector<1x64xf32>
    %13 = arith.divf %11, %12 : vector<1x64xf32>
    %14 = vector.broadcast %6 : vector<1x64xf32> to vector<384x64xf32>
    %15 = arith.subf %2, %14 : vector<384x64xf32>
    %cst_7 = arith.constant 9.99999974E-6 : f32
    %16 = vector.broadcast %cst_7 : f32 to vector<1x64xf32>
    %17 = arith.addf %13, %16 : vector<1x64xf32>
    %18 = math.rsqrt %17 : vector<1x64xf32>
    %19 = vector.broadcast %18 : vector<1x64xf32> to vector<384x64xf32>
    %20 = arith.mulf %15, %19 : vector<384x64xf32>
    %c0_8 = arith.constant 0 : index
    %c0_9 = arith.constant 0 : index
    %21 = vector.load %arg3[%c0_8, %c0_9] : memref<1x64xf32, #tpu.memory_space<vmem>>, vector<1x64xf32>
    %22 = vector.broadcast %21 : vector<1x64xf32> to vector<384x64xf32>
    %23 = arith.mulf %20, %22 : vector<384x64xf32>
    %c0_10 = arith.constant 0 : index
    %c0_11 = arith.constant 0 : index
    %24 = vector.load %arg4[%c0_10, %c0_11] : memref<1x64xf32, #tpu.memory_space<vmem>>, vector<1x64xf32>
    %25 = vector.broadcast %24 : vector<1x64xf32> to vector<384x64xf32>
    %26 = arith.addf %23, %25 : vector<384x64xf32>
    %cst_12 = arith.constant 0.000000e+00 : f32
    %27 = vector.broadcast %cst_12 : f32 to vector<384x64xf32>
    %28 = arith.maximumf %26, %27 : vector<384x64xf32>
    %29 = arith.truncf %28 : vector<384x64xf32> to vector<384x64xbf16>
    %c0_13 = arith.constant 0 : index
    %c0_14 = arith.constant 0 : index
    %30 = vector.load %arg5[%c0_13, %c0_14] : memref<384x64xbf16, #tpu.memory_space<vmem>>, vector<384x64xbf16>
    tpu.vector_store %arg5[%c0_13, %c0_14], %29 {strides = array<i32>} : memref<384x64xbf16, #tpu.memory_space<vmem>>, vector<384x64xbf16>,
    return
  }
  func.func @transform_0(%arg0: i32) -> (i32, i32) {
    %c0_i32 = arith.constant 0 : i32
    %c0_i32_0 = arith.constant 0 : i32
    %c0_i32_1 = arith.constant 0 : i32
    return %c0_i32, %c0_i32_0 : i32, i32
  }
  func.func @transform_1(%arg0: i32) -> (i32, i32) {
    %c0_i32 = arith.constant 0 : i32
    %c0_i32_0 = arith.constant 0 : i32
    %c0_i32_1 = arith.constant 0 : i32
    return %c0_i32, %c0_i32_0 : i32, i32
  }
  func.func @transform_2(%arg0: i32) -> (i32, i32) {
    %c0_i32 = arith.constant 0 : i32
    %c0_i32_0 = arith.constant 0 : i32
    %c0_i32_1 = arith.constant 0 : i32
    return %c0_i32, %c0_i32_0 : i32, i32
  }
  func.func @transform_3(%arg0: i32) -> (i32, i32) {
    %c0_i32 = arith.constant 0 : i32
    %c0_i32_0 = arith.constant 0 : i32
    %c0_i32_1 = arith.constant 0 : i32
    return %c0_i32, %c0_i32_0 : i32, i32
  }
  func.func @transform_4(%arg0: i32) -> (i32, i32) {
    %c0_i32 = arith.constant 0 : i32
    %c0_i32_0 = arith.constant 0 : i32
    %c0_i32_1 = arith.constant 0 : i32
    return %c0_i32, %c0_i32_0 : i32, i32
  }
}

module attributes {stable_mosaic.version = 11 : i64} {
  func.func @_gemm_bn_relu_kernel(%arg0: i32, %arg1: memref<96x1600xbf16, #tpu.memory_space<vmem>>, %arg2: memref<1600x128xbf16, #tpu.memory_space<vmem>>, %arg3: memref<1x128xf32, #tpu.memory_space<vmem>>, %arg4: memref<1x128xf32, #tpu.memory_space<vmem>>, %arg5: memref<96x128xbf16, #tpu.memory_space<vmem>>) attributes {dimension_semantics = [#tpu.dimension_semantics<arbitrary>], iteration_bounds = array<i64: 1>, scalar_prefetch = 0 : i64, scratch_operands = 0 : i64, tpu.core_type = #tpu.core_type<tc>, window_params = [{pipeline_mode = #tpu.pipeline_mode<synchronous>, transform_indices = @transform_0, window_bounds = array<i64: 96, 1600>}, {pipeline_mode = #tpu.pipeline_mode<synchronous>, transform_indices = @transform_1, window_bounds = array<i64: 1600, 128>}, {pipeline_mode = #tpu.pipeline_mode<synchronous>, transform_indices = @transform_2, window_bounds = array<i64: 1, 128>}, {pipeline_mode = #tpu.pipeline_mode<synchronous>, transform_indices = @transform_3, window_bounds = array<i64: 1, 128>}, {pipeline_mode = #tpu.pipeline_mode<synchronous>, transform_indices = @transform_4, window_bounds = array<i64: 96, 128>}]} {
    %c0 = arith.constant 0 : index
    %c0_0 = arith.constant 0 : index
    %0 = vector.load %arg1[%c0, %c0_0] : memref<96x1600xbf16, #tpu.memory_space<vmem>>, vector<96x1600xbf16>
    %c0_1 = arith.constant 0 : index
    %c0_2 = arith.constant 0 : index
    %1 = vector.load %arg2[%c0_1, %c0_2] : memref<1600x128xbf16, #tpu.memory_space<vmem>>, vector<1600x128xbf16>
    %cst = arith.constant dense<0.000000e+00> : vector<96x128xf32>
    %2 = tpu.matmul %0, %1, %cst {dimension_numbers = #tpu.dot_dimension_numbers<[1], [0], [0], [1], [0, 0, 1, 1], [], []>} : vector<96x1600xbf16>, vector<1600x128xbf16>, vector<96x128xf32> -> vector<96x128xf32>
    %cst_3 = arith.constant dense<0.000000e+00> : vector<128xf32>
    %3 = vector.multi_reduction <add>, %2, %cst_3 [0] : vector<96x128xf32> to vector<128xf32>
    %4 = vector.shape_cast %3 : vector<128xf32> to vector<1x128xf32>
    %cst_4 = arith.constant 9.600000e+01 : f32
    %5 = vector.broadcast %cst_4 : f32 to vector<1x128xf32>
    %6 = arith.divf %4, %5 : vector<1x128xf32>
    %7 = vector.broadcast %6 : vector<1x128xf32> to vector<96x128xf32>
    %8 = arith.subf %2, %7 : vector<96x128xf32>
    %9 = arith.mulf %8, %8 : vector<96x128xf32>
    %cst_5 = arith.constant dense<0.000000e+00> : vector<128xf32>
    %10 = vector.multi_reduction <add>, %9, %cst_5 [0] : vector<96x128xf32> to vector<128xf32>
    %11 = vector.shape_cast %10 : vector<128xf32> to vector<1x128xf32>
    %cst_6 = arith.constant 9.600000e+01 : f32
    %12 = vector.broadcast %cst_6 : f32 to vector<1x128xf32>
    %13 = arith.divf %11, %12 : vector<1x128xf32>
    %14 = vector.broadcast %6 : vector<1x128xf32> to vector<96x128xf32>
    %15 = arith.subf %2, %14 : vector<96x128xf32>
    %cst_7 = arith.constant 9.99999974E-6 : f32
    %16 = vector.broadcast %cst_7 : f32 to vector<1x128xf32>
    %17 = arith.addf %13, %16 : vector<1x128xf32>
    %18 = math.rsqrt %17 : vector<1x128xf32>
    %19 = vector.broadcast %18 : vector<1x128xf32> to vector<96x128xf32>
    %20 = arith.mulf %15, %19 : vector<96x128xf32>
    %c0_8 = arith.constant 0 : index
    %c0_9 = arith.constant 0 : index
    %21 = vector.load %arg3[%c0_8, %c0_9] : memref<1x128xf32, #tpu.memory_space<vmem>>, vector<1x128xf32>
    %22 = vector.broadcast %21 : vector<1x128xf32> to vector<96x128xf32>
    %23 = arith.mulf %20, %22 : vector<96x128xf32>
    %c0_10 = arith.constant 0 : index
    %c0_11 = arith.constant 0 : index
    %24 = vector.load %arg4[%c0_10, %c0_11] : memref<1x128xf32, #tpu.memory_space<vmem>>, vector<1x128xf32>
    %25 = vector.broadcast %24 : vector<1x128xf32> to vector<96x128xf32>
    %26 = arith.addf %23, %25 : vector<96x128xf32>
    %cst_12 = arith.constant 0.000000e+00 : f32
    %27 = vector.broadcast %cst_12 : f32 to vector<96x128xf32>
    %28 = arith.maximumf %26, %27 : vector<96x128xf32>
    %29 = arith.truncf %28 : vector<96x128xf32> to vector<96x128xbf16>
    %c0_13 = arith.constant 0 : index
    %c0_14 = arith.constant 0 : index
    %30 = vector.load %arg5[%c0_13, %c0_14] : memref<96x128xbf16, #tpu.memory_space<vmem>>, vector<96x128xbf16>
    tpu.vector_store %arg5[%c0_13, %c0_14], %29 {strides = array<i32>} : memref<96x128xbf16, #tpu.memory_space<vmem>>, vector<96x128xbf16>,
    return
  }
  func.func @transform_0(%arg0: i32) -> (i32, i32) {
    %c0_i32 = arith.constant 0 : i32
    %c0_i32_0 = arith.constant 0 : i32
    %c0_i32_1 = arith.constant 0 : i32
    return %c0_i32, %c0_i32_0 : i32, i32
  }
  func.func @transform_1(%arg0: i32) -> (i32, i32) {
    %c0_i32 = arith.constant 0 : i32
    %c0_i32_0 = arith.constant 0 : i32
    %c0_i32_1 = arith.constant 0 : i32
    return %c0_i32, %c0_i32_0 : i32, i32
  }
  func.func @transform_2(%arg0: i32) -> (i32, i32) {
    %c0_i32 = arith.constant 0 : i32
    %c0_i32_0 = arith.constant 0 : i32
    %c0_i32_1 = arith.constant 0 : i32
    return %c0_i32, %c0_i32_0 : i32, i32
  }
  func.func @transform_3(%arg0: i32) -> (i32, i32) {
    %c0_i32 = arith.constant 0 : i32
    %c0_i32_0 = arith.constant 0 : i32
    %c0_i32_1 = arith.constant 0 : i32
    return %c0_i32, %c0_i32_0 : i32, i32
  }
  func.func @transform_4(%arg0: i32) -> (i32, i32) {
    %c0_i32 = arith.constant 0 : i32
    %c0_i32_0 = arith.constant 0 : i32
    %c0_i32_1 = arith.constant 0 : i32
    return %c0_i32, %c0_i32_0 : i32, i32
  }
}

module attributes {stable_mosaic.version = 11 : i64} {
  func.func @_gemm_bias_act_kernel(%arg0: i32, %arg1: memref<24x3200xbf16, #tpu.memory_space<vmem>>, %arg2: memref<3200x128xbf16, #tpu.memory_space<vmem>>, %arg3: memref<1x128xf32, #tpu.memory_space<vmem>>, %arg4: memref<24x128xf32, #tpu.memory_space<vmem>>) attributes {dimension_semantics = [#tpu.dimension_semantics<parallel>], iteration_bounds = array<i64: 1>, scalar_prefetch = 0 : i64, scratch_operands = 0 : i64, tpu.core_type = #tpu.core_type<tc>, window_params = [{transform_indices = @transform_0, window_bounds = array<i64: 24, 3200>}, {pipeline_mode = #tpu.pipeline_mode<synchronous>, transform_indices = @transform_1, window_bounds = array<i64: 3200, 128>}, {pipeline_mode = #tpu.pipeline_mode<synchronous>, transform_indices = @transform_2, window_bounds = array<i64: 1, 128>}, {transform_indices = @transform_3, window_bounds = array<i64: 24, 128>}]} {
    %c0 = arith.constant 0 : index
    %c0_0 = arith.constant 0 : index
    %0 = vector.load %arg1[%c0, %c0_0] : memref<24x3200xbf16, #tpu.memory_space<vmem>>, vector<24x3200xbf16>
    %c0_1 = arith.constant 0 : index
    %c0_2 = arith.constant 0 : index
    %1 = vector.load %arg2[%c0_1, %c0_2] : memref<3200x128xbf16, #tpu.memory_space<vmem>>, vector<3200x128xbf16>
    %cst = arith.constant dense<0.000000e+00> : vector<24x128xf32>
    %2 = tpu.matmul %0, %1, %cst {dimension_numbers = #tpu.dot_dimension_numbers<[1], [0], [0], [1], [0, 0, 1, 1], [], []>} : vector<24x3200xbf16>, vector<3200x128xbf16>, vector<24x128xf32> -> vector<24x128xf32>
    %c0_3 = arith.constant 0 : index
    %c0_4 = arith.constant 0 : index
    %3 = vector.load %arg3[%c0_3, %c0_4] : memref<1x128xf32, #tpu.memory_space<vmem>>, vector<1x128xf32>
    %4 = vector.broadcast %3 : vector<1x128xf32> to vector<24x128xf32>
    %5 = arith.addf %2, %4 : vector<24x128xf32>
    %c0_5 = arith.constant 0 : index
    %c0_6 = arith.constant 0 : index
    %6 = vector.load %arg4[%c0_5, %c0_6] : memref<24x128xf32, #tpu.memory_space<vmem>>, vector<24x128xf32>
    tpu.vector_store %arg4[%c0_5, %c0_6], %5 {strides = array<i32>} : memref<24x128xf32, #tpu.memory_space<vmem>>, vector<24x128xf32>,
    return
  }
  func.func @transform_0(%arg0: i32) -> (i32, i32) {
    %c0_i32 = arith.constant 0 : i32
    %c0_i32_0 = arith.constant 0 : i32
    return %arg0, %c0_i32 : i32, i32
  }
  func.func @transform_1(%arg0: i32) -> (i32, i32) {
    %c0_i32 = arith.constant 0 : i32
    %c0_i32_0 = arith.constant 0 : i32
    %c0_i32_1 = arith.constant 0 : i32
    return %c0_i32, %c0_i32_0 : i32, i32
  }
  func.func @transform_2(%arg0: i32) -> (i32, i32) {
    %c0_i32 = arith.constant 0 : i32
    %c0_i32_0 = arith.constant 0 : i32
    %c0_i32_1 = arith.constant 0 : i32
    return %c0_i32, %c0_i32_0 : i32, i32
  }
  func.func @transform_3(%arg0: i32) -> (i32, i32) {
    %c0_i32 = arith.constant 0 : i32
    %c0_i32_0 = arith.constant 0 : i32
    return %arg0, %c0_i32 : i32, i32
  }
}

</mosaic_0001>

<llo_original>
// kernel: discriminator_forward.4
$region0: #{discriminator_forward.4}
  #allocation0 [shape = 'u32[]', space=smem, size = 0x4, offset = 0x4, fixed_abs, tag = 'smem constant byte address 0x4 - core index']
  #allocation1 [shape = 'u32[144,128]{1,0:T(1,128)}', space=vmem, size = 0x12000, scoped, tag = 'internal scratch']
  %s0 = inlined_call_operand.vmem [shape: bf16[384,300], index: 0, kind: input, shape index: {}]
  %s1 = inlined_call_operand.vmem [shape: bf16[300,128], index: 1, kind: input, shape index: {}]
  %s2 = inlined_call_operand.vmem [shape: f32[1,128], index: 2, kind: input, shape index: {}]
  %s3 = inlined_call_operand.vmem [shape: bf16[384,128], index: 3, kind: output, shape index: {}]
  %s4 = sld [smem:[#allocation0]]
  $region45: #{discriminator_forward.4} parent=0
    _
  %s6 = ssub.s32 1, %s4
  %s7 = scalar_select 0, %s6, %s4
  loop: start=0, step=1, limit=6
  $region2: #{discriminator_forward.4} parent=0 // loop_pre_header
    _
  $region3: #{discriminator_forward.4} parent=0 // loop_header
    %s9 = sphi 0, %s13
    %p10 = scmp.ge.s32.totalorder %s9, 6
    %s19 = sphi 0, %s21
    %s22 = sphi 0, %s19
    %s23 = sphi 0, %s22
    %s39 = sphi 0, %s23
    %s43 = sphi 0, %s43
    %s45 = sphi 0, %s43
    %s46 = sphi 0, %s45
    %s60 = sphi 0, %s46
    %s64 = sphi 0, %s64
    %s66 = sphi 0, %s64
    %s67 = sphi 0, %s66
    %s81 = sphi 0, %s67
    %s87 = sphi 0, %s89
    %s90 = sphi 0, %s87
    %s91 = sphi 0, %s90
    %s107 = sphi 0, %s91
  $region4: #{discriminator_forward.4} parent=0 // loop_header_branch
    %12 = sbr.rel (%p10) target = $region8
  $region5: #{discriminator_forward.4} parent=0 // loop_body
    %s14 = ssub.s32 %s9, 1
    %s15 = ssub.s32 %s9, 2
    %s16 = sadd.s32 %s9, 1
    %s17 = ssub.s32 %s9, %s16
    %p18 = scmp.eq.s32.totalorder %s17, 0
    %s20 = sadd.s32 %s19, 1
    %s21 = scalar_select %p18, %s19, %s20
    %p24 = pneg %p18
    %p25 = scmp.eq.s32.totalorder %s9, 3
    %p26 = por %p24, %p25
    %p27 = scmp.ne.s32.totalorder %s19, %s22
    %p28 = scmp.eq.s32.totalorder %s9, 0
    %p29 = por %p27, %p28
    %p30 = scmp.ne.s32.totalorder %s19, %s22
    %p31 = scmp.eq.s32.totalorder %s14, 3
    %p32 = por %p30, %p31
    %p33 = scmp.ne.s32.totalorder %s22, %s23
    %p34 = scmp.eq.s32.totalorder %s14, 0
    %p35 = por %p33, %p34
    %p36 = scmp.ne.s32.totalorder %s22, %s23
    %p37 = scmp.eq.s32.totalorder %s15, 3
    %p38 = por %p36, %p37
    %p40 = scmp.ne.s32.totalorder %s23, %s39
    %p41 = scmp.eq.s32.totalorder %s15, 0
    %p42 = por %p40, %p41
    %s44 = sadd.s32 %s43, 1
    %p47 = scmp.eq.s32.totalorder %s9, 3
    %p48 = scmp.ne.s32.totalorder %s43, %s45
    %p49 = scmp.eq.s32.totalorder %s9, 0
    %p50 = por %p48, %p49
    %p51 = scmp.ne.s32.totalorder %s43, %s45
    %p52 = scmp.eq.s32.totalorder %s14, 3
    %p53 = por %p51, %p52
    %p54 = scmp.ne.s32.totalorder %s45, %s46
    %p55 = scmp.eq.s32.totalorder %s14, 0
    %p56 = por %p54, %p55
    %p57 = scmp.ne.s32.totalorder %s45, %s46
    %p58 = scmp.eq.s32.totalorder %s15, 3
    %p59 = por %p57, %p58
    %p61 = scmp.ne.s32.totalorder %s46, %s60
    %p62 = scmp.eq.s32.totalorder %s15, 0
    %p63 = por %p61, %p62
    %s65 = sadd.s32 %s64, 1
    %p68 = scmp.eq.s32.totalorder %s9, 3
    %p69 = scmp.ne.s32.totalorder %s64, %s66
    %p70 = scmp.eq.s32.totalorder %s9, 0
    %p71 = por %p69, %p70
    %p72 = scmp.ne.s32.totalorder %s64, %s66
    %p73 = scmp.eq.s32.totalorder %s14, 3
    %p74 = por %p72, %p73
    %p75 = scmp.ne.s32.totalorder %s66, %s67
    %p76 = scmp.eq.s32.totalorder %s14, 0
    %p77 = por %p75, %p76
    %p78 = scmp.ne.s32.totalorder %s66, %s67
    %p79 = scmp.eq.s32.totalorder %s15, 3
    %p80 = por %p78, %p79
    %p82 = scmp.ne.s32.totalorder %s67, %s81
    %p83 = scmp.eq.s32.totalorder %s15, 0
    %p84 = por %p82, %p83
    %s85 = ssub.s32 %s9, %s16
    %p86 = scmp.eq.s32.totalorder %s85, 0
    %s88 = sadd.s32 %s87, 1
    %s89 = scalar_select %p86, %s87, %s88
    %p92 = pneg %p86
    %p93 = scmp.eq.s32.totalorder %s9, 3
    %p94 = por %p92, %p93
    %p95 = scmp.ne.s32.totalorder %s87, %s90
    %p96 = scmp.eq.s32.totalorder %s9, 0
    %p97 = por %p95, %p96
    %p98 = scmp.ne.s32.totalorder %s87, %s90
    %p99 = scmp.eq.s32.totalorder %s14, 3
    %p100 = por %p98, %p99
    %p101 = scmp.ne.s32.totalorder %s90, %s91
    %p102 = scmp.eq.s32.totalorder %s14, 0
    %p103 = por %p101, %p102
    %p104 = scmp.ne.s32.totalorder %s90, %s91
    %p105 = scmp.eq.s32.totalorder %s15, 3
    %p106 = por %p104, %p105
    %p108 = scmp.ne.s32.totalorder %s91, %s107
    %p109 = scmp.eq.s32.totalorder %s15, 0
    %p110 = por %p108, %p109
    %p111 = scmp.le.s32.totalorder 1, %s9
    %p112 = scmp.lt.s32.totalorder %s9, 5
    %p113 = pnand %p111, %p112
    %p114 = pneg %p113
    // Predicated region
    $region9: #{discriminator_forward.4} parent=5 // pred_check
      _
    $region10: #{discriminator_forward.4} parent=5 // pred_check_branch
      %116 = sbr.rel (%p113) target = $region12
    $region11: #{discriminator_forward.4} parent=5 // pred_region
      %s117 = ssub.s32 %s9, 1
      // Predicated region
      $region13: #{discriminator_forward.4} parent=11 // pred_check
        %p118 = pneg %p56
      $region14: #{discriminator_forward.4} parent=11 // pred_check_branch
        %120 = sbr.rel (%p118) target = $region16
      $region15: #{discriminator_forward.4} parent=11 // pred_region
        _
      $region16: #{discriminator_forward.4} parent=11 // pred_fallthru
        _
      // Predicated region
      $region17: #{discriminator_forward.4} parent=11 // pred_check
        %p121 = pneg %p77
      $region18: #{discriminator_forward.4} parent=11 // pred_check_branch
        %123 = sbr.rel (%p121) target = $region20
      $region19: #{discriminator_forward.4} parent=11 // pred_region
        _
      $region20: #{discriminator_forward.4} parent=11 // pred_fallthru
        _
    $region12: #{discriminator_forward.4} parent=5 // pred_fallthru
      _
    %p124 = scmp.lt.s32.totalorder %s9, 4
    // Predicated region
    $region21: #{discriminator_forward.4} parent=5 // pred_check
      %p125 = pneg %p124
    $region22: #{discriminator_forward.4} parent=5 // pred_check_branch
      %127 = sbr.rel (%p125) target = $region24
    $region23: #{discriminator_forward.4} parent=5 // pred_region
      // Predicated region
      $region25: #{discriminator_forward.4} parent=23 // pred_check
        %p128 = pneg %p29
      $region26: #{discriminator_forward.4} parent=23 // pred_check_branch
        %130 = sbr.rel (%p128) target = $region28
      $region27: #{discriminator_forward.4} parent=23 // pred_region
        %s131 = smul.u32 12, %s9
        %p132 = scmp.lt.s32.totalorder %s131, 47
        %s133 = scalar_select %p132, %s131, 47
        %s134 = smul.addr %s133, 3
        %s135 = smul.addr %s134, 4
        %s136 = scalar_lea.vmem %s0, %s135
        %s137 = smul.u32 12, %s9
      $region28: #{discriminator_forward.4} parent=23 // pred_fallthru
        _
    $region24: #{discriminator_forward.4} parent=5 // pred_fallthru
      _
    %p138 = scmp.le.s32.totalorder 1, %s9
    %p139 = scmp.lt.s32.totalorder %s9, 5
    %p140 = pnand %p138, %p139
    %p141 = pneg %p140
    // Predicated region
    $region29: #{discriminator_forward.4} parent=5 // pred_check
      _
    $region30: #{discriminator_forward.4} parent=5 // pred_check_branch
      %143 = sbr.rel (%p140) target = $region32
    $region31: #{discriminator_forward.4} parent=5 // pred_region
      %s144 = ssub.s32 %s9, 1
      %s145 = smul.u32 12, %s14
      %p146 = scmp.lt.s32.totalorder %s145, 47
      %s147 = scalar_select %p146, %s145, 47
      %s148 = smul.addr %s147, 3
      %s149 = smul.addr %s148, 4
      %s150 = scalar_lea.vmem %s0, %s149
      %p151 = pneg %p35
      %p152 = pneg %p32
      %p153 = pneg %p56
      %p154 = pneg %p53
      %p155 = pneg %p77
      %p156 = pneg %p74
      %p157 = pneg %p103
      %p158 = pneg %p100
      %s159 = smul.u32 12, %s14
      %p160 = scmp.lt.s32.totalorder %s159, 47
      %s161 = scalar_select %p160, %s159, 47
      %s162 = smul.addr %s161, 4
      %s163 = scalar_lea.vmem %s3, %s162
      %s164 = smul.u32 12, %s14
      %p165 = scmp.lt.s32.totalorder %s164, 47
      %s166 = scalar_select %p165, %s164, 47
      %s167 = smul.addr %s166, 3
      %s168 = smul.addr %s167, 4
      %s169 = scalar_lea.vmem %s0, %s168
      %s170 = smul.u32 12, %s14
      %s171 = smul.u32 12, %s14
      %p172 = scmp.lt.s32.totalorder %s171, 47
      %s173 = scalar_select %p172, %s171, 47
      %s174 = smul.addr %s173, 4
      %s175 = scalar_lea.vmem %s3, %s174
      %s176 = smul.u32 12, %s14
      %v178 = vld [vmem:[%s169] sm:$0xff]
      %v179 = vld [vmem:[%s169 + $0x8] sm:$0xf]
      %v180 = vld [vmem:[%s169 + $0xc] sm:$0xff]
      %v181 = vld [vmem:[%s169 + $0x14] sm:$0xf]
      %v182 = vld [vmem:[%s169 + $0x18] sm:$0xff]
      %v183 = vld [vmem:[%s169 + $0x20] sm:$0xf]
      %v184 = vld [vmem:[%s169 + $0x24] sm:$0xff]
      %v185 = vld [vmem:[%s169 + $0x2c] sm:$0xf]
      %v186 = vld [vmem:[%s169 + $0x30] sm:$0xff]
      %v187 = vld [vmem:[%s169 + $0x38] sm:$0xf]
      %v188 = vld [vmem:[%s169 + $0x3c] sm:$0xff]
      %v189 = vld [vmem:[%s169 + $0x44] sm:$0xf]
      %v190 = vld [vmem:[%s169 + $0x48] sm:$0xff]
      %v191 = vld [vmem:[%s169 + $0x50] sm:$0xf]
      %v192 = vld [vmem:[%s169 + $0x54] sm:$0xff]
      %v193 = vld [vmem:[%s169 + $0x5c] sm:$0xf]
      %v194 = vld [vmem:[%s169 + $0x60] sm:$0xff]
      %v195 = vld [vmem:[%s169 + $0x68] sm:$0xf]
      %v196 = vld [vmem:[%s169 + $0x6c] sm:$0xff]
      %v197 = vld [vmem:[%s169 + $0x74] sm:$0xf]
      %v198 = vld [vmem:[%s169 + $0x78] sm:$0xff]
      %v199 = vld [vmem:[%s169 + $0x80] sm:$0xf]
      %v200 = vld [vmem:[%s169 + $0x84] sm:$0xff]
      %v201 = vld [vmem:[%s169 + $0x8c] sm:$0xf]
      %v202 = vld [vmem:[%s1] sm:$0xf]
      %v203 = vld [vmem:[%s1 + $0x4] sm:$0xf]
      %v204 = vld [vmem:[%s1 + $0x8] sm:$0xf]
      %v205 = vld [vmem:[%s1 + $0xc] sm:$0xf]
      %v206 = vld [vmem:[%s1 + $0x10] sm:$0xf]
      %v207 = vld [vmem:[%s1 + $0x14] sm:$0xf]
      %v208 = vld [vmem:[%s1 + $0x18] sm:$0xf]
      %v209 = vld [vmem:[%s1 + $0x1c] sm:$0xf]
      %v210 = vld [vmem:[%s1 + $0x20] sm:$0xf]
      %v211 = vld [vmem:[%s1 + $0x24] sm:$0xf]
      %v212 = vld [vmem:[%s1 + $0x28] sm:$0xf]
      %v213 = vld [vmem:[%s1 + $0x2c] sm:$0xf]
      %v214 = vld [vmem:[%s1 + $0x30] sm:$0xf]
      %v215 = vld [vmem:[%s1 + $0x34] sm:$0xf]
      %v216 = vld [vmem:[%s1 + $0x38] sm:$0xf]
      %v217 = vld [vmem:[%s1 + $0x3c] sm:$0xf]
      %v218 = vld [vmem:[%s1 + $0x40] sm:$0xf]
      %v219 = vld [vmem:[%s1 + $0x44] sm:$0xf]
      %v220 = vld [vmem:[%s1 + $0x48] sm:$0xf]
      %v221 = vld [vmem:[%s1 + $0x4c] sm:$0xf]
      %v222 = vld [vmem:[%s1 + $0x50] sm:$0xf]
      %v223 = vld [vmem:[%s1 + $0x54] sm:$0xf]
      %v224 = vld [vmem:[%s1 + $0x58] sm:$0xf]
      %v225 = vld [vmem:[%s1 + $0x5c] sm:$0xf]
      %v226 = vld [vmem:[%s1 + $0x60] sm:$0xf]
      %v227 = vld [vmem:[%s1 + $0x64] sm:$0xf]
      %v228 = vld [vmem:[%s1 + $0x68] sm:$0xf]
      %v229 = vld [vmem:[%s1 + $0x6c] sm:$0xf]
      %v230 = vld [vmem:[%s1 + $0x70] sm:$0xf]
      %v231 = vld [vmem:[%s1 + $0x74] sm:$0xf]
      %v232 = vld [vmem:[%s1 + $0x78] sm:$0xf]
      %v233 = vld [vmem:[%s1 + $0x7c] sm:$0xf]
      %v234 = vld [vmem:[%s1 + $0x80] sm:$0xf]
      %v235 = vld [vmem:[%s1 + $0x84] sm:$0xf]
      %v236 = vld [vmem:[%s1 + $0x88] sm:$0xf]
      %v237 = vld [vmem:[%s1 + $0x8c] sm:$0xf]
      %v238 = vld [vmem:[%s1 + $0x90] sm:$0xf]
      %v239 = vld [vmem:[%s1 + $0x94] sm:$0x3]
      %v240 = vld [vmem:[%s2] sm:$0x1]
      %v242 = vlaneseq
      %v243 = vshrl.u32 %v242, 7
      %v244 = vsub.s32 0, %v243
      %v245 = vrot.slane %v240, %v244
      %v271 = vunpack.c.l.b16 %v178
      %v272 = vunpack.c.h.b16 %v178
      %v273 = vunpack.c.l.b16 %v179
      %v274 = vunpack.c.l.b16 %v180
      %v275 = vunpack.c.h.b16 %v180
      %v276 = vunpack.c.l.b16 %v181
      %v277 = vunpack.c.l.b16 %v182
      %v278 = vunpack.c.h.b16 %v182
      %v279 = vunpack.c.l.b16 %v183
      %v280 = vunpack.c.l.b16 %v184
      %v281 = vunpack.c.h.b16 %v184
      %v282 = vunpack.c.l.b16 %v185
      %v283 = vunpack.c.l.b16 %v186
      %v284 = vunpack.c.h.b16 %v186
      %v285 = vunpack.c.l.b16 %v187
      %v286 = vunpack.c.l.b16 %v188
      %v287 = vunpack.c.h.b16 %v188
      %v288 = vunpack.c.l.b16 %v189
      %v289 = vunpack.c.l.b16 %v190
      %v290 = vunpack.c.h.b16 %v190
      %v291 = vunpack.c.l.b16 %v191
      %v292 = vunpack.c.l.b16 %v192
      %v293 = vunpack.c.h.b16 %v192
      %v294 = vunpack.c.l.b16 %v193
      %v295 = vunpack.c.l.b16 %v194
      %v296 = vunpack.c.h.b16 %v194
      %v297 = vunpack.c.l.b16 %v195
      %v298 = vunpack.c.l.b16 %v196
      %v299 = vunpack.c.h.b16 %v196
      %v300 = vunpack.c.l.b16 %v197
      %v301 = vunpack.c.l.b16 %v198
      %v302 = vunpack.c.h.b16 %v198
      %v303 = vunpack.c.l.b16 %v199
      %v304 = vunpack.c.l.b16 %v200
      %v305 = vunpack.c.h.b16 %v200
      %v306 = vunpack.c.l.b16 %v201
      %v307 = vpack.c.b16 %v274, %v271
      %v308 = vpack.c.b16 %v275, %v272
      %v309 = vpack.c.b16 %v276, %v273
      %v310 = vpack.c.b16 %v280, %v277
      %v311 = vpack.c.b16 %v281, %v278
      %v312 = vpack.c.b16 %v282, %v279
      %v313 = vpack.c.b16 %v286, %v283
      %v314 = vpack.c.b16 %v287, %v284
      %v315 = vpack.c.b16 %v288, %v285
      %v316 = vpack.c.b16 %v292, %v289
      %v317 = vpack.c.b16 %v293, %v290
      %v318 = vpack.c.b16 %v294, %v291
      %v319 = vpack.c.b16 %v298, %v295
      %v320 = vpack.c.b16 %v299, %v296
      %v321 = vpack.c.b16 %v300, %v297
      %v322 = vpack.c.b16 %v304, %v301
      %v323 = vpack.c.b16 %v305, %v302
      %v324 = vpack.c.b16 %v306, %v303
      %v375 = vunpack.c.l.b16 %v202
      %v376 = vunpack.c.l.b16 %v203
      %v377 = vunpack.c.l.b16 %v204
      %v378 = vunpack.c.l.b16 %v205
      %v379 = vunpack.c.l.b16 %v206
      %v380 = vunpack.c.l.b16 %v207
      %v381 = vunpack.c.l.b16 %v208
      %v382 = vunpack.c.l.b16 %v209
      %v383 = vunpack.c.l.b16 %v210
      %v384 = vunpack.c.l.b16 %v211
      %v385 = vunpack.c.l.b16 %v212
      %v386 = vunpack.c.l.b16 %v213
      %v387 = vunpack.c.l.b16 %v214
      %v388 = vunpack.c.l.b16 %v215
      %v389 = vunpack.c.l.b16 %v216
      %v390 = vunpack.c.l.b16 %v217
      %v391 = vunpack.c.l.b16 %v218
      %v392 = vunpack.c.l.b16 %v219
      %v393 = vunpack.c.l.b16 %v220
      %v394 = vunpack.c.l.b16 %v221
      %v395 = vunpack.c.l.b16 %v222
      %v396 = vunpack.c.l.b16 %v223
      %v397 = vunpack.c.l.b16 %v224
      %v398 = vunpack.c.l.b16 %v225
      %v399 = vunpack.c.l.b16 %v226
      %v400 = vunpack.c.l.b16 %v227
      %v401 = vunpack.c.l.b16 %v228
      %v402 = vunpack.c.l.b16 %v229
      %v403 = vunpack.c.l.b16 %v230
      %v404 = vunpack.c.l.b16 %v231
      %v405 = vunpack.c.l.b16 %v232
      %v406 = vunpack.c.l.b16 %v233
      %v407 = vunpack.c.l.b16 %v234
      %v408 = vunpack.c.l.b16 %v235
      %v409 = vunpack.c.l.b16 %v236
      %v410 = vunpack.c.l.b16 %v237
      %v411 = vunpack.c.l.b16 %v238
      %v412 = vunpack.c.l.b16 %v239
      %v413 = vpack.c.b16 %v376, %v375
      %v414 = vpack.c.b16 %v378, %v377
      %v415 = vpack.c.b16 %v380, %v379
      %v416 = vpack.c.b16 %v382, %v381
      %v417 = vpack.c.b16 %v384, %v383
      %v418 = vpack.c.b16 %v386, %v385
      %v419 = vpack.c.b16 %v388, %v387
      %v420 = vpack.c.b16 %v390, %v389
      %v421 = vpack.c.b16 %v392, %v391
      %v422 = vpack.c.b16 %v394, %v393
      %v423 = vpack.c.b16 %v396, %v395
      %v424 = vpack.c.b16 %v398, %v397
      %v425 = vpack.c.b16 %v400, %v399
      %v426 = vpack.c.b16 %v402, %v401
      %v427 = vpack.c.b16 %v404, %v403
      %v428 = vpack.c.b16 %v406, %v405
      %v429 = vpack.c.b16 %v408, %v407
      %v430 = vpack.c.b16 %v410, %v409
      %v431 = vpack.c.b16 %v412, %v411
      %vm450 = vcmask 359424
      %v452 = vsel %vm450, %v309, 0
      %v455 = vsel %vm450, %v312, 0
      %v458 = vsel %vm450, %v315, 0
      %v461 = vsel %vm450, %v318, 0
      %v464 = vsel %vm450, %v321, 0
      %v467 = vsel %vm450, %v324, 0
      %vm469 = vcmask 1045504
      %v471 = vsel %vm469, %v431, 0
      %473 = vmatprep.subr.bf16.mxu0 0
      %474 = vmatpush1.bf16.msra.mxu0 %v420
      %475 = vmatprep.subr.bf16.mxu0 0
      %476 = vmatpush1.bf16.msra.mxu0 %v419
      %477 = vmatprep.subr.bf16.mxu0 0
      %478 = vmatpush1.bf16.msra.mxu0 %v418
      %479 = vmatprep.subr.bf16.mxu0 0
      %480 = vmatpush1.bf16.msra.mxu0 %v417
      %481 = vmatprep.subr.bf16.mxu0 0
      %482 = vmatpush1.bf16.msra.mxu0 %v416
      %483 = vmatprep.subr.bf16.mxu0 0
      %484 = vmatpush1.bf16.msra.mxu0 %v415
      %485 = vmatprep.subr.bf16.mxu0 0
      %486 = vmatpush1.bf16.msra.mxu0 %v414
      %487 = vmatprep.subr.bf16.mxu0 0
      %488 = vmatpush1.bf16.msra.mxu0 %v413
      %489 = vmatprep.subr.bf16.mxu0 0
      %490 = vmatpush2.bf16.msra.mxu0 %v428
      %491 = vmatprep.subr.bf16.mxu0 0
      %492 = vmatpush2.bf16.msra.mxu0 %v427
      %493 = vmatprep.subr.bf16.mxu0 0
      %494 = vmatpush2.bf16.msra.mxu0 %v426
      %495 = vmatprep.subr.bf16.mxu0 0
      %496 = vmatpush2.bf16.msra.mxu0 %v425
      %497 = vmatprep.subr.bf16.mxu0 0
      %498 = vmatpush2.bf16.msra.mxu0 %v424
      %499 = vmatprep.subr.bf16.mxu0 0
      %500 = vmatpush2.bf16.msra.mxu0 %v423
      %501 = vmatprep.subr.bf16.mxu0 0
      %502 = vmatpush2.bf16.msra.mxu0 %v422
      %503 = vmatprep.subr.bf16.mxu0 0
      %504 = vmatpush2.bf16.msra.mxu0 %v421
      %505 = vmatprep.mubr.bf16.mxu0 %v308
      %506 = vmatmul.mubr.bf16.gmra.mxu0 %v307
      %v507 = vpop.f32.mrf.mxu0
      %v508 = vadd.f32 %v245, %v507
      %v509 = vpop.f32.mrf.mxu0
      %v510 = vpop.f32.mrf.mxu0
      %v511 = vadd.f32 %v245, %v510
      %v512 = vpop.f32.mrf.mxu0
      %513 = vmatprep.mubr.bf16.mxu0 %v311
      %514 = vmatmul.mubr.bf16.gmra.mxu0 %v310
      %v515 = vpop.f32.mrf.mxu0
      %v516 = vadd.f32 %v245, %v515
      %v517 = vpop.f32.mrf.mxu0
      %v518 = vpop.f32.mrf.mxu0
      %v519 = vadd.f32 %v245, %v518
      %v520 = vpop.f32.mrf.mxu0
      %521 = vmatprep.mubr.bf16.mxu0 %v314
      %522 = vmatmul.mubr.bf16.gmra.mxu0 %v313
      %v523 = vpop.f32.mrf.mxu0
      %v524 = vadd.f32 %v245, %v523
      %v525 = vpop.f32.mrf.mxu0
      %v526 = vpop.f32.mrf.mxu0
      %v527 = vadd.f32 %v245, %v526
      %v528 = vpop.f32.mrf.mxu0
      %529 = vmatprep.mubr.bf16.mxu0 %v317
      %530 = vmatmul.mubr.bf16.gmra.mxu0 %v316
      %v531 = vpop.f32.mrf.mxu0
      %v532 = vadd.f32 %v245, %v531
      %v533 = vpop.f32.mrf.mxu0
      %v534 = vpop.f32.mrf.mxu0
      %v535 = vadd.f32 %v245, %v534
      %v536 = vpop.f32.mrf.mxu0
      %537 = vmatprep.mubr.bf16.mxu0 %v320
      %538 = vmatmul.mubr.bf16.gmra.mxu0 %v319
      %v539 = vpop.f32.mrf.mxu0
      %v540 = vadd.f32 %v245, %v539
      %v541 = vpop.f32.mrf.mxu0
      %v542 = vpop.f32.mrf.mxu0
      %v543 = vadd.f32 %v245, %v542
      %v544 = vpop.f32.mrf.mxu0
      %545 = vmatprep.mubr.bf16.mxu0 %v323
      %546 = vmatmul.mubr.bf16.gmra.mxu0 %v322
      %v547 = vpop.f32.mrf.mxu0
      %v548 = vadd.f32 %v245, %v547
      %v549 = vpop.f32.mrf.mxu0
      %v550 = vpop.f32.mrf.mxu0
      %v551 = vadd.f32 %v245, %v550
      %v552 = vpop.f32.mrf.mxu0
      %553 = vdwg.mxu0
      %554 = vmatprep.subr.bf16.mxu0 0
      %555 = vmatpush1.bf16.msra.mxu0 0
      %556 = vmatprep.subr.bf16.mxu0 0
      %557 = vmatpush1.bf16.msra.mxu0 0
      %558 = vmatprep.subr.bf16.mxu0 0
      %559 = vmatpush1.bf16.msra.mxu0 0
      %560 = vmatprep.subr.bf16.mxu0 0
      %561 = vmatpush1.bf16.msra.mxu0 0
      %562 = vmatprep.subr.bf16.mxu0 0
      %563 = vmatpush1.bf16.msra.mxu0 0
      %564 = vmatprep.subr.bf16.mxu0 0
      %565 = vmatpush1.bf16.msra.mxu0 %v471
      %566 = vmatprep.subr.bf16.mxu0 0
      %567 = vmatpush1.bf16.msra.mxu0 %v430
      %568 = vmatprep.subr.bf16.mxu0 0
      %569 = vmatpush1.bf16.msra.mxu0 %v429
      %570 = vmatprep.subr.bf16.mxu0 0
      %571 = vmatpush2.bf16.msra.mxu0 0
      %572 = vmatprep.subr.bf16.mxu0 0
      %573 = vmatpush2.bf16.msra.mxu0 0
      %574 = vmatprep.subr.bf16.mxu0 0
      %575 = vmatpush2.bf16.msra.mxu0 0
      %576 = vmatprep.subr.bf16.mxu0 0
      %577 = vmatpush2.bf16.msra.mxu0 0
      %578 = vmatprep.subr.bf16.mxu0 0
      %579 = vmatpush2.bf16.msra.mxu0 0
      %580 = vmatprep.subr.bf16.mxu0 0
      %581 = vmatpush2.bf16.msra.mxu0 0
      %582 = vmatprep.subr.bf16.mxu0 0
      %583 = vmatpush2.bf16.msra.mxu0 0
      %584 = vmatprep.subr.bf16.mxu0 0
      %585 = vmatpush2.bf16.msra.mxu0 0
      %586 = vmatprep.mubr.bf16.mxu0 0
      %587 = vmatmul.mubr.bf16.gmra.mxu0 %v452
      %v588 = vpop.f32.mrf.mxu0
      %v589 = vadd.f32 %v508, %v588
      %v590 = vpop.f32.mrf.mxu0
      %v591 = vpop.f32.mrf.mxu0
      %v592 = vadd.f32 %v511, %v591
      %v593 = vpop.f32.mrf.mxu0
      %594 = vmatprep.mubr.bf16.mxu0 0
      %595 = vmatmul.mubr.bf16.gmra.mxu0 %v455
      %v596 = vpop.f32.mrf.mxu0
      %v597 = vadd.f32 %v516, %v596
      %v598 = vpop.f32.mrf.mxu0
      %v599 = vpop.f32.mrf.mxu0
      %v600 = vadd.f32 %v519, %v599
      %v601 = vpop.f32.mrf.mxu0
      %602 = vmatprep.mubr.bf16.mxu0 0
      %603 = vmatmul.mubr.bf16.gmra.mxu0 %v458
      %v604 = vpop.f32.mrf.mxu0
      %v605 = vadd.f32 %v524, %v604
      %v606 = vpop.f32.mrf.mxu0
      %v607 = vpop.f32.mrf.mxu0
      %v608 = vadd.f32 %v527, %v607
      %v609 = vpop.f32.mrf.mxu0
      %610 = vmatprep.mubr.bf16.mxu0 0
      %611 = vmatmul.mubr.bf16.gmra.mxu0 %v461
      %v612 = vpop.f32.mrf.mxu0
      %v613 = vadd.f32 %v532, %v612
      %v614 = vpop.f32.mrf.mxu0
      %v615 = vpop.f32.mrf.mxu0
      %v616 = vadd.f32 %v535, %v615
      %v617 = vpop.f32.mrf.mxu0
      %618 = vmatprep.mubr.bf16.mxu0 0
      %619 = vmatmul.mubr.bf16.gmra.mxu0 %v464
      %v620 = vpop.f32.mrf.mxu0
      %v621 = vadd.f32 %v540, %v620
      %v622 = vpop.f32.mrf.mxu0
      %v623 = vpop.f32.mrf.mxu0
      %v624 = vadd.f32 %v543, %v623
      %v625 = vpop.f32.mrf.mxu0
      %626 = vmatprep.mubr.bf16.mxu0 0
      %627 = vmatmul.mubr.bf16.gmra.mxu0 %v467
      %v628 = vpop.f32.mrf.mxu0
      %v629 = vadd.f32 %v548, %v628
      %v630 = vpop.f32.mrf.mxu0
      %v631 = vpop.f32.mrf.mxu0
      %v632 = vadd.f32 %v551, %v631
      %v633 = vpop.f32.mrf.mxu0
      %634 = vdwg.mxu0
      %v635 = vmax.f32 %v589, 0.0
      %v636 = vmax.f32 %v592, 0.0
      %v637 = vmax.f32 %v597, 0.0
      %v638 = vmax.f32 %v600, 0.0
      %v639 = vmax.f32 %v605, 0.0
      %v640 = vmax.f32 %v608, 0.0
      %v641 = vmax.f32 %v613, 0.0
      %v642 = vmax.f32 %v616, 0.0
      %v643 = vmax.f32 %v621, 0.0
      %v644 = vmax.f32 %v624, 0.0
      %v645 = vmax.f32 %v629, 0.0
      %v646 = vmax.f32 %v632, 0.0
      %v647 = vpack.c.bf16 %v636, %v635
      %v648 = vpack.c.bf16 %v638, %v637
      %v649 = vpack.c.bf16 %v640, %v639
      %v650 = vpack.c.bf16 %v642, %v641
      %v651 = vpack.c.bf16 %v644, %v643
      %v652 = vpack.c.bf16 %v646, %v645
      %v659 = vunpack.c.l.b16 %v647
      %v660 = vunpack.c.h.b16 %v647
      %v661 = vunpack.c.l.b16 %v648
      %v662 = vunpack.c.h.b16 %v648
      %v663 = vunpack.c.l.b16 %v649
      %v664 = vunpack.c.h.b16 %v649
      %v665 = vunpack.c.l.b16 %v650
      %v666 = vunpack.c.h.b16 %v650
      %v667 = vunpack.c.l.b16 %v651
      %v668 = vunpack.c.h.b16 %v651
      %v669 = vunpack.c.l.b16 %v652
      %v670 = vunpack.c.h.b16 %v652
      %v671 = vpack.c.b16 %v659, %v659
      %v672 = vpack.c.b16 %v660, %v660
      %v673 = vpack.c.b16 %v661, %v661
      %v674 = vpack.c.b16 %v662, %v662
      %v675 = vpack.c.b16 %v663, %v663
      %v676 = vpack.c.b16 %v664, %v664
      %v677 = vpack.c.b16 %v665, %v665
      %v678 = vpack.c.b16 %v666, %v666
      %v679 = vpack.c.b16 %v667, %v667
      %v680 = vpack.c.b16 %v668, %v668
      %v681 = vpack.c.b16 %v669, %v669
      %v682 = vpack.c.b16 %v670, %v670
      %695 = vst [vmem:[%s175] sm:$0xf] %v671
      %696 = vst [vmem:[%s175 + $0x4] sm:$0xf] %v672
      %697 = vst [vmem:[%s175 + $0x8] sm:$0xf] %v673
      %698 = vst [vmem:[%s175 + $0xc] sm:$0xf] %v674
      %699 = vst [vmem:[%s175 + $0x10] sm:$0xf] %v675
      %700 = vst [vmem:[%s175 + $0x14] sm:$0xf] %v676
      %701 = vst [vmem:[%s175 + $0x18] sm:$0xf] %v677
      %702 = vst [vmem:[%s175 + $0x1c] sm:$0xf] %v678
      %703 = vst [vmem:[%s175 + $0x20] sm:$0xf] %v679
      %704 = vst [vmem:[%s175 + $0x24] sm:$0xf] %v680
      %705 = vst [vmem:[%s175 + $0x28] sm:$0xf] %v681
      %706 = vst [vmem:[%s175 + $0x2c] sm:$0xf] %v682
      %s707 = smul.u32 12, %s14
      %p708 = scmp.lt.s32.totalorder %s707, 47
      %s709 = scalar_select %p708, %s707, 47
      %s710 = smul.addr %s709, 4
      %s711 = scalar_lea.vmem %s3, %s710
      // Predicated region
      $region33: #{discriminator_forward.4} parent=31 // pred_check
        %p712 = pneg %p100
      $region34: #{discriminator_forward.4} parent=31 // pred_check_branch
        %714 = sbr.rel (%p712) target = $region36
      $region35: #{discriminator_forward.4} parent=31 // pred_region
        %s715 = smul.u32 12, %s14
      $region36: #{discriminator_forward.4} parent=31 // pred_fallthru
        _
    $region32: #{discriminator_forward.4} parent=5 // pred_fallthru
      _
    %p716 = scmp.le.s32.totalorder 2, %s9
    // Predicated region
    $region37: #{discriminator_forward.4} parent=5 // pred_check
      %p717 = pneg %p716
    $region38: #{discriminator_forward.4} parent=5 // pred_check_branch
      %719 = sbr.rel (%p717) target = $region40
    $region39: #{discriminator_forward.4} parent=5 // pred_region
      %s720 = ssub.s32 %s9, 2
      // Predicated region
      $region41: #{discriminator_forward.4} parent=39 // pred_check
        %p721 = pneg %p106
      $region42: #{discriminator_forward.4} parent=39 // pred_check_branch
        %723 = sbr.rel (%p721) target = $region44
      $region43: #{discriminator_forward.4} parent=39 // pred_region
        %s724 = smul.u32 12, %s15
        %p725 = scmp.lt.s32.totalorder %s724, 47
        %s726 = scalar_select %p725, %s724, 47
        %s727 = smul.addr %s726, 4
        %s728 = scalar_lea.vmem %s3, %s727
      $region44: #{discriminator_forward.4} parent=39 // pred_fallthru
        _
    $region40: #{discriminator_forward.4} parent=5 // pred_fallthru
      _
  $region6: #{discriminator_forward.4} parent=0 // loop_footer
    %s13 = sadd.s32 1, %s9
  $region7: #{discriminator_forward.4} parent=0 // loop_footer_branch
    %8 = sbr.rel target = $region3
  $region8: #{discriminator_forward.4} parent=0 // loop_exit
    _

// kernel: discriminator_forward.5
$region0: #{discriminator_forward.5}
  #allocation0 [shape = 'u32[]', space=smem, size = 0x4, offset = 0x4, fixed_abs, tag = 'smem constant byte address 0x4 - core index']
  #allocation1 [shape = 'u32[144,128]{1,0:T(1,128)}', space=vmem, size = 0x12000, scoped, tag = 'internal scratch']
  %s0 = inlined_call_operand.vmem [shape: bf16[384,800], index: 0, kind: input, shape index: {}]
  %s1 = inlined_call_operand.vmem [shape: bf16[800,64], index: 1, kind: input, shape index: {}]
  %s2 = inlined_call_operand.vmem [shape: f32[1,64], index: 2, kind: input, shape index: {}]
  %s3 = inlined_call_operand.vmem [shape: f32[1,64], index: 3, kind: input, shape index: {}]
  %s4 = inlined_call_operand.vmem [shape: bf16[384,64], index: 4, kind: output, shape index: {}]
  %s5 = sld [smem:[#allocation0]]
  $region26: #{discriminator_forward.5} parent=0
    _
  %s7 = ssub.s32 1, %s5
  %s8 = scalar_select 0, %s7, %s5
  // Predicated region
  $region2: #{discriminator_forward.5} parent=0 // pred_check
    _
  $region3: #{discriminator_forward.5} parent=0 // pred_check_branch
    %10 = sbr.rel (0) target = $region5
  $region4: #{discriminator_forward.5} parent=0 // pred_region
    _
  $region5: #{discriminator_forward.5} parent=0 // pred_fallthru
    _
  // Predicated region
  $region6: #{discriminator_forward.5} parent=0 // pred_check
    _
  $region7: #{discriminator_forward.5} parent=0 // pred_check_branch
    %12 = sbr.rel (0) target = $region9
  $region8: #{discriminator_forward.5} parent=0 // pred_region
    _
  $region9: #{discriminator_forward.5} parent=0 // pred_fallthru
    _
  // Predicated region
  $region10: #{discriminator_forward.5} parent=0 // pred_check
    _
  $region11: #{discriminator_forward.5} parent=0 // pred_check_branch
    %14 = sbr.rel (0) target = $region13
  $region12: #{discriminator_forward.5} parent=0 // pred_region
    _
  $region13: #{discriminator_forward.5} parent=0 // pred_fallthru
    _
  // Predicated region
  $region14: #{discriminator_forward.5} parent=0 // pred_check
    _
  $region15: #{discriminator_forward.5} parent=0 // pred_check_branch
    %16 = sbr.rel (0) target = $region17
  $region16: #{discriminator_forward.5} parent=0 // pred_region
    _
  $region17: #{discriminator_forward.5} parent=0 // pred_fallthru
    _
  %v18 = vld [vmem:[%s0] sm:$0xff]
  %v19 = vld [vmem:[%s0 + $0x8] sm:$0xff]
  %v20 = vld [vmem:[%s0 + $0x10] sm:$0xff]
  %v21 = vld [vmem:[%s0 + $0x18] sm:$0xf]
  %v22 = vld [vmem:[%s0 + $0x1c] sm:$0xff]
  %v23 = vld [vmem:[%s0 + $0x24] sm:$0xff]
  %v24 = vld [vmem:[%s0 + $0x2c] sm:$0xff]
  %v25 = vld [vmem:[%s0 + $0x34] sm:$0xf]
  %v26 = vld [vmem:[%s0 + $0x38] sm:$0xff]
  %v27 = vld [vmem:[%s0 + $0x40] sm:$0xff]
  %v28 = vld [vmem:[%s0 + $0x48] sm:$0xff]
  %v29 = vld [vmem:[%s0 + $0x50] sm:$0xf]
  %v30 = vld [vmem:[%s0 + $0x54] sm:$0xff]
  %v31 = vld [vmem:[%s0 + $0x5c] sm:$0xff]
  %v32 = vld [vmem:[%s0 + $0x64] sm:$0xff]
  %v33 = vld [vmem:[%s0 + $0x6c] sm:$0xf]
  %v34 = vld [vmem:[%s0 + $0x70] sm:$0xff]
  %v35 = vld [vmem:[%s0 + $0x78] sm:$0xff]
  %v36 = vld [vmem:[%s0 + $0x80] sm:$0xff]
  %v37 = vld [vmem:[%s0 + $0x88] sm:$0xf]
  %v38 = vld [vmem:[%s0 + $0x8c] sm:$0xff]
  %v39 = vld [vmem:[%s0 + $0x94] sm:$0xff]
  %v40 = vld [vmem:[%s0 + $0x9c] sm:$0xff]
  %v41 = vld [vmem:[%s0 + $0xa4] sm:$0xf]
  %v42 = vld [vmem:[%s0 + $0xa8] sm:$0xff]
  %v43 = vld [vmem:[%s0 + $0xb0] sm:$0xff]
  %v44 = vld [vmem:[%s0 + $0xb8] sm:$0xff]
  %v45 = vld [vmem:[%s0 + $0xc0] sm:$0xf]
  %v46 = vld [vmem:[%s0 + $0xc4] sm:$0xff]
  %v47 = vld [vmem:[%s0 + $0xcc] sm:$0xff]
  %v48 = vld [vmem:[%s0 + $0xd4] sm:$0xff]
  %v49 = vld [vmem:[%s0 + $0xdc] sm:$0xf]
  %v50 = vld [vmem:[%s0 + $0xe0] sm:$0xff]
  %v51 = vld [vmem:[%s0 + $0xe8] sm:$0xff]
  %v52 = vld [vmem:[%s0 + $0xf0] sm:$0xff]
  %v53 = vld [vmem:[%s0 + $0xf8] sm:$0xf]
  %v54 = vld [vmem:[%s0 + $0xfc] sm:$0xff]
  %v55 = vld [vmem:[%s0 + $0x104] sm:$0xff]
  %v56 = vld [vmem:[%s0 + $0x10c] sm:$0xff]
  %v57 = vld [vmem:[%s0 + $0x114] sm:$0xf]
  %v58 = vld [vmem:[%s0 + $0x118] sm:$0xff]
  %v59 = vld [vmem:[%s0 + $0x120] sm:$0xff]
  %v60 = vld [vmem:[%s0 + $0x128] sm:$0xff]
  %v61 = vld [vmem:[%s0 + $0x130] sm:$0xf]
  %v62 = vld [vmem:[%s0 + $0x134] sm:$0xff]
  %v63 = vld [vmem:[%s0 + $0x13c] sm:$0xff]
  %v64 = vld [vmem:[%s0 + $0x144] sm:$0xff]
  %v65 = vld [vmem:[%s0 + $0x14c] sm:$0xf]
  %v66 = vld [vmem:[%s0 + $0x150] sm:$0xff]
  %v67 = vld [vmem:[%s0 + $0x158] sm:$0xff]
  %v68 = vld [vmem:[%s0 + $0x160] sm:$0xff]
  %v69 = vld [vmem:[%s0 + $0x168] sm:$0xf]
  %v70 = vld [vmem:[%s0 + $0x16c] sm:$0xff]
  %v71 = vld [vmem:[%s0 + $0x174] sm:$0xff]
  %v72 = vld [vmem:[%s0 + $0x17c] sm:$0xff]
  %v73 = vld [vmem:[%s0 + $0x184] sm:$0xf]
  %v74 = vld [vmem:[%s0 + $0x188] sm:$0xff]
  %v75 = vld [vmem:[%s0 + $0x190] sm:$0xff]
  %v76 = vld [vmem:[%s0 + $0x198] sm:$0xff]
  %v77 = vld [vmem:[%s0 + $0x1a0] sm:$0xf]
  %v78 = vld [vmem:[%s0 + $0x1a4] sm:$0xff]
  %v79 = vld [vmem:[%s0 + $0x1ac] sm:$0xff]
  %v80 = vld [vmem:[%s0 + $0x1b4] sm:$0xff]
  %v81 = vld [vmem:[%s0 + $0x1bc] sm:$0xf]
  %v82 = vld [vmem:[%s0 + $0x1c0] sm:$0xff]
  %v83 = vld [vmem:[%s0 + $0x1c8] sm:$0xff]
  %v84 = vld [vmem:[%s0 + $0x1d0] sm:$0xff]
  %v85 = vld [vmem:[%s0 + $0x1d8] sm:$0xf]
  %v86 = vld [vmem:[%s0 + $0x1dc] sm:$0xff]
  %v87 = vld [vmem:[%s0 + $0x1e4] sm:$0xff]
  %v88 = vld [vmem:[%s0 + $0x1ec] sm:$0xff]
  %v89 = vld [vmem:[%s0 + $0x1f4] sm:$0xf]
  %v90 = vld [vmem:[%s0 + $0x1f8] sm:$0xff]
  %v91 = vld [vmem:[%s0 + $0x200] sm:$0xff]
  %v92 = vld [vmem:[%s0 + $0x208] sm:$0xff]
  %v93 = vld [vmem:[%s0 + $0x210] sm:$0xf]
  %v94 = vld [vmem:[%s0 + $0x214] sm:$0xff]
  %v95 = vld [vmem:[%s0 + $0x21c] sm:$0xff]
  %v96 = vld [vmem:[%s0 + $0x224] sm:$0xff]
  %v97 = vld [vmem:[%s0 + $0x22c] sm:$0xf]
  %v98 = vld [vmem:[%s0 + $0x230] sm:$0xff]
  %v99 = vld [vmem:[%s0 + $0x238] sm:$0xff]
  %v100 = vld [vmem:[%s0 + $0x240] sm:$0xff]
  %v101 = vld [vmem:[%s0 + $0x248] sm:$0xf]
  %v102 = vld [vmem:[%s0 + $0x24c] sm:$0xff]
  %v103 = vld [vmem:[%s0 + $0x254] sm:$0xff]
  %v104 = vld [vmem:[%s0 + $0x25c] sm:$0xff]
  %v105 = vld [vmem:[%s0 + $0x264] sm:$0xf]
  %v106 = vld [vmem:[%s0 + $0x268] sm:$0xff]
  %v107 = vld [vmem:[%s0 + $0x270] sm:$0xff]
  %v108 = vld [vmem:[%s0 + $0x278] sm:$0xff]
  %v109 = vld [vmem:[%s0 + $0x280] sm:$0xf]
  %v110 = vld [vmem:[%s0 + $0x284] sm:$0xff]
  %v111 = vld [vmem:[%s0 + $0x28c] sm:$0xff]
  %v112 = vld [vmem:[%s0 + $0x294] sm:$0xff]
  %v113 = vld [vmem:[%s0 + $0x29c] sm:$0xf]
  %v114 = vld [vmem:[%s0 + $0x2a0] sm:$0xff]
  %v115 = vld [vmem:[%s0 + $0x2a8] sm:$0xff]
  %v116 = vld [vmem:[%s0 + $0x2b0] sm:$0xff]
  %v117 = vld [vmem:[%s0 + $0x2b8] sm:$0xf]
  %v118 = vld [vmem:[%s0 + $0x2bc] sm:$0xff]
  %v119 = vld [vmem:[%s0 + $0x2c4] sm:$0xff]
  %v120 = vld [vmem:[%s0 + $0x2cc] sm:$0xff]
  %v121 = vld [vmem:[%s0 + $0x2d4] sm:$0xf]
  %v122 = vld [vmem:[%s0 + $0x2d8] sm:$0xff]
  %v123 = vld [vmem:[%s0 + $0x2e0] sm:$0xff]
  %v124 = vld [vmem:[%s0 + $0x2e8] sm:$0xff]
  %v125 = vld [vmem:[%s0 + $0x2f0] sm:$0xf]
  %v126 = vld [vmem:[%s0 + $0x2f4] sm:$0xff]
  %v127 = vld [vmem:[%s0 + $0x2fc] sm:$0xff]
  %v128 = vld [vmem:[%s0 + $0x304] sm:$0xff]
  %v129 = vld [vmem:[%s0 + $0x30c] sm:$0xf]
  %v130 = vld [vmem:[%s0 + $0x310] sm:$0xff]
  %v131 = vld [vmem:[%s0 + $0x318] sm:$0xff]
  %v132 = vld [vmem:[%s0 + $0x320] sm:$0xff]
  %v133 = vld [vmem:[%s0 + $0x328] sm:$0xf]
  %v134 = vld [vmem:[%s0 + $0x32c] sm:$0xff]
  %v135 = vld [vmem:[%s0 + $0x334] sm:$0xff]
  %v136 = vld [vmem:[%s0 + $0x33c] sm:$0xff]
  %v137 = vld [vmem:[%s0 + $0x344] sm:$0xf]
  %v138 = vld [vmem:[%s0 + $0x348] sm:$0xff]
  %v139 = vld [vmem:[%s0 + $0x350] sm:$0xff]
  %v140 = vld [vmem:[%s0 + $0x358] sm:$0xff]
  %v141 = vld [vmem:[%s0 + $0x360] sm:$0xf]
  %v142 = vld [vmem:[%s0 + $0x364] sm:$0xff]
  %v143 = vld [vmem:[%s0 + $0x36c] sm:$0xff]
  %v144 = vld [vmem:[%s0 + $0x374] sm:$0xff]
  %v145 = vld [vmem:[%s0 + $0x37c] sm:$0xf]
  %v146 = vld [vmem:[%s0 + $0x380] sm:$0xff]
  %v147 = vld [vmem:[%s0 + $0x388] sm:$0xff]
  %v148 = vld [vmem:[%s0 + $0x390] sm:$0xff]
  %v149 = vld [vmem:[%s0 + $0x398] sm:$0xf]
  %v150 = vld [vmem:[%s0 + $0x39c] sm:$0xff]
  %v151 = vld [vmem:[%s0 + $0x3a4] sm:$0xff]
  %v152 = vld [vmem:[%s0 + $0x3ac] sm:$0xff]
  %v153 = vld [vmem:[%s0 + $0x3b4] sm:$0xf]
  %v154 = vld [vmem:[%s0 + $0x3b8] sm:$0xff]
  %v155 = vld [vmem:[%s0 + $0x3c0] sm:$0xff]
  %v156 = vld [vmem:[%s0 + $0x3c8] sm:$0xff]
  %v157 = vld [vmem:[%s0 + $0x3d0] sm:$0xf]
  %v158 = vld [vmem:[%s0 + $0x3d4] sm:$0xff]
  %v159 = vld [vmem:[%s0 + $0x3dc] sm:$0xff]
  %v160 = vld [vmem:[%s0 + $0x3e4] sm:$0xff]
  %v161 = vld [vmem:[%s0 + $0x3ec] sm:$0xf]
  %v162 = vld [vmem:[%s0 + $0x3f0] sm:$0xff]
  %v163 = vld [vmem:[%s0 + $0x3f8] sm:$0xff]
  %v164 = vld [vmem:[%s0 + $0x400] sm:$0xff]
  %v165 = vld [vmem:[%s0 + $0x408] sm:$0xf]
  %v166 = vld [vmem:[%s0 + $0x40c] sm:$0xff]
  %v167 = vld [vmem:[%s0 + $0x414] sm:$0xff]
  %v168 = vld [vmem:[%s0 + $0x41c] sm:$0xff]
  %v169 = vld [vmem:[%s0 + $0x424] sm:$0xf]
  %v170 = vld [vmem:[%s0 + $0x428] sm:$0xff]
  %v171 = vld [vmem:[%s0 + $0x430] sm:$0xff]
  %v172 = vld [vmem:[%s0 + $0x438] sm:$0xff]
  %v173 = vld [vmem:[%s0 + $0x440] sm:$0xf]
  %v174 = vld [vmem:[%s0 + $0x444] sm:$0xff]
  %v175 = vld [vmem:[%s0 + $0x44c] sm:$0xff]
  %v176 = vld [vmem:[%s0 + $0x454] sm:$0xff]
  %v177 = vld [vmem:[%s0 + $0x45c] sm:$0xf]
  %v178 = vld [vmem:[%s0 + $0x460] sm:$0xff]
  %v179 = vld [vmem:[%s0 + $0x468] sm:$0xff]
  %v180 = vld [vmem:[%s0 + $0x470] sm:$0xff]
  %v181 = vld [vmem:[%s0 + $0x478] sm:$0xf]
  %v182 = vld [vmem:[%s0 + $0x47c] sm:$0xff]
  %v183 = vld [vmem:[%s0 + $0x484] sm:$0xff]
  %v184 = vld [vmem:[%s0 + $0x48c] sm:$0xff]
  %v185 = vld [vmem:[%s0 + $0x494] sm:$0xf]
  %v186 = vld [vmem:[%s0 + $0x498] sm:$0xff]
  %v187 = vld [vmem:[%s0 + $0x4a0] sm:$0xff]
  %v188 = vld [vmem:[%s0 + $0x4a8] sm:$0xff]
  %v189 = vld [vmem:[%s0 + $0x4b0] sm:$0xf]
  %v190 = vld [vmem:[%s0 + $0x4b4] sm:$0xff]
  %v191 = vld [vmem:[%s0 + $0x4bc] sm:$0xff]
  %v192 = vld [vmem:[%s0 + $0x4c4] sm:$0xff]
  %v193 = vld [vmem:[%s0 + $0x4cc] sm:$0xf]
  %v194 = vld [vmem:[%s0 + $0x4d0] sm:$0xff]
  %v195 = vld [vmem:[%s0 + $0x4d8] sm:$0xff]
  %v196 = vld [vmem:[%s0 + $0x4e0] sm:$0xff]
  %v197 = vld [vmem:[%s0 + $0x4e8] sm:$0xf]
  %v198 = vld [vmem:[%s0 + $0x4ec] sm:$0xff]
  %v199 = vld [vmem:[%s0 + $0x4f4] sm:$0xff]
  %v200 = vld [vmem:[%s0 + $0x4fc] sm:$0xff]
  %v201 = vld [vmem:[%s0 + $0x504] sm:$0xf]
  %v202 = vld [vmem:[%s0 + $0x508] sm:$0xff]
  %v203 = vld [vmem:[%s0 + $0x510] sm:$0xff]
  %v204 = vld [vmem:[%s0 + $0x518] sm:$0xff]
  %v205 = vld [vmem:[%s0 + $0x520] sm:$0xf]
  %v206 = vld [vmem:[%s0 + $0x524] sm:$0xff]
  %v207 = vld [vmem:[%s0 + $0x52c] sm:$0xff]
  %v208 = vld [vmem:[%s0 + $0x534] sm:$0xff]
  %v209 = vld [vmem:[%s0 + $0x53c] sm:$0xf]
  %v210 = vld [vmem:[%s1] sm:$0xf]
  %v211 = vld [vmem:[%s1 + $0x4] sm:$0xf]
  %v212 = vld [vmem:[%s1 + $0x8] sm:$0xf]
  %v213 = vld [vmem:[%s1 + $0xc] sm:$0xf]
  %v214 = vld [vmem:[%s1 + $0x10] sm:$0xf]
  %v215 = vld [vmem:[%s1 + $0x14] sm:$0xf]
  %v216 = vld [vmem:[%s1 + $0x18] sm:$0xf]
  %v217 = vld [vmem:[%s1 + $0x1c] sm:$0xf]
  %v218 = vld [vmem:[%s1 + $0x20] sm:$0xf]
  %v219 = vld [vmem:[%s1 + $0x24] sm:$0xf]
  %v220 = vld [vmem:[%s1 + $0x28] sm:$0xf]
  %v221 = vld [vmem:[%s1 + $0x2c] sm:$0xf]
  %v222 = vld [vmem:[%s1 + $0x30] sm:$0xf]
  %v223 = vld [vmem:[%s1 + $0x34] sm:$0xf]
  %v224 = vld [vmem:[%s1 + $0x38] sm:$0xf]
  %v225 = vld [vmem:[%s1 + $0x3c] sm:$0xf]
  %v226 = vld [vmem:[%s1 + $0x40] sm:$0xf]
  %v227 = vld [vmem:[%s1 + $0x44] sm:$0xf]
  %v228 = vld [vmem:[%s1 + $0x48] sm:$0xf]
  %v229 = vld [vmem:[%s1 + $0x4c] sm:$0xf]
  %v230 = vld [vmem:[%s1 + $0x50] sm:$0xf]
  %v231 = vld [vmem:[%s1 + $0x54] sm:$0xf]
  %v232 = vld [vmem:[%s1 + $0x58] sm:$0xf]
  %v233 = vld [vmem:[%s1 + $0x5c] sm:$0xf]
  %v234 = vld [vmem:[%s1 + $0x60] sm:$0xf]
  %v235 = vld [vmem:[%s1 + $0x64] sm:$0xf]
  %v236 = vld [vmem:[%s1 + $0x68] sm:$0xf]
  %v237 = vld [vmem:[%s1 + $0x6c] sm:$0xf]
  %v238 = vld [vmem:[%s1 + $0x70] sm:$0xf]
  %v239 = vld [vmem:[%s1 + $0x74] sm:$0xf]
  %v240 = vld [vmem:[%s1 + $0x78] sm:$0xf]
  %v241 = vld [vmem:[%s1 + $0x7c] sm:$0xf]
  %v242 = vld [vmem:[%s1 + $0x80] sm:$0xf]
  %v243 = vld [vmem:[%s1 + $0x84] sm:$0xf]
  %v244 = vld [vmem:[%s1 + $0x88] sm:$0xf]
  %v245 = vld [vmem:[%s1 + $0x8c] sm:$0xf]
  %v246 = vld [vmem:[%s1 + $0x90] sm:$0xf]
  %v247 = vld [vmem:[%s1 + $0x94] sm:$0xf]
  %v248 = vld [vmem:[%s1 + $0x98] sm:$0xf]
  %v249 = vld [vmem:[%s1 + $0x9c] sm:$0xf]
  %v250 = vld [vmem:[%s1 + $0xa0] sm:$0xf]
  %v251 = vld [vmem:[%s1 + $0xa4] sm:$0xf]
  %v252 = vld [vmem:[%s1 + $0xa8] sm:$0xf]
  %v253 = vld [vmem:[%s1 + $0xac] sm:$0xf]
  %v254 = vld [vmem:[%s1 + $0xb0] sm:$0xf]
  %v255 = vld [vmem:[%s1 + $0xb4] sm:$0xf]
  %v256 = vld [vmem:[%s1 + $0xb8] sm:$0xf]
  %v257 = vld [vmem:[%s1 + $0xbc] sm:$0xf]
  %v258 = vld [vmem:[%s1 + $0xc0] sm:$0xf]
  %v259 = vld [vmem:[%s1 + $0xc4] sm:$0xf]
  %v260 = vld [vmem:[%s1 + $0xc8] sm:$0xf]
  %v261 = vld [vmem:[%s1 + $0xcc] sm:$0xf]
  %v262 = vld [vmem:[%s1 + $0xd0] sm:$0xf]
  %v263 = vld [vmem:[%s1 + $0xd4] sm:$0xf]
  %v264 = vld [vmem:[%s1 + $0xd8] sm:$0xf]
  %v265 = vld [vmem:[%s1 + $0xdc] sm:$0xf]
  %v266 = vld [vmem:[%s1 + $0xe0] sm:$0xf]
  %v267 = vld [vmem:[%s1 + $0xe4] sm:$0xf]
  %v268 = vld [vmem:[%s1 + $0xe8] sm:$0xf]
  %v269 = vld [vmem:[%s1 + $0xec] sm:$0xf]
  %v270 = vld [vmem:[%s1 + $0xf0] sm:$0xf]
  %v271 = vld [vmem:[%s1 + $0xf4] sm:$0xf]
  %v272 = vld [vmem:[%s1 + $0xf8] sm:$0xf]
  %v273 = vld [vmem:[%s1 + $0xfc] sm:$0xf]
  %v274 = vld [vmem:[%s1 + $0x100] sm:$0xf]
  %v275 = vld [vmem:[%s1 + $0x104] sm:$0xf]
  %v276 = vld [vmem:[%s1 + $0x108] sm:$0xf]
  %v277 = vld [vmem:[%s1 + $0x10c] sm:$0xf]
  %v278 = vld [vmem:[%s1 + $0x110] sm:$0xf]
  %v279 = vld [vmem:[%s1 + $0x114] sm:$0xf]
  %v280 = vld [vmem:[%s1 + $0x118] sm:$0xf]
  %v281 = vld [vmem:[%s1 + $0x11c] sm:$0xf]
  %v282 = vld [vmem:[%s1 + $0x120] sm:$0xf]
  %v283 = vld [vmem:[%s1 + $0x124] sm:$0xf]
  %v284 = vld [vmem:[%s1 + $0x128] sm:$0xf]
  %v285 = vld [vmem:[%s1 + $0x12c] sm:$0xf]
  %v286 = vld [vmem:[%s1 + $0x130] sm:$0xf]
  %v287 = vld [vmem:[%s1 + $0x134] sm:$0xf]
  %v288 = vld [vmem:[%s1 + $0x138] sm:$0xf]
  %v289 = vld [vmem:[%s1 + $0x13c] sm:$0xf]
  %v290 = vld [vmem:[%s1 + $0x140] sm:$0xf]
  %v291 = vld [vmem:[%s1 + $0x144] sm:$0xf]
  %v292 = vld [vmem:[%s1 + $0x148] sm:$0xf]
  %v293 = vld [vmem:[%s1 + $0x14c] sm:$0xf]
  %v294 = vld [vmem:[%s1 + $0x150] sm:$0xf]
  %v295 = vld [vmem:[%s1 + $0x154] sm:$0xf]
  %v296 = vld [vmem:[%s1 + $0x158] sm:$0xf]
  %v297 = vld [vmem:[%s1 + $0x15c] sm:$0xf]
  %v298 = vld [vmem:[%s1 + $0x160] sm:$0xf]
  %v299 = vld [vmem:[%s1 + $0x164] sm:$0xf]
  %v300 = vld [vmem:[%s1 + $0x168] sm:$0xf]
  %v301 = vld [vmem:[%s1 + $0x16c] sm:$0xf]
  %v302 = vld [vmem:[%s1 + $0x170] sm:$0xf]
  %v303 = vld [vmem:[%s1 + $0x174] sm:$0xf]
  %v304 = vld [vmem:[%s1 + $0x178] sm:$0xf]
  %v305 = vld [vmem:[%s1 + $0x17c] sm:$0xf]
  %v306 = vld [vmem:[%s1 + $0x180] sm:$0xf]
  %v307 = vld [vmem:[%s1 + $0x184] sm:$0xf]
  %v308 = vld [vmem:[%s1 + $0x188] sm:$0xf]
  %v309 = vld [vmem:[%s1 + $0x18c] sm:$0xf]
  %v502 = vunpack.c.l.b16 %v18
  %v503 = vunpack.c.h.b16 %v18
  %v504 = vunpack.c.l.b16 %v19
  %v505 = vunpack.c.h.b16 %v19
  %v506 = vunpack.c.l.b16 %v20
  %v507 = vunpack.c.h.b16 %v20
  %v508 = vunpack.c.l.b16 %v21
  %v509 = vunpack.c.l.b16 %v22
  %v510 = vunpack.c.h.b16 %v22
  %v511 = vunpack.c.l.b16 %v23
  %v512 = vunpack.c.h.b16 %v23
  %v513 = vunpack.c.l.b16 %v24
  %v514 = vunpack.c.h.b16 %v24
  %v515 = vunpack.c.l.b16 %v25
  %v516 = vunpack.c.l.b16 %v26
  %v517 = vunpack.c.h.b16 %v26
  %v518 = vunpack.c.l.b16 %v27
  %v519 = vunpack.c.h.b16 %v27
  %v520 = vunpack.c.l.b16 %v28
  %v521 = vunpack.c.h.b16 %v28
  %v522 = vunpack.c.l.b16 %v29
  %v523 = vunpack.c.l.b16 %v30
  %v524 = vunpack.c.h.b16 %v30
  %v525 = vunpack.c.l.b16 %v31
  %v526 = vunpack.c.h.b16 %v31
  %v527 = vunpack.c.l.b16 %v32
  %v528 = vunpack.c.h.b16 %v32
  %v529 = vunpack.c.l.b16 %v33
  %v530 = vunpack.c.l.b16 %v34
  %v531 = vunpack.c.h.b16 %v34
  %v532 = vunpack.c.l.b16 %v35
  %v533 = vunpack.c.h.b16 %v35
  %v534 = vunpack.c.l.b16 %v36
  %v535 = vunpack.c.h.b16 %v36
  %v536 = vunpack.c.l.b16 %v37
  %v537 = vunpack.c.l.b16 %v38
  %v538 = vunpack.c.h.b16 %v38
  %v539 = vunpack.c.l.b16 %v39
  %v540 = vunpack.c.h.b16 %v39
  %v541 = vunpack.c.l.b16 %v40
  %v542 = vunpack.c.h.b16 %v40
  %v543 = vunpack.c.l.b16 %v41
  %v544 = vunpack.c.l.b16 %v42
  %v545 = vunpack.c.h.b16 %v42
  %v546 = vunpack.c.l.b16 %v43
  %v547 = vunpack.c.h.b16 %v43
  %v548 = vunpack.c.l.b16 %v44
  %v549 = vunpack.c.h.b16 %v44
  %v550 = vunpack.c.l.b16 %v45
  %v551 = vunpack.c.l.b16 %v46
  %v552 = vunpack.c.h.b16 %v46
  %v553 = vunpack.c.l.b16 %v47
  %v554 = vunpack.c.h.b16 %v47
  %v555 = vunpack.c.l.b16 %v48
  %v556 = vunpack.c.h.b16 %v48
  %v557 = vunpack.c.l.b16 %v49
  %v558 = vunpack.c.l.b16 %v50
  %v559 = vunpack.c.h.b16 %v50
  %v560 = vunpack.c.l.b16 %v51
  %v561 = vunpack.c.h.b16 %v51
  %v562 = vunpack.c.l.b16 %v52
  %v563 = vunpack.c.h.b16 %v52
  %v564 = vunpack.c.l.b16 %v53
  %v565 = vunpack.c.l.b16 %v54
  %v566 = vunpack.c.h.b16 %v54
  %v567 = vunpack.c.l.b16 %v55
  %v568 = vunpack.c.h.b16 %v55
  %v569 = vunpack.c.l.b16 %v56
  %v570 = vunpack.c.h.b16 %v56
  %v571 = vunpack.c.l.b16 %v57
  %v572 = vunpack.c.l.b16 %v58
  %v573 = vunpack.c.h.b16 %v58
  %v574 = vunpack.c.l.b16 %v59
  %v575 = vunpack.c.h.b16 %v59
  %v576 = vunpack.c.l.b16 %v60
  %v577 = vunpack.c.h.b16 %v60
  %v578 = vunpack.c.l.b16 %v61
  %v579 = vunpack.c.l.b16 %v62
  %v580 = vunpack.c.h.b16 %v62
  %v581 = vunpack.c.l.b16 %v63
  %v582 = vunpack.c.h.b16 %v63
  %v583 = vunpack.c.l.b16 %v64
  %v584 = vunpack.c.h.b16 %v64
  %v585 = vunpack.c.l.b16 %v65
  %v586 = vunpack.c.l.b16 %v66
  %v587 = vunpack.c.h.b16 %v66
  %v588 = vunpack.c.l.b16 %v67
  %v589 = vunpack.c.h.b16 %v67
  %v590 = vunpack.c.l.b16 %v68
  %v591 = vunpack.c.h.b16 %v68
  %v592 = vunpack.c.l.b16 %v69
  %v593 = vunpack.c.l.b16 %v70
  %v594 = vunpack.c.h.b16 %v70
  %v595 = vunpack.c.l.b16 %v71
  %v596 = vunpack.c.h.b16 %v71
  %v597 = vunpack.c.l.b16 %v72
  %v598 = vunpack.c.h.b16 %v72
  %v599 = vunpack.c.l.b16 %v73
  %v600 = vunpack.c.l.b16 %v74
  %v601 = vunpack.c.h.b16 %v74
  %v602 = vunpack.c.l.b16 %v75
  %v603 = vunpack.c.h.b16 %v75
  %v604 = vunpack.c.l.b16 %v76
  %v605 = vunpack.c.h.b16 %v76
  %v606 = vunpack.c.l.b16 %v77
  %v607 = vunpack.c.l.b16 %v78
  %v608 = vunpack.c.h.b16 %v78
  %v609 = vunpack.c.l.b16 %v79
  %v610 = vunpack.c.h.b16 %v79
  %v611 = vunpack.c.l.b16 %v80
  %v612 = vunpack.c.h.b16 %v80
  %v613 = vunpack.c.l.b16 %v81
  %v614 = vunpack.c.l.b16 %v82
  %v615 = vunpack.c.h.b16 %v82
  %v616 = vunpack.c.l.b16 %v83
  %v617 = vunpack.c.h.b16 %v83
  %v618 = vunpack.c.l.b16 %v84
  %v619 = vunpack.c.h.b16 %v84
  %v620 = vunpack.c.l.b16 %v85
  %v621 = vunpack.c.l.b16 %v86
  %v622 = vunpack.c.h.b16 %v86
  %v623 = vunpack.c.l.b16 %v87
  %v624 = vunpack.c.h.b16 %v87
  %v625 = vunpack.c.l.b16 %v88
  %v626 = vunpack.c.h.b16 %v88
  %v627 = vunpack.c.l.b16 %v89
  %v628 = vunpack.c.l.b16 %v90
  %v629 = vunpack.c.h.b16 %v90
  %v630 = vunpack.c.l.b16 %v91
  %v631 = vunpack.c.h.b16 %v91
  %v632 = vunpack.c.l.b16 %v92
  %v633 = vunpack.c.h.b16 %v92
  %v634 = vunpack.c.l.b16 %v93
  %v635 = vunpack.c.l.b16 %v94
  %v636 = vunpack.c.h.b16 %v94
  %v637 = vunpack.c.l.b16 %v95
  %v638 = vunpack.c.h.b16 %v95
  %v639 = vunpack.c.l.b16 %v96
  %v640 = vunpack.c.h.b16 %v96
  %v641 = vunpack.c.l.b16 %v97
  %v642 = vunpack.c.l.b16 %v98
  %v643 = vunpack.c.h.b16 %v98
  %v644 = vunpack.c.l.b16 %v99
  %v645 = vunpack.c.h.b16 %v99
  %v646 = vunpack.c.l.b16 %v100
  %v647 = vunpack.c.h.b16 %v100
  %v648 = vunpack.c.l.b16 %v101
  %v649 = vunpack.c.l.b16 %v102
  %v650 = vunpack.c.h.b16 %v102
  %v651 = vunpack.c.l.b16 %v103
  %v652 = vunpack.c.h.b16 %v103
  %v653 = vunpack.c.l.b16 %v104
  %v654 = vunpack.c.h.b16 %v104
  %v655 = vunpack.c.l.b16 %v105
  %v656 = vunpack.c.l.b16 %v106
  %v657 = vunpack.c.h.b16 %v106
  %v658 = vunpack.c.l.b16 %v107
  %v659 = vunpack.c.h.b16 %v107
  %v660 = vunpack.c.l.b16 %v108
  %v661 = vunpack.c.h.b16 %v108
  %v662 = vunpack.c.l.b16 %v109
  %v663 = vunpack.c.l.b16 %v110
  %v664 = vunpack.c.h.b16 %v110
  %v665 = vunpack.c.l.b16 %v111
  %v666 = vunpack.c.h.b16 %v111
  %v667 = vunpack.c.l.b16 %v112
  %v668 = vunpack.c.h.b16 %v112
  %v669 = vunpack.c.l.b16 %v113
  %v670 = vunpack.c.l.b16 %v114
  %v671 = vunpack.c.h.b16 %v114
  %v672 = vunpack.c.l.b16 %v115
  %v673 = vunpack.c.h.b16 %v115
  %v674 = vunpack.c.l.b16 %v116
  %v675 = vunpack.c.h.b16 %v116
  %v676 = vunpack.c.l.b16 %v117
  %v677 = vunpack.c.l.b16 %v118
  %v678 = vunpack.c.h.b16 %v118
  %v679 = vunpack.c.l.b16 %v119
  %v680 = vunpack.c.h.b16 %v119
  %v681 = vunpack.c.l.b16 %v120
  %v682 = vunpack.c.h.b16 %v120
  %v683 = vunpack.c.l.b16 %v121
  %v684 = vunpack.c.l.b16 %v122
  %v685 = vunpack.c.h.b16 %v122
  %v686 = vunpack.c.l.b16 %v123
  %v687 = vunpack.c.h.b16 %v123
  %v688 = vunpack.c.l.b16 %v124
  %v689 = vunpack.c.h.b16 %v124
  %v690 = vunpack.c.l.b16 %v125
  %v691 = vunpack.c.l.b16 %v126
  %v692 = vunpack.c.h.b16 %v126
  %v693 = vunpack.c.l.b16 %v127
  %v694 = vunpack.c.h.b16 %v127
  %v695 = vunpack.c.l.b16 %v128
  %v696 = vunpack.c.h.b16 %v128
  %v697 = vunpack.c.l.b16 %v129
  %v698 = vunpack.c.l.b16 %v130
  %v699 = vunpack.c.h.b16 %v130
  %v700 = vunpack.c.l.b16 %v131
  %v701 = vunpack.c.h.b16 %v131
  %v702 = vunpack.c.l.b16 %v132
  %v703 = vunpack.c.h.b16 %v132
  %v704 = vunpack.c.l.b16 %v133
  %v705 = vunpack.c.l.b16 %v134
  %v706 = vunpack.c.h.b16 %v134
  %v707 = vunpack.c.l.b16 %v135
  %v708 = vunpack.c.h.b16 %v135
  %v709 = vunpack.c.l.b16 %v136
  %v710 = vunpack.c.h.b16 %v136
  %v711 = vunpack.c.l.b16 %v137
  %v712 = vunpack.c.l.b16 %v138
  %v713 = vunpack.c.h.b16 %v138
  %v714 = vunpack.c.l.b16 %v139
  %v715 = vunpack.c.h.b16 %v139
  %v716 = vunpack.c.l.b16 %v140
  %v717 = vunpack.c.h.b16 %v140
  %v718 = vunpack.c.l.b16 %v141
  %v719 = vunpack.c.l.b16 %v142
  %v720 = vunpack.c.h.b16 %v142
  %v721 = vunpack.c.l.b16 %v143
  %v722 = vunpack.c.h.b16 %v143
  %v723 = vunpack.c.l.b16 %v144
  %v724 = vunpack.c.h.b16 %v144
  %v725 = vunpack.c.l.b16 %v145
  %v726 = vunpack.c.l.b16 %v146
  %v727 = vunpack.c.h.b16 %v146
  %v728 = vunpack.c.l.b16 %v147
  %v729 = vunpack.c.h.b16 %v147
  %v730 = vunpack.c.l.b16 %v148
  %v731 = vunpack.c.h.b16 %v148
  %v732 = vunpack.c.l.b16 %v149
  %v733 = vunpack.c.l.b16 %v150
  %v734 = vunpack.c.h.b16 %v150
  %v735 = vunpack.c.l.b16 %v151
  %v736 = vunpack.c.h.b16 %v151
  %v737 = vunpack.c.l.b16 %v152
  %v738 = vunpack.c.h.b16 %v152
  %v739 = vunpack.c.l.b16 %v153
  %v740 = vunpack.c.l.b16 %v154
  %v741 = vunpack.c.h.b16 %v154
  %v742 = vunpack.c.l.b16 %v155
  %v743 = vunpack.c.h.b16 %v155
  %v744 = vunpack.c.l.b16 %v156
  %v745 = vunpack.c.h.b16 %v156
  %v746 = vunpack.c.l.b16 %v157
  %v747 = vunpack.c.l.b16 %v158
  %v748 = vunpack.c.h.b16 %v158
  %v749 = vunpack.c.l.b16 %v159
  %v750 = vunpack.c.h.b16 %v159
  %v751 = vunpack.c.l.b16 %v160
  %v752 = vunpack.c.h.b16 %v160
  %v753 = vunpack.c.l.b16 %v161
  %v754 = vunpack.c.l.b16 %v162
  %v755 = vunpack.c.h.b16 %v162
  %v756 = vunpack.c.l.b16 %v163
  %v757 = vunpack.c.h.b16 %v163
  %v758 = vunpack.c.l.b16 %v164
  %v759 = vunpack.c.h.b16 %v164
  %v760 = vunpack.c.l.b16 %v165
  %v761 = vunpack.c.l.b16 %v166
  %v762 = vunpack.c.h.b16 %v166
  %v763 = vunpack.c.l.b16 %v167
  %v764 = vunpack.c.h.b16 %v167
  %v765 = vunpack.c.l.b16 %v168
  %v766 = vunpack.c.h.b16 %v168
  %v767 = vunpack.c.l.b16 %v169
  %v768 = vunpack.c.l.b16 %v170
  %v769 = vunpack.c.h.b16 %v170
  %v770 = vunpack.c.l.b16 %v171
  %v771 = vunpack.c.h.b16 %v171
  %v772 = vunpack.c.l.b16 %v172
  %v773 = vunpack.c.h.b16 %v172
  %v774 = vunpack.c.l.b16 %v173
  %v775 = vunpack.c.l.b16 %v174
  %v776 = vunpack.c.h.b16 %v174
  %v777 = vunpack.c.l.b16 %v175
  %v778 = vunpack.c.h.b16 %v175
  %v779 = vunpack.c.l.b16 %v176
  %v780 = vunpack.c.h.b16 %v176
  %v781 = vunpack.c.l.b16 %v177
  %v782 = vunpack.c.l.b16 %v178
  %v783 = vunpack.c.h.b16 %v178
  %v784 = vunpack.c.l.b16 %v179
  %v785 = vunpack.c.h.b16 %v179
  %v786 = vunpack.c.l.b16 %v180
  %v787 = vunpack.c.h.b16 %v180
  %v788 = vunpack.c.l.b16 %v181
  %v789 = vunpack.c.l.b16 %v182
  %v790 = vunpack.c.h.b16 %v182
  %v791 = vunpack.c.l.b16 %v183
  %v792 = vunpack.c.h.b16 %v183
  %v793 = vunpack.c.l.b16 %v184
  %v794 = vunpack.c.h.b16 %v184
  %v795 = vunpack.c.l.b16 %v185
  %v796 = vunpack.c.l.b16 %v186
  %v797 = vunpack.c.h.b16 %v186
  %v798 = vunpack.c.l.b16 %v187
  %v799 = vunpack.c.h.b16 %v187
  %v800 = vunpack.c.l.b16 %v188
  %v801 = vunpack.c.h.b16 %v188
  %v802 = vunpack.c.l.b16 %v189
  %v803 = vunpack.c.l.b16 %v190
  %v804 = vunpack.c.h.b16 %v190
  %v805 = vunpack.c.l.b16 %v191
  %v806 = vunpack.c.h.b16 %v191
  %v807 = vunpack.c.l.b16 %v192
  %v808 = vunpack.c.h.b16 %v192
  %v809 = vunpack.c.l.b16 %v193
  %v810 = vunpack.c.l.b16 %v194
  %v811 = vunpack.c.h.b16 %v194
  %v812 = vunpack.c.l.b16 %v195
  %v813 = vunpack.c.h.b16 %v195
  %v814 = vunpack.c.l.b16 %v196
  %v815 = vunpack.c.h.b16 %v196
  %v816 = vunpack.c.l.b16 %v197
  %v817 = vunpack.c.l.b16 %v198
  %v818 = vunpack.c.h.b16 %v198
  %v819 = vunpack.c.l.b16 %v199
  %v820 = vunpack.c.h.b16 %v199
  %v821 = vunpack.c.l.b16 %v200
  %v822 = vunpack.c.h.b16 %v200
  %v823 = vunpack.c.l.b16 %v201
  %v824 = vunpack.c.l.b16 %v202
  %v825 = vunpack.c.h.b16 %v202
  %v826 = vunpack.c.l.b16 %v203
  %v827 = vunpack.c.h.b16 %v203
  %v828 = vunpack.c.l.b16 %v204
  %v829 = vunpack.c.h.b16 %v204
  %v830 = vunpack.c.l.b16 %v205
  %v831 = vunpack.c.l.b16 %v206
  %v832 = vunpack.c.h.b16 %v206
  %v833 = vunpack.c.l.b16 %v207
  %v834 = vunpack.c.h.b16 %v207
  %v835 = vunpack.c.l.b16 %v208
  %v836 = vunpack.c.h.b16 %v208
  %v837 = vunpack.c.l.b16 %v209
  %v838 = vpack.c.b16 %v509, %v502
  %v839 = vpack.c.b16 %v510, %v503
  %v840 = vpack.c.b16 %v511, %v504
  %v841 = vpack.c.b16 %v512, %v505
  %v842 = vpack.c.b16 %v513, %v506
  %v843 = vpack.c.b16 %v514, %v507
  %v844 = vpack.c.b16 %v515, %v508
  %v845 = vpack.c.b16 %v523, %v516
  %v846 = vpack.c.b16 %v524, %v517
  %v847 = vpack.c.b16 %v525, %v518
  %v848 = vpack.c.b16 %v526, %v519
  %v849 = vpack.c.b16 %v527, %v520
  %v850 = vpack.c.b16 %v528, %v521
  %v851 = vpack.c.b16 %v529, %v522
  %v852 = vpack.c.b16 %v537, %v530
  %v853 = vpack.c.b16 %v538, %v531
  %v854 = vpack.c.b16 %v539, %v532
  %v855 = vpack.c.b16 %v540, %v533
  %v856 = vpack.c.b16 %v541, %v534
  %v857 = vpack.c.b16 %v542, %v535
  %v858 = vpack.c.b16 %v543, %v536
  %v859 = vpack.c.b16 %v551, %v544
  %v860 = vpack.c.b16 %v552, %v545
  %v861 = vpack.c.b16 %v553, %v546
  %v862 = vpack.c.b16 %v554, %v547
  %v863 = vpack.c.b16 %v555, %v548
  %v864 = vpack.c.b16 %v556, %v549
  %v865 = vpack.c.b16 %v557, %v550
  %v866 = vpack.c.b16 %v565, %v558
  %v867 = vpack.c.b16 %v566, %v559
  %v868 = vpack.c.b16 %v567, %v560
  %v869 = vpack.c.b16 %v568, %v561
  %v870 = vpack.c.b16 %v569, %v562
  %v871 = vpack.c.b16 %v570, %v563
  %v872 = vpack.c.b16 %v571, %v564
  %v873 = vpack.c.b16 %v579, %v572
  %v874 = vpack.c.b16 %v580, %v573
  %v875 = vpack.c.b16 %v581, %v574
  %v876 = vpack.c.b16 %v582, %v575
  %v877 = vpack.c.b16 %v583, %v576
  %v878 = vpack.c.b16 %v584, %v577
  %v879 = vpack.c.b16 %v585, %v578
  %v880 = vpack.c.b16 %v593, %v586
  %v881 = vpack.c.b16 %v594, %v587
  %v882 = vpack.c.b16 %v595, %v588
  %v883 = vpack.c.b16 %v596, %v589
  %v884 = vpack.c.b16 %v597, %v590
  %v885 = vpack.c.b16 %v598, %v591
  %v886 = vpack.c.b16 %v599, %v592
  %v887 = vpack.c.b16 %v607, %v600
  %v888 = vpack.c.b16 %v608, %v601
  %v889 = vpack.c.b16 %v609, %v602
  %v890 = vpack.c.b16 %v610, %v603
  %v891 = vpack.c.b16 %v611, %v604
  %v892 = vpack.c.b16 %v612, %v605
  %v893 = vpack.c.b16 %v613, %v606
  %v894 = vpack.c.b16 %v621, %v614
  %v895 = vpack.c.b16 %v622, %v615
  %v896 = vpack.c.b16 %v623, %v616
  %v897 = vpack.c.b16 %v624, %v617
  %v898 = vpack.c.b16 %v625, %v618
  %v899 = vpack.c.b16 %v626, %v619
  %v900 = vpack.c.b16 %v627, %v620
  %v901 = vpack.c.b16 %v635, %v628
  %v902 = vpack.c.b16 %v636, %v629
  %v903 = vpack.c.b16 %v637, %v630
  %v904 = vpack.c.b16 %v638, %v631
  %v905 = vpack.c.b16 %v639, %v632
  %v906 = vpack.c.b16 %v640, %v633
  %v907 = vpack.c.b16 %v641, %v634
  %v908 = vpack.c.b16 %v649, %v642
  %v909 = vpack.c.b16 %v650, %v643
  %v910 = vpack.c.b16 %v651, %v644
  %v911 = vpack.c.b16 %v652, %v645
  %v912 = vpack.c.b16 %v653, %v646
  %v913 = vpack.c.b16 %v654, %v647
  %v914 = vpack.c.b16 %v655, %v648
  %v915 = vpack.c.b16 %v663, %v656
  %v916 = vpack.c.b16 %v664, %v657
  %v917 = vpack.c.b16 %v665, %v658
  %v918 = vpack.c.b16 %v666, %v659
  %v919 = vpack.c.b16 %v667, %v660
  %v920 = vpack.c.b16 %v668, %v661
  %v921 = vpack.c.b16 %v669, %v662
  %v922 = vpack.c.b16 %v677, %v670
  %v923 = vpack.c.b16 %v678, %v671
  %v924 = vpack.c.b16 %v679, %v672
  %v925 = vpack.c.b16 %v680, %v673
  %v926 = vpack.c.b16 %v681, %v674
  %v927 = vpack.c.b16 %v682, %v675
  %v928 = vpack.c.b16 %v683, %v676
  %v929 = vpack.c.b16 %v691, %v684
  %v930 = vpack.c.b16 %v692, %v685
  %v931 = vpack.c.b16 %v693, %v686
  %v932 = vpack.c.b16 %v694, %v687
  %v933 = vpack.c.b16 %v695, %v688
  %v934 = vpack.c.b16 %v696, %v689
  %v935 = vpack.c.b16 %v697, %v690
  %v936 = vpack.c.b16 %v705, %v698
  %v937 = vpack.c.b16 %v706, %v699
  %v938 = vpack.c.b16 %v707, %v700
  %v939 = vpack.c.b16 %v708, %v701
  %v940 = vpack.c.b16 %v709, %v702
  %v941 = vpack.c.b16 %v710, %v703
  %v942 = vpack.c.b16 %v711, %v704
  %v943 = vpack.c.b16 %v719, %v712
  %v944 = vpack.c.b16 %v720, %v713
  %v945 = vpack.c.b16 %v721, %v714
  %v946 = vpack.c.b16 %v722, %v715
  %v947 = vpack.c.b16 %v723, %v716
  %v948 = vpack.c.b16 %v724, %v717
  %v949 = vpack.c.b16 %v725, %v718
  %v950 = vpack.c.b16 %v733, %v726
  %v951 = vpack.c.b16 %v734, %v727
  %v952 = vpack.c.b16 %v735, %v728
  %v953 = vpack.c.b16 %v736, %v729
  %v954 = vpack.c.b16 %v737, %v730
  %v955 = vpack.c.b16 %v738, %v731
  %v956 = vpack.c.b16 %v739, %v732
  %v957 = vpack.c.b16 %v747, %v740
  %v958 = vpack.c.b16 %v748, %v741
  %v959 = vpack.c.b16 %v749, %v742
  %v960 = vpack.c.b16 %v750, %v743
  %v961 = vpack.c.b16 %v751, %v744
  %v962 = vpack.c.b16 %v752, %v745
  %v963 = vpack.c.b16 %v753, %v746
  %v964 = vpack.c.b16 %v761, %v754
  %v965 = vpack.c.b16 %v762, %v755
  %v966 = vpack.c.b16 %v763, %v756
  %v967 = vpack.c.b16 %v764, %v757
  %v968 = vpack.c.b16 %v765, %v758
  %v969 = vpack.c.b16 %v766, %v759
  %v970 = vpack.c.b16 %v767, %v760
  %v971 = vpack.c.b16 %v775, %v768
  %v972 = vpack.c.b16 %v776, %v769
  %v973 = vpack.c.b16 %v777, %v770
  %v974 = vpack.c.b16 %v778, %v771
  %v975 = vpack.c.b16 %v779, %v772
  %v976 = vpack.c.b16 %v780, %v773
  %v977 = vpack.c.b16 %v781, %v774
  %v978 = vpack.c.b16 %v789, %v782
  %v979 = vpack.c.b16 %v790, %v783
  %v980 = vpack.c.b16 %v791, %v784
  %v981 = vpack.c.b16 %v792, %v785
  %v982 = vpack.c.b16 %v793, %v786
  %v983 = vpack.c.b16 %v794, %v787
  %v984 = vpack.c.b16 %v795, %v788
  %v985 = vpack.c.b16 %v803, %v796
  %v986 = vpack.c.b16 %v804, %v797
  %v987 = vpack.c.b16 %v805, %v798
  %v988 = vpack.c.b16 %v806, %v799
  %v989 = vpack.c.b16 %v807, %v800
  %v990 = vpack.c.b16 %v808, %v801
  %v991 = vpack.c.b16 %v809, %v802
  %v992 = vpack.c.b16 %v817, %v810
  %v993 = vpack.c.b16 %v818, %v811
  %v994 = vpack.c.b16 %v819, %v812
  %v995 = vpack.c.b16 %v820, %v813
  %v996 = vpack.c.b16 %v821, %v814
  %v997 = vpack.c.b16 %v822, %v815
  %v998 = vpack.c.b16 %v823, %v816
  %v999 = vpack.c.b16 %v831, %v824
  %v1000 = vpack.c.b16 %v832, %v825
  %v1001 = vpack.c.b16 %v833, %v826
  %v1002 = vpack.c.b16 %v834, %v827
  %v1003 = vpack.c.b16 %v835, %v828
  %v1004 = vpack.c.b16 %v836, %v829
  %v1005 = vpack.c.b16 %v837, %v830
  %v1250 = vunpack.c.l.b16 %v210
  %v1251 = vunpack.c.l.b16 %v211
  %v1252 = vunpack.c.l.b16 %v212
  %v1253 = vunpack.c.l.b16 %v213
  %v1254 = vunpack.c.l.b16 %v214
  %v1255 = vunpack.c.l.b16 %v215
  %v1256 = vunpack.c.l.b16 %v216
  %v1257 = vunpack.c.l.b16 %v217
  %v1258 = vunpack.c.l.b16 %v218
  %v1259 = vunpack.c.l.b16 %v219
  %v1260 = vunpack.c.l.b16 %v220
  %v1261 = vunpack.c.l.b16 %v221
  %v1262 = vunpack.c.l.b16 %v222
  %v1263 = vunpack.c.l.b16 %v223
  %v1264 = vunpack.c.l.b16 %v224
  %v1265 = vunpack.c.l.b16 %v225
  %v1266 = vunpack.c.l.b16 %v226
  %v1267 = vunpack.c.l.b16 %v227
  %v1268 = vunpack.c.l.b16 %v228
  %v1269 = vunpack.c.l.b16 %v229
  %v1270 = vunpack.c.l.b16 %v230
  %v1271 = vunpack.c.l.b16 %v231
  %v1272 = vunpack.c.l.b16 %v232
  %v1273 = vunpack.c.l.b16 %v233
  %v1274 = vunpack.c.l.b16 %v234
  %v1275 = vunpack.c.l.b16 %v235
  %v1276 = vunpack.c.l.b16 %v236
  %v1277 = vunpack.c.l.b16 %v237
  %v1278 = vunpack.c.l.b16 %v238
  %v1279 = vunpack.c.l.b16 %v239
  %v1280 = vunpack.c.l.b16 %v240
  %v1281 = vunpack.c.l.b16 %v241
  %v1282 = vunpack.c.l.b16 %v242
  %v1283 = vunpack.c.l.b16 %v243
  %v1284 = vunpack.c.l.b16 %v244
  %v1285 = vunpack.c.l.b16 %v245
  %v1286 = vunpack.c.l.b16 %v246
  %v1287 = vunpack.c.l.b16 %v247
  %v1288 = vunpack.c.l.b16 %v248
  %v1289 = vunpack.c.l.b16 %v249
  %v1290 = vunpack.c.l.b16 %v250
  %v1291 = vunpack.c.l.b16 %v251
  %v1292 = vunpack.c.l.b16 %v252
  %v1293 = vunpack.c.l.b16 %v253
  %v1294 = vunpack.c.l.b16 %v254
  %v1295 = vunpack.c.l.b16 %v255
  %v1296 = vunpack.c.l.b16 %v256
  %v1297 = vunpack.c.l.b16 %v257
  %v1298 = vunpack.c.l.b16 %v258
  %v1299 = vunpack.c.l.b16 %v259
  %v1300 = vunpack.c.l.b16 %v260
  %v1301 = vunpack.c.l.b16 %v261
  %v1302 = vunpack.c.l.b16 %v262
  %v1303 = vunpack.c.l.b16 %v263
  %v1304 = vunpack.c.l.b16 %v264
  %v1305 = vunpack.c.l.b16 %v265
  %v1306 = vunpack.c.l.b16 %v266
  %v1307 = vunpack.c.l.b16 %v267
  %v1308 = vunpack.c.l.b16 %v268
  %v1309 = vunpack.c.l.b16 %v269
  %v1310 = vunpack.c.l.b16 %v270
  %v1311 = vunpack.c.l.b16 %v271
  %v1312 = vunpack.c.l.b16 %v272
  %v1313 = vunpack.c.l.b16 %v273
  %v1314 = vunpack.c.l.b16 %v274
  %v1315 = vunpack.c.l.b16 %v275
  %v1316 = vunpack.c.l.b16 %v276
  %v1317 = vunpack.c.l.b16 %v277
  %v1318 = vunpack.c.l.b16 %v278
  %v1319 = vunpack.c.l.b16 %v279
  %v1320 = vunpack.c.l.b16 %v280
  %v1321 = vunpack.c.l.b16 %v281
  %v1322 = vunpack.c.l.b16 %v282
  %v1323 = vunpack.c.l.b16 %v283
  %v1324 = vunpack.c.l.b16 %v284
  %v1325 = vunpack.c.l.b16 %v285
  %v1326 = vunpack.c.l.b16 %v286
  %v1327 = vunpack.c.l.b16 %v287
  %v1328 = vunpack.c.l.b16 %v288
  %v1329 = vunpack.c.l.b16 %v289
  %v1330 = vunpack.c.l.b16 %v290
  %v1331 = vunpack.c.l.b16 %v291
  %v1332 = vunpack.c.l.b16 %v292
  %v1333 = vunpack.c.l.b16 %v293
  %v1334 = vunpack.c.l.b16 %v294
  %v1335 = vunpack.c.l.b16 %v295
  %v1336 = vunpack.c.l.b16 %v296
  %v1337 = vunpack.c.l.b16 %v297
  %v1338 = vunpack.c.l.b16 %v298
  %v1339 = vunpack.c.l.b16 %v299
  %v1340 = vunpack.c.l.b16 %v300
  %v1341 = vunpack.c.l.b16 %v301
  %v1342 = vunpack.c.l.b16 %v302
  %v1343 = vunpack.c.l.b16 %v303
  %v1344 = vunpack.c.l.b16 %v304
  %v1345 = vunpack.c.l.b16 %v305
  %v1346 = vunpack.c.l.b16 %v306
  %v1347 = vunpack.c.l.b16 %v307
  %v1348 = vunpack.c.l.b16 %v308
  %v1349 = vunpack.c.l.b16 %v309
  %v1350 = vpack.c.b16 %v1251, %v1250
  %v1351 = vpack.c.b16 %v1253, %v1252
  %v1352 = vpack.c.b16 %v1255, %v1254
  %v1353 = vpack.c.b16 %v1257, %v1256
  %v1354 = vpack.c.b16 %v1259, %v1258
  %v1355 = vpack.c.b16 %v1261, %v1260
  %v1356 = vpack.c.b16 %v1263, %v1262
  %v1357 = vpack.c.b16 %v1265, %v1264
  %v1358 = vpack.c.b16 %v1267, %v1266
  %v1359 = vpack.c.b16 %v1269, %v1268
  %v1360 = vpack.c.b16 %v1271, %v1270
  %v1361 = vpack.c.b16 %v1273, %v1272
  %v1362 = vpack.c.b16 %v1275, %v1274
  %v1363 = vpack.c.b16 %v1277, %v1276
  %v1364 = vpack.c.b16 %v1279, %v1278
  %v1365 = vpack.c.b16 %v1281, %v1280
  %v1366 = vpack.c.b16 %v1283, %v1282
  %v1367 = vpack.c.b16 %v1285, %v1284
  %v1368 = vpack.c.b16 %v1287, %v1286
  %v1369 = vpack.c.b16 %v1289, %v1288
  %v1370 = vpack.c.b16 %v1291, %v1290
  %v1371 = vpack.c.b16 %v1293, %v1292
  %v1372 = vpack.c.b16 %v1295, %v1294
  %v1373 = vpack.c.b16 %v1297, %v1296
  %v1374 = vpack.c.b16 %v1299, %v1298
  %v1375 = vpack.c.b16 %v1301, %v1300
  %v1376 = vpack.c.b16 %v1303, %v1302
  %v1377 = vpack.c.b16 %v1305, %v1304
  %v1378 = vpack.c.b16 %v1307, %v1306
  %v1379 = vpack.c.b16 %v1309, %v1308
  %v1380 = vpack.c.b16 %v1311, %v1310
  %v1381 = vpack.c.b16 %v1313, %v1312
  %v1382 = vpack.c.b16 %v1315, %v1314
  %v1383 = vpack.c.b16 %v1317, %v1316
  %v1384 = vpack.c.b16 %v1319, %v1318
  %v1385 = vpack.c.b16 %v1321, %v1320
  %v1386 = vpack.c.b16 %v1323, %v1322
  %v1387 = vpack.c.b16 %v1325, %v1324
  %v1388 = vpack.c.b16 %v1327, %v1326
  %v1389 = vpack.c.b16 %v1329, %v1328
  %v1390 = vpack.c.b16 %v1331, %v1330
  %v1391 = vpack.c.b16 %v1333, %v1332
  %v1392 = vpack.c.b16 %v1335, %v1334
  %v1393 = vpack.c.b16 %v1337, %v1336
  %v1394 = vpack.c.b16 %v1339, %v1338
  %v1395 = vpack.c.b16 %v1341, %v1340
  %v1396 = vpack.c.b16 %v1343, %v1342
  %v1397 = vpack.c.b16 %v1345, %v1344
  %v1398 = vpack.c.b16 %v1347, %v1346
  %v1399 = vpack.c.b16 %v1349, %v1348
  %vm1450 = vcmask 261120
  %v1452 = vsel %vm1450, %v844, 0
  %v1455 = vsel %vm1450, %v851, 0
  %v1458 = vsel %vm1450, %v858, 0
  %v1461 = vsel %vm1450, %v865, 0
  %v1464 = vsel %vm1450, %v872, 0
  %v1467 = vsel %vm1450, %v879, 0
  %v1470 = vsel %vm1450, %v886, 0
  %v1473 = vsel %vm1450, %v893, 0
  %v1476 = vsel %vm1450, %v900, 0
  %v1479 = vsel %vm1450, %v907, 0
  %v1482 = vsel %vm1450, %v914, 0
  %v1485 = vsel %vm1450, %v921, 0
  %v1488 = vsel %vm1450, %v928, 0
  %v1491 = vsel %vm1450, %v935, 0
  %v1494 = vsel %vm1450, %v942, 0
  %v1497 = vsel %vm1450, %v949, 0
  %v1500 = vsel %vm1450, %v956, 0
  %v1503 = vsel %vm1450, %v963, 0
  %v1506 = vsel %vm1450, %v970, 0
  %v1509 = vsel %vm1450, %v977, 0
  %v1512 = vsel %vm1450, %v984, 0
  %v1515 = vsel %vm1450, %v991, 0
  %v1518 = vsel %vm1450, %v998, 0
  %v1521 = vsel %vm1450, %v1005, 0
  %1523 = vmatprep.subr.bf16.mxu0 0
  %1524 = vmatpush1.bf16.msra.mxu0 %v1357
  %1525 = vmatprep.subr.bf16.mxu0 0
  %1526 = vmatpush1.bf16.msra.mxu0 %v1356
  %1527 = vmatprep.subr.bf16.mxu0 0
  %1528 = vmatpush1.bf16.msra.mxu0 %v1355
  %1529 = vmatprep.subr.bf16.mxu0 0
  %1530 = vmatpush1.bf16.msra.mxu0 %v1354
  %1531 = vmatprep.subr.bf16.mxu0 0
  %1532 = vmatpush1.bf16.msra.mxu0 %v1353
  %1533 = vmatprep.subr.bf16.mxu0 0
  %1534 = vmatpush1.bf16.msra.mxu0 %v1352
  %1535 = vmatprep.subr.bf16.mxu0 0
  %1536 = vmatpush1.bf16.msra.mxu0 %v1351
  %1537 = vmatprep.subr.bf16.mxu0 0
  %1538 = vmatpush1.bf16.msra.mxu0 %v1350
  %1539 = vmatprep.subr.bf16.mxu0 0
  %1540 = vmatpush2.bf16.msra.mxu0 %v1365
  %1541 = vmatprep.subr.bf16.mxu0 0
  %1542 = vmatpush2.bf16.msra.mxu0 %v1364
  %1543 = vmatprep.subr.bf16.mxu0 0
  %1544 = vmatpush2.bf16.msra.mxu0 %v1363
  %1545 = vmatprep.subr.bf16.mxu0 0
  %1546 = vmatpush2.bf16.msra.mxu0 %v1362
  %1547 = vmatprep.subr.bf16.mxu0 0
  %1548 = vmatpush2.bf16.msra.mxu0 %v1361
  %1549 = vmatprep.subr.bf16.mxu0 0
  %1550 = vmatpush2.bf16.msra.mxu0 %v1360
  %1551 = vmatprep.subr.bf16.mxu0 0
  %1552 = vmatpush2.bf16.msra.mxu0 %v1359
  %1553 = vmatprep.subr.bf16.mxu0 0
  %1554 = vmatpush2.bf16.msra.mxu0 %v1358
  %1555 = vmatprep.mubr.bf16.mxu0 %v839
  %1556 = vmatmul.mubr.bf16.gmra.mxu0 %v838
  %v1557 = vpop.f32.mrf.mxu0
  %v1558 = vadd.f32 0.0, %v1557
  %v1559 = vpop.f32.mrf.mxu0
  %v1560 = vpop.f32.mrf.mxu0
  %v1561 = vadd.f32 0.0, %v1560
  %v1562 = vpop.f32.mrf.mxu0
  %1563 = vmatprep.mubr.bf16.mxu0 %v846
  %1564 = vmatmul.mubr.bf16.gmra.mxu0 %v845
  %v1565 = vpop.f32.mrf.mxu0
  %v1566 = vadd.f32 0.0, %v1565
  %v1567 = vpop.f32.mrf.mxu0
  %v1568 = vpop.f32.mrf.mxu0
  %v1569 = vadd.f32 0.0, %v1568
  %v1570 = vpop.f32.mrf.mxu0
  %1571 = vmatprep.mubr.bf16.mxu0 %v853
  %1572 = vmatmul.mubr.bf16.gmra.mxu0 %v852
  %v1573 = vpop.f32.mrf.mxu0
  %v1574 = vadd.f32 0.0, %v1573
  %v1575 = vpop.f32.mrf.mxu0
  %v1576 = vpop.f32.mrf.mxu0
  %v1577 = vadd.f32 0.0, %v1576
  %v1578 = vpop.f32.mrf.mxu0
  %1579 = vmatprep.mubr.bf16.mxu0 %v860
  %1580 = vmatmul.mubr.bf16.gmra.mxu0 %v859
  %v1581 = vpop.f32.mrf.mxu0
  %v1582 = vadd.f32 0.0, %v1581
  %v1583 = vpop.f32.mrf.mxu0
  %v1584 = vpop.f32.mrf.mxu0
  %v1585 = vadd.f32 0.0, %v1584
  %v1586 = vpop.f32.mrf.mxu0
  %1587 = vmatprep.mubr.bf16.mxu0 %v867
  %1588 = vmatmul.mubr.bf16.gmra.mxu0 %v866
  %v1589 = vpop.f32.mrf.mxu0
  %v1590 = vadd.f32 0.0, %v1589
  %v1591 = vpop.f32.mrf.mxu0
  %v1592 = vpop.f32.mrf.mxu0
  %v1593 = vadd.f32 0.0, %v1592
  %v1594 = vpop.f32.mrf.mxu0
  %1595 = vmatprep.mubr.bf16.mxu0 %v874
  %1596 = vmatmul.mubr.bf16.gmra.mxu0 %v873
  %v1597 = vpop.f32.mrf.mxu0
  %v1598 = vadd.f32 0.0, %v1597
  %v1599 = vpop.f32.mrf.mxu0
  %v1600 = vpop.f32.mrf.mxu0
  %v1601 = vadd.f32 0.0, %v1600
  %v1602 = vpop.f32.mrf.mxu0
  %1603 = vmatprep.mubr.bf16.mxu0 %v881
  %1604 = vmatmul.mubr.bf16.gmra.mxu0 %v880
  %v1605 = vpop.f32.mrf.mxu0
  %v1606 = vadd.f32 0.0, %v1605
  %v1607 = vpop.f32.mrf.mxu0
  %v1608 = vpop.f32.mrf.mxu0
  %v1609 = vadd.f32 0.0, %v1608
  %v1610 = vpop.f32.mrf.mxu0
  %1611 = vmatprep.mubr.bf16.mxu0 %v888
  %1612 = vmatmul.mubr.bf16.gmra.mxu0 %v887
  %v1613 = vpop.f32.mrf.mxu0
  %v1614 = vadd.f32 0.0, %v1613
  %v1615 = vpop.f32.mrf.mxu0
  %v1616 = vpop.f32.mrf.mxu0
  %v1617 = vadd.f32 0.0, %v1616
  %v1618 = vpop.f32.mrf.mxu0
  %1619 = vmatprep.mubr.bf16.mxu0 %v895
  %1620 = vmatmul.mubr.bf16.gmra.mxu0 %v894
  %v1621 = vpop.f32.mrf.mxu0
  %v1622 = vadd.f32 0.0, %v1621
  %v1623 = vpop.f32.mrf.mxu0
  %v1624 = vpop.f32.mrf.mxu0
  %v1625 = vadd.f32 0.0, %v1624
  %v1626 = vpop.f32.mrf.mxu0
  %1627 = vmatprep.mubr.bf16.mxu0 %v902
  %1628 = vmatmul.mubr.bf16.gmra.mxu0 %v901
  %v1629 = vpop.f32.mrf.mxu0
  %v1630 = vadd.f32 0.0, %v1629
  %v1631 = vpop.f32.mrf.mxu0
  %v1632 = vpop.f32.mrf.mxu0
  %v1633 = vadd.f32 0.0, %v1632
  %v1634 = vpop.f32.mrf.mxu0
  %1635 = vmatprep.mubr.bf16.mxu0 %v909
  %1636 = vmatmul.mubr.bf16.gmra.mxu0 %v908
  %v1637 = vpop.f32.mrf.mxu0
  %v1638 = vadd.f32 0.0, %v1637
  %v1639 = vpop.f32.mrf.mxu0
  %v1640 = vpop.f32.mrf.mxu0
  %v1641 = vadd.f32 0.0, %v1640
  %v1642 = vpop.f32.mrf.mxu0
  %1643 = vmatprep.mubr.bf16.mxu0 %v916
  %1644 = vmatmul.mubr.bf16.gmra.mxu0 %v915
  %v1645 = vpop.f32.mrf.mxu0
  %v1646 = vadd.f32 0.0, %v1645
  %v1647 = vpop.f32.mrf.mxu0
  %v1648 = vpop.f32.mrf.mxu0
  %v1649 = vadd.f32 0.0, %v1648
  %v1650 = vpop.f32.mrf.mxu0
  %1651 = vmatprep.mubr.bf16.mxu0 %v923
  %1652 = vmatmul.mubr.bf16.gmra.mxu0 %v922
  %v1653 = vpop.f32.mrf.mxu0
  %v1654 = vadd.f32 0.0, %v1653
  %v1655 = vpop.f32.mrf.mxu0
  %v1656 = vpop.f32.mrf.mxu0
  %v1657 = vadd.f32 0.0, %v1656
  %v1658 = vpop.f32.mrf.mxu0
  %1659 = vmatprep.mubr.bf16.mxu0 %v930
  %1660 = vmatmul.mubr.bf16.gmra.mxu0 %v929
  %v1661 = vpop.f32.mrf.mxu0
  %v1662 = vadd.f32 0.0, %v1661
  %v1663 = vpop.f32.mrf.mxu0
  %v1664 = vpop.f32.mrf.mxu0
  %v1665 = vadd.f32 0.0, %v1664
  %v1666 = vpop.f32.mrf.mxu0
  %1667 = vmatprep.mubr.bf16.mxu0 %v937
  %1668 = vmatmul.mubr.bf16.gmra.mxu0 %v936
  %v1669 = vpop.f32.mrf.mxu0
  %v1670 = vadd.f32 0.0, %v1669
  %v1671 = vpop.f32.mrf.mxu0
  %v1672 = vpop.f32.mrf.mxu0
  %v1673 = vadd.f32 0.0, %v1672
  %v1674 = vpop.f32.mrf.mxu0
  %1675 = vmatprep.mubr.bf16.mxu0 %v944
  %1676 = vmatmul.mubr.bf16.gmra.mxu0 %v943
  %v1677 = vpop.f32.mrf.mxu0
  %v1678 = vadd.f32 0.0, %v1677
  %v1679 = vpop.f32.mrf.mxu0
  %v1680 = vpop.f32.mrf.mxu0
  %v1681 = vadd.f32 0.0, %v1680
  %v1682 = vpop.f32.mrf.mxu0
  %1683 = vmatprep.mubr.bf16.mxu0 %v951
  %1684 = vmatmul.mubr.bf16.gmra.mxu0 %v950
  %v1685 = vpop.f32.mrf.mxu0
  %v1686 = vadd.f32 0.0, %v1685
  %v1687 = vpop.f32.mrf.mxu0
  %v1688 = vpop.f32.mrf.mxu0
  %v1689 = vadd.f32 0.0, %v1688
  %v1690 = vpop.f32.mrf.mxu0
  %1691 = vmatprep.mubr.bf16.mxu0 %v958
  %1692 = vmatmul.mubr.bf16.gmra.mxu0 %v957
  %v1693 = vpop.f32.mrf.mxu0
  %v1694 = vadd.f32 0.0, %v1693
  %v1695 = vpop.f32.mrf.mxu0
  %v1696 = vpop.f32.mrf.mxu0
  %v1697 = vadd.f32 0.0, %v1696
  %v1698 = vpop.f32.mrf.mxu0
  %1699 = vmatprep.mubr.bf16.mxu0 %v965
  %1700 = vmatmul.mubr.bf16.gmra.mxu0 %v964
  %v1701 = vpop.f32.mrf.mxu0
  %v1702 = vadd.f32 0.0, %v1701
  %v1703 = vpop.f32.mrf.mxu0
  %v1704 = vpop.f32.mrf.mxu0
  %v1705 = vadd.f32 0.0, %v1704
  %v1706 = vpop.f32.mrf.mxu0
  %1707 = vmatprep.mubr.bf16.mxu0 %v972
  %1708 = vmatmul.mubr.bf16.gmra.mxu0 %v971
  %v1709 = vpop.f32.mrf.mxu0
  %v1710 = vadd.f32 0.0, %v1709
  %v1711 = vpop.f32.mrf.mxu0
  %v1712 = vpop.f32.mrf.mxu0
  %v1713 = vadd.f32 0.0, %v1712
  %v1714 = vpop.f32.mrf.mxu0
  %1715 = vmatprep.mubr.bf16.mxu0 %v979
  %1716 = vmatmul.mubr.bf16.gmra.mxu0 %v978
  %v1717 = vpop.f32.mrf.mxu0
  %v1718 = vadd.f32 0.0, %v1717
  %v1719 = vpop.f32.mrf.mxu0
  %v1720 = vpop.f32.mrf.mxu0
  %v1721 = vadd.f32 0.0, %v1720
  %v1722 = vpop.f32.mrf.mxu0
  %1723 = vmatprep.mubr.bf16.mxu0 %v986
  %1724 = vmatmul.mubr.bf16.gmra.mxu0 %v985
  %v1725 = vpop.f32.mrf.mxu0
  %v1726 = vadd.f32 0.0, %v1725
  %v1727 = vpop.f32.mrf.mxu0
  %v1728 = vpop.f32.mrf.mxu0
  %v1729 = vadd.f32 0.0, %v1728
  %v1730 = vpop.f32.mrf.mxu0
  %1731 = vmatprep.mubr.bf16.mxu0 %v993
  %1732 = vmatmul.mubr.bf16.gmra.mxu0 %v992
  %v1733 = vpop.f32.mrf.mxu0
  %v1734 = vadd.f32 0.0, %v1733
  %v1735 = vpop.f32.mrf.mxu0
  %v1736 = vpop.f32.mrf.mxu0
  %v1737 = vadd.f32 0.0, %v1736
  %v1738 = vpop.f32.mrf.mxu0
  %1739 = vmatprep.mubr.bf16.mxu0 %v1000
  %1740 = vmatmul.mubr.bf16.gmra.mxu0 %v999
  %v1741 = vpop.f32.mrf.mxu0
  %v1742 = vadd.f32 0.0, %v1741
  %v1743 = vpop.f32.mrf.mxu0
  %v1744 = vpop.f32.mrf.mxu0
  %v1745 = vadd.f32 0.0, %v1744
  %v1746 = vpop.f32.mrf.mxu0
  %1747 = vdwg.mxu0
  %1748 = vmatprep.subr.bf16.mxu0 0
  %1749 = vmatpush1.bf16.msra.mxu0 %v1373
  %1750 = vmatprep.subr.bf16.mxu0 0
  %1751 = vmatpush1.bf16.msra.mxu0 %v1372
  %1752 = vmatprep.subr.bf16.mxu0 0
  %1753 = vmatpush1.bf16.msra.mxu0 %v1371
  %1754 = vmatprep.subr.bf16.mxu0 0
  %1755 = vmatpush1.bf16.msra.mxu0 %v1370
  %1756 = vmatprep.subr.bf16.mxu0 0
  %1757 = vmatpush1.bf16.msra.mxu0 %v1369
  %1758 = vmatprep.subr.bf16.mxu0 0
  %1759 = vmatpush1.bf16.msra.mxu0 %v1368
  %1760 = vmatprep.subr.bf16.mxu0 0
  %1761 = vmatpush1.bf16.msra.mxu0 %v1367
  %1762 = vmatprep.subr.bf16.mxu0 0
  %1763 = vmatpush1.bf16.msra.mxu0 %v1366
  %1764 = vmatprep.subr.bf16.mxu0 0
  %1765 = vmatpush2.bf16.msra.mxu0 %v1381
  %1766 = vmatprep.subr.bf16.mxu0 0
  %1767 = vmatpush2.bf16.msra.mxu0 %v1380
  %1768 = vmatprep.subr.bf16.mxu0 0
  %1769 = vmatpush2.bf16.msra.mxu0 %v1379
  %1770 = vmatprep.subr.bf16.mxu0 0
  %1771 = vmatpush2.bf16.msra.mxu0 %v1378
  %1772 = vmatprep.subr.bf16.mxu0 0
  %1773 = vmatpush2.bf16.msra.mxu0 %v1377
  %1774 = vmatprep.subr.bf16.mxu0 0
  %1775 = vmatpush2.bf16.msra.mxu0 %v1376
  %1776 = vmatprep.subr.bf16.mxu0 0
  %1777 = vmatpush2.bf16.msra.mxu0 %v1375
  %1778 = vmatprep.subr.bf16.mxu0 0
  %1779 = vmatpush2.bf16.msra.mxu0 %v1374
  %1780 = vmatprep.mubr.bf16.mxu0 %v841
  %1781 = vmatmul.mubr.bf16.gmra.mxu0 %v840
  %v1782 = vpop.f32.mrf.mxu0
  %v1783 = vadd.f32 %v1558, %v1782
  %v1784 = vpop.f32.mrf.mxu0
  %v1785 = vpop.f32.mrf.mxu0
  %v1786 = vadd.f32 %v1561, %v1785
  %v1787 = vpop.f32.mrf.mxu0
  %1788 = vmatprep.mubr.bf16.mxu0 %v848
  %1789 = vmatmul.mubr.bf16.gmra.mxu0 %v847
  %v1790 = vpop.f32.mrf.mxu0
  %v1791 = vadd.f32 %v1566, %v1790
  %v1792 = vpop.f32.mrf.mxu0
  %v1793 = vpop.f32.mrf.mxu0
  %v1794 = vadd.f32 %v1569, %v1793
  %v1795 = vpop.f32.mrf.mxu0
  %1796 = vmatprep.mubr.bf16.mxu0 %v855
  %1797 = vmatmul.mubr.bf16.gmra.mxu0 %v854
  %v1798 = vpop.f32.mrf.mxu0
  %v1799 = vadd.f32 %v1574, %v1798
  %v1800 = vpop.f32.mrf.mxu0
  %v1801 = vpop.f32.mrf.mxu0
  %v1802 = vadd.f32 %v1577, %v1801
  %v1803 = vpop.f32.mrf.mxu0
  %1804 = vmatprep.mubr.bf16.mxu0 %v862
  %1805 = vmatmul.mubr.bf16.gmra.mxu0 %v861
  %v1806 = vpop.f32.mrf.mxu0
  %v1807 = vadd.f32 %v1582, %v1806
  %v1808 = vpop.f32.mrf.mxu0
  %v1809 = vpop.f32.mrf.mxu0
  %v1810 = vadd.f32 %v1585, %v1809
  %v1811 = vpop.f32.mrf.mxu0
  %1812 = vmatprep.mubr.bf16.mxu0 %v869
  %1813 = vmatmul.mubr.bf16.gmra.mxu0 %v868
  %v1814 = vpop.f32.mrf.mxu0
  %v1815 = vadd.f32 %v1590, %v1814
  %v1816 = vpop.f32.mrf.mxu0
  %v1817 = vpop.f32.mrf.mxu0
  %v1818 = vadd.f32 %v1593, %v1817
  %v1819 = vpop.f32.mrf.mxu0
  %1820 = vmatprep.mubr.bf16.mxu0 %v876
  %1821 = vmatmul.mubr.bf16.gmra.mxu0 %v875
  %v1822 = vpop.f32.mrf.mxu0
  %v1823 = vadd.f32 %v1598, %v1822
  %v1824 = vpop.f32.mrf.mxu0
  %v1825 = vpop.f32.mrf.mxu0
  %v1826 = vadd.f32 %v1601, %v1825
  %v1827 = vpop.f32.mrf.mxu0
  %1828 = vmatprep.mubr.bf16.mxu0 %v883
  %1829 = vmatmul.mubr.bf16.gmra.mxu0 %v882
  %v1830 = vpop.f32.mrf.mxu0
  %v1831 = vadd.f32 %v1606, %v1830
  %v1832 = vpop.f32.mrf.mxu0
  %v1833 = vpop.f32.mrf.mxu0
  %v1834 = vadd.f32 %v1609, %v1833
  %v1835 = vpop.f32.mrf.mxu0
  %1836 = vmatprep.mubr.bf16.mxu0 %v890
  %1837 = vmatmul.mubr.bf16.gmra.mxu0 %v889
  %v1838 = vpop.f32.mrf.mxu0
  %v1839 = vadd.f32 %v1614, %v1838
  %v1840 = vpop.f32.mrf.mxu0
  %v1841 = vpop.f32.mrf.mxu0
  %v1842 = vadd.f32 %v1617, %v1841
  %v1843 = vpop.f32.mrf.mxu0
  %1844 = vmatprep.mubr.bf16.mxu0 %v897
  %1845 = vmatmul.mubr.bf16.gmra.mxu0 %v896
  %v1846 = vpop.f32.mrf.mxu0
  %v1847 = vadd.f32 %v1622, %v1846
  %v1848 = vpop.f32.mrf.mxu0
  %v1849 = vpop.f32.mrf.mxu0
  %v1850 = vadd.f32 %v1625, %v1849
  %v1851 = vpop.f32.mrf.mxu0
  %1852 = vmatprep.mubr.bf16.mxu0 %v904
  %1853 = vmatmul.mubr.bf16.gmra.mxu0 %v903
  %v1854 = vpop.f32.mrf.mxu0
  %v1855 = vadd.f32 %v1630, %v1854
  %v1856 = vpop.f32.mrf.mxu0
  %v1857 = vpop.f32.mrf.mxu0
  %v1858 = vadd.f32 %v1633, %v1857
  %v1859 = vpop.f32.mrf.mxu0
  %1860 = vmatprep.mubr.bf16.mxu0 %v911
  %1861 = vmatmul.mubr.bf16.gmra.mxu0 %v910
  %v1862 = vpop.f32.mrf.mxu0
  %v1863 = vadd.f32 %v1638, %v1862
  %v1864 = vpop.f32.mrf.mxu0
  %v1865 = vpop.f32.mrf.mxu0
  %v1866 = vadd.f32 %v1641, %v1865
  %v1867 = vpop.f32.mrf.mxu0
  %1868 = vmatprep.mubr.bf16.mxu0 %v918
  %1869 = vmatmul.mubr.bf16.gmra.mxu0 %v917
  %v1870 = vpop.f32.mrf.mxu0
  %v1871 = vadd.f32 %v1646, %v1870
  %v1872 = vpop.f32.mrf.mxu0
  %v1873 = vpop.f32.mrf.mxu0
  %v1874 = vadd.f32 %v1649, %v1873
  %v1875 = vpop.f32.mrf.mxu0
  %1876 = vmatprep.mubr.bf16.mxu0 %v925
  %1877 = vmatmul.mubr.bf16.gmra.mxu0 %v924
  %v1878 = vpop.f32.mrf.mxu0
  %v1879 = vadd.f32 %v1654, %v1878
  %v1880 = vpop.f32.mrf.mxu0
  %v1881 = vpop.f32.mrf.mxu0
  %v1882 = vadd.f32 %v1657, %v1881
  %v1883 = vpop.f32.mrf.mxu0
  %1884 = vmatprep.mubr.bf16.mxu0 %v932
  %1885 = vmatmul.mubr.bf16.gmra.mxu0 %v931
  %v1886 = vpop.f32.mrf.mxu0
  %v1887 = vadd.f32 %v1662, %v1886
  %v1888 = vpop.f32.mrf.mxu0
  %v1889 = vpop.f32.mrf.mxu0
  %v1890 = vadd.f32 %v1665, %v1889
  %v1891 = vpop.f32.mrf.mxu0
  %1892 = vmatprep.mubr.bf16.mxu0 %v939
  %1893 = vmatmul.mubr.bf16.gmra.mxu0 %v938
  %v1894 = vpop.f32.mrf.mxu0
  %v1895 = vadd.f32 %v1670, %v1894
  %v1896 = vpop.f32.mrf.mxu0
  %v1897 = vpop.f32.mrf.mxu0
  %v1898 = vadd.f32 %v1673, %v1897
  %v1899 = vpop.f32.mrf.mxu0
  %1900 = vmatprep.mubr.bf16.mxu0 %v946
  %1901 = vmatmul.mubr.bf16.gmra.mxu0 %v945
  %v1902 = vpop.f32.mrf.mxu0
  %v1903 = vadd.f32 %v1678, %v1902
  %v1904 = vpop.f32.mrf.mxu0
  %v1905 = vpop.f32.mrf.mxu0
  %v1906 = vadd.f32 %v1681, %v1905
  %v1907 = vpop.f32.mrf.mxu0
  %1908 = vmatprep.mubr.bf16.mxu0 %v953
  %1909 = vmatmul.mubr.bf16.gmra.mxu0 %v952
  %v1910 = vpop.f32.mrf.mxu0
  %v1911 = vadd.f32 %v1686, %v1910
  %v1912 = vpop.f32.mrf.mxu0
  %v1913 = vpop.f32.mrf.mxu0
  %v1914 = vadd.f32 %v1689, %v1913
  %v1915 = vpop.f32.mrf.mxu0
  %1916 = vmatprep.mubr.bf16.mxu0 %v960
  %1917 = vmatmul.mubr.bf16.gmra.mxu0 %v959
  %v1918 = vpop.f32.mrf.mxu0
  %v1919 = vadd.f32 %v1694, %v1918
  %v1920 = vpop.f32.mrf.mxu0
  %v1921 = vpop.f32.mrf.mxu0
  %v1922 = vadd.f32 %v1697, %v1921
  %v1923 = vpop.f32.mrf.mxu0
  %1924 = vmatprep.mubr.bf16.mxu0 %v967
  %1925 = vmatmul.mubr.bf16.gmra.mxu0 %v966
  %v1926 = vpop.f32.mrf.mxu0
  %v1927 = vadd.f32 %v1702, %v1926
  %v1928 = vpop.f32.mrf.mxu0
  %v1929 = vpop.f32.mrf.mxu0
  %v1930 = vadd.f32 %v1705, %v1929
  %v1931 = vpop.f32.mrf.mxu0
  %1932 = vmatprep.mubr.bf16.mxu0 %v974
  %1933 = vmatmul.mubr.bf16.gmra.mxu0 %v973
  %v1934 = vpop.f32.mrf.mxu0
  %v1935 = vadd.f32 %v1710, %v1934
  %v1936 = vpop.f32.mrf.mxu0
  %v1937 = vpop.f32.mrf.mxu0
  %v1938 = vadd.f32 %v1713, %v1937
  %v1939 = vpop.f32.mrf.mxu0
  %1940 = vmatprep.mubr.bf16.mxu0 %v981
  %1941 = vmatmul.mubr.bf16.gmra.mxu0 %v980
  %v1942 = vpop.f32.mrf.mxu0
  %v1943 = vadd.f32 %v1718, %v1942
  %v1944 = vpop.f32.mrf.mxu0
  %v1945 = vpop.f32.mrf.mxu0
  %v1946 = vadd.f32 %v1721, %v1945
  %v1947 = vpop.f32.mrf.mxu0
  %1948 = vmatprep.mubr.bf16.mxu0 %v988
  %1949 = vmatmul.mubr.bf16.gmra.mxu0 %v987
  %v1950 = vpop.f32.mrf.mxu0
  %v1951 = vadd.f32 %v1726, %v1950
  %v1952 = vpop.f32.mrf.mxu0
  %v1953 = vpop.f32.mrf.mxu0
  %v1954 = vadd.f32 %v1729, %v1953
  %v1955 = vpop.f32.mrf.mxu0
  %1956 = vmatprep.mubr.bf16.mxu0 %v995
  %1957 = vmatmul.mubr.bf16.gmra.mxu0 %v994
  %v1958 = vpop.f32.mrf.mxu0
  %v1959 = vadd.f32 %v1734, %v1958
  %v1960 = vpop.f32.mrf.mxu0
  %v1961 = vpop.f32.mrf.mxu0
  %v1962 = vadd.f32 %v1737, %v1961
  %v1963 = vpop.f32.mrf.mxu0
  %1964 = vmatprep.mubr.bf16.mxu0 %v1002
  %1965 = vmatmul.mubr.bf16.gmra.mxu0 %v1001
  %v1966 = vpop.f32.mrf.mxu0
  %v1967 = vadd.f32 %v1742, %v1966
  %v1968 = vpop.f32.mrf.mxu0
  %v1969 = vpop.f32.mrf.mxu0
  %v1970 = vadd.f32 %v1745, %v1969
  %v1971 = vpop.f32.mrf.mxu0
  %1972 = vdwg.mxu0
  %1973 = vmatprep.subr.bf16.mxu0 0
  %1974 = vmatpush1.bf16.msra.mxu0 %v1389
  %1975 = vmatprep.subr.bf16.mxu0 0
  %1976 = vmatpush1.bf16.msra.mxu0 %v1388
  %1977 = vmatprep.subr.bf16.mxu0 0
  %1978 = vmatpush1.bf16.msra.mxu0 %v1387
  %1979 = vmatprep.subr.bf16.mxu0 0
  %1980 = vmatpush1.bf16.msra.mxu0 %v1386
  %1981 = vmatprep.subr.bf16.mxu0 0
  %1982 = vmatpush1.bf16.msra.mxu0 %v1385
  %1983 = vmatprep.subr.bf16.mxu0 0
  %1984 = vmatpush1.bf16.msra.mxu0 %v1384
  %1985 = vmatprep.subr.bf16.mxu0 0
  %1986 = vmatpush1.bf16.msra.mxu0 %v1383
  %1987 = vmatprep.subr.bf16.mxu0 0
  %1988 = vmatpush1.bf16.msra.mxu0 %v1382
  %1989 = vmatprep.subr.bf16.mxu0 0
  %1990 = vmatpush2.bf16.msra.mxu0 %v1397
  %1991 = vmatprep.subr.bf16.mxu0 0
  %1992 = vmatpush2.bf16.msra.mxu0 %v1396
  %1993 = vmatprep.subr.bf16.mxu0 0
  %1994 = vmatpush2.bf16.msra.mxu0 %v1395
  %1995 = vmatprep.subr.bf16.mxu0 0
  %1996 = vmatpush2.bf16.msra.mxu0 %v1394
  %1997 = vmatprep.subr.bf16.mxu0 0
  %1998 = vmatpush2.bf16.msra.mxu0 %v1393
  %1999 = vmatprep.subr.bf16.mxu0 0
  %2000 = vmatpush2.bf16.msra.mxu0 %v1392
  %2001 = vmatprep.subr.bf16.mxu0 0
  %2002 = vmatpush2.bf16.msra.mxu0 %v1391
  %2003 = vmatprep.subr.bf16.mxu0 0
  %2004 = vmatpush2.bf16.msra.mxu0 %v1390
  %2005 = vmatprep.mubr.bf16.mxu0 %v843
  %2006 = vmatmul.mubr.bf16.gmra.mxu0 %v842
  %v2007 = vpop.f32.mrf.mxu0
  %v2008 = vadd.f32 %v1783, %v2007
  %v2009 = vpop.f32.mrf.mxu0
  %v2010 = vpop.f32.mrf.mxu0
  %v2011 = vadd.f32 %v1786, %v2010
  %v2012 = vpop.f32.mrf.mxu0
  %2013 = vmatprep.mubr.bf16.mxu0 %v850
  %2014 = vmatmul.mubr.bf16.gmra.mxu0 %v849
  %v2015 = vpop.f32.mrf.mxu0
  %v2016 = vadd.f32 %v1791, %v2015
  %v2017 = vpop.f32.mrf.mxu0
  %v2018 = vpop.f32.mrf.mxu0
  %v2019 = vadd.f32 %v1794, %v2018
  %v2020 = vpop.f32.mrf.mxu0
  %2021 = vmatprep.mubr.bf16.mxu0 %v857
  %2022 = vmatmul.mubr.bf16.gmra.mxu0 %v856
  %v2023 = vpop.f32.mrf.mxu0
  %v2024 = vadd.f32 %v1799, %v2023
  %v2025 = vpop.f32.mrf.mxu0
  %v2026 = vpop.f32.mrf.mxu0
  %v2027 = vadd.f32 %v1802, %v2026
  %v2028 = vpop.f32.mrf.mxu0
  %2029 = vmatprep.mubr.bf16.mxu0 %v864
  %2030 = vmatmul.mubr.bf16.gmra.mxu0 %v863
  %v2031 = vpop.f32.mrf.mxu0
  %v2032 = vadd.f32 %v1807, %v2031
  %v2033 = vpop.f32.mrf.mxu0
  %v2034 = vpop.f32.mrf.mxu0
  %v2035 = vadd.f32 %v1810, %v2034
  %v2036 = vpop.f32.mrf.mxu0
  %2037 = vmatprep.mubr.bf16.mxu0 %v871
  %2038 = vmatmul.mubr.bf16.gmra.mxu0 %v870
  %v2039 = vpop.f32.mrf.mxu0
  %v2040 = vadd.f32 %v1815, %v2039
  %v2041 = vpop.f32.mrf.mxu0
  %v2042 = vpop.f32.mrf.mxu0
  %v2043 = vadd.f32 %v1818, %v2042
  %v2044 = vpop.f32.mrf.mxu0
  %2045 = vmatprep.mubr.bf16.mxu0 %v878
  %2046 = vmatmul.mubr.bf16.gmra.mxu0 %v877
  %v2047 = vpop.f32.mrf.mxu0
  %v2048 = vadd.f32 %v1823, %v2047
  %v2049 = vpop.f32.mrf.mxu0
  %v2050 = vpop.f32.mrf.mxu0
  %v2051 = vadd.f32 %v1826, %v2050
  %v2052 = vpop.f32.mrf.mxu0
  %2053 = vmatprep.mubr.bf16.mxu0 %v885
  %2054 = vmatmul.mubr.bf16.gmra.mxu0 %v884
  %v2055 = vpop.f32.mrf.mxu0
  %v2056 = vadd.f32 %v1831, %v2055
  %v2057 = vpop.f32.mrf.mxu0
  %v2058 = vpop.f32.mrf.mxu0
  %v2059 = vadd.f32 %v1834, %v2058
  %v2060 = vpop.f32.mrf.mxu0
  %2061 = vmatprep.mubr.bf16.mxu0 %v892
  %2062 = vmatmul.mubr.bf16.gmra.mxu0 %v891
  %v2063 = vpop.f32.mrf.mxu0
  %v2064 = vadd.f32 %v1839, %v2063
  %v2065 = vpop.f32.mrf.mxu0
  %v2066 = vpop.f32.mrf.mxu0
  %v2067 = vadd.f32 %v1842, %v2066
  %v2068 = vpop.f32.mrf.mxu0
  %2069 = vmatprep.mubr.bf16.mxu0 %v899
  %2070 = vmatmul.mubr.bf16.gmra.mxu0 %v898
  %v2071 = vpop.f32.mrf.mxu0
  %v2072 = vadd.f32 %v1847, %v2071
  %v2073 = vpop.f32.mrf.mxu0
  %v2074 = vpop.f32.mrf.mxu0
  %v2075 = vadd.f32 %v1850, %v2074
  %v2076 = vpop.f32.mrf.mxu0
  %2077 = vmatprep.mubr.bf16.mxu0 %v906
  %2078 = vmatmul.mubr.bf16.gmra.mxu0 %v905
  %v2079 = vpop.f32.mrf.mxu0
  %v2080 = vadd.f32 %v1855, %v2079
  %v2081 = vpop.f32.mrf.mxu0
  %v2082 = vpop.f32.mrf.mxu0
  %v2083 = vadd.f32 %v1858, %v2082
  %v2084 = vpop.f32.mrf.mxu0
  %2085 = vmatprep.mubr.bf16.mxu0 %v913
  %2086 = vmatmul.mubr.bf16.gmra.mxu0 %v912
  %v2087 = vpop.f32.mrf.mxu0
  %v2088 = vadd.f32 %v1863, %v2087
  %v2089 = vpop.f32.mrf.mxu0
  %v2090 = vpop.f32.mrf.mxu0
  %v2091 = vadd.f32 %v1866, %v2090
  %v2092 = vpop.f32.mrf.mxu0
  %2093 = vmatprep.mubr.bf16.mxu0 %v920
  %2094 = vmatmul.mubr.bf16.gmra.mxu0 %v919
  %v2095 = vpop.f32.mrf.mxu0
  %v2096 = vadd.f32 %v1871, %v2095
  %v2097 = vpop.f32.mrf.mxu0
  %v2098 = vpop.f32.mrf.mxu0
  %v2099 = vadd.f32 %v1874, %v2098
  %v2100 = vpop.f32.mrf.mxu0
  %2101 = vmatprep.mubr.bf16.mxu0 %v927
  %2102 = vmatmul.mubr.bf16.gmra.mxu0 %v926
  %v2103 = vpop.f32.mrf.mxu0
  %v2104 = vadd.f32 %v1879, %v2103
  %v2105 = vpop.f32.mrf.mxu0
  %v2106 = vpop.f32.mrf.mxu0
  %v2107 = vadd.f32 %v1882, %v2106
  %v2108 = vpop.f32.mrf.mxu0
  %2109 = vmatprep.mubr.bf16.mxu0 %v934
  %2110 = vmatmul.mubr.bf16.gmra.mxu0 %v933
  %v2111 = vpop.f32.mrf.mxu0
  %v2112 = vadd.f32 %v1887, %v2111
  %v2113 = vpop.f32.mrf.mxu0
  %v2114 = vpop.f32.mrf.mxu0
  %v2115 = vadd.f32 %v1890, %v2114
  %v2116 = vpop.f32.mrf.mxu0
  %2117 = vmatprep.mubr.bf16.mxu0 %v941
  %2118 = vmatmul.mubr.bf16.gmra.mxu0 %v940
  %v2119 = vpop.f32.mrf.mxu0
  %v2120 = vadd.f32 %v1895, %v2119
  %v2121 = vpop.f32.mrf.mxu0
  %v2122 = vpop.f32.mrf.mxu0
  %v2123 = vadd.f32 %v1898, %v2122
  %v2124 = vpop.f32.mrf.mxu0
  %2125 = vmatprep.mubr.bf16.mxu0 %v948
  %2126 = vmatmul.mubr.bf16.gmra.mxu0 %v947
  %v2127 = vpop.f32.mrf.mxu0
  %v2128 = vadd.f32 %v1903, %v2127
  %v2129 = vpop.f32.mrf.mxu0
  %v2130 = vpop.f32.mrf.mxu0
  %v2131 = vadd.f32 %v1906, %v2130
  %v2132 = vpop.f32.mrf.mxu0
  %2133 = vmatprep.mubr.bf16.mxu0 %v955
  %2134 = vmatmul.mubr.bf16.gmra.mxu0 %v954
  %v2135 = vpop.f32.mrf.mxu0
  %v2136 = vadd.f32 %v1911, %v2135
  %v2137 = vpop.f32.mrf.mxu0
  %v2138 = vpop.f32.mrf.mxu0
  %v2139 = vadd.f32 %v1914, %v2138
  %v2140 = vpop.f32.mrf.mxu0
  %2141 = vmatprep.mubr.bf16.mxu0 %v962
  %2142 = vmatmul.mubr.bf16.gmra.mxu0 %v961
  %v2143 = vpop.f32.mrf.mxu0
  %v2144 = vadd.f32 %v1919, %v2143
  %v2145 = vpop.f32.mrf.mxu0
  %v2146 = vpop.f32.mrf.mxu0
  %v2147 = vadd.f32 %v1922, %v2146
  %v2148 = vpop.f32.mrf.mxu0
  %2149 = vmatprep.mubr.bf16.mxu0 %v969
  %2150 = vmatmul.mubr.bf16.gmra.mxu0 %v968
  %v2151 = vpop.f32.mrf.mxu0
  %v2152 = vadd.f32 %v1927, %v2151
  %v2153 = vpop.f32.mrf.mxu0
  %v2154 = vpop.f32.mrf.mxu0
  %v2155 = vadd.f32 %v1930, %v2154
  %v2156 = vpop.f32.mrf.mxu0
  %2157 = vmatprep.mubr.bf16.mxu0 %v976
  %2158 = vmatmul.mubr.bf16.gmra.mxu0 %v975
  %v2159 = vpop.f32.mrf.mxu0
  %v2160 = vadd.f32 %v1935, %v2159
  %v2161 = vpop.f32.mrf.mxu0
  %v2162 = vpop.f32.mrf.mxu0
  %v2163 = vadd.f32 %v1938, %v2162
  %v2164 = vpop.f32.mrf.mxu0
  %2165 = vmatprep.mubr.bf16.mxu0 %v983
  %2166 = vmatmul.mubr.bf16.gmra.mxu0 %v982
  %v2167 = vpop.f32.mrf.mxu0
  %v2168 = vadd.f32 %v1943, %v2167
  %v2169 = vpop.f32.mrf.mxu0
  %v2170 = vpop.f32.mrf.mxu0
  %v2171 = vadd.f32 %v1946, %v2170
  %v2172 = vpop.f32.mrf.mxu0
  %2173 = vmatprep.mubr.bf16.mxu0 %v990
  %2174 = vmatmul.mubr.bf16.gmra.mxu0 %v989
  %v2175 = vpop.f32.mrf.mxu0
  %v2176 = vadd.f32 %v1951, %v2175
  %v2177 = vpop.f32.mrf.mxu0
  %v2178 = vpop.f32.mrf.mxu0
  %v2179 = vadd.f32 %v1954, %v2178
  %v2180 = vpop.f32.mrf.mxu0
  %2181 = vmatprep.mubr.bf16.mxu0 %v997
  %2182 = vmatmul.mubr.bf16.gmra.mxu0 %v996
  %v2183 = vpop.f32.mrf.mxu0
  %v2184 = vadd.f32 %v1959, %v2183
  %v2185 = vpop.f32.mrf.mxu0
  %v2186 = vpop.f32.mrf.mxu0
  %v2187 = vadd.f32 %v1962, %v2186
  %v2188 = vpop.f32.mrf.mxu0
  %2189 = vmatprep.mubr.bf16.mxu0 %v1004
  %2190 = vmatmul.mubr.bf16.gmra.mxu0 %v1003
  %v2191 = vpop.f32.mrf.mxu0
  %v2192 = vadd.f32 %v1967, %v2191
  %v2193 = vpop.f32.mrf.mxu0
  %v2194 = vpop.f32.mrf.mxu0
  %v2195 = vadd.f32 %v1970, %v2194
  %v2196 = vpop.f32.mrf.mxu0
  %2197 = vdwg.mxu0
  %2198 = vmatprep.subr.bf16.mxu0 0
  %2199 = vmatpush1.bf16.msra.mxu0 0
  %2200 = vmatprep.subr.bf16.mxu0 0
  %2201 = vmatpush1.bf16.msra.mxu0 0
  %2202 = vmatprep.subr.bf16.mxu0 0
  %2203 = vmatpush1.bf16.msra.mxu0 0
  %2204 = vmatprep.subr.bf16.mxu0 0
  %2205 = vmatpush1.bf16.msra.mxu0 0
  %2206 = vmatprep.subr.bf16.mxu0 0
  %2207 = vmatpush1.bf16.msra.mxu0 0
  %2208 = vmatprep.subr.bf16.mxu0 0
  %2209 = vmatpush1.bf16.msra.mxu0 0
  %2210 = vmatprep.subr.bf16.mxu0 0
  %2211 = vmatpush1.bf16.msra.mxu0 %v1399
  %2212 = vmatprep.subr.bf16.mxu0 0
  %2213 = vmatpush1.bf16.msra.mxu0 %v1398
  %2214 = vmatprep.subr.bf16.mxu0 0
  %2215 = vmatpush2.bf16.msra.mxu0 0
  %2216 = vmatprep.subr.bf16.mxu0 0
  %2217 = vmatpush2.bf16.msra.mxu0 0
  %2218 = vmatprep.subr.bf16.mxu0 0
  %2219 = vmatpush2.bf16.msra.mxu0 0
  %2220 = vmatprep.subr.bf16.mxu0 0
  %2221 = vmatpush2.bf16.msra.mxu0 0
  %2222 = vmatprep.subr.bf16.mxu0 0
  %2223 = vmatpush2.bf16.msra.mxu0 0
  %2224 = vmatprep.subr.bf16.mxu0 0
  %2225 = vmatpush2.bf16.msra.mxu0 0
  %2226 = vmatprep.subr.bf16.mxu0 0
  %2227 = vmatpush2.bf16.msra.mxu0 0
  %2228 = vmatprep.subr.bf16.mxu0 0
  %2229 = vmatpush2.bf16.msra.mxu0 0
  %2230 = vmatprep.mubr.bf16.mxu0 0
  %2231 = vmatmul.mubr.bf16.gmra.mxu0 %v1452
  %v2232 = vpop.f32.mrf.mxu0
  %v2233 = vadd.f32 %v2008, %v2232
  %v2234 = vpop.f32.mrf.mxu0
  %v2235 = vpop.f32.mrf.mxu0
  %v2236 = vadd.f32 %v2011, %v2235
  %v2237 = vpop.f32.mrf.mxu0
  %2238 = vmatprep.mubr.bf16.mxu0 0
  %2239 = vmatmul.mubr.bf16.gmra.mxu0 %v1455
  %v2240 = vpop.f32.mrf.mxu0
  %v2241 = vadd.f32 %v2016, %v2240
  %v2242 = vpop.f32.mrf.mxu0
  %v2243 = vpop.f32.mrf.mxu0
  %v2244 = vadd.f32 %v2019, %v2243
  %v2245 = vpop.f32.mrf.mxu0
  %2246 = vmatprep.mubr.bf16.mxu0 0
  %2247 = vmatmul.mubr.bf16.gmra.mxu0 %v1458
  %v2248 = vpop.f32.mrf.mxu0
  %v2249 = vadd.f32 %v2024, %v2248
  %v2250 = vpop.f32.mrf.mxu0
  %v2251 = vpop.f32.mrf.mxu0
  %v2252 = vadd.f32 %v2027, %v2251
  %v2253 = vpop.f32.mrf.mxu0
  %2254 = vmatprep.mubr.bf16.mxu0 0
  %2255 = vmatmul.mubr.bf16.gmra.mxu0 %v1461
  %v2256 = vpop.f32.mrf.mxu0
  %v2257 = vadd.f32 %v2032, %v2256
  %v2258 = vpop.f32.mrf.mxu0
  %v2259 = vpop.f32.mrf.mxu0
  %v2260 = vadd.f32 %v2035, %v2259
  %v2261 = vpop.f32.mrf.mxu0
  %2262 = vmatprep.mubr.bf16.mxu0 0
  %2263 = vmatmul.mubr.bf16.gmra.mxu0 %v1464
  %v2264 = vpop.f32.mrf.mxu0
  %v2265 = vadd.f32 %v2040, %v2264
  %v2266 = vpop.f32.mrf.mxu0
  %v2267 = vpop.f32.mrf.mxu0
  %v2268 = vadd.f32 %v2043, %v2267
  %v2269 = vpop.f32.mrf.mxu0
  %2270 = vmatprep.mubr.bf16.mxu0 0
  %2271 = vmatmul.mubr.bf16.gmra.mxu0 %v1467
  %v2272 = vpop.f32.mrf.mxu0
  %v2273 = vadd.f32 %v2048, %v2272
  %v2274 = vpop.f32.mrf.mxu0
  %v2275 = vpop.f32.mrf.mxu0
  %v2276 = vadd.f32 %v2051, %v2275
  %v2277 = vpop.f32.mrf.mxu0
  %2278 = vmatprep.mubr.bf16.mxu0 0
  %2279 = vmatmul.mubr.bf16.gmra.mxu0 %v1470
  %v2280 = vpop.f32.mrf.mxu0
  %v2281 = vadd.f32 %v2056, %v2280
  %v2282 = vpop.f32.mrf.mxu0
  %v2283 = vpop.f32.mrf.mxu0
  %v2284 = vadd.f32 %v2059, %v2283
  %v2285 = vpop.f32.mrf.mxu0
  %2286 = vmatprep.mubr.bf16.mxu0 0
  %2287 = vmatmul.mubr.bf16.gmra.mxu0 %v1473
  %v2288 = vpop.f32.mrf.mxu0
  %v2289 = vadd.f32 %v2064, %v2288
  %v2290 = vpop.f32.mrf.mxu0
  %v2291 = vpop.f32.mrf.mxu0
  %v2292 = vadd.f32 %v2067, %v2291
  %v2293 = vpop.f32.mrf.mxu0
  %2294 = vmatprep.mubr.bf16.mxu0 0
  %2295 = vmatmul.mubr.bf16.gmra.mxu0 %v1476
  %v2296 = vpop.f32.mrf.mxu0
  %v2297 = vadd.f32 %v2072, %v2296
  %v2298 = vpop.f32.mrf.mxu0
  %v2299 = vpop.f32.mrf.mxu0
  %v2300 = vadd.f32 %v2075, %v2299
  %v2301 = vpop.f32.mrf.mxu0
  %2302 = vmatprep.mubr.bf16.mxu0 0
  %2303 = vmatmul.mubr.bf16.gmra.mxu0 %v1479
  %v2304 = vpop.f32.mrf.mxu0
  %v2305 = vadd.f32 %v2080, %v2304
  %v2306 = vpop.f32.mrf.mxu0
  %v2307 = vpop.f32.mrf.mxu0
  %v2308 = vadd.f32 %v2083, %v2307
  %v2309 = vpop.f32.mrf.mxu0
  %2310 = vmatprep.mubr.bf16.mxu0 0
  %2311 = vmatmul.mubr.bf16.gmra.mxu0 %v1482
  %v2312 = vpop.f32.mrf.mxu0
  %v2313 = vadd.f32 %v2088, %v2312
  %v2314 = vpop.f32.mrf.mxu0
  %v2315 = vpop.f32.mrf.mxu0
  %v2316 = vadd.f32 %v2091, %v2315
  %v2317 = vpop.f32.mrf.mxu0
  %2318 = vmatprep.mubr.bf16.mxu0 0
  %2319 = vmatmul.mubr.bf16.gmra.mxu0 %v1485
  %v2320 = vpop.f32.mrf.mxu0
  %v2321 = vadd.f32 %v2096, %v2320
  %v2322 = vpop.f32.mrf.mxu0
  %v2323 = vpop.f32.mrf.mxu0
  %v2324 = vadd.f32 %v2099, %v2323
  %v2325 = vpop.f32.mrf.mxu0
  %2326 = vmatprep.mubr.bf16.mxu0 0
  %2327 = vmatmul.mubr.bf16.gmra.mxu0 %v1488
  %v2328 = vpop.f32.mrf.mxu0
  %v2329 = vadd.f32 %v2104, %v2328
  %v2330 = vpop.f32.mrf.mxu0
  %v2331 = vpop.f32.mrf.mxu0
  %v2332 = vadd.f32 %v2107, %v2331
  %v2333 = vpop.f32.mrf.mxu0
  %2334 = vmatprep.mubr.bf16.mxu0 0
  %2335 = vmatmul.mubr.bf16.gmra.mxu0 %v1491
  %v2336 = vpop.f32.mrf.mxu0
  %v2337 = vadd.f32 %v2112, %v2336
  %v2338 = vpop.f32.mrf.mxu0
  %v2339 = vpop.f32.mrf.mxu0
  %v2340 = vadd.f32 %v2115, %v2339
  %v2341 = vpop.f32.mrf.mxu0
  %2342 = vmatprep.mubr.bf16.mxu0 0
  %2343 = vmatmul.mubr.bf16.gmra.mxu0 %v1494
  %v2344 = vpop.f32.mrf.mxu0
  %v2345 = vadd.f32 %v2120, %v2344
  %v2346 = vpop.f32.mrf.mxu0
  %v2347 = vpop.f32.mrf.mxu0
  %v2348 = vadd.f32 %v2123, %v2347
  %v2349 = vpop.f32.mrf.mxu0
  %2350 = vmatprep.mubr.bf16.mxu0 0
  %2351 = vmatmul.mubr.bf16.gmra.mxu0 %v1497
  %v2352 = vpop.f32.mrf.mxu0
  %v2353 = vadd.f32 %v2128, %v2352
  %v2354 = vpop.f32.mrf.mxu0
  %v2355 = vpop.f32.mrf.mxu0
  %v2356 = vadd.f32 %v2131, %v2355
  %v2357 = vpop.f32.mrf.mxu0
  %2358 = vmatprep.mubr.bf16.mxu0 0
  %2359 = vmatmul.mubr.bf16.gmra.mxu0 %v1500
  %v2360 = vpop.f32.mrf.mxu0
  %v2361 = vadd.f32 %v2136, %v2360
  %v2362 = vpop.f32.mrf.mxu0
  %v2363 = vpop.f32.mrf.mxu0
  %v2364 = vadd.f32 %v2139, %v2363
  %v2365 = vpop.f32.mrf.mxu0
  %2366 = vmatprep.mubr.bf16.mxu0 0
  %2367 = vmatmul.mubr.bf16.gmra.mxu0 %v1503
  %v2368 = vpop.f32.mrf.mxu0
  %v2369 = vadd.f32 %v2144, %v2368
  %v2370 = vpop.f32.mrf.mxu0
  %v2371 = vpop.f32.mrf.mxu0
  %v2372 = vadd.f32 %v2147, %v2371
  %v2373 = vpop.f32.mrf.mxu0
  %2374 = vmatprep.mubr.bf16.mxu0 0
  %2375 = vmatmul.mubr.bf16.gmra.mxu0 %v1506
  %v2376 = vpop.f32.mrf.mxu0
  %v2377 = vadd.f32 %v2152, %v2376
  %v2378 = vpop.f32.mrf.mxu0
  %v2379 = vpop.f32.mrf.mxu0
  %v2380 = vadd.f32 %v2155, %v2379
  %v2381 = vpop.f32.mrf.mxu0
  %2382 = vmatprep.mubr.bf16.mxu0 0
  %2383 = vmatmul.mubr.bf16.gmra.mxu0 %v1509
  %v2384 = vpop.f32.mrf.mxu0
  %v2385 = vadd.f32 %v2160, %v2384
  %v2386 = vpop.f32.mrf.mxu0
  %v2387 = vpop.f32.mrf.mxu0
  %v2388 = vadd.f32 %v2163, %v2387
  %v2389 = vpop.f32.mrf.mxu0
  %2390 = vmatprep.mubr.bf16.mxu0 0
  %2391 = vmatmul.mubr.bf16.gmra.mxu0 %v1512
  %v2392 = vpop.f32.mrf.mxu0
  %v2393 = vadd.f32 %v2168, %v2392
  %v2394 = vpop.f32.mrf.mxu0
  %v2395 = vpop.f32.mrf.mxu0
  %v2396 = vadd.f32 %v2171, %v2395
  %v2397 = vpop.f32.mrf.mxu0
  %2398 = vmatprep.mubr.bf16.mxu0 0
  %2399 = vmatmul.mubr.bf16.gmra.mxu0 %v1515
  %v2400 = vpop.f32.mrf.mxu0
  %v2401 = vadd.f32 %v2176, %v2400
  %v2402 = vpop.f32.mrf.mxu0
  %v2403 = vpop.f32.mrf.mxu0
  %v2404 = vadd.f32 %v2179, %v2403
  %v2405 = vpop.f32.mrf.mxu0
  %2406 = vmatprep.mubr.bf16.mxu0 0
  %2407 = vmatmul.mubr.bf16.gmra.mxu0 %v1518
  %v2408 = vpop.f32.mrf.mxu0
  %v2409 = vadd.f32 %v2184, %v2408
  %v2410 = vpop.f32.mrf.mxu0
  %v2411 = vpop.f32.mrf.mxu0
  %v2412 = vadd.f32 %v2187, %v2411
  %v2413 = vpop.f32.mrf.mxu0
  %2414 = vmatprep.mubr.bf16.mxu0 0
  %2415 = vmatmul.mubr.bf16.gmra.mxu0 %v1521
  %v2416 = vpop.f32.mrf.mxu0
  %v2417 = vadd.f32 %v2192, %v2416
  %v2418 = vpop.f32.mrf.mxu0
  %v2419 = vpop.f32.mrf.mxu0
  %v2420 = vadd.f32 %v2195, %v2419
  %v2421 = vpop.f32.mrf.mxu0
  %2422 = vdwg.mxu0
  %vm2423 = vcmask 523264
  %v2424 = vsel %vm2423, %v2233, 0.0
  %v2425 = vsel %vm2423, %v2236, 0.0
  %v2426 = vadd.f32 %v2424, %v2425
  %v2427 = vsel %vm2423, %v2241, 0.0
  %v2428 = vadd.f32 %v2426, %v2427
  %v2429 = vsel %vm2423, %v2244, 0.0
  %v2430 = vadd.f32 %v2428, %v2429
  %v2431 = vsel %vm2423, %v2249, 0.0
  %v2432 = vadd.f32 %v2430, %v2431
  %v2433 = vsel %vm2423, %v2252, 0.0
  %v2434 = vadd.f32 %v2432, %v2433
  %v2435 = vsel %vm2423, %v2257, 0.0
  %v2436 = vadd.f32 %v2434, %v2435
  %v2437 = vsel %vm2423, %v2260, 0.0
  %v2438 = vadd.f32 %v2436, %v2437
  %v2439 = vsel %vm2423, %v2265, 0.0
  %v2440 = vadd.f32 %v2438, %v2439
  %v2441 = vsel %vm2423, %v2268, 0.0
  %v2442 = vadd.f32 %v2440, %v2441
  %v2443 = vsel %vm2423, %v2273, 0.0
  %v2444 = vadd.f32 %v2442, %v2443
  %v2445 = vsel %vm2423, %v2276, 0.0
  %v2446 = vadd.f32 %v2444, %v2445
  %v2447 = vsel %vm2423, %v2281, 0.0
  %v2448 = vadd.f32 %v2446, %v2447
  %v2449 = vsel %vm2423, %v2284, 0.0
  %v2450 = vadd.f32 %v2448, %v2449
  %v2451 = vsel %vm2423, %v2289, 0.0
  %v2452 = vadd.f32 %v2450, %v2451
  %v2453 = vsel %vm2423, %v2292, 0.0
  %v2454 = vadd.f32 %v2452, %v2453
  %v2455 = vsel %vm2423, %v2297, 0.0
  %v2456 = vadd.f32 %v2454, %v2455
  %v2457 = vsel %vm2423, %v2300, 0.0
  %v2458 = vadd.f32 %v2456, %v2457
  %v2459 = vsel %vm2423, %v2305, 0.0
  %v2460 = vadd.f32 %v2458, %v2459
  %v2461 = vsel %vm2423, %v2308, 0.0
  %v2462 = vadd.f32 %v2460, %v2461
  %v2463 = vsel %vm2423, %v2313, 0.0
  %v2464 = vadd.f32 %v2462, %v2463
  %v2465 = vsel %vm2423, %v2316, 0.0
  %v2466 = vadd.f32 %v2464, %v2465
  %v2467 = vsel %vm2423, %v2321, 0.0
  %v2468 = vadd.f32 %v2466, %v2467
  %v2469 = vsel %vm2423, %v2324, 0.0
  %v2470 = vadd.f32 %v2468, %v2469
  %v2471 = vsel %vm2423, %v2329, 0.0
  %v2472 = vadd.f32 %v2470, %v2471
  %v2473 = vsel %vm2423, %v2332, 0.0
  %v2474 = vadd.f32 %v2472, %v2473
  %v2475 = vsel %vm2423, %v2337, 0.0
  %v2476 = vadd.f32 %v2474, %v2475
  %v2477 = vsel %vm2423, %v2340, 0.0
  %v2478 = vadd.f32 %v2476, %v2477
  %v2479 = vsel %vm2423, %v2345, 0.0
  %v2480 = vadd.f32 %v2478, %v2479
  %v2481 = vsel %vm2423, %v2348, 0.0
  %v2482 = vadd.f32 %v2480, %v2481
  %v2483 = vsel %vm2423, %v2353, 0.0
  %v2484 = vadd.f32 %v2482, %v2483
  %v2485 = vsel %vm2423, %v2356, 0.0
  %v2486 = vadd.f32 %v2484, %v2485
  %v2487 = vsel %vm2423, %v2361, 0.0
  %v2488 = vadd.f32 %v2486, %v2487
  %v2489 = vsel %vm2423, %v2364, 0.0
  %v2490 = vadd.f32 %v2488, %v2489
  %v2491 = vsel %vm2423, %v2369, 0.0
  %v2492 = vadd.f32 %v2490, %v2491
  %v2493 = vsel %vm2423, %v2372, 0.0
  %v2494 = vadd.f32 %v2492, %v2493
  %v2495 = vsel %vm2423, %v2377, 0.0
  %v2496 = vadd.f32 %v2494, %v2495
  %v2497 = vsel %vm2423, %v2380, 0.0
  %v2498 = vadd.f32 %v2496, %v2497
  %v2499 = vsel %vm2423, %v2385, 0.0
  %v2500 = vadd.f32 %v2498, %v2499
  %v2501 = vsel %vm2423, %v2388, 0.0
  %v2502 = vadd.f32 %v2500, %v2501
  %v2503 = vsel %vm2423, %v2393, 0.0
  %v2504 = vadd.f32 %v2502, %v2503
  %v2505 = vsel %vm2423, %v2396, 0.0
  %v2506 = vadd.f32 %v2504, %v2505
  %v2507 = vsel %vm2423, %v2401, 0.0
  %v2508 = vadd.f32 %v2506, %v2507
  %v2509 = vsel %vm2423, %v2404, 0.0
  %v2510 = vadd.f32 %v2508, %v2509
  %v2511 = vsel %vm2423, %v2409, 0.0
  %v2512 = vadd.f32 %v2510, %v2511
  %v2513 = vsel %vm2423, %v2412, 0.0
  %v2514 = vadd.f32 %v2512, %v2513
  %v2515 = vsel %vm2423, %v2417, 0.0
  %v2516 = vadd.f32 %v2514, %v2515
  %v2517 = vsel %vm2423, %v2420, 0.0
  %v2518 = vadd.f32 %v2516, %v2517
  %v2519 = vrot.slane %v2518, 4
  %v2520 = vadd.f32 %v2518, %v2519
  %v2521 = vrot.slane %v2520, 2
  %v2522 = vadd.f32 %v2520, %v2521
  %v2523 = vrot.slane %v2522, 1
  %v2524 = vadd.f32 %v2522, %v2523
  %v2525 = vrcp.pop 384.0
  %v2526 = vmul.f32 %v2524, %v2525
  %v2527 = vsub.f32 %v2233, %v2526
  %v2528 = vsub.f32 %v2236, %v2526
  %v2529 = vsub.f32 %v2241, %v2526
  %v2530 = vsub.f32 %v2244, %v2526
  %v2531 = vsub.f32 %v2249, %v2526
  %v2532 = vsub.f32 %v2252, %v2526
  %v2533 = vsub.f32 %v2257, %v2526
  %v2534 = vsub.f32 %v2260, %v2526
  %v2535 = vsub.f32 %v2265, %v2526
  %v2536 = vsub.f32 %v2268, %v2526
  %v2537 = vsub.f32 %v2273, %v2526
  %v2538 = vsub.f32 %v2276, %v2526
  %v2539 = vsub.f32 %v2281, %v2526
  %v2540 = vsub.f32 %v2284, %v2526
  %v2541 = vsub.f32 %v2289, %v2526
  %v2542 = vsub.f32 %v2292, %v2526
  %v2543 = vsub.f32 %v2297, %v2526
  %v2544 = vsub.f32 %v2300, %v2526
  %v2545 = vsub.f32 %v2305, %v2526
  %v2546 = vsub.f32 %v2308, %v2526
  %v2547 = vsub.f32 %v2313, %v2526
  %v2548 = vsub.f32 %v2316, %v2526
  %v2549 = vsub.f32 %v2321, %v2526
  %v2550 = vsub.f32 %v2324, %v2526
  %v2551 = vsub.f32 %v2329, %v2526
  %v2552 = vsub.f32 %v2332, %v2526
  %v2553 = vsub.f32 %v2337, %v2526
  %v2554 = vsub.f32 %v2340, %v2526
  %v2555 = vsub.f32 %v2345, %v2526
  %v2556 = vsub.f32 %v2348, %v2526
  %v2557 = vsub.f32 %v2353, %v2526
  %v2558 = vsub.f32 %v2356, %v2526
  %v2559 = vsub.f32 %v2361, %v2526
  %v2560 = vsub.f32 %v2364, %v2526
  %v2561 = vsub.f32 %v2369, %v2526
  %v2562 = vsub.f32 %v2372, %v2526
  %v2563 = vsub.f32 %v2377, %v2526
  %v2564 = vsub.f32 %v2380, %v2526
  %v2565 = vsub.f32 %v2385, %v2526
  %v2566 = vsub.f32 %v2388, %v2526
  %v2567 = vsub.f32 %v2393, %v2526
  %v2568 = vsub.f32 %v2396, %v2526
  %v2569 = vsub.f32 %v2401, %v2526
  %v2570 = vsub.f32 %v2404, %v2526
  %v2571 = vsub.f32 %v2409, %v2526
  %v2572 = vsub.f32 %v2412, %v2526
  %v2573 = vsub.f32 %v2417, %v2526
  %v2574 = vsub.f32 %v2420, %v2526
  %v2575 = vmul.f32 %v2527, %v2527
  %v2576 = vmul.f32 %v2528, %v2528
  %v2577 = vmul.f32 %v2529, %v2529
  %v2578 = vmul.f32 %v2530, %v2530
  %v2579 = vmul.f32 %v2531, %v2531
  %v2580 = vmul.f32 %v2532, %v2532
  %v2581 = vmul.f32 %v2533, %v2533
  %v2582 = vmul.f32 %v2534, %v2534
  %v2583 = vmul.f32 %v2535, %v2535
  %v2584 = vmul.f32 %v2536, %v2536
  %v2585 = vmul.f32 %v2537, %v2537
  %v2586 = vmul.f32 %v2538, %v2538
  %v2587 = vmul.f32 %v2539, %v2539
  %v2588 = vmul.f32 %v2540, %v2540
  %v2589 = vmul.f32 %v2541, %v2541
  %v2590 = vmul.f32 %v2542, %v2542
  %v2591 = vmul.f32 %v2543, %v2543
  %v2592 = vmul.f32 %v2544, %v2544
  %v2593 = vmul.f32 %v2545, %v2545
  %v2594 = vmul.f32 %v2546, %v2546
  %v2595 = vmul.f32 %v2547, %v2547
  %v2596 = vmul.f32 %v2548, %v2548
  %v2597 = vmul.f32 %v2549, %v2549
  %v2598 = vmul.f32 %v2550, %v2550
  %v2599 = vmul.f32 %v2551, %v2551
  %v2600 = vmul.f32 %v2552, %v2552
  %v2601 = vmul.f32 %v2553, %v2553
  %v2602 = vmul.f32 %v2554, %v2554
  %v2603 = vmul.f32 %v2555, %v2555
  %v2604 = vmul.f32 %v2556, %v2556
  %v2605 = vmul.f32 %v2557, %v2557
  %v2606 = vmul.f32 %v2558, %v2558
  %v2607 = vmul.f32 %v2559, %v2559
  %v2608 = vmul.f32 %v2560, %v2560
  %v2609 = vmul.f32 %v2561, %v2561
  %v2610 = vmul.f32 %v2562, %v2562
  %v2611 = vmul.f32 %v2563, %v2563
  %v2612 = vmul.f32 %v2564, %v2564
  %v2613 = vmul.f32 %v2565, %v2565
  %v2614 = vmul.f32 %v2566, %v2566
  %v2615 = vmul.f32 %v2567, %v2567
  %v2616 = vmul.f32 %v2568, %v2568
  %v2617 = vmul.f32 %v2569, %v2569
  %v2618 = vmul.f32 %v2570, %v2570
  %v2619 = vmul.f32 %v2571, %v2571
  %v2620 = vmul.f32 %v2572, %v2572
  %v2621 = vmul.f32 %v2573, %v2573
  %v2622 = vmul.f32 %v2574, %v2574
  %v2623 = vsel %vm2423, %v2575, 0.0
  %v2624 = vsel %vm2423, %v2576, 0.0
  %v2625 = vadd.f32 %v2623, %v2624
  %v2626 = vsel %vm2423, %v2577, 0.0
  %v2627 = vadd.f32 %v2625, %v2626
  %v2628 = vsel %vm2423, %v2578, 0.0
  %v2629 = vadd.f32 %v2627, %v2628
  %v2630 = vsel %vm2423, %v2579, 0.0
  %v2631 = vadd.f32 %v2629, %v2630
  %v2632 = vsel %vm2423, %v2580, 0.0
  %v2633 = vadd.f32 %v2631, %v2632
  %v2634 = vsel %vm2423, %v2581, 0.0
  %v2635 = vadd.f32 %v2633, %v2634
  %v2636 = vsel %vm2423, %v2582, 0.0
  %v2637 = vadd.f32 %v2635, %v2636
  %v2638 = vsel %vm2423, %v2583, 0.0
  %v2639 = vadd.f32 %v2637, %v2638
  %v2640 = vsel %vm2423, %v2584, 0.0
  %v2641 = vadd.f32 %v2639, %v2640
  %v2642 = vsel %vm2423, %v2585, 0.0
  %v2643 = vadd.f32 %v2641, %v2642
  %v2644 = vsel %vm2423, %v2586, 0.0
  %v2645 = vadd.f32 %v2643, %v2644
  %v2646 = vsel %vm2423, %v2587, 0.0
  %v2647 = vadd.f32 %v2645, %v2646
  %v2648 = vsel %vm2423, %v2588, 0.0
  %v2649 = vadd.f32 %v2647, %v2648
  %v2650 = vsel %vm2423, %v2589, 0.0
  %v2651 = vadd.f32 %v2649, %v2650
  %v2652 = vsel %vm2423, %v2590, 0.0
  %v2653 = vadd.f32 %v2651, %v2652
  %v2654 = vsel %vm2423, %v2591, 0.0
  %v2655 = vadd.f32 %v2653, %v2654
  %v2656 = vsel %vm2423, %v2592, 0.0
  %v2657 = vadd.f32 %v2655, %v2656
  %v2658 = vsel %vm2423, %v2593, 0.0
  %v2659 = vadd.f32 %v2657, %v2658
  %v2660 = vsel %vm2423, %v2594, 0.0
  %v2661 = vadd.f32 %v2659, %v2660
  %v2662 = vsel %vm2423, %v2595, 0.0
  %v2663 = vadd.f32 %v2661, %v2662
  %v2664 = vsel %vm2423, %v2596, 0.0
  %v2665 = vadd.f32 %v2663, %v2664
  %v2666 = vsel %vm2423, %v2597, 0.0
  %v2667 = vadd.f32 %v2665, %v2666
  %v2668 = vsel %vm2423, %v2598, 0.0
  %v2669 = vadd.f32 %v2667, %v2668
  %v2670 = vsel %vm2423, %v2599, 0.0
  %v2671 = vadd.f32 %v2669, %v2670
  %v2672 = vsel %vm2423, %v2600, 0.0
  %v2673 = vadd.f32 %v2671, %v2672
  %v2674 = vsel %vm2423, %v2601, 0.0
  %v2675 = vadd.f32 %v2673, %v2674
  %v2676 = vsel %vm2423, %v2602, 0.0
  %v2677 = vadd.f32 %v2675, %v2676
  %v2678 = vsel %vm2423, %v2603, 0.0
  %v2679 = vadd.f32 %v2677, %v2678
  %v2680 = vsel %vm2423, %v2604, 0.0
  %v2681 = vadd.f32 %v2679, %v2680
  %v2682 = vsel %vm2423, %v2605, 0.0
  %v2683 = vadd.f32 %v2681, %v2682
  %v2684 = vsel %vm2423, %v2606, 0.0
  %v2685 = vadd.f32 %v2683, %v2684
  %v2686 = vsel %vm2423, %v2607, 0.0
  %v2687 = vadd.f32 %v2685, %v2686
  %v2688 = vsel %vm2423, %v2608, 0.0
  %v2689 = vadd.f32 %v2687, %v2688
  %v2690 = vsel %vm2423, %v2609, 0.0
  %v2691 = vadd.f32 %v2689, %v2690
  %v2692 = vsel %vm2423, %v2610, 0.0
  %v2693 = vadd.f32 %v2691, %v2692
  %v2694 = vsel %vm2423, %v2611, 0.0
  %v2695 = vadd.f32 %v2693, %v2694
  %v2696 = vsel %vm2423, %v2612, 0.0
  %v2697 = vadd.f32 %v2695, %v2696
  %v2698 = vsel %vm2423, %v2613, 0.0
  %v2699 = vadd.f32 %v2697, %v2698
  %v2700 = vsel %vm2423, %v2614, 0.0
  %v2701 = vadd.f32 %v2699, %v2700
  %v2702 = vsel %vm2423, %v2615, 0.0
  %v2703 = vadd.f32 %v2701, %v2702
  %v2704 = vsel %vm2423, %v2616, 0.0
  %v2705 = vadd.f32 %v2703, %v2704
  %v2706 = vsel %vm2423, %v2617, 0.0
  %v2707 = vadd.f32 %v2705, %v2706
  %v2708 = vsel %vm2423, %v2618, 0.0
  %v2709 = vadd.f32 %v2707, %v2708
  %v2710 = vsel %vm2423, %v2619, 0.0
  %v2711 = vadd.f32 %v2709, %v2710
  %v2712 = vsel %vm2423, %v2620, 0.0
  %v2713 = vadd.f32 %v2711, %v2712
  %v2714 = vsel %vm2423, %v2621, 0.0
  %v2715 = vadd.f32 %v2713, %v2714
  %v2716 = vsel %vm2423, %v2622, 0.0
  %v2717 = vadd.f32 %v2715, %v2716
  %v2718 = vrot.slane %v2717, 4
  %v2719 = vadd.f32 %v2717, %v2718
  %v2720 = vrot.slane %v2719, 2
  %v2721 = vadd.f32 %v2719, %v2720
  %v2722 = vrot.slane %v2721, 1
  %v2723 = vadd.f32 %v2721, %v2722
  %v2724 = vmul.f32 %v2723, %v2525
  %v2725 = vadd.f32 %v2724, 1e-05
  %v2726 = vrsqrt.pop %v2725
  %v2727 = vmul.f32 %v2527, %v2726
  %v2728 = vmul.f32 %v2528, %v2726
  %v2729 = vmul.f32 %v2529, %v2726
  %v2730 = vmul.f32 %v2530, %v2726
  %v2731 = vmul.f32 %v2531, %v2726
  %v2732 = vmul.f32 %v2532, %v2726
  %v2733 = vmul.f32 %v2533, %v2726
  %v2734 = vmul.f32 %v2534, %v2726
  %v2735 = vmul.f32 %v2535, %v2726
  %v2736 = vmul.f32 %v2536, %v2726
  %v2737 = vmul.f32 %v2537, %v2726
  %v2738 = vmul.f32 %v2538, %v2726
  %v2739 = vmul.f32 %v2539, %v2726
  %v2740 = vmul.f32 %v2540, %v2726
  %v2741 = vmul.f32 %v2541, %v2726
  %v2742 = vmul.f32 %v2542, %v2726
  %v2743 = vmul.f32 %v2543, %v2726
  %v2744 = vmul.f32 %v2544, %v2726
  %v2745 = vmul.f32 %v2545, %v2726
  %v2746 = vmul.f32 %v2546, %v2726
  %v2747 = vmul.f32 %v2547, %v2726
  %v2748 = vmul.f32 %v2548, %v2726
  %v2749 = vmul.f32 %v2549, %v2726
  %v2750 = vmul.f32 %v2550, %v2726
  %v2751 = vmul.f32 %v2551, %v2726
  %v2752 = vmul.f32 %v2552, %v2726
  %v2753 = vmul.f32 %v2553, %v2726
  %v2754 = vmul.f32 %v2554, %v2726
  %v2755 = vmul.f32 %v2555, %v2726
  %v2756 = vmul.f32 %v2556, %v2726
  %v2757 = vmul.f32 %v2557, %v2726
  %v2758 = vmul.f32 %v2558, %v2726
  %v2759 = vmul.f32 %v2559, %v2726
  %v2760 = vmul.f32 %v2560, %v2726
  %v2761 = vmul.f32 %v2561, %v2726
  %v2762 = vmul.f32 %v2562, %v2726
  %v2763 = vmul.f32 %v2563, %v2726
  %v2764 = vmul.f32 %v2564, %v2726
  %v2765 = vmul.f32 %v2565, %v2726
  %v2766 = vmul.f32 %v2566, %v2726
  %v2767 = vmul.f32 %v2567, %v2726
  %v2768 = vmul.f32 %v2568, %v2726
  %v2769 = vmul.f32 %v2569, %v2726
  %v2770 = vmul.f32 %v2570, %v2726
  %v2771 = vmul.f32 %v2571, %v2726
  %v2772 = vmul.f32 %v2572, %v2726
  %v2773 = vmul.f32 %v2573, %v2726
  %v2774 = vmul.f32 %v2574, %v2726
  %v2775 = vld [vmem:[%s2] sm:$0x1]
  %v2777 = vlaneseq
  %v2778 = vshrl.u32 %v2777, 7
  %v2779 = vsub.s32 0, %v2778
  %v2780 = vrot.slane %v2775, %v2779
  %v2782 = vmul.f32 %v2727, %v2780
  %v2783 = vmul.f32 %v2728, %v2780
  %v2784 = vmul.f32 %v2729, %v2780
  %v2785 = vmul.f32 %v2730, %v2780
  %v2786 = vmul.f32 %v2731, %v2780
  %v2787 = vmul.f32 %v2732, %v2780
  %v2788 = vmul.f32 %v2733, %v2780
  %v2789 = vmul.f32 %v2734, %v2780
  %v2790 = vmul.f32 %v2735, %v2780
  %v2791 = vmul.f32 %v2736, %v2780
  %v2792 = vmul.f32 %v2737, %v2780
  %v2793 = vmul.f32 %v2738, %v2780
  %v2794 = vmul.f32 %v2739, %v2780
  %v2795 = vmul.f32 %v2740, %v2780
  %v2796 = vmul.f32 %v2741, %v2780
  %v2797 = vmul.f32 %v2742, %v2780
  %v2798 = vmul.f32 %v2743, %v2780
  %v2799 = vmul.f32 %v2744, %v2780
  %v2800 = vmul.f32 %v2745, %v2780
  %v2801 = vmul.f32 %v2746, %v2780
  %v2802 = vmul.f32 %v2747, %v2780
  %v2803 = vmul.f32 %v2748, %v2780
  %v2804 = vmul.f32 %v2749, %v2780
  %v2805 = vmul.f32 %v2750, %v2780
  %v2806 = vmul.f32 %v2751, %v2780
  %v2807 = vmul.f32 %v2752, %v2780
  %v2808 = vmul.f32 %v2753, %v2780
  %v2809 = vmul.f32 %v2754, %v2780
  %v2810 = vmul.f32 %v2755, %v2780
  %v2811 = vmul.f32 %v2756, %v2780
  %v2812 = vmul.f32 %v2757, %v2780
  %v2813 = vmul.f32 %v2758, %v2780
  %v2814 = vmul.f32 %v2759, %v2780
  %v2815 = vmul.f32 %v2760, %v2780
  %v2816 = vmul.f32 %v2761, %v2780
  %v2817 = vmul.f32 %v2762, %v2780
  %v2818 = vmul.f32 %v2763, %v2780
  %v2819 = vmul.f32 %v2764, %v2780
  %v2820 = vmul.f32 %v2765, %v2780
  %v2821 = vmul.f32 %v2766, %v2780
  %v2822 = vmul.f32 %v2767, %v2780
  %v2823 = vmul.f32 %v2768, %v2780
  %v2824 = vmul.f32 %v2769, %v2780
  %v2825 = vmul.f32 %v2770, %v2780
  %v2826 = vmul.f32 %v2771, %v2780
  %v2827 = vmul.f32 %v2772, %v2780
  %v2828 = vmul.f32 %v2773, %v2780
  %v2829 = vmul.f32 %v2774, %v2780
  %v2830 = vld [vmem:[%s3] sm:$0x1]
  %v2832 = vlaneseq
  %v2833 = vshrl.u32 %v2832, 7
  %v2834 = vsub.s32 0, %v2833
  %v2835 = vrot.slane %v2830, %v2834
  %v2837 = vadd.f32 %v2782, %v2835
  %v2838 = vadd.f32 %v2783, %v2835
  %v2839 = vadd.f32 %v2784, %v2835
  %v2840 = vadd.f32 %v2785, %v2835
  %v2841 = vadd.f32 %v2786, %v2835
  %v2842 = vadd.f32 %v2787, %v2835
  %v2843 = vadd.f32 %v2788, %v2835
  %v2844 = vadd.f32 %v2789, %v2835
  %v2845 = vadd.f32 %v2790, %v2835
  %v2846 = vadd.f32 %v2791, %v2835
  %v2847 = vadd.f32 %v2792, %v2835
  %v2848 = vadd.f32 %v2793, %v2835
  %v2849 = vadd.f32 %v2794, %v2835
  %v2850 = vadd.f32 %v2795, %v2835
  %v2851 = vadd.f32 %v2796, %v2835
  %v2852 = vadd.f32 %v2797, %v2835
  %v2853 = vadd.f32 %v2798, %v2835
  %v2854 = vadd.f32 %v2799, %v2835
  %v2855 = vadd.f32 %v2800, %v2835
  %v2856 = vadd.f32 %v2801, %v2835
  %v2857 = vadd.f32 %v2802, %v2835
  %v2858 = vadd.f32 %v2803, %v2835
  %v2859 = vadd.f32 %v2804, %v2835
  %v2860 = vadd.f32 %v2805, %v2835
  %v2861 = vadd.f32 %v2806, %v2835
  %v2862 = vadd.f32 %v2807, %v2835
  %v2863 = vadd.f32 %v2808, %v2835
  %v2864 = vadd.f32 %v2809, %v2835
  %v2865 = vadd.f32 %v2810, %v2835
  %v2866 = vadd.f32 %v2811, %v2835
  %v2867 = vadd.f32 %v2812, %v2835
  %v2868 = vadd.f32 %v2813, %v2835
  %v2869 = vadd.f32 %v2814, %v2835
  %v2870 = vadd.f32 %v2815, %v2835
  %v2871 = vadd.f32 %v2816, %v2835
  %v2872 = vadd.f32 %v2817, %v2835
  %v2873 = vadd.f32 %v2818, %v2835
  %v2874 = vadd.f32 %v2819, %v2835
  %v2875 = vadd.f32 %v2820, %v2835
  %v2876 = vadd.f32 %v2821, %v2835
  %v2877 = vadd.f32 %v2822, %v2835
  %v2878 = vadd.f32 %v2823, %v2835
  %v2879 = vadd.f32 %v2824, %v2835
  %v2880 = vadd.f32 %v2825, %v2835
  %v2881 = vadd.f32 %v2826, %v2835
  %v2882 = vadd.f32 %v2827, %v2835
  %v2883 = vadd.f32 %v2828, %v2835
  %v2884 = vadd.f32 %v2829, %v2835
  %v2885 = vmax.f32 %v2837, 0.0
  %v2886 = vmax.f32 %v2838, 0.0
  %v2887 = vmax.f32 %v2839, 0.0
  %v2888 = vmax.f32 %v2840, 0.0
  %v2889 = vmax.f32 %v2841, 0.0
  %v2890 = vmax.f32 %v2842, 0.0
  %v2891 = vmax.f32 %v2843, 0.0
  %v2892 = vmax.f32 %v2844, 0.0
  %v2893 = vmax.f32 %v2845, 0.0
  %v2894 = vmax.f32 %v2846, 0.0
  %v2895 = vmax.f32 %v2847, 0.0
  %v2896 = vmax.f32 %v2848, 0.0
  %v2897 = vmax.f32 %v2849, 0.0
  %v2898 = vmax.f32 %v2850, 0.0
  %v2899 = vmax.f32 %v2851, 0.0
  %v2900 = vmax.f32 %v2852, 0.0
  %v2901 = vmax.f32 %v2853, 0.0
  %v2902 = vmax.f32 %v2854, 0.0
  %v2903 = vmax.f32 %v2855, 0.0
  %v2904 = vmax.f32 %v2856, 0.0
  %v2905 = vmax.f32 %v2857, 0.0
  %v2906 = vmax.f32 %v2858, 0.0
  %v2907 = vmax.f32 %v2859, 0.0
  %v2908 = vmax.f32 %v2860, 0.0
  %v2909 = vmax.f32 %v2861, 0.0
  %v2910 = vmax.f32 %v2862, 0.0
  %v2911 = vmax.f32 %v2863, 0.0
  %v2912 = vmax.f32 %v2864, 0.0
  %v2913 = vmax.f32 %v2865, 0.0
  %v2914 = vmax.f32 %v2866, 0.0
  %v2915 = vmax.f32 %v2867, 0.0
  %v2916 = vmax.f32 %v2868, 0.0
  %v2917 = vmax.f32 %v2869, 0.0
  %v2918 = vmax.f32 %v2870, 0.0
  %v2919 = vmax.f32 %v2871, 0.0
  %v2920 = vmax.f32 %v2872, 0.0
  %v2921 = vmax.f32 %v2873, 0.0
  %v2922 = vmax.f32 %v2874, 0.0
  %v2923 = vmax.f32 %v2875, 0.0
  %v2924 = vmax.f32 %v2876, 0.0
  %v2925 = vmax.f32 %v2877, 0.0
  %v2926 = vmax.f32 %v2878, 0.0
  %v2927 = vmax.f32 %v2879, 0.0
  %v2928 = vmax.f32 %v2880, 0.0
  %v2929 = vmax.f32 %v2881, 0.0
  %v2930 = vmax.f32 %v2882, 0.0
  %v2931 = vmax.f32 %v2883, 0.0
  %v2932 = vmax.f32 %v2884, 0.0
  %v2933 = vpack.c.bf16 %v2886, %v2885
  %v2934 = vpack.c.bf16 %v2888, %v2887
  %v2935 = vpack.c.bf16 %v2890, %v2889
  %v2936 = vpack.c.bf16 %v2892, %v2891
  %v2937 = vpack.c.bf16 %v2894, %v2893
  %v2938 = vpack.c.bf16 %v2896, %v2895
  %v2939 = vpack.c.bf16 %v2898, %v2897
  %v2940 = vpack.c.bf16 %v2900, %v2899
  %v2941 = vpack.c.bf16 %v2902, %v2901
  %v2942 = vpack.c.bf16 %v2904, %v2903
  %v2943 = vpack.c.bf16 %v2906, %v2905
  %v2944 = vpack.c.bf16 %v2908, %v2907
  %v2945 = vpack.c.bf16 %v2910, %v2909
  %v2946 = vpack.c.bf16 %v2912, %v2911
  %v2947 = vpack.c.bf16 %v2914, %v2913
  %v2948 = vpack.c.bf16 %v2916, %v2915
  %v2949 = vpack.c.bf16 %v2918, %v2917
  %v2950 = vpack.c.bf16 %v2920, %v2919
  %v2951 = vpack.c.bf16 %v2922, %v2921
  %v2952 = vpack.c.bf16 %v2924, %v2923
  %v2953 = vpack.c.bf16 %v2926, %v2925
  %v2954 = vpack.c.bf16 %v2928, %v2927
  %v2955 = vpack.c.bf16 %v2930, %v2929
  %v2956 = vpack.c.bf16 %v2932, %v2931
  %v2981 = vunpack.c.l.b16 %v2933
  %v2982 = vunpack.c.h.b16 %v2933
  %v2983 = vunpack.c.l.b16 %v2934
  %v2984 = vunpack.c.h.b16 %v2934
  %v2985 = vunpack.c.l.b16 %v2935
  %v2986 = vunpack.c.h.b16 %v2935
  %v2987 = vunpack.c.l.b16 %v2936
  %v2988 = vunpack.c.h.b16 %v2936
  %v2989 = vunpack.c.l.b16 %v2937
  %v2990 = vunpack.c.h.b16 %v2937
  %v2991 = vunpack.c.l.b16 %v2938
  %v2992 = vunpack.c.h.b16 %v2938
  %v2993 = vunpack.c.l.b16 %v2939
  %v2994 = vunpack.c.h.b16 %v2939
  %v2995 = vunpack.c.l.b16 %v2940
  %v2996 = vunpack.c.h.b16 %v2940
  %v2997 = vunpack.c.l.b16 %v2941
  %v2998 = vunpack.c.h.b16 %v2941
  %v2999 = vunpack.c.l.b16 %v2942
  %v3000 = vunpack.c.h.b16 %v2942
  %v3001 = vunpack.c.l.b16 %v2943
  %v3002 = vunpack.c.h.b16 %v2943
  %v3003 = vunpack.c.l.b16 %v2944
  %v3004 = vunpack.c.h.b16 %v2944
  %v3005 = vunpack.c.l.b16 %v2945
  %v3006 = vunpack.c.h.b16 %v2945
  %v3007 = vunpack.c.l.b16 %v2946
  %v3008 = vunpack.c.h.b16 %v2946
  %v3009 = vunpack.c.l.b16 %v2947
  %v3010 = vunpack.c.h.b16 %v2947
  %v3011 = vunpack.c.l.b16 %v2948
  %v3012 = vunpack.c.h.b16 %v2948
  %v3013 = vunpack.c.l.b16 %v2949
  %v3014 = vunpack.c.h.b16 %v2949
  %v3015 = vunpack.c.l.b16 %v2950
  %v3016 = vunpack.c.h.b16 %v2950
  %v3017 = vunpack.c.l.b16 %v2951
  %v3018 = vunpack.c.h.b16 %v2951
  %v3019 = vunpack.c.l.b16 %v2952
  %v3020 = vunpack.c.h.b16 %v2952
  %v3021 = vunpack.c.l.b16 %v2953
  %v3022 = vunpack.c.h.b16 %v2953
  %v3023 = vunpack.c.l.b16 %v2954
  %v3024 = vunpack.c.h.b16 %v2954
  %v3025 = vunpack.c.l.b16 %v2955
  %v3026 = vunpack.c.h.b16 %v2955
  %v3027 = vunpack.c.l.b16 %v2956
  %v3028 = vunpack.c.h.b16 %v2956
  %v3029 = vpack.c.b16 %v2981, %v2981
  %v3030 = vpack.c.b16 %v2982, %v2982
  %v3031 = vpack.c.b16 %v2983, %v2983
  %v3032 = vpack.c.b16 %v2984, %v2984
  %v3033 = vpack.c.b16 %v2985, %v2985
  %v3034 = vpack.c.b16 %v2986, %v2986
  %v3035 = vpack.c.b16 %v2987, %v2987
  %v3036 = vpack.c.b16 %v2988, %v2988
  %v3037 = vpack.c.b16 %v2989, %v2989
  %v3038 = vpack.c.b16 %v2990, %v2990
  %v3039 = vpack.c.b16 %v2991, %v2991
  %v3040 = vpack.c.b16 %v2992, %v2992
  %v3041 = vpack.c.b16 %v2993, %v2993
  %v3042 = vpack.c.b16 %v2994, %v2994
  %v3043 = vpack.c.b16 %v2995, %v2995
  %v3044 = vpack.c.b16 %v2996, %v2996
  %v3045 = vpack.c.b16 %v2997, %v2997
  %v3046 = vpack.c.b16 %v2998, %v2998
  %v3047 = vpack.c.b16 %v2999, %v2999
  %v3048 = vpack.c.b16 %v3000, %v3000
  %v3049 = vpack.c.b16 %v3001, %v3001
  %v3050 = vpack.c.b16 %v3002, %v3002
  %v3051 = vpack.c.b16 %v3003, %v3003
  %v3052 = vpack.c.b16 %v3004, %v3004
  %v3053 = vpack.c.b16 %v3005, %v3005
  %v3054 = vpack.c.b16 %v3006, %v3006
  %v3055 = vpack.c.b16 %v3007, %v3007
  %v3056 = vpack.c.b16 %v3008, %v3008
  %v3057 = vpack.c.b16 %v3009, %v3009
  %v3058 = vpack.c.b16 %v3010, %v3010
  %v3059 = vpack.c.b16 %v3011, %v3011
  %v3060 = vpack.c.b16 %v3012, %v3012
  %v3061 = vpack.c.b16 %v3013, %v3013
  %v3062 = vpack.c.b16 %v3014, %v3014
  %v3063 = vpack.c.b16 %v3015, %v3015
  %v3064 = vpack.c.b16 %v3016, %v3016
  %v3065 = vpack.c.b16 %v3017, %v3017
  %v3066 = vpack.c.b16 %v3018, %v3018
  %v3067 = vpack.c.b16 %v3019, %v3019
  %v3068 = vpack.c.b16 %v3020, %v3020
  %v3069 = vpack.c.b16 %v3021, %v3021
  %v3070 = vpack.c.b16 %v3022, %v3022
  %v3071 = vpack.c.b16 %v3023, %v3023
  %v3072 = vpack.c.b16 %v3024, %v3024
  %v3073 = vpack.c.b16 %v3025, %v3025
  %v3074 = vpack.c.b16 %v3026, %v3026
  %v3075 = vpack.c.b16 %v3027, %v3027
  %v3076 = vpack.c.b16 %v3028, %v3028
  %vm3125 = vcmask 519168
  %3126 = vst.msk [vmem:[%s4] sm:$0xf] %vm3125, %v3029
  %3127 = vst.msk [vmem:[%s4 + $0x4] sm:$0xf] %vm3125, %v3030
  %3128 = vst.msk [vmem:[%s4 + $0x8] sm:$0xf] %vm3125, %v3031
  %3129 = vst.msk [vmem:[%s4 + $0xc] sm:$0xf] %vm3125, %v3032
  %3130 = vst.msk [vmem:[%s4 + $0x10] sm:$0xf] %vm3125, %v3033
  %3131 = vst.msk [vmem:[%s4 + $0x14] sm:$0xf] %vm3125, %v3034
  %3132 = vst.msk [vmem:[%s4 + $0x18] sm:$0xf] %vm3125, %v3035
  %3133 = vst.msk [vmem:[%s4 + $0x1c] sm:$0xf] %vm3125, %v3036
  %3134 = vst.msk [vmem:[%s4 + $0x20] sm:$0xf] %vm3125, %v3037
  %3135 = vst.msk [vmem:[%s4 + $0x24] sm:$0xf] %vm3125, %v3038
  %3136 = vst.msk [vmem:[%s4 + $0x28] sm:$0xf] %vm3125, %v3039
  %3137 = vst.msk [vmem:[%s4 + $0x2c] sm:$0xf] %vm3125, %v3040
  %3138 = vst.msk [vmem:[%s4 + $0x30] sm:$0xf] %vm3125, %v3041
  %3139 = vst.msk [vmem:[%s4 + $0x34] sm:$0xf] %vm3125, %v3042
  %3140 = vst.msk [vmem:[%s4 + $0x38] sm:$0xf] %vm3125, %v3043
  %3141 = vst.msk [vmem:[%s4 + $0x3c] sm:$0xf] %vm3125, %v3044
  %3142 = vst.msk [vmem:[%s4 + $0x40] sm:$0xf] %vm3125, %v3045
  %3143 = vst.msk [vmem:[%s4 + $0x44] sm:$0xf] %vm3125, %v3046
  %3144 = vst.msk [vmem:[%s4 + $0x48] sm:$0xf] %vm3125, %v3047
  %3145 = vst.msk [vmem:[%s4 + $0x4c] sm:$0xf] %vm3125, %v3048
  %3146 = vst.msk [vmem:[%s4 + $0x50] sm:$0xf] %vm3125, %v3049
  %3147 = vst.msk [vmem:[%s4 + $0x54] sm:$0xf] %vm3125, %v3050
  %3148 = vst.msk [vmem:[%s4 + $0x58] sm:$0xf] %vm3125, %v3051
  %3149 = vst.msk [vmem:[%s4 + $0x5c] sm:$0xf] %vm3125, %v3052
  %3150 = vst.msk [vmem:[%s4 + $0x60] sm:$0xf] %vm3125, %v3053
  %3151 = vst.msk [vmem:[%s4 + $0x64] sm:$0xf] %vm3125, %v3054
  %3152 = vst.msk [vmem:[%s4 + $0x68] sm:$0xf] %vm3125, %v3055
  %3153 = vst.msk [vmem:[%s4 + $0x6c] sm:$0xf] %vm3125, %v3056
  %3154 = vst.msk [vmem:[%s4 + $0x70] sm:$0xf] %vm3125, %v3057
  %3155 = vst.msk [vmem:[%s4 + $0x74] sm:$0xf] %vm3125, %v3058
  %3156 = vst.msk [vmem:[%s4 + $0x78] sm:$0xf] %vm3125, %v3059
  %3157 = vst.msk [vmem:[%s4 + $0x7c] sm:$0xf] %vm3125, %v3060
  %3158 = vst.msk [vmem:[%s4 + $0x80] sm:$0xf] %vm3125, %v3061
  %3159 = vst.msk [vmem:[%s4 + $0x84] sm:$0xf] %vm3125, %v3062
  %3160 = vst.msk [vmem:[%s4 + $0x88] sm:$0xf] %vm3125, %v3063
  %3161 = vst.msk [vmem:[%s4 + $0x8c] sm:$0xf] %vm3125, %v3064
  %3162 = vst.msk [vmem:[%s4 + $0x90] sm:$0xf] %vm3125, %v3065
  %3163 = vst.msk [vmem:[%s4 + $0x94] sm:$0xf] %vm3125, %v3066
  %3164 = vst.msk [vmem:[%s4 + $0x98] sm:$0xf] %vm3125, %v3067
  %3165 = vst.msk [vmem:[%s4 + $0x9c] sm:$0xf] %vm3125, %v3068
  %3166 = vst.msk [vmem:[%s4 + $0xa0] sm:$0xf] %vm3125, %v3069
  %3167 = vst.msk [vmem:[%s4 + $0xa4] sm:$0xf] %vm3125, %v3070
  %3168 = vst.msk [vmem:[%s4 + $0xa8] sm:$0xf] %vm3125, %v3071
  %3169 = vst.msk [vmem:[%s4 + $0xac] sm:$0xf] %vm3125, %v3072
  %3170 = vst.msk [vmem:[%s4 + $0xb0] sm:$0xf] %vm3125, %v3073
  %3171 = vst.msk [vmem:[%s4 + $0xb4] sm:$0xf] %vm3125, %v3074
  %3172 = vst.msk [vmem:[%s4 + $0xb8] sm:$0xf] %vm3125, %v3075
  %3173 = vst.msk [vmem:[%s4 + $0xbc] sm:$0xf] %vm3125, %v3076
  // Predicated region
  $region18: #{discriminator_forward.5} parent=0 // pred_check
    _
  $region19: #{discriminator_forward.5} parent=0 // pred_check_branch
    %3175 = sbr.rel (0) target = $region21
  $region20: #{discriminator_forward.5} parent=0 // pred_region
    _
  $region21: #{discriminator_forward.5} parent=0 // pred_fallthru
    _
  // Predicated region
  $region22: #{discriminator_forward.5} parent=0 // pred_check
    _
  $region23: #{discriminator_forward.5} parent=0 // pred_check_branch
    %3177 = sbr.rel (0) target = $region25
  $region24: #{discriminator_forward.5} parent=0 // pred_region
    _
  $region25: #{discriminator_forward.5} parent=0 // pred_fallthru
    _

// kernel: discriminator_forward.6
$region0: #{discriminator_forward.6}
  #allocation0 [shape = 'u32[]', space=smem, size = 0x4, offset = 0x4, fixed_abs, tag = 'smem constant byte address 0x4 - core index']
  #allocation1 [shape = 'u32[144,128]{1,0:T(1,128)}', space=vmem, size = 0x12000, scoped, tag = 'internal scratch']
  %s0 = inlined_call_operand.vmem [shape: bf16[96,1600], index: 0, kind: input, shape index: {}]
  %s1 = inlined_call_operand.vmem [shape: bf16[1600,128], index: 1, kind: input, shape index: {}]
  %s2 = inlined_call_operand.vmem [shape: f32[1,128], index: 2, kind: input, shape index: {}]
  %s3 = inlined_call_operand.vmem [shape: f32[1,128], index: 3, kind: input, shape index: {}]
  %s4 = inlined_call_operand.vmem [shape: bf16[96,128], index: 4, kind: output, shape index: {}]
  %s5 = sld [smem:[#allocation0]]
  $region26: #{discriminator_forward.6} parent=0
    _
  %s7 = ssub.s32 1, %s5
  %s8 = scalar_select 0, %s7, %s5
  // Predicated region
  $region2: #{discriminator_forward.6} parent=0 // pred_check
    _
  $region3: #{discriminator_forward.6} parent=0 // pred_check_branch
    %10 = sbr.rel (0) target = $region5
  $region4: #{discriminator_forward.6} parent=0 // pred_region
    _
  $region5: #{discriminator_forward.6} parent=0 // pred_fallthru
    _
  // Predicated region
  $region6: #{discriminator_forward.6} parent=0 // pred_check
    _
  $region7: #{discriminator_forward.6} parent=0 // pred_check_branch
    %12 = sbr.rel (0) target = $region9
  $region8: #{discriminator_forward.6} parent=0 // pred_region
    _
  $region9: #{discriminator_forward.6} parent=0 // pred_fallthru
    _
  // Predicated region
  $region10: #{discriminator_forward.6} parent=0 // pred_check
    _
  $region11: #{discriminator_forward.6} parent=0 // pred_check_branch
    %14 = sbr.rel (0) target = $region13
  $region12: #{discriminator_forward.6} parent=0 // pred_region
    _
  $region13: #{discriminator_forward.6} parent=0 // pred_fallthru
    _
  // Predicated region
  $region14: #{discriminator_forward.6} parent=0 // pred_check
    _
  $region15: #{discriminator_forward.6} parent=0 // pred_check_branch
    %16 = sbr.rel (0) target = $region17
  $region16: #{discriminator_forward.6} parent=0 // pred_region
    _
  $region17: #{discriminator_forward.6} parent=0 // pred_fallthru
    _
  %v18 = vld [vmem:[%s0] sm:$0xff]
  %v19 = vld [vmem:[%s0 + $0x8] sm:$0xff]
  %v20 = vld [vmem:[%s0 + $0x10] sm:$0xff]
  %v21 = vld [vmem:[%s0 + $0x18] sm:$0xff]
  %v22 = vld [vmem:[%s0 + $0x20] sm:$0xff]
  %v23 = vld [vmem:[%s0 + $0x28] sm:$0xff]
  %v24 = vld [vmem:[%s0 + $0x30] sm:$0xf]
  %v25 = vld [vmem:[%s0 + $0x34] sm:$0xff]
  %v26 = vld [vmem:[%s0 + $0x3c] sm:$0xff]
  %v27 = vld [vmem:[%s0 + $0x44] sm:$0xff]
  %v28 = vld [vmem:[%s0 + $0x4c] sm:$0xff]
  %v29 = vld [vmem:[%s0 + $0x54] sm:$0xff]
  %v30 = vld [vmem:[%s0 + $0x5c] sm:$0xff]
  %v31 = vld [vmem:[%s0 + $0x64] sm:$0xf]
  %v32 = vld [vmem:[%s0 + $0x68] sm:$0xff]
  %v33 = vld [vmem:[%s0 + $0x70] sm:$0xff]
  %v34 = vld [vmem:[%s0 + $0x78] sm:$0xff]
  %v35 = vld [vmem:[%s0 + $0x80] sm:$0xff]
  %v36 = vld [vmem:[%s0 + $0x88] sm:$0xff]
  %v37 = vld [vmem:[%s0 + $0x90] sm:$0xff]
  %v38 = vld [vmem:[%s0 + $0x98] sm:$0xf]
  %v39 = vld [vmem:[%s0 + $0x9c] sm:$0xff]
  %v40 = vld [vmem:[%s0 + $0xa4] sm:$0xff]
  %v41 = vld [vmem:[%s0 + $0xac] sm:$0xff]
  %v42 = vld [vmem:[%s0 + $0xb4] sm:$0xff]
  %v43 = vld [vmem:[%s0 + $0xbc] sm:$0xff]
  %v44 = vld [vmem:[%s0 + $0xc4] sm:$0xff]
  %v45 = vld [vmem:[%s0 + $0xcc] sm:$0xf]
  %v46 = vld [vmem:[%s0 + $0xd0] sm:$0xff]
  %v47 = vld [vmem:[%s0 + $0xd8] sm:$0xff]
  %v48 = vld [vmem:[%s0 + $0xe0] sm:$0xff]
  %v49 = vld [vmem:[%s0 + $0xe8] sm:$0xff]
  %v50 = vld [vmem:[%s0 + $0xf0] sm:$0xff]
  %v51 = vld [vmem:[%s0 + $0xf8] sm:$0xff]
  %v52 = vld [vmem:[%s0 + $0x100] sm:$0xf]
  %v53 = vld [vmem:[%s0 + $0x104] sm:$0xff]
  %v54 = vld [vmem:[%s0 + $0x10c] sm:$0xff]
  %v55 = vld [vmem:[%s0 + $0x114] sm:$0xff]
  %v56 = vld [vmem:[%s0 + $0x11c] sm:$0xff]
  %v57 = vld [vmem:[%s0 + $0x124] sm:$0xff]
  %v58 = vld [vmem:[%s0 + $0x12c] sm:$0xff]
  %v59 = vld [vmem:[%s0 + $0x134] sm:$0xf]
  %v60 = vld [vmem:[%s0 + $0x138] sm:$0xff]
  %v61 = vld [vmem:[%s0 + $0x140] sm:$0xff]
  %v62 = vld [vmem:[%s0 + $0x148] sm:$0xff]
  %v63 = vld [vmem:[%s0 + $0x150] sm:$0xff]
  %v64 = vld [vmem:[%s0 + $0x158] sm:$0xff]
  %v65 = vld [vmem:[%s0 + $0x160] sm:$0xff]
  %v66 = vld [vmem:[%s0 + $0x168] sm:$0xf]
  %v67 = vld [vmem:[%s0 + $0x16c] sm:$0xff]
  %v68 = vld [vmem:[%s0 + $0x174] sm:$0xff]
  %v69 = vld [vmem:[%s0 + $0x17c] sm:$0xff]
  %v70 = vld [vmem:[%s0 + $0x184] sm:$0xff]
  %v71 = vld [vmem:[%s0 + $0x18c] sm:$0xff]
  %v72 = vld [vmem:[%s0 + $0x194] sm:$0xff]
  %v73 = vld [vmem:[%s0 + $0x19c] sm:$0xf]
  %v74 = vld [vmem:[%s0 + $0x1a0] sm:$0xff]
  %v75 = vld [vmem:[%s0 + $0x1a8] sm:$0xff]
  %v76 = vld [vmem:[%s0 + $0x1b0] sm:$0xff]
  %v77 = vld [vmem:[%s0 + $0x1b8] sm:$0xff]
  %v78 = vld [vmem:[%s0 + $0x1c0] sm:$0xff]
  %v79 = vld [vmem:[%s0 + $0x1c8] sm:$0xff]
  %v80 = vld [vmem:[%s0 + $0x1d0] sm:$0xf]
  %v81 = vld [vmem:[%s0 + $0x1d4] sm:$0xff]
  %v82 = vld [vmem:[%s0 + $0x1dc] sm:$0xff]
  %v83 = vld [vmem:[%s0 + $0x1e4] sm:$0xff]
  %v84 = vld [vmem:[%s0 + $0x1ec] sm:$0xff]
  %v85 = vld [vmem:[%s0 + $0x1f4] sm:$0xff]
  %v86 = vld [vmem:[%s0 + $0x1fc] sm:$0xff]
  %v87 = vld [vmem:[%s0 + $0x204] sm:$0xf]
  %v88 = vld [vmem:[%s0 + $0x208] sm:$0xff]
  %v89 = vld [vmem:[%s0 + $0x210] sm:$0xff]
  %v90 = vld [vmem:[%s0 + $0x218] sm:$0xff]
  %v91 = vld [vmem:[%s0 + $0x220] sm:$0xff]
  %v92 = vld [vmem:[%s0 + $0x228] sm:$0xff]
  %v93 = vld [vmem:[%s0 + $0x230] sm:$0xff]
  %v94 = vld [vmem:[%s0 + $0x238] sm:$0xf]
  %v95 = vld [vmem:[%s0 + $0x23c] sm:$0xff]
  %v96 = vld [vmem:[%s0 + $0x244] sm:$0xff]
  %v97 = vld [vmem:[%s0 + $0x24c] sm:$0xff]
  %v98 = vld [vmem:[%s0 + $0x254] sm:$0xff]
  %v99 = vld [vmem:[%s0 + $0x25c] sm:$0xff]
  %v100 = vld [vmem:[%s0 + $0x264] sm:$0xff]
  %v101 = vld [vmem:[%s0 + $0x26c] sm:$0xf]
  %v102 = vld [vmem:[%s1] sm:$0xf]
  %v103 = vld [vmem:[%s1 + $0x4] sm:$0xf]
  %v104 = vld [vmem:[%s1 + $0x8] sm:$0xf]
  %v105 = vld [vmem:[%s1 + $0xc] sm:$0xf]
  %v106 = vld [vmem:[%s1 + $0x10] sm:$0xf]
  %v107 = vld [vmem:[%s1 + $0x14] sm:$0xf]
  %v108 = vld [vmem:[%s1 + $0x18] sm:$0xf]
  %v109 = vld [vmem:[%s1 + $0x1c] sm:$0xf]
  %v110 = vld [vmem:[%s1 + $0x20] sm:$0xf]
  %v111 = vld [vmem:[%s1 + $0x24] sm:$0xf]
  %v112 = vld [vmem:[%s1 + $0x28] sm:$0xf]
  %v113 = vld [vmem:[%s1 + $0x2c] sm:$0xf]
  %v114 = vld [vmem:[%s1 + $0x30] sm:$0xf]
  %v115 = vld [vmem:[%s1 + $0x34] sm:$0xf]
  %v116 = vld [vmem:[%s1 + $0x38] sm:$0xf]
  %v117 = vld [vmem:[%s1 + $0x3c] sm:$0xf]
  %v118 = vld [vmem:[%s1 + $0x40] sm:$0xf]
  %v119 = vld [vmem:[%s1 + $0x44] sm:$0xf]
  %v120 = vld [vmem:[%s1 + $0x48] sm:$0xf]
  %v121 = vld [vmem:[%s1 + $0x4c] sm:$0xf]
  %v122 = vld [vmem:[%s1 + $0x50] sm:$0xf]
  %v123 = vld [vmem:[%s1 + $0x54] sm:$0xf]
  %v124 = vld [vmem:[%s1 + $0x58] sm:$0xf]
  %v125 = vld [vmem:[%s1 + $0x5c] sm:$0xf]
  %v126 = vld [vmem:[%s1 + $0x60] sm:$0xf]
  %v127 = vld [vmem:[%s1 + $0x64] sm:$0xf]
  %v128 = vld [vmem:[%s1 + $0x68] sm:$0xf]
  %v129 = vld [vmem:[%s1 + $0x6c] sm:$0xf]
  %v130 = vld [vmem:[%s1 + $0x70] sm:$0xf]
  %v131 = vld [vmem:[%s1 + $0x74] sm:$0xf]
  %v132 = vld [vmem:[%s1 + $0x78] sm:$0xf]
  %v133 = vld [vmem:[%s1 + $0x7c] sm:$0xf]
  %v134 = vld [vmem:[%s1 + $0x80] sm:$0xf]
  %v135 = vld [vmem:[%s1 + $0x84] sm:$0xf]
  %v136 = vld [vmem:[%s1 + $0x88] sm:$0xf]
  %v137 = vld [vmem:[%s1 + $0x8c] sm:$0xf]
  %v138 = vld [vmem:[%s1 + $0x90] sm:$0xf]
  %v139 = vld [vmem:[%s1 + $0x94] sm:$0xf]
  %v140 = vld [vmem:[%s1 + $0x98] sm:$0xf]
  %v141 = vld [vmem:[%s1 + $0x9c] sm:$0xf]
  %v142 = vld [vmem:[%s1 + $0xa0] sm:$0xf]
  %v143 = vld [vmem:[%s1 + $0xa4] sm:$0xf]
  %v144 = vld [vmem:[%s1 + $0xa8] sm:$0xf]
  %v145 = vld [vmem:[%s1 + $0xac] sm:$0xf]
  %v146 = vld [vmem:[%s1 + $0xb0] sm:$0xf]
  %v147 = vld [vmem:[%s1 + $0xb4] sm:$0xf]
  %v148 = vld [vmem:[%s1 + $0xb8] sm:$0xf]
  %v149 = vld [vmem:[%s1 + $0xbc] sm:$0xf]
  %v150 = vld [vmem:[%s1 + $0xc0] sm:$0xf]
  %v151 = vld [vmem:[%s1 + $0xc4] sm:$0xf]
  %v152 = vld [vmem:[%s1 + $0xc8] sm:$0xf]
  %v153 = vld [vmem:[%s1 + $0xcc] sm:$0xf]
  %v154 = vld [vmem:[%s1 + $0xd0] sm:$0xf]
  %v155 = vld [vmem:[%s1 + $0xd4] sm:$0xf]
  %v156 = vld [vmem:[%s1 + $0xd8] sm:$0xf]
  %v157 = vld [vmem:[%s1 + $0xdc] sm:$0xf]
  %v158 = vld [vmem:[%s1 + $0xe0] sm:$0xf]
  %v159 = vld [vmem:[%s1 + $0xe4] sm:$0xf]
  %v160 = vld [vmem:[%s1 + $0xe8] sm:$0xf]
  %v161 = vld [vmem:[%s1 + $0xec] sm:$0xf]
  %v162 = vld [vmem:[%s1 + $0xf0] sm:$0xf]
  %v163 = vld [vmem:[%s1 + $0xf4] sm:$0xf]
  %v164 = vld [vmem:[%s1 + $0xf8] sm:$0xf]
  %v165 = vld [vmem:[%s1 + $0xfc] sm:$0xf]
  %v166 = vld [vmem:[%s1 + $0x100] sm:$0xf]
  %v167 = vld [vmem:[%s1 + $0x104] sm:$0xf]
  %v168 = vld [vmem:[%s1 + $0x108] sm:$0xf]
  %v169 = vld [vmem:[%s1 + $0x10c] sm:$0xf]
  %v170 = vld [vmem:[%s1 + $0x110] sm:$0xf]
  %v171 = vld [vmem:[%s1 + $0x114] sm:$0xf]
  %v172 = vld [vmem:[%s1 + $0x118] sm:$0xf]
  %v173 = vld [vmem:[%s1 + $0x11c] sm:$0xf]
  %v174 = vld [vmem:[%s1 + $0x120] sm:$0xf]
  %v175 = vld [vmem:[%s1 + $0x124] sm:$0xf]
  %v176 = vld [vmem:[%s1 + $0x128] sm:$0xf]
  %v177 = vld [vmem:[%s1 + $0x12c] sm:$0xf]
  %v178 = vld [vmem:[%s1 + $0x130] sm:$0xf]
  %v179 = vld [vmem:[%s1 + $0x134] sm:$0xf]
  %v180 = vld [vmem:[%s1 + $0x138] sm:$0xf]
  %v181 = vld [vmem:[%s1 + $0x13c] sm:$0xf]
  %v182 = vld [vmem:[%s1 + $0x140] sm:$0xf]
  %v183 = vld [vmem:[%s1 + $0x144] sm:$0xf]
  %v184 = vld [vmem:[%s1 + $0x148] sm:$0xf]
  %v185 = vld [vmem:[%s1 + $0x14c] sm:$0xf]
  %v186 = vld [vmem:[%s1 + $0x150] sm:$0xf]
  %v187 = vld [vmem:[%s1 + $0x154] sm:$0xf]
  %v188 = vld [vmem:[%s1 + $0x158] sm:$0xf]
  %v189 = vld [vmem:[%s1 + $0x15c] sm:$0xf]
  %v190 = vld [vmem:[%s1 + $0x160] sm:$0xf]
  %v191 = vld [vmem:[%s1 + $0x164] sm:$0xf]
  %v192 = vld [vmem:[%s1 + $0x168] sm:$0xf]
  %v193 = vld [vmem:[%s1 + $0x16c] sm:$0xf]
  %v194 = vld [vmem:[%s1 + $0x170] sm:$0xf]
  %v195 = vld [vmem:[%s1 + $0x174] sm:$0xf]
  %v196 = vld [vmem:[%s1 + $0x178] sm:$0xf]
  %v197 = vld [vmem:[%s1 + $0x17c] sm:$0xf]
  %v198 = vld [vmem:[%s1 + $0x180] sm:$0xf]
  %v199 = vld [vmem:[%s1 + $0x184] sm:$0xf]
  %v200 = vld [vmem:[%s1 + $0x188] sm:$0xf]
  %v201 = vld [vmem:[%s1 + $0x18c] sm:$0xf]
  %v202 = vld [vmem:[%s1 + $0x190] sm:$0xf]
  %v203 = vld [vmem:[%s1 + $0x194] sm:$0xf]
  %v204 = vld [vmem:[%s1 + $0x198] sm:$0xf]
  %v205 = vld [vmem:[%s1 + $0x19c] sm:$0xf]
  %v206 = vld [vmem:[%s1 + $0x1a0] sm:$0xf]
  %v207 = vld [vmem:[%s1 + $0x1a4] sm:$0xf]
  %v208 = vld [vmem:[%s1 + $0x1a8] sm:$0xf]
  %v209 = vld [vmem:[%s1 + $0x1ac] sm:$0xf]
  %v210 = vld [vmem:[%s1 + $0x1b0] sm:$0xf]
  %v211 = vld [vmem:[%s1 + $0x1b4] sm:$0xf]
  %v212 = vld [vmem:[%s1 + $0x1b8] sm:$0xf]
  %v213 = vld [vmem:[%s1 + $0x1bc] sm:$0xf]
  %v214 = vld [vmem:[%s1 + $0x1c0] sm:$0xf]
  %v215 = vld [vmem:[%s1 + $0x1c4] sm:$0xf]
  %v216 = vld [vmem:[%s1 + $0x1c8] sm:$0xf]
  %v217 = vld [vmem:[%s1 + $0x1cc] sm:$0xf]
  %v218 = vld [vmem:[%s1 + $0x1d0] sm:$0xf]
  %v219 = vld [vmem:[%s1 + $0x1d4] sm:$0xf]
  %v220 = vld [vmem:[%s1 + $0x1d8] sm:$0xf]
  %v221 = vld [vmem:[%s1 + $0x1dc] sm:$0xf]
  %v222 = vld [vmem:[%s1 + $0x1e0] sm:$0xf]
  %v223 = vld [vmem:[%s1 + $0x1e4] sm:$0xf]
  %v224 = vld [vmem:[%s1 + $0x1e8] sm:$0xf]
  %v225 = vld [vmem:[%s1 + $0x1ec] sm:$0xf]
  %v226 = vld [vmem:[%s1 + $0x1f0] sm:$0xf]
  %v227 = vld [vmem:[%s1 + $0x1f4] sm:$0xf]
  %v228 = vld [vmem:[%s1 + $0x1f8] sm:$0xf]
  %v229 = vld [vmem:[%s1 + $0x1fc] sm:$0xf]
  %v230 = vld [vmem:[%s1 + $0x200] sm:$0xf]
  %v231 = vld [vmem:[%s1 + $0x204] sm:$0xf]
  %v232 = vld [vmem:[%s1 + $0x208] sm:$0xf]
  %v233 = vld [vmem:[%s1 + $0x20c] sm:$0xf]
  %v234 = vld [vmem:[%s1 + $0x210] sm:$0xf]
  %v235 = vld [vmem:[%s1 + $0x214] sm:$0xf]
  %v236 = vld [vmem:[%s1 + $0x218] sm:$0xf]
  %v237 = vld [vmem:[%s1 + $0x21c] sm:$0xf]
  %v238 = vld [vmem:[%s1 + $0x220] sm:$0xf]
  %v239 = vld [vmem:[%s1 + $0x224] sm:$0xf]
  %v240 = vld [vmem:[%s1 + $0x228] sm:$0xf]
  %v241 = vld [vmem:[%s1 + $0x22c] sm:$0xf]
  %v242 = vld [vmem:[%s1 + $0x230] sm:$0xf]
  %v243 = vld [vmem:[%s1 + $0x234] sm:$0xf]
  %v244 = vld [vmem:[%s1 + $0x238] sm:$0xf]
  %v245 = vld [vmem:[%s1 + $0x23c] sm:$0xf]
  %v246 = vld [vmem:[%s1 + $0x240] sm:$0xf]
  %v247 = vld [vmem:[%s1 + $0x244] sm:$0xf]
  %v248 = vld [vmem:[%s1 + $0x248] sm:$0xf]
  %v249 = vld [vmem:[%s1 + $0x24c] sm:$0xf]
  %v250 = vld [vmem:[%s1 + $0x250] sm:$0xf]
  %v251 = vld [vmem:[%s1 + $0x254] sm:$0xf]
  %v252 = vld [vmem:[%s1 + $0x258] sm:$0xf]
  %v253 = vld [vmem:[%s1 + $0x25c] sm:$0xf]
  %v254 = vld [vmem:[%s1 + $0x260] sm:$0xf]
  %v255 = vld [vmem:[%s1 + $0x264] sm:$0xf]
  %v256 = vld [vmem:[%s1 + $0x268] sm:$0xf]
  %v257 = vld [vmem:[%s1 + $0x26c] sm:$0xf]
  %v258 = vld [vmem:[%s1 + $0x270] sm:$0xf]
  %v259 = vld [vmem:[%s1 + $0x274] sm:$0xf]
  %v260 = vld [vmem:[%s1 + $0x278] sm:$0xf]
  %v261 = vld [vmem:[%s1 + $0x27c] sm:$0xf]
  %v262 = vld [vmem:[%s1 + $0x280] sm:$0xf]
  %v263 = vld [vmem:[%s1 + $0x284] sm:$0xf]
  %v264 = vld [vmem:[%s1 + $0x288] sm:$0xf]
  %v265 = vld [vmem:[%s1 + $0x28c] sm:$0xf]
  %v266 = vld [vmem:[%s1 + $0x290] sm:$0xf]
  %v267 = vld [vmem:[%s1 + $0x294] sm:$0xf]
  %v268 = vld [vmem:[%s1 + $0x298] sm:$0xf]
  %v269 = vld [vmem:[%s1 + $0x29c] sm:$0xf]
  %v270 = vld [vmem:[%s1 + $0x2a0] sm:$0xf]
  %v271 = vld [vmem:[%s1 + $0x2a4] sm:$0xf]
  %v272 = vld [vmem:[%s1 + $0x2a8] sm:$0xf]
  %v273 = vld [vmem:[%s1 + $0x2ac] sm:$0xf]
  %v274 = vld [vmem:[%s1 + $0x2b0] sm:$0xf]
  %v275 = vld [vmem:[%s1 + $0x2b4] sm:$0xf]
  %v276 = vld [vmem:[%s1 + $0x2b8] sm:$0xf]
  %v277 = vld [vmem:[%s1 + $0x2bc] sm:$0xf]
  %v278 = vld [vmem:[%s1 + $0x2c0] sm:$0xf]
  %v279 = vld [vmem:[%s1 + $0x2c4] sm:$0xf]
  %v280 = vld [vmem:[%s1 + $0x2c8] sm:$0xf]
  %v281 = vld [vmem:[%s1 + $0x2cc] sm:$0xf]
  %v282 = vld [vmem:[%s1 + $0x2d0] sm:$0xf]
  %v283 = vld [vmem:[%s1 + $0x2d4] sm:$0xf]
  %v284 = vld [vmem:[%s1 + $0x2d8] sm:$0xf]
  %v285 = vld [vmem:[%s1 + $0x2dc] sm:$0xf]
  %v286 = vld [vmem:[%s1 + $0x2e0] sm:$0xf]
  %v287 = vld [vmem:[%s1 + $0x2e4] sm:$0xf]
  %v288 = vld [vmem:[%s1 + $0x2e8] sm:$0xf]
  %v289 = vld [vmem:[%s1 + $0x2ec] sm:$0xf]
  %v290 = vld [vmem:[%s1 + $0x2f0] sm:$0xf]
  %v291 = vld [vmem:[%s1 + $0x2f4] sm:$0xf]
  %v292 = vld [vmem:[%s1 + $0x2f8] sm:$0xf]
  %v293 = vld [vmem:[%s1 + $0x2fc] sm:$0xf]
  %v294 = vld [vmem:[%s1 + $0x300] sm:$0xf]
  %v295 = vld [vmem:[%s1 + $0x304] sm:$0xf]
  %v296 = vld [vmem:[%s1 + $0x308] sm:$0xf]
  %v297 = vld [vmem:[%s1 + $0x30c] sm:$0xf]
  %v298 = vld [vmem:[%s1 + $0x310] sm:$0xf]
  %v299 = vld [vmem:[%s1 + $0x314] sm:$0xf]
  %v300 = vld [vmem:[%s1 + $0x318] sm:$0xf]
  %v301 = vld [vmem:[%s1 + $0x31c] sm:$0xf]
  %v386 = vunpack.c.l.b16 %v18
  %v387 = vunpack.c.h.b16 %v18
  %v388 = vunpack.c.l.b16 %v19
  %v389 = vunpack.c.h.b16 %v19
  %v390 = vunpack.c.l.b16 %v20
  %v391 = vunpack.c.h.b16 %v20
  %v392 = vunpack.c.l.b16 %v21
  %v393 = vunpack.c.h.b16 %v21
  %v394 = vunpack.c.l.b16 %v22
  %v395 = vunpack.c.h.b16 %v22
  %v396 = vunpack.c.l.b16 %v23
  %v397 = vunpack.c.h.b16 %v23
  %v398 = vunpack.c.l.b16 %v24
  %v399 = vunpack.c.l.b16 %v25
  %v400 = vunpack.c.h.b16 %v25
  %v401 = vunpack.c.l.b16 %v26
  %v402 = vunpack.c.h.b16 %v26
  %v403 = vunpack.c.l.b16 %v27
  %v404 = vunpack.c.h.b16 %v27
  %v405 = vunpack.c.l.b16 %v28
  %v406 = vunpack.c.h.b16 %v28
  %v407 = vunpack.c.l.b16 %v29
  %v408 = vunpack.c.h.b16 %v29
  %v409 = vunpack.c.l.b16 %v30
  %v410 = vunpack.c.h.b16 %v30
  %v411 = vunpack.c.l.b16 %v31
  %v412 = vunpack.c.l.b16 %v32
  %v413 = vunpack.c.h.b16 %v32
  %v414 = vunpack.c.l.b16 %v33
  %v415 = vunpack.c.h.b16 %v33
  %v416 = vunpack.c.l.b16 %v34
  %v417 = vunpack.c.h.b16 %v34
  %v418 = vunpack.c.l.b16 %v35
  %v419 = vunpack.c.h.b16 %v35
  %v420 = vunpack.c.l.b16 %v36
  %v421 = vunpack.c.h.b16 %v36
  %v422 = vunpack.c.l.b16 %v37
  %v423 = vunpack.c.h.b16 %v37
  %v424 = vunpack.c.l.b16 %v38
  %v425 = vunpack.c.l.b16 %v39
  %v426 = vunpack.c.h.b16 %v39
  %v427 = vunpack.c.l.b16 %v40
  %v428 = vunpack.c.h.b16 %v40
  %v429 = vunpack.c.l.b16 %v41
  %v430 = vunpack.c.h.b16 %v41
  %v431 = vunpack.c.l.b16 %v42
  %v432 = vunpack.c.h.b16 %v42
  %v433 = vunpack.c.l.b16 %v43
  %v434 = vunpack.c.h.b16 %v43
  %v435 = vunpack.c.l.b16 %v44
  %v436 = vunpack.c.h.b16 %v44
  %v437 = vunpack.c.l.b16 %v45
  %v438 = vunpack.c.l.b16 %v46
  %v439 = vunpack.c.h.b16 %v46
  %v440 = vunpack.c.l.b16 %v47
  %v441 = vunpack.c.h.b16 %v47
  %v442 = vunpack.c.l.b16 %v48
  %v443 = vunpack.c.h.b16 %v48
  %v444 = vunpack.c.l.b16 %v49
  %v445 = vunpack.c.h.b16 %v49
  %v446 = vunpack.c.l.b16 %v50
  %v447 = vunpack.c.h.b16 %v50
  %v448 = vunpack.c.l.b16 %v51
  %v449 = vunpack.c.h.b16 %v51
  %v450 = vunpack.c.l.b16 %v52
  %v451 = vunpack.c.l.b16 %v53
  %v452 = vunpack.c.h.b16 %v53
  %v453 = vunpack.c.l.b16 %v54
  %v454 = vunpack.c.h.b16 %v54
  %v455 = vunpack.c.l.b16 %v55
  %v456 = vunpack.c.h.b16 %v55
  %v457 = vunpack.c.l.b16 %v56
  %v458 = vunpack.c.h.b16 %v56
  %v459 = vunpack.c.l.b16 %v57
  %v460 = vunpack.c.h.b16 %v57
  %v461 = vunpack.c.l.b16 %v58
  %v462 = vunpack.c.h.b16 %v58
  %v463 = vunpack.c.l.b16 %v59
  %v464 = vunpack.c.l.b16 %v60
  %v465 = vunpack.c.h.b16 %v60
  %v466 = vunpack.c.l.b16 %v61
  %v467 = vunpack.c.h.b16 %v61
  %v468 = vunpack.c.l.b16 %v62
  %v469 = vunpack.c.h.b16 %v62
  %v470 = vunpack.c.l.b16 %v63
  %v471 = vunpack.c.h.b16 %v63
  %v472 = vunpack.c.l.b16 %v64
  %v473 = vunpack.c.h.b16 %v64
  %v474 = vunpack.c.l.b16 %v65
  %v475 = vunpack.c.h.b16 %v65
  %v476 = vunpack.c.l.b16 %v66
  %v477 = vunpack.c.l.b16 %v67
  %v478 = vunpack.c.h.b16 %v67
  %v479 = vunpack.c.l.b16 %v68
  %v480 = vunpack.c.h.b16 %v68
  %v481 = vunpack.c.l.b16 %v69
  %v482 = vunpack.c.h.b16 %v69
  %v483 = vunpack.c.l.b16 %v70
  %v484 = vunpack.c.h.b16 %v70
  %v485 = vunpack.c.l.b16 %v71
  %v486 = vunpack.c.h.b16 %v71
  %v487 = vunpack.c.l.b16 %v72
  %v488 = vunpack.c.h.b16 %v72
  %v489 = vunpack.c.l.b16 %v73
  %v490 = vunpack.c.l.b16 %v74
  %v491 = vunpack.c.h.b16 %v74
  %v492 = vunpack.c.l.b16 %v75
  %v493 = vunpack.c.h.b16 %v75
  %v494 = vunpack.c.l.b16 %v76
  %v495 = vunpack.c.h.b16 %v76
  %v496 = vunpack.c.l.b16 %v77
  %v497 = vunpack.c.h.b16 %v77
  %v498 = vunpack.c.l.b16 %v78
  %v499 = vunpack.c.h.b16 %v78
  %v500 = vunpack.c.l.b16 %v79
  %v501 = vunpack.c.h.b16 %v79
  %v502 = vunpack.c.l.b16 %v80
  %v503 = vunpack.c.l.b16 %v81
  %v504 = vunpack.c.h.b16 %v81
  %v505 = vunpack.c.l.b16 %v82
  %v506 = vunpack.c.h.b16 %v82
  %v507 = vunpack.c.l.b16 %v83
  %v508 = vunpack.c.h.b16 %v83
  %v509 = vunpack.c.l.b16 %v84
  %v510 = vunpack.c.h.b16 %v84
  %v511 = vunpack.c.l.b16 %v85
  %v512 = vunpack.c.h.b16 %v85
  %v513 = vunpack.c.l.b16 %v86
  %v514 = vunpack.c.h.b16 %v86
  %v515 = vunpack.c.l.b16 %v87
  %v516 = vunpack.c.l.b16 %v88
  %v517 = vunpack.c.h.b16 %v88
  %v518 = vunpack.c.l.b16 %v89
  %v519 = vunpack.c.h.b16 %v89
  %v520 = vunpack.c.l.b16 %v90
  %v521 = vunpack.c.h.b16 %v90
  %v522 = vunpack.c.l.b16 %v91
  %v523 = vunpack.c.h.b16 %v91
  %v524 = vunpack.c.l.b16 %v92
  %v525 = vunpack.c.h.b16 %v92
  %v526 = vunpack.c.l.b16 %v93
  %v527 = vunpack.c.h.b16 %v93
  %v528 = vunpack.c.l.b16 %v94
  %v529 = vunpack.c.l.b16 %v95
  %v530 = vunpack.c.h.b16 %v95
  %v531 = vunpack.c.l.b16 %v96
  %v532 = vunpack.c.h.b16 %v96
  %v533 = vunpack.c.l.b16 %v97
  %v534 = vunpack.c.h.b16 %v97
  %v535 = vunpack.c.l.b16 %v98
  %v536 = vunpack.c.h.b16 %v98
  %v537 = vunpack.c.l.b16 %v99
  %v538 = vunpack.c.h.b16 %v99
  %v539 = vunpack.c.l.b16 %v100
  %v540 = vunpack.c.h.b16 %v100
  %v541 = vunpack.c.l.b16 %v101
  %v542 = vpack.c.b16 %v399, %v386
  %v543 = vpack.c.b16 %v400, %v387
  %v544 = vpack.c.b16 %v401, %v388
  %v545 = vpack.c.b16 %v402, %v389
  %v546 = vpack.c.b16 %v403, %v390
  %v547 = vpack.c.b16 %v404, %v391
  %v548 = vpack.c.b16 %v405, %v392
  %v549 = vpack.c.b16 %v406, %v393
  %v550 = vpack.c.b16 %v407, %v394
  %v551 = vpack.c.b16 %v408, %v395
  %v552 = vpack.c.b16 %v409, %v396
  %v553 = vpack.c.b16 %v410, %v397
  %v554 = vpack.c.b16 %v411, %v398
  %v555 = vpack.c.b16 %v425, %v412
  %v556 = vpack.c.b16 %v426, %v413
  %v557 = vpack.c.b16 %v427, %v414
  %v558 = vpack.c.b16 %v428, %v415
  %v559 = vpack.c.b16 %v429, %v416
  %v560 = vpack.c.b16 %v430, %v417
  %v561 = vpack.c.b16 %v431, %v418
  %v562 = vpack.c.b16 %v432, %v419
  %v563 = vpack.c.b16 %v433, %v420
  %v564 = vpack.c.b16 %v434, %v421
  %v565 = vpack.c.b16 %v435, %v422
  %v566 = vpack.c.b16 %v436, %v423
  %v567 = vpack.c.b16 %v437, %v424
  %v568 = vpack.c.b16 %v451, %v438
  %v569 = vpack.c.b16 %v452, %v439
  %v570 = vpack.c.b16 %v453, %v440
  %v571 = vpack.c.b16 %v454, %v441
  %v572 = vpack.c.b16 %v455, %v442
  %v573 = vpack.c.b16 %v456, %v443
  %v574 = vpack.c.b16 %v457, %v444
  %v575 = vpack.c.b16 %v458, %v445
  %v576 = vpack.c.b16 %v459, %v446
  %v577 = vpack.c.b16 %v460, %v447
  %v578 = vpack.c.b16 %v461, %v448
  %v579 = vpack.c.b16 %v462, %v449
  %v580 = vpack.c.b16 %v463, %v450
  %v581 = vpack.c.b16 %v477, %v464
  %v582 = vpack.c.b16 %v478, %v465
  %v583 = vpack.c.b16 %v479, %v466
  %v584 = vpack.c.b16 %v480, %v467
  %v585 = vpack.c.b16 %v481, %v468
  %v586 = vpack.c.b16 %v482, %v469
  %v587 = vpack.c.b16 %v483, %v470
  %v588 = vpack.c.b16 %v484, %v471
  %v589 = vpack.c.b16 %v485, %v472
  %v590 = vpack.c.b16 %v486, %v473
  %v591 = vpack.c.b16 %v487, %v474
  %v592 = vpack.c.b16 %v488, %v475
  %v593 = vpack.c.b16 %v489, %v476
  %v594 = vpack.c.b16 %v503, %v490
  %v595 = vpack.c.b16 %v504, %v491
  %v596 = vpack.c.b16 %v505, %v492
  %v597 = vpack.c.b16 %v506, %v493
  %v598 = vpack.c.b16 %v507, %v494
  %v599 = vpack.c.b16 %v508, %v495
  %v600 = vpack.c.b16 %v509, %v496
  %v601 = vpack.c.b16 %v510, %v497
  %v602 = vpack.c.b16 %v511, %v498
  %v603 = vpack.c.b16 %v512, %v499
  %v604 = vpack.c.b16 %v513, %v500
  %v605 = vpack.c.b16 %v514, %v501
  %v606 = vpack.c.b16 %v515, %v502
  %v607 = vpack.c.b16 %v529, %v516
  %v608 = vpack.c.b16 %v530, %v517
  %v609 = vpack.c.b16 %v531, %v518
  %v610 = vpack.c.b16 %v532, %v519
  %v611 = vpack.c.b16 %v533, %v520
  %v612 = vpack.c.b16 %v534, %v521
  %v613 = vpack.c.b16 %v535, %v522
  %v614 = vpack.c.b16 %v536, %v523
  %v615 = vpack.c.b16 %v537, %v524
  %v616 = vpack.c.b16 %v538, %v525
  %v617 = vpack.c.b16 %v539, %v526
  %v618 = vpack.c.b16 %v540, %v527
  %v619 = vpack.c.b16 %v541, %v528
  %v892 = vunpack.c.l.b16 %v102
  %v893 = vunpack.c.l.b16 %v103
  %v894 = vunpack.c.l.b16 %v104
  %v895 = vunpack.c.l.b16 %v105
  %v896 = vunpack.c.l.b16 %v106
  %v897 = vunpack.c.l.b16 %v107
  %v898 = vunpack.c.l.b16 %v108
  %v899 = vunpack.c.l.b16 %v109
  %v900 = vunpack.c.l.b16 %v110
  %v901 = vunpack.c.l.b16 %v111
  %v902 = vunpack.c.l.b16 %v112
  %v903 = vunpack.c.l.b16 %v113
  %v904 = vunpack.c.l.b16 %v114
  %v905 = vunpack.c.l.b16 %v115
  %v906 = vunpack.c.l.b16 %v116
  %v907 = vunpack.c.l.b16 %v117
  %v908 = vunpack.c.l.b16 %v118
  %v909 = vunpack.c.l.b16 %v119
  %v910 = vunpack.c.l.b16 %v120
  %v911 = vunpack.c.l.b16 %v121
  %v912 = vunpack.c.l.b16 %v122
  %v913 = vunpack.c.l.b16 %v123
  %v914 = vunpack.c.l.b16 %v124
  %v915 = vunpack.c.l.b16 %v125
  %v916 = vunpack.c.l.b16 %v126
  %v917 = vunpack.c.l.b16 %v127
  %v918 = vunpack.c.l.b16 %v128
  %v919 = vunpack.c.l.b16 %v129
  %v920 = vunpack.c.l.b16 %v130
  %v921 = vunpack.c.l.b16 %v131
  %v922 = vunpack.c.l.b16 %v132
  %v923 = vunpack.c.l.b16 %v133
  %v924 = vunpack.c.l.b16 %v134
  %v925 = vunpack.c.l.b16 %v135
  %v926 = vunpack.c.l.b16 %v136
  %v927 = vunpack.c.l.b16 %v137
  %v928 = vunpack.c.l.b16 %v138
  %v929 = vunpack.c.l.b16 %v139
  %v930 = vunpack.c.l.b16 %v140
  %v931 = vunpack.c.l.b16 %v141
  %v932 = vunpack.c.l.b16 %v142
  %v933 = vunpack.c.l.b16 %v143
  %v934 = vunpack.c.l.b16 %v144
  %v935 = vunpack.c.l.b16 %v145
  %v936 = vunpack.c.l.b16 %v146
  %v937 = vunpack.c.l.b16 %v147
  %v938 = vunpack.c.l.b16 %v148
  %v939 = vunpack.c.l.b16 %v149
  %v940 = vunpack.c.l.b16 %v150
  %v941 = vunpack.c.l.b16 %v151
  %v942 = vunpack.c.l.b16 %v152
  %v943 = vunpack.c.l.b16 %v153
  %v944 = vunpack.c.l.b16 %v154
  %v945 = vunpack.c.l.b16 %v155
  %v946 = vunpack.c.l.b16 %v156
  %v947 = vunpack.c.l.b16 %v157
  %v948 = vunpack.c.l.b16 %v158
  %v949 = vunpack.c.l.b16 %v159
  %v950 = vunpack.c.l.b16 %v160
  %v951 = vunpack.c.l.b16 %v161
  %v952 = vunpack.c.l.b16 %v162
  %v953 = vunpack.c.l.b16 %v163
  %v954 = vunpack.c.l.b16 %v164
  %v955 = vunpack.c.l.b16 %v165
  %v956 = vunpack.c.l.b16 %v166
  %v957 = vunpack.c.l.b16 %v167
  %v958 = vunpack.c.l.b16 %v168
  %v959 = vunpack.c.l.b16 %v169
  %v960 = vunpack.c.l.b16 %v170
  %v961 = vunpack.c.l.b16 %v171
  %v962 = vunpack.c.l.b16 %v172
  %v963 = vunpack.c.l.b16 %v173
  %v964 = vunpack.c.l.b16 %v174
  %v965 = vunpack.c.l.b16 %v175
  %v966 = vunpack.c.l.b16 %v176
  %v967 = vunpack.c.l.b16 %v177
  %v968 = vunpack.c.l.b16 %v178
  %v969 = vunpack.c.l.b16 %v179
  %v970 = vunpack.c.l.b16 %v180
  %v971 = vunpack.c.l.b16 %v181
  %v972 = vunpack.c.l.b16 %v182
  %v973 = vunpack.c.l.b16 %v183
  %v974 = vunpack.c.l.b16 %v184
  %v975 = vunpack.c.l.b16 %v185
  %v976 = vunpack.c.l.b16 %v186
  %v977 = vunpack.c.l.b16 %v187
  %v978 = vunpack.c.l.b16 %v188
  %v979 = vunpack.c.l.b16 %v189
  %v980 = vunpack.c.l.b16 %v190
  %v981 = vunpack.c.l.b16 %v191
  %v982 = vunpack.c.l.b16 %v192
  %v983 = vunpack.c.l.b16 %v193
  %v984 = vunpack.c.l.b16 %v194
  %v985 = vunpack.c.l.b16 %v195
  %v986 = vunpack.c.l.b16 %v196
  %v987 = vunpack.c.l.b16 %v197
  %v988 = vunpack.c.l.b16 %v198
  %v989 = vunpack.c.l.b16 %v199
  %v990 = vunpack.c.l.b16 %v200
  %v991 = vunpack.c.l.b16 %v201
  %v992 = vunpack.c.l.b16 %v202
  %v993 = vunpack.c.l.b16 %v203
  %v994 = vunpack.c.l.b16 %v204
  %v995 = vunpack.c.l.b16 %v205
  %v996 = vunpack.c.l.b16 %v206
  %v997 = vunpack.c.l.b16 %v207
  %v998 = vunpack.c.l.b16 %v208
  %v999 = vunpack.c.l.b16 %v209
  %v1000 = vunpack.c.l.b16 %v210
  %v1001 = vunpack.c.l.b16 %v211
  %v1002 = vunpack.c.l.b16 %v212
  %v1003 = vunpack.c.l.b16 %v213
  %v1004 = vunpack.c.l.b16 %v214
  %v1005 = vunpack.c.l.b16 %v215
  %v1006 = vunpack.c.l.b16 %v216
  %v1007 = vunpack.c.l.b16 %v217
  %v1008 = vunpack.c.l.b16 %v218
  %v1009 = vunpack.c.l.b16 %v219
  %v1010 = vunpack.c.l.b16 %v220
  %v1011 = vunpack.c.l.b16 %v221
  %v1012 = vunpack.c.l.b16 %v222
  %v1013 = vunpack.c.l.b16 %v223
  %v1014 = vunpack.c.l.b16 %v224
  %v1015 = vunpack.c.l.b16 %v225
  %v1016 = vunpack.c.l.b16 %v226
  %v1017 = vunpack.c.l.b16 %v227
  %v1018 = vunpack.c.l.b16 %v228
  %v1019 = vunpack.c.l.b16 %v229
  %v1020 = vunpack.c.l.b16 %v230
  %v1021 = vunpack.c.l.b16 %v231
  %v1022 = vunpack.c.l.b16 %v232
  %v1023 = vunpack.c.l.b16 %v233
  %v1024 = vunpack.c.l.b16 %v234
  %v1025 = vunpack.c.l.b16 %v235
  %v1026 = vunpack.c.l.b16 %v236
  %v1027 = vunpack.c.l.b16 %v237
  %v1028 = vunpack.c.l.b16 %v238
  %v1029 = vunpack.c.l.b16 %v239
  %v1030 = vunpack.c.l.b16 %v240
  %v1031 = vunpack.c.l.b16 %v241
  %v1032 = vunpack.c.l.b16 %v242
  %v1033 = vunpack.c.l.b16 %v243
  %v1034 = vunpack.c.l.b16 %v244
  %v1035 = vunpack.c.l.b16 %v245
  %v1036 = vunpack.c.l.b16 %v246
  %v1037 = vunpack.c.l.b16 %v247
  %v1038 = vunpack.c.l.b16 %v248
  %v1039 = vunpack.c.l.b16 %v249
  %v1040 = vunpack.c.l.b16 %v250
  %v1041 = vunpack.c.l.b16 %v251
  %v1042 = vunpack.c.l.b16 %v252
  %v1043 = vunpack.c.l.b16 %v253
  %v1044 = vunpack.c.l.b16 %v254
  %v1045 = vunpack.c.l.b16 %v255
  %v1046 = vunpack.c.l.b16 %v256
  %v1047 = vunpack.c.l.b16 %v257
  %v1048 = vunpack.c.l.b16 %v258
  %v1049 = vunpack.c.l.b16 %v259
  %v1050 = vunpack.c.l.b16 %v260
  %v1051 = vunpack.c.l.b16 %v261
  %v1052 = vunpack.c.l.b16 %v262
  %v1053 = vunpack.c.l.b16 %v263
  %v1054 = vunpack.c.l.b16 %v264
  %v1055 = vunpack.c.l.b16 %v265
  %v1056 = vunpack.c.l.b16 %v266
  %v1057 = vunpack.c.l.b16 %v267
  %v1058 = vunpack.c.l.b16 %v268
  %v1059 = vunpack.c.l.b16 %v269
  %v1060 = vunpack.c.l.b16 %v270
  %v1061 = vunpack.c.l.b16 %v271
  %v1062 = vunpack.c.l.b16 %v272
  %v1063 = vunpack.c.l.b16 %v273
  %v1064 = vunpack.c.l.b16 %v274
  %v1065 = vunpack.c.l.b16 %v275
  %v1066 = vunpack.c.l.b16 %v276
  %v1067 = vunpack.c.l.b16 %v277
  %v1068 = vunpack.c.l.b16 %v278
  %v1069 = vunpack.c.l.b16 %v279
  %v1070 = vunpack.c.l.b16 %v280
  %v1071 = vunpack.c.l.b16 %v281
  %v1072 = vunpack.c.l.b16 %v282
  %v1073 = vunpack.c.l.b16 %v283
  %v1074 = vunpack.c.l.b16 %v284
  %v1075 = vunpack.c.l.b16 %v285
  %v1076 = vunpack.c.l.b16 %v286
  %v1077 = vunpack.c.l.b16 %v287
  %v1078 = vunpack.c.l.b16 %v288
  %v1079 = vunpack.c.l.b16 %v289
  %v1080 = vunpack.c.l.b16 %v290
  %v1081 = vunpack.c.l.b16 %v291
  %v1082 = vunpack.c.l.b16 %v292
  %v1083 = vunpack.c.l.b16 %v293
  %v1084 = vunpack.c.l.b16 %v294
  %v1085 = vunpack.c.l.b16 %v295
  %v1086 = vunpack.c.l.b16 %v296
  %v1087 = vunpack.c.l.b16 %v297
  %v1088 = vunpack.c.l.b16 %v298
  %v1089 = vunpack.c.l.b16 %v299
  %v1090 = vunpack.c.l.b16 %v300
  %v1091 = vunpack.c.l.b16 %v301
  %v1092 = vpack.c.b16 %v893, %v892
  %v1093 = vpack.c.b16 %v895, %v894
  %v1094 = vpack.c.b16 %v897, %v896
  %v1095 = vpack.c.b16 %v899, %v898
  %v1096 = vpack.c.b16 %v901, %v900
  %v1097 = vpack.c.b16 %v903, %v902
  %v1098 = vpack.c.b16 %v905, %v904
  %v1099 = vpack.c.b16 %v907, %v906
  %v1100 = vpack.c.b16 %v909, %v908
  %v1101 = vpack.c.b16 %v911, %v910
  %v1102 = vpack.c.b16 %v913, %v912
  %v1103 = vpack.c.b16 %v915, %v914
  %v1104 = vpack.c.b16 %v917, %v916
  %v1105 = vpack.c.b16 %v919, %v918
  %v1106 = vpack.c.b16 %v921, %v920
  %v1107 = vpack.c.b16 %v923, %v922
  %v1108 = vpack.c.b16 %v925, %v924
  %v1109 = vpack.c.b16 %v927, %v926
  %v1110 = vpack.c.b16 %v929, %v928
  %v1111 = vpack.c.b16 %v931, %v930
  %v1112 = vpack.c.b16 %v933, %v932
  %v1113 = vpack.c.b16 %v935, %v934
  %v1114 = vpack.c.b16 %v937, %v936
  %v1115 = vpack.c.b16 %v939, %v938
  %v1116 = vpack.c.b16 %v941, %v940
  %v1117 = vpack.c.b16 %v943, %v942
  %v1118 = vpack.c.b16 %v945, %v944
  %v1119 = vpack.c.b16 %v947, %v946
  %v1120 = vpack.c.b16 %v949, %v948
  %v1121 = vpack.c.b16 %v951, %v950
  %v1122 = vpack.c.b16 %v953, %v952
  %v1123 = vpack.c.b16 %v955, %v954
  %v1124 = vpack.c.b16 %v957, %v956
  %v1125 = vpack.c.b16 %v959, %v958
  %v1126 = vpack.c.b16 %v961, %v960
  %v1127 = vpack.c.b16 %v963, %v962
  %v1128 = vpack.c.b16 %v965, %v964
  %v1129 = vpack.c.b16 %v967, %v966
  %v1130 = vpack.c.b16 %v969, %v968
  %v1131 = vpack.c.b16 %v971, %v970
  %v1132 = vpack.c.b16 %v973, %v972
  %v1133 = vpack.c.b16 %v975, %v974
  %v1134 = vpack.c.b16 %v977, %v976
  %v1135 = vpack.c.b16 %v979, %v978
  %v1136 = vpack.c.b16 %v981, %v980
  %v1137 = vpack.c.b16 %v983, %v982
  %v1138 = vpack.c.b16 %v985, %v984
  %v1139 = vpack.c.b16 %v987, %v986
  %v1140 = vpack.c.b16 %v989, %v988
  %v1141 = vpack.c.b16 %v991, %v990
  %v1142 = vpack.c.b16 %v993, %v992
  %v1143 = vpack.c.b16 %v995, %v994
  %v1144 = vpack.c.b16 %v997, %v996
  %v1145 = vpack.c.b16 %v999, %v998
  %v1146 = vpack.c.b16 %v1001, %v1000
  %v1147 = vpack.c.b16 %v1003, %v1002
  %v1148 = vpack.c.b16 %v1005, %v1004
  %v1149 = vpack.c.b16 %v1007, %v1006
  %v1150 = vpack.c.b16 %v1009, %v1008
  %v1151 = vpack.c.b16 %v1011, %v1010
  %v1152 = vpack.c.b16 %v1013, %v1012
  %v1153 = vpack.c.b16 %v1015, %v1014
  %v1154 = vpack.c.b16 %v1017, %v1016
  %v1155 = vpack.c.b16 %v1019, %v1018
  %v1156 = vpack.c.b16 %v1021, %v1020
  %v1157 = vpack.c.b16 %v1023, %v1022
  %v1158 = vpack.c.b16 %v1025, %v1024
  %v1159 = vpack.c.b16 %v1027, %v1026
  %v1160 = vpack.c.b16 %v1029, %v1028
  %v1161 = vpack.c.b16 %v1031, %v1030
  %v1162 = vpack.c.b16 %v1033, %v1032
  %v1163 = vpack.c.b16 %v1035, %v1034
  %v1164 = vpack.c.b16 %v1037, %v1036
  %v1165 = vpack.c.b16 %v1039, %v1038
  %v1166 = vpack.c.b16 %v1041, %v1040
  %v1167 = vpack.c.b16 %v1043, %v1042
  %v1168 = vpack.c.b16 %v1045, %v1044
  %v1169 = vpack.c.b16 %v1047, %v1046
  %v1170 = vpack.c.b16 %v1049, %v1048
  %v1171 = vpack.c.b16 %v1051, %v1050
  %v1172 = vpack.c.b16 %v1053, %v1052
  %v1173 = vpack.c.b16 %v1055, %v1054
  %v1174 = vpack.c.b16 %v1057, %v1056
  %v1175 = vpack.c.b16 %v1059, %v1058
  %v1176 = vpack.c.b16 %v1061, %v1060
  %v1177 = vpack.c.b16 %v1063, %v1062
  %v1178 = vpack.c.b16 %v1065, %v1064
  %v1179 = vpack.c.b16 %v1067, %v1066
  %v1180 = vpack.c.b16 %v1069, %v1068
  %v1181 = vpack.c.b16 %v1071, %v1070
  %v1182 = vpack.c.b16 %v1073, %v1072
  %v1183 = vpack.c.b16 %v1075, %v1074
  %v1184 = vpack.c.b16 %v1077, %v1076
  %v1185 = vpack.c.b16 %v1079, %v1078
  %v1186 = vpack.c.b16 %v1081, %v1080
  %v1187 = vpack.c.b16 %v1083, %v1082
  %v1188 = vpack.c.b16 %v1085, %v1084
  %v1189 = vpack.c.b16 %v1087, %v1086
  %v1190 = vpack.c.b16 %v1089, %v1088
  %v1191 = vpack.c.b16 %v1091, %v1090
  %vm1292 = vcmask 523264
  %v1294 = vsel %vm1292, %v554, 0
  %v1297 = vsel %vm1292, %v567, 0
  %v1300 = vsel %vm1292, %v580, 0
  %v1303 = vsel %vm1292, %v593, 0
  %v1306 = vsel %vm1292, %v606, 0
  %v1309 = vsel %vm1292, %v619, 0
  %1311 = vmatprep.subr.bf16.mxu0 0
  %1312 = vmatpush1.bf16.msra.mxu0 %v1099
  %1313 = vmatprep.subr.bf16.mxu0 0
  %1314 = vmatpush1.bf16.msra.mxu0 %v1098
  %1315 = vmatprep.subr.bf16.mxu0 0
  %1316 = vmatpush1.bf16.msra.mxu0 %v1097
  %1317 = vmatprep.subr.bf16.mxu0 0
  %1318 = vmatpush1.bf16.msra.mxu0 %v1096
  %1319 = vmatprep.subr.bf16.mxu0 0
  %1320 = vmatpush1.bf16.msra.mxu0 %v1095
  %1321 = vmatprep.subr.bf16.mxu0 0
  %1322 = vmatpush1.bf16.msra.mxu0 %v1094
  %1323 = vmatprep.subr.bf16.mxu0 0
  %1324 = vmatpush1.bf16.msra.mxu0 %v1093
  %1325 = vmatprep.subr.bf16.mxu0 0
  %1326 = vmatpush1.bf16.msra.mxu0 %v1092
  %1327 = vmatprep.subr.bf16.mxu0 0
  %1328 = vmatpush2.bf16.msra.mxu0 %v1107
  %1329 = vmatprep.subr.bf16.mxu0 0
  %1330 = vmatpush2.bf16.msra.mxu0 %v1106
  %1331 = vmatprep.subr.bf16.mxu0 0
  %1332 = vmatpush2.bf16.msra.mxu0 %v1105
  %1333 = vmatprep.subr.bf16.mxu0 0
  %1334 = vmatpush2.bf16.msra.mxu0 %v1104
  %1335 = vmatprep.subr.bf16.mxu0 0
  %1336 = vmatpush2.bf16.msra.mxu0 %v1103
  %1337 = vmatprep.subr.bf16.mxu0 0
  %1338 = vmatpush2.bf16.msra.mxu0 %v1102
  %1339 = vmatprep.subr.bf16.mxu0 0
  %1340 = vmatpush2.bf16.msra.mxu0 %v1101
  %1341 = vmatprep.subr.bf16.mxu0 0
  %1342 = vmatpush2.bf16.msra.mxu0 %v1100
  %1343 = vmatprep.mubr.bf16.mxu0 %v543
  %1344 = vmatmul.mubr.bf16.gmra.mxu0 %v542
  %v1345 = vpop.f32.mrf.mxu0
  %v1346 = vadd.f32 0.0, %v1345
  %v1347 = vpop.f32.mrf.mxu0
  %v1348 = vpop.f32.mrf.mxu0
  %v1349 = vadd.f32 0.0, %v1348
  %v1350 = vpop.f32.mrf.mxu0
  %1351 = vmatprep.mubr.bf16.mxu0 %v556
  %1352 = vmatmul.mubr.bf16.gmra.mxu0 %v555
  %v1353 = vpop.f32.mrf.mxu0
  %v1354 = vadd.f32 0.0, %v1353
  %v1355 = vpop.f32.mrf.mxu0
  %v1356 = vpop.f32.mrf.mxu0
  %v1357 = vadd.f32 0.0, %v1356
  %v1358 = vpop.f32.mrf.mxu0
  %1359 = vmatprep.mubr.bf16.mxu0 %v569
  %1360 = vmatmul.mubr.bf16.gmra.mxu0 %v568
  %v1361 = vpop.f32.mrf.mxu0
  %v1362 = vadd.f32 0.0, %v1361
  %v1363 = vpop.f32.mrf.mxu0
  %v1364 = vpop.f32.mrf.mxu0
  %v1365 = vadd.f32 0.0, %v1364
  %v1366 = vpop.f32.mrf.mxu0
  %1367 = vmatprep.mubr.bf16.mxu0 %v582
  %1368 = vmatmul.mubr.bf16.gmra.mxu0 %v581
  %v1369 = vpop.f32.mrf.mxu0
  %v1370 = vadd.f32 0.0, %v1369
  %v1371 = vpop.f32.mrf.mxu0
  %v1372 = vpop.f32.mrf.mxu0
  %v1373 = vadd.f32 0.0, %v1372
  %v1374 = vpop.f32.mrf.mxu0
  %1375 = vmatprep.mubr.bf16.mxu0 %v595
  %1376 = vmatmul.mubr.bf16.gmra.mxu0 %v594
  %v1377 = vpop.f32.mrf.mxu0
  %v1378 = vadd.f32 0.0, %v1377
  %v1379 = vpop.f32.mrf.mxu0
  %v1380 = vpop.f32.mrf.mxu0
  %v1381 = vadd.f32 0.0, %v1380
  %v1382 = vpop.f32.mrf.mxu0
  %1383 = vmatprep.mubr.bf16.mxu0 %v608
  %1384 = vmatmul.mubr.bf16.gmra.mxu0 %v607
  %v1385 = vpop.f32.mrf.mxu0
  %v1386 = vadd.f32 0.0, %v1385
  %v1387 = vpop.f32.mrf.mxu0
  %v1388 = vpop.f32.mrf.mxu0
  %v1389 = vadd.f32 0.0, %v1388
  %v1390 = vpop.f32.mrf.mxu0
  %1391 = vdwg.mxu0
  %1392 = vmatprep.subr.bf16.mxu0 0
  %1393 = vmatpush1.bf16.msra.mxu0 %v1115
  %1394 = vmatprep.subr.bf16.mxu0 0
  %1395 = vmatpush1.bf16.msra.mxu0 %v1114
  %1396 = vmatprep.subr.bf16.mxu0 0
  %1397 = vmatpush1.bf16.msra.mxu0 %v1113
  %1398 = vmatprep.subr.bf16.mxu0 0
  %1399 = vmatpush1.bf16.msra.mxu0 %v1112
  %1400 = vmatprep.subr.bf16.mxu0 0
  %1401 = vmatpush1.bf16.msra.mxu0 %v1111
  %1402 = vmatprep.subr.bf16.mxu0 0
  %1403 = vmatpush1.bf16.msra.mxu0 %v1110
  %1404 = vmatprep.subr.bf16.mxu0 0
  %1405 = vmatpush1.bf16.msra.mxu0 %v1109
  %1406 = vmatprep.subr.bf16.mxu0 0
  %1407 = vmatpush1.bf16.msra.mxu0 %v1108
  %1408 = vmatprep.subr.bf16.mxu0 0
  %1409 = vmatpush2.bf16.msra.mxu0 %v1123
  %1410 = vmatprep.subr.bf16.mxu0 0
  %1411 = vmatpush2.bf16.msra.mxu0 %v1122
  %1412 = vmatprep.subr.bf16.mxu0 0
  %1413 = vmatpush2.bf16.msra.mxu0 %v1121
  %1414 = vmatprep.subr.bf16.mxu0 0
  %1415 = vmatpush2.bf16.msra.mxu0 %v1120
  %1416 = vmatprep.subr.bf16.mxu0 0
  %1417 = vmatpush2.bf16.msra.mxu0 %v1119
  %1418 = vmatprep.subr.bf16.mxu0 0
  %1419 = vmatpush2.bf16.msra.mxu0 %v1118
  %1420 = vmatprep.subr.bf16.mxu0 0
  %1421 = vmatpush2.bf16.msra.mxu0 %v1117
  %1422 = vmatprep.subr.bf16.mxu0 0
  %1423 = vmatpush2.bf16.msra.mxu0 %v1116
  %1424 = vmatprep.mubr.bf16.mxu0 %v545
  %1425 = vmatmul.mubr.bf16.gmra.mxu0 %v544
  %v1426 = vpop.f32.mrf.mxu0
  %v1427 = vadd.f32 %v1346, %v1426
  %v1428 = vpop.f32.mrf.mxu0
  %v1429 = vpop.f32.mrf.mxu0
  %v1430 = vadd.f32 %v1349, %v1429
  %v1431 = vpop.f32.mrf.mxu0
  %1432 = vmatprep.mubr.bf16.mxu0 %v558
  %1433 = vmatmul.mubr.bf16.gmra.mxu0 %v557
  %v1434 = vpop.f32.mrf.mxu0
  %v1435 = vadd.f32 %v1354, %v1434
  %v1436 = vpop.f32.mrf.mxu0
  %v1437 = vpop.f32.mrf.mxu0
  %v1438 = vadd.f32 %v1357, %v1437
  %v1439 = vpop.f32.mrf.mxu0
  %1440 = vmatprep.mubr.bf16.mxu0 %v571
  %1441 = vmatmul.mubr.bf16.gmra.mxu0 %v570
  %v1442 = vpop.f32.mrf.mxu0
  %v1443 = vadd.f32 %v1362, %v1442
  %v1444 = vpop.f32.mrf.mxu0
  %v1445 = vpop.f32.mrf.mxu0
  %v1446 = vadd.f32 %v1365, %v1445
  %v1447 = vpop.f32.mrf.mxu0
  %1448 = vmatprep.mubr.bf16.mxu0 %v584
  %1449 = vmatmul.mubr.bf16.gmra.mxu0 %v583
  %v1450 = vpop.f32.mrf.mxu0
  %v1451 = vadd.f32 %v1370, %v1450
  %v1452 = vpop.f32.mrf.mxu0
  %v1453 = vpop.f32.mrf.mxu0
  %v1454 = vadd.f32 %v1373, %v1453
  %v1455 = vpop.f32.mrf.mxu0
  %1456 = vmatprep.mubr.bf16.mxu0 %v597
  %1457 = vmatmul.mubr.bf16.gmra.mxu0 %v596
  %v1458 = vpop.f32.mrf.mxu0
  %v1459 = vadd.f32 %v1378, %v1458
  %v1460 = vpop.f32.mrf.mxu0
  %v1461 = vpop.f32.mrf.mxu0
  %v1462 = vadd.f32 %v1381, %v1461
  %v1463 = vpop.f32.mrf.mxu0
  %1464 = vmatprep.mubr.bf16.mxu0 %v610
  %1465 = vmatmul.mubr.bf16.gmra.mxu0 %v609
  %v1466 = vpop.f32.mrf.mxu0
  %v1467 = vadd.f32 %v1386, %v1466
  %v1468 = vpop.f32.mrf.mxu0
  %v1469 = vpop.f32.mrf.mxu0
  %v1470 = vadd.f32 %v1389, %v1469
  %v1471 = vpop.f32.mrf.mxu0
  %1472 = vdwg.mxu0
  %1473 = vmatprep.subr.bf16.mxu0 0
  %1474 = vmatpush1.bf16.msra.mxu0 %v1131
  %1475 = vmatprep.subr.bf16.mxu0 0
  %1476 = vmatpush1.bf16.msra.mxu0 %v1130
  %1477 = vmatprep.subr.bf16.mxu0 0
  %1478 = vmatpush1.bf16.msra.mxu0 %v1129
  %1479 = vmatprep.subr.bf16.mxu0 0
  %1480 = vmatpush1.bf16.msra.mxu0 %v1128
  %1481 = vmatprep.subr.bf16.mxu0 0
  %1482 = vmatpush1.bf16.msra.mxu0 %v1127
  %1483 = vmatprep.subr.bf16.mxu0 0
  %1484 = vmatpush1.bf16.msra.mxu0 %v1126
  %1485 = vmatprep.subr.bf16.mxu0 0
  %1486 = vmatpush1.bf16.msra.mxu0 %v1125
  %1487 = vmatprep.subr.bf16.mxu0 0
  %1488 = vmatpush1.bf16.msra.mxu0 %v1124
  %1489 = vmatprep.subr.bf16.mxu0 0
  %1490 = vmatpush2.bf16.msra.mxu0 %v1139
  %1491 = vmatprep.subr.bf16.mxu0 0
  %1492 = vmatpush2.bf16.msra.mxu0 %v1138
  %1493 = vmatprep.subr.bf16.mxu0 0
  %1494 = vmatpush2.bf16.msra.mxu0 %v1137
  %1495 = vmatprep.subr.bf16.mxu0 0
  %1496 = vmatpush2.bf16.msra.mxu0 %v1136
  %1497 = vmatprep.subr.bf16.mxu0 0
  %1498 = vmatpush2.bf16.msra.mxu0 %v1135
  %1499 = vmatprep.subr.bf16.mxu0 0
  %1500 = vmatpush2.bf16.msra.mxu0 %v1134
  %1501 = vmatprep.subr.bf16.mxu0 0
  %1502 = vmatpush2.bf16.msra.mxu0 %v1133
  %1503 = vmatprep.subr.bf16.mxu0 0
  %1504 = vmatpush2.bf16.msra.mxu0 %v1132
  %1505 = vmatprep.mubr.bf16.mxu0 %v547
  %1506 = vmatmul.mubr.bf16.gmra.mxu0 %v546
  %v1507 = vpop.f32.mrf.mxu0
  %v1508 = vadd.f32 %v1427, %v1507
  %v1509 = vpop.f32.mrf.mxu0
  %v1510 = vpop.f32.mrf.mxu0
  %v1511 = vadd.f32 %v1430, %v1510
  %v1512 = vpop.f32.mrf.mxu0
  %1513 = vmatprep.mubr.bf16.mxu0 %v560
  %1514 = vmatmul.mubr.bf16.gmra.mxu0 %v559
  %v1515 = vpop.f32.mrf.mxu0
  %v1516 = vadd.f32 %v1435, %v1515
  %v1517 = vpop.f32.mrf.mxu0
  %v1518 = vpop.f32.mrf.mxu0
  %v1519 = vadd.f32 %v1438, %v1518
  %v1520 = vpop.f32.mrf.mxu0
  %1521 = vmatprep.mubr.bf16.mxu0 %v573
  %1522 = vmatmul.mubr.bf16.gmra.mxu0 %v572
  %v1523 = vpop.f32.mrf.mxu0
  %v1524 = vadd.f32 %v1443, %v1523
  %v1525 = vpop.f32.mrf.mxu0
  %v1526 = vpop.f32.mrf.mxu0
  %v1527 = vadd.f32 %v1446, %v1526
  %v1528 = vpop.f32.mrf.mxu0
  %1529 = vmatprep.mubr.bf16.mxu0 %v586
  %1530 = vmatmul.mubr.bf16.gmra.mxu0 %v585
  %v1531 = vpop.f32.mrf.mxu0
  %v1532 = vadd.f32 %v1451, %v1531
  %v1533 = vpop.f32.mrf.mxu0
  %v1534 = vpop.f32.mrf.mxu0
  %v1535 = vadd.f32 %v1454, %v1534
  %v1536 = vpop.f32.mrf.mxu0
  %1537 = vmatprep.mubr.bf16.mxu0 %v599
  %1538 = vmatmul.mubr.bf16.gmra.mxu0 %v598
  %v1539 = vpop.f32.mrf.mxu0
  %v1540 = vadd.f32 %v1459, %v1539
  %v1541 = vpop.f32.mrf.mxu0
  %v1542 = vpop.f32.mrf.mxu0
  %v1543 = vadd.f32 %v1462, %v1542
  %v1544 = vpop.f32.mrf.mxu0
  %1545 = vmatprep.mubr.bf16.mxu0 %v612
  %1546 = vmatmul.mubr.bf16.gmra.mxu0 %v611
  %v1547 = vpop.f32.mrf.mxu0
  %v1548 = vadd.f32 %v1467, %v1547
  %v1549 = vpop.f32.mrf.mxu0
  %v1550 = vpop.f32.mrf.mxu0
  %v1551 = vadd.f32 %v1470, %v1550
  %v1552 = vpop.f32.mrf.mxu0
  %1553 = vdwg.mxu0
  %1554 = vmatprep.subr.bf16.mxu0 0
  %1555 = vmatpush1.bf16.msra.mxu0 %v1147
  %1556 = vmatprep.subr.bf16.mxu0 0
  %1557 = vmatpush1.bf16.msra.mxu0 %v1146
  %1558 = vmatprep.subr.bf16.mxu0 0
  %1559 = vmatpush1.bf16.msra.mxu0 %v1145
  %1560 = vmatprep.subr.bf16.mxu0 0
  %1561 = vmatpush1.bf16.msra.mxu0 %v1144
  %1562 = vmatprep.subr.bf16.mxu0 0
  %1563 = vmatpush1.bf16.msra.mxu0 %v1143
  %1564 = vmatprep.subr.bf16.mxu0 0
  %1565 = vmatpush1.bf16.msra.mxu0 %v1142
  %1566 = vmatprep.subr.bf16.mxu0 0
  %1567 = vmatpush1.bf16.msra.mxu0 %v1141
  %1568 = vmatprep.subr.bf16.mxu0 0
  %1569 = vmatpush1.bf16.msra.mxu0 %v1140
  %1570 = vmatprep.subr.bf16.mxu0 0
  %1571 = vmatpush2.bf16.msra.mxu0 %v1155
  %1572 = vmatprep.subr.bf16.mxu0 0
  %1573 = vmatpush2.bf16.msra.mxu0 %v1154
  %1574 = vmatprep.subr.bf16.mxu0 0
  %1575 = vmatpush2.bf16.msra.mxu0 %v1153
  %1576 = vmatprep.subr.bf16.mxu0 0
  %1577 = vmatpush2.bf16.msra.mxu0 %v1152
  %1578 = vmatprep.subr.bf16.mxu0 0
  %1579 = vmatpush2.bf16.msra.mxu0 %v1151
  %1580 = vmatprep.subr.bf16.mxu0 0
  %1581 = vmatpush2.bf16.msra.mxu0 %v1150
  %1582 = vmatprep.subr.bf16.mxu0 0
  %1583 = vmatpush2.bf16.msra.mxu0 %v1149
  %1584 = vmatprep.subr.bf16.mxu0 0
  %1585 = vmatpush2.bf16.msra.mxu0 %v1148
  %1586 = vmatprep.mubr.bf16.mxu0 %v549
  %1587 = vmatmul.mubr.bf16.gmra.mxu0 %v548
  %v1588 = vpop.f32.mrf.mxu0
  %v1589 = vadd.f32 %v1508, %v1588
  %v1590 = vpop.f32.mrf.mxu0
  %v1591 = vpop.f32.mrf.mxu0
  %v1592 = vadd.f32 %v1511, %v1591
  %v1593 = vpop.f32.mrf.mxu0
  %1594 = vmatprep.mubr.bf16.mxu0 %v562
  %1595 = vmatmul.mubr.bf16.gmra.mxu0 %v561
  %v1596 = vpop.f32.mrf.mxu0
  %v1597 = vadd.f32 %v1516, %v1596
  %v1598 = vpop.f32.mrf.mxu0
  %v1599 = vpop.f32.mrf.mxu0
  %v1600 = vadd.f32 %v1519, %v1599
  %v1601 = vpop.f32.mrf.mxu0
  %1602 = vmatprep.mubr.bf16.mxu0 %v575
  %1603 = vmatmul.mubr.bf16.gmra.mxu0 %v574
  %v1604 = vpop.f32.mrf.mxu0
  %v1605 = vadd.f32 %v1524, %v1604
  %v1606 = vpop.f32.mrf.mxu0
  %v1607 = vpop.f32.mrf.mxu0
  %v1608 = vadd.f32 %v1527, %v1607
  %v1609 = vpop.f32.mrf.mxu0
  %1610 = vmatprep.mubr.bf16.mxu0 %v588
  %1611 = vmatmul.mubr.bf16.gmra.mxu0 %v587
  %v1612 = vpop.f32.mrf.mxu0
  %v1613 = vadd.f32 %v1532, %v1612
  %v1614 = vpop.f32.mrf.mxu0
  %v1615 = vpop.f32.mrf.mxu0
  %v1616 = vadd.f32 %v1535, %v1615
  %v1617 = vpop.f32.mrf.mxu0
  %1618 = vmatprep.mubr.bf16.mxu0 %v601
  %1619 = vmatmul.mubr.bf16.gmra.mxu0 %v600
  %v1620 = vpop.f32.mrf.mxu0
  %v1621 = vadd.f32 %v1540, %v1620
  %v1622 = vpop.f32.mrf.mxu0
  %v1623 = vpop.f32.mrf.mxu0
  %v1624 = vadd.f32 %v1543, %v1623
  %v1625 = vpop.f32.mrf.mxu0
  %1626 = vmatprep.mubr.bf16.mxu0 %v614
  %1627 = vmatmul.mubr.bf16.gmra.mxu0 %v613
  %v1628 = vpop.f32.mrf.mxu0
  %v1629 = vadd.f32 %v1548, %v1628
  %v1630 = vpop.f32.mrf.mxu0
  %v1631 = vpop.f32.mrf.mxu0
  %v1632 = vadd.f32 %v1551, %v1631
  %v1633 = vpop.f32.mrf.mxu0
  %1634 = vdwg.mxu0
  %1635 = vmatprep.subr.bf16.mxu0 0
  %1636 = vmatpush1.bf16.msra.mxu0 %v1163
  %1637 = vmatprep.subr.bf16.mxu0 0
  %1638 = vmatpush1.bf16.msra.mxu0 %v1162
  %1639 = vmatprep.subr.bf16.mxu0 0
  %1640 = vmatpush1.bf16.msra.mxu0 %v1161
  %1641 = vmatprep.subr.bf16.mxu0 0
  %1642 = vmatpush1.bf16.msra.mxu0 %v1160
  %1643 = vmatprep.subr.bf16.mxu0 0
  %1644 = vmatpush1.bf16.msra.mxu0 %v1159
  %1645 = vmatprep.subr.bf16.mxu0 0
  %1646 = vmatpush1.bf16.msra.mxu0 %v1158
  %1647 = vmatprep.subr.bf16.mxu0 0
  %1648 = vmatpush1.bf16.msra.mxu0 %v1157
  %1649 = vmatprep.subr.bf16.mxu0 0
  %1650 = vmatpush1.bf16.msra.mxu0 %v1156
  %1651 = vmatprep.subr.bf16.mxu0 0
  %1652 = vmatpush2.bf16.msra.mxu0 %v1171
  %1653 = vmatprep.subr.bf16.mxu0 0
  %1654 = vmatpush2.bf16.msra.mxu0 %v1170
  %1655 = vmatprep.subr.bf16.mxu0 0
  %1656 = vmatpush2.bf16.msra.mxu0 %v1169
  %1657 = vmatprep.subr.bf16.mxu0 0
  %1658 = vmatpush2.bf16.msra.mxu0 %v1168
  %1659 = vmatprep.subr.bf16.mxu0 0
  %1660 = vmatpush2.bf16.msra.mxu0 %v1167
  %1661 = vmatprep.subr.bf16.mxu0 0
  %1662 = vmatpush2.bf16.msra.mxu0 %v1166
  %1663 = vmatprep.subr.bf16.mxu0 0
  %1664 = vmatpush2.bf16.msra.mxu0 %v1165
  %1665 = vmatprep.subr.bf16.mxu0 0
  %1666 = vmatpush2.bf16.msra.mxu0 %v1164
  %1667 = vmatprep.mubr.bf16.mxu0 %v551
  %1668 = vmatmul.mubr.bf16.gmra.mxu0 %v550
  %v1669 = vpop.f32.mrf.mxu0
  %v1670 = vadd.f32 %v1589, %v1669
  %v1671 = vpop.f32.mrf.mxu0
  %v1672 = vpop.f32.mrf.mxu0
  %v1673 = vadd.f32 %v1592, %v1672
  %v1674 = vpop.f32.mrf.mxu0
  %1675 = vmatprep.mubr.bf16.mxu0 %v564
  %1676 = vmatmul.mubr.bf16.gmra.mxu0 %v563
  %v1677 = vpop.f32.mrf.mxu0
  %v1678 = vadd.f32 %v1597, %v1677
  %v1679 = vpop.f32.mrf.mxu0
  %v1680 = vpop.f32.mrf.mxu0
  %v1681 = vadd.f32 %v1600, %v1680
  %v1682 = vpop.f32.mrf.mxu0
  %1683 = vmatprep.mubr.bf16.mxu0 %v577
  %1684 = vmatmul.mubr.bf16.gmra.mxu0 %v576
  %v1685 = vpop.f32.mrf.mxu0
  %v1686 = vadd.f32 %v1605, %v1685
  %v1687 = vpop.f32.mrf.mxu0
  %v1688 = vpop.f32.mrf.mxu0
  %v1689 = vadd.f32 %v1608, %v1688
  %v1690 = vpop.f32.mrf.mxu0
  %1691 = vmatprep.mubr.bf16.mxu0 %v590
  %1692 = vmatmul.mubr.bf16.gmra.mxu0 %v589
  %v1693 = vpop.f32.mrf.mxu0
  %v1694 = vadd.f32 %v1613, %v1693
  %v1695 = vpop.f32.mrf.mxu0
  %v1696 = vpop.f32.mrf.mxu0
  %v1697 = vadd.f32 %v1616, %v1696
  %v1698 = vpop.f32.mrf.mxu0
  %1699 = vmatprep.mubr.bf16.mxu0 %v603
  %1700 = vmatmul.mubr.bf16.gmra.mxu0 %v602
  %v1701 = vpop.f32.mrf.mxu0
  %v1702 = vadd.f32 %v1621, %v1701
  %v1703 = vpop.f32.mrf.mxu0
  %v1704 = vpop.f32.mrf.mxu0
  %v1705 = vadd.f32 %v1624, %v1704
  %v1706 = vpop.f32.mrf.mxu0
  %1707 = vmatprep.mubr.bf16.mxu0 %v616
  %1708 = vmatmul.mubr.bf16.gmra.mxu0 %v615
  %v1709 = vpop.f32.mrf.mxu0
  %v1710 = vadd.f32 %v1629, %v1709
  %v1711 = vpop.f32.mrf.mxu0
  %v1712 = vpop.f32.mrf.mxu0
  %v1713 = vadd.f32 %v1632, %v1712
  %v1714 = vpop.f32.mrf.mxu0
  %1715 = vdwg.mxu0
  %1716 = vmatprep.subr.bf16.mxu0 0
  %1717 = vmatpush1.bf16.msra.mxu0 %v1179
  %1718 = vmatprep.subr.bf16.mxu0 0
  %1719 = vmatpush1.bf16.msra.mxu0 %v1178
  %1720 = vmatprep.subr.bf16.mxu0 0
  %1721 = vmatpush1.bf16.msra.mxu0 %v1177
  %1722 = vmatprep.subr.bf16.mxu0 0
  %1723 = vmatpush1.bf16.msra.mxu0 %v1176
  %1724 = vmatprep.subr.bf16.mxu0 0
  %1725 = vmatpush1.bf16.msra.mxu0 %v1175
  %1726 = vmatprep.subr.bf16.mxu0 0
  %1727 = vmatpush1.bf16.msra.mxu0 %v1174
  %1728 = vmatprep.subr.bf16.mxu0 0
  %1729 = vmatpush1.bf16.msra.mxu0 %v1173
  %1730 = vmatprep.subr.bf16.mxu0 0
  %1731 = vmatpush1.bf16.msra.mxu0 %v1172
  %1732 = vmatprep.subr.bf16.mxu0 0
  %1733 = vmatpush2.bf16.msra.mxu0 %v1187
  %1734 = vmatprep.subr.bf16.mxu0 0
  %1735 = vmatpush2.bf16.msra.mxu0 %v1186
  %1736 = vmatprep.subr.bf16.mxu0 0
  %1737 = vmatpush2.bf16.msra.mxu0 %v1185
  %1738 = vmatprep.subr.bf16.mxu0 0
  %1739 = vmatpush2.bf16.msra.mxu0 %v1184
  %1740 = vmatprep.subr.bf16.mxu0 0
  %1741 = vmatpush2.bf16.msra.mxu0 %v1183
  %1742 = vmatprep.subr.bf16.mxu0 0
  %1743 = vmatpush2.bf16.msra.mxu0 %v1182
  %1744 = vmatprep.subr.bf16.mxu0 0
  %1745 = vmatpush2.bf16.msra.mxu0 %v1181
  %1746 = vmatprep.subr.bf16.mxu0 0
  %1747 = vmatpush2.bf16.msra.mxu0 %v1180
  %1748 = vmatprep.mubr.bf16.mxu0 %v553
  %1749 = vmatmul.mubr.bf16.gmra.mxu0 %v552
  %v1750 = vpop.f32.mrf.mxu0
  %v1751 = vadd.f32 %v1670, %v1750
  %v1752 = vpop.f32.mrf.mxu0
  %v1753 = vpop.f32.mrf.mxu0
  %v1754 = vadd.f32 %v1673, %v1753
  %v1755 = vpop.f32.mrf.mxu0
  %1756 = vmatprep.mubr.bf16.mxu0 %v566
  %1757 = vmatmul.mubr.bf16.gmra.mxu0 %v565
  %v1758 = vpop.f32.mrf.mxu0
  %v1759 = vadd.f32 %v1678, %v1758
  %v1760 = vpop.f32.mrf.mxu0
  %v1761 = vpop.f32.mrf.mxu0
  %v1762 = vadd.f32 %v1681, %v1761
  %v1763 = vpop.f32.mrf.mxu0
  %1764 = vmatprep.mubr.bf16.mxu0 %v579
  %1765 = vmatmul.mubr.bf16.gmra.mxu0 %v578
  %v1766 = vpop.f32.mrf.mxu0
  %v1767 = vadd.f32 %v1686, %v1766
  %v1768 = vpop.f32.mrf.mxu0
  %v1769 = vpop.f32.mrf.mxu0
  %v1770 = vadd.f32 %v1689, %v1769
  %v1771 = vpop.f32.mrf.mxu0
  %1772 = vmatprep.mubr.bf16.mxu0 %v592
  %1773 = vmatmul.mubr.bf16.gmra.mxu0 %v591
  %v1774 = vpop.f32.mrf.mxu0
  %v1775 = vadd.f32 %v1694, %v1774
  %v1776 = vpop.f32.mrf.mxu0
  %v1777 = vpop.f32.mrf.mxu0
  %v1778 = vadd.f32 %v1697, %v1777
  %v1779 = vpop.f32.mrf.mxu0
  %1780 = vmatprep.mubr.bf16.mxu0 %v605
  %1781 = vmatmul.mubr.bf16.gmra.mxu0 %v604
  %v1782 = vpop.f32.mrf.mxu0
  %v1783 = vadd.f32 %v1702, %v1782
  %v1784 = vpop.f32.mrf.mxu0
  %v1785 = vpop.f32.mrf.mxu0
  %v1786 = vadd.f32 %v1705, %v1785
  %v1787 = vpop.f32.mrf.mxu0
  %1788 = vmatprep.mubr.bf16.mxu0 %v618
  %1789 = vmatmul.mubr.bf16.gmra.mxu0 %v617
  %v1790 = vpop.f32.mrf.mxu0
  %v1791 = vadd.f32 %v1710, %v1790
  %v1792 = vpop.f32.mrf.mxu0
  %v1793 = vpop.f32.mrf.mxu0
  %v1794 = vadd.f32 %v1713, %v1793
  %v1795 = vpop.f32.mrf.mxu0
  %1796 = vdwg.mxu0
  %1797 = vmatprep.subr.bf16.mxu0 0
  %1798 = vmatpush1.bf16.msra.mxu0 0
  %1799 = vmatprep.subr.bf16.mxu0 0
  %1800 = vmatpush1.bf16.msra.mxu0 0
  %1801 = vmatprep.subr.bf16.mxu0 0
  %1802 = vmatpush1.bf16.msra.mxu0 0
  %1803 = vmatprep.subr.bf16.mxu0 0
  %1804 = vmatpush1.bf16.msra.mxu0 0
  %1805 = vmatprep.subr.bf16.mxu0 0
  %1806 = vmatpush1.bf16.msra.mxu0 %v1191
  %1807 = vmatprep.subr.bf16.mxu0 0
  %1808 = vmatpush1.bf16.msra.mxu0 %v1190
  %1809 = vmatprep.subr.bf16.mxu0 0
  %1810 = vmatpush1.bf16.msra.mxu0 %v1189
  %1811 = vmatprep.subr.bf16.mxu0 0
  %1812 = vmatpush1.bf16.msra.mxu0 %v1188
  %1813 = vmatprep.subr.bf16.mxu0 0
  %1814 = vmatpush2.bf16.msra.mxu0 0
  %1815 = vmatprep.subr.bf16.mxu0 0
  %1816 = vmatpush2.bf16.msra.mxu0 0
  %1817 = vmatprep.subr.bf16.mxu0 0
  %1818 = vmatpush2.bf16.msra.mxu0 0
  %1819 = vmatprep.subr.bf16.mxu0 0
  %1820 = vmatpush2.bf16.msra.mxu0 0
  %1821 = vmatprep.subr.bf16.mxu0 0
  %1822 = vmatpush2.bf16.msra.mxu0 0
  %1823 = vmatprep.subr.bf16.mxu0 0
  %1824 = vmatpush2.bf16.msra.mxu0 0
  %1825 = vmatprep.subr.bf16.mxu0 0
  %1826 = vmatpush2.bf16.msra.mxu0 0
  %1827 = vmatprep.subr.bf16.mxu0 0
  %1828 = vmatpush2.bf16.msra.mxu0 0
  %1829 = vmatprep.mubr.bf16.mxu0 0
  %1830 = vmatmul.mubr.bf16.gmra.mxu0 %v1294
  %v1831 = vpop.f32.mrf.mxu0
  %v1832 = vadd.f32 %v1751, %v1831
  %v1833 = vpop.f32.mrf.mxu0
  %v1834 = vpop.f32.mrf.mxu0
  %v1835 = vadd.f32 %v1754, %v1834
  %v1836 = vpop.f32.mrf.mxu0
  %1837 = vmatprep.mubr.bf16.mxu0 0
  %1838 = vmatmul.mubr.bf16.gmra.mxu0 %v1297
  %v1839 = vpop.f32.mrf.mxu0
  %v1840 = vadd.f32 %v1759, %v1839
  %v1841 = vpop.f32.mrf.mxu0
  %v1842 = vpop.f32.mrf.mxu0
  %v1843 = vadd.f32 %v1762, %v1842
  %v1844 = vpop.f32.mrf.mxu0
  %1845 = vmatprep.mubr.bf16.mxu0 0
  %1846 = vmatmul.mubr.bf16.gmra.mxu0 %v1300
  %v1847 = vpop.f32.mrf.mxu0
  %v1848 = vadd.f32 %v1767, %v1847
  %v1849 = vpop.f32.mrf.mxu0
  %v1850 = vpop.f32.mrf.mxu0
  %v1851 = vadd.f32 %v1770, %v1850
  %v1852 = vpop.f32.mrf.mxu0
  %1853 = vmatprep.mubr.bf16.mxu0 0
  %1854 = vmatmul.mubr.bf16.gmra.mxu0 %v1303
  %v1855 = vpop.f32.mrf.mxu0
  %v1856 = vadd.f32 %v1775, %v1855
  %v1857 = vpop.f32.mrf.mxu0
  %v1858 = vpop.f32.mrf.mxu0
  %v1859 = vadd.f32 %v1778, %v1858
  %v1860 = vpop.f32.mrf.mxu0
  %1861 = vmatprep.mubr.bf16.mxu0 0
  %1862 = vmatmul.mubr.bf16.gmra.mxu0 %v1306
  %v1863 = vpop.f32.mrf.mxu0
  %v1864 = vadd.f32 %v1783, %v1863
  %v1865 = vpop.f32.mrf.mxu0
  %v1866 = vpop.f32.mrf.mxu0
  %v1867 = vadd.f32 %v1786, %v1866
  %v1868 = vpop.f32.mrf.mxu0
  %1869 = vmatprep.mubr.bf16.mxu0 0
  %1870 = vmatmul.mubr.bf16.gmra.mxu0 %v1309
  %v1871 = vpop.f32.mrf.mxu0
  %v1872 = vadd.f32 %v1791, %v1871
  %v1873 = vpop.f32.mrf.mxu0
  %v1874 = vpop.f32.mrf.mxu0
  %v1875 = vadd.f32 %v1794, %v1874
  %v1876 = vpop.f32.mrf.mxu0
  %1877 = vdwg.mxu0
  %v1878 = vadd.f32 %v1832, %v1835
  %v1879 = vadd.f32 %v1878, %v1840
  %v1880 = vadd.f32 %v1879, %v1843
  %v1881 = vadd.f32 %v1880, %v1848
  %v1882 = vadd.f32 %v1881, %v1851
  %v1883 = vadd.f32 %v1882, %v1856
  %v1884 = vadd.f32 %v1883, %v1859
  %v1885 = vadd.f32 %v1884, %v1864
  %v1886 = vadd.f32 %v1885, %v1867
  %v1887 = vadd.f32 %v1886, %v1872
  %v1888 = vadd.f32 %v1887, %v1875
  %v1889 = vrot.slane %v1888, 4
  %v1890 = vadd.f32 %v1888, %v1889
  %v1891 = vrot.slane %v1890, 2
  %v1892 = vadd.f32 %v1890, %v1891
  %v1893 = vrot.slane %v1892, 1
  %v1894 = vadd.f32 %v1892, %v1893
  %v1895 = vrcp.pop 96.0
  %v1896 = vmul.f32 %v1894, %v1895
  %v1897 = vsub.f32 %v1832, %v1896
  %v1898 = vsub.f32 %v1835, %v1896
  %v1899 = vsub.f32 %v1840, %v1896
  %v1900 = vsub.f32 %v1843, %v1896
  %v1901 = vsub.f32 %v1848, %v1896
  %v1902 = vsub.f32 %v1851, %v1896
  %v1903 = vsub.f32 %v1856, %v1896
  %v1904 = vsub.f32 %v1859, %v1896
  %v1905 = vsub.f32 %v1864, %v1896
  %v1906 = vsub.f32 %v1867, %v1896
  %v1907 = vsub.f32 %v1872, %v1896
  %v1908 = vsub.f32 %v1875, %v1896
  %v1909 = vmul.f32 %v1897, %v1897
  %v1910 = vmul.f32 %v1898, %v1898
  %v1911 = vmul.f32 %v1899, %v1899
  %v1912 = vmul.f32 %v1900, %v1900
  %v1913 = vmul.f32 %v1901, %v1901
  %v1914 = vmul.f32 %v1902, %v1902
  %v1915 = vmul.f32 %v1903, %v1903
  %v1916 = vmul.f32 %v1904, %v1904
  %v1917 = vmul.f32 %v1905, %v1905
  %v1918 = vmul.f32 %v1906, %v1906
  %v1919 = vmul.f32 %v1907, %v1907
  %v1920 = vmul.f32 %v1908, %v1908
  %v1921 = vadd.f32 %v1909, %v1910
  %v1922 = vadd.f32 %v1921, %v1911
  %v1923 = vadd.f32 %v1922, %v1912
  %v1924 = vadd.f32 %v1923, %v1913
  %v1925 = vadd.f32 %v1924, %v1914
  %v1926 = vadd.f32 %v1925, %v1915
  %v1927 = vadd.f32 %v1926, %v1916
  %v1928 = vadd.f32 %v1927, %v1917
  %v1929 = vadd.f32 %v1928, %v1918
  %v1930 = vadd.f32 %v1929, %v1919
  %v1931 = vadd.f32 %v1930, %v1920
  %v1932 = vrot.slane %v1931, 4
  %v1933 = vadd.f32 %v1931, %v1932
  %v1934 = vrot.slane %v1933, 2
  %v1935 = vadd.f32 %v1933, %v1934
  %v1936 = vrot.slane %v1935, 1
  %v1937 = vadd.f32 %v1935, %v1936
  %v1938 = vmul.f32 %v1937, %v1895
  %v1939 = vadd.f32 %v1938, 1e-05
  %v1940 = vrsqrt.pop %v1939
  %v1941 = vmul.f32 %v1897, %v1940
  %v1942 = vmul.f32 %v1898, %v1940
  %v1943 = vmul.f32 %v1899, %v1940
  %v1944 = vmul.f32 %v1900, %v1940
  %v1945 = vmul.f32 %v1901, %v1940
  %v1946 = vmul.f32 %v1902, %v1940
  %v1947 = vmul.f32 %v1903, %v1940
  %v1948 = vmul.f32 %v1904, %v1940
  %v1949 = vmul.f32 %v1905, %v1940
  %v1950 = vmul.f32 %v1906, %v1940
  %v1951 = vmul.f32 %v1907, %v1940
  %v1952 = vmul.f32 %v1908, %v1940
  %v1953 = vld [vmem:[%s2] sm:$0x1]
  %v1955 = vlaneseq
  %v1956 = vshrl.u32 %v1955, 7
  %v1957 = vsub.s32 0, %v1956
  %v1958 = vrot.slane %v1953, %v1957
  %v1960 = vmul.f32 %v1941, %v1958
  %v1961 = vmul.f32 %v1942, %v1958
  %v1962 = vmul.f32 %v1943, %v1958
  %v1963 = vmul.f32 %v1944, %v1958
  %v1964 = vmul.f32 %v1945, %v1958
  %v1965 = vmul.f32 %v1946, %v1958
  %v1966 = vmul.f32 %v1947, %v1958
  %v1967 = vmul.f32 %v1948, %v1958
  %v1968 = vmul.f32 %v1949, %v1958
  %v1969 = vmul.f32 %v1950, %v1958
  %v1970 = vmul.f32 %v1951, %v1958
  %v1971 = vmul.f32 %v1952, %v1958
  %v1972 = vld [vmem:[%s3] sm:$0x1]
  %v1974 = vlaneseq
  %v1975 = vshrl.u32 %v1974, 7
  %v1976 = vsub.s32 0, %v1975
  %v1977 = vrot.slane %v1972, %v1976
  %v1979 = vadd.f32 %v1960, %v1977
  %v1980 = vadd.f32 %v1961, %v1977
  %v1981 = vadd.f32 %v1962, %v1977
  %v1982 = vadd.f32 %v1963, %v1977
  %v1983 = vadd.f32 %v1964, %v1977
  %v1984 = vadd.f32 %v1965, %v1977
  %v1985 = vadd.f32 %v1966, %v1977
  %v1986 = vadd.f32 %v1967, %v1977
  %v1987 = vadd.f32 %v1968, %v1977
  %v1988 = vadd.f32 %v1969, %v1977
  %v1989 = vadd.f32 %v1970, %v1977
  %v1990 = vadd.f32 %v1971, %v1977
  %v1991 = vmax.f32 %v1979, 0.0
  %v1992 = vmax.f32 %v1980, 0.0
  %v1993 = vmax.f32 %v1981, 0.0
  %v1994 = vmax.f32 %v1982, 0.0
  %v1995 = vmax.f32 %v1983, 0.0
  %v1996 = vmax.f32 %v1984, 0.0
  %v1997 = vmax.f32 %v1985, 0.0
  %v1998 = vmax.f32 %v1986, 0.0
  %v1999 = vmax.f32 %v1987, 0.0
  %v2000 = vmax.f32 %v1988, 0.0
  %v2001 = vmax.f32 %v1989, 0.0
  %v2002 = vmax.f32 %v1990, 0.0
  %v2003 = vpack.c.bf16 %v1992, %v1991
  %v2004 = vpack.c.bf16 %v1994, %v1993
  %v2005 = vpack.c.bf16 %v1996, %v1995
  %v2006 = vpack.c.bf16 %v1998, %v1997
  %v2007 = vpack.c.bf16 %v2000, %v1999
  %v2008 = vpack.c.bf16 %v2002, %v2001
  %v2015 = vunpack.c.l.b16 %v2003
  %v2016 = vunpack.c.h.b16 %v2003
  %v2017 = vunpack.c.l.b16 %v2004
  %v2018 = vunpack.c.h.b16 %v2004
  %v2019 = vunpack.c.l.b16 %v2005
  %v2020 = vunpack.c.h.b16 %v2005
  %v2021 = vunpack.c.l.b16 %v2006
  %v2022 = vunpack.c.h.b16 %v2006
  %v2023 = vunpack.c.l.b16 %v2007
  %v2024 = vunpack.c.h.b16 %v2007
  %v2025 = vunpack.c.l.b16 %v2008
  %v2026 = vunpack.c.h.b16 %v2008
  %v2027 = vpack.c.b16 %v2015, %v2015
  %v2028 = vpack.c.b16 %v2016, %v2016
  %v2029 = vpack.c.b16 %v2017, %v2017
  %v2030 = vpack.c.b16 %v2018, %v2018
  %v2031 = vpack.c.b16 %v2019, %v2019
  %v2032 = vpack.c.b16 %v2020, %v2020
  %v2033 = vpack.c.b16 %v2021, %v2021
  %v2034 = vpack.c.b16 %v2022, %v2022
  %v2035 = vpack.c.b16 %v2023, %v2023
  %v2036 = vpack.c.b16 %v2024, %v2024
  %v2037 = vpack.c.b16 %v2025, %v2025
  %v2038 = vpack.c.b16 %v2026, %v2026
  %2051 = vst [vmem:[%s4] sm:$0xf] %v2027
  %2052 = vst [vmem:[%s4 + $0x4] sm:$0xf] %v2028
  %2053 = vst [vmem:[%s4 + $0x8] sm:$0xf] %v2029
  %2054 = vst [vmem:[%s4 + $0xc] sm:$0xf] %v2030
  %2055 = vst [vmem:[%s4 + $0x10] sm:$0xf] %v2031
  %2056 = vst [vmem:[%s4 + $0x14] sm:$0xf] %v2032
  %2057 = vst [vmem:[%s4 + $0x18] sm:$0xf] %v2033
  %2058 = vst [vmem:[%s4 + $0x1c] sm:$0xf] %v2034
  %2059 = vst [vmem:[%s4 + $0x20] sm:$0xf] %v2035
  %2060 = vst [vmem:[%s4 + $0x24] sm:$0xf] %v2036
  %2061 = vst [vmem:[%s4 + $0x28] sm:$0xf] %v2037
  %2062 = vst [vmem:[%s4 + $0x2c] sm:$0xf] %v2038
  // Predicated region
  $region18: #{discriminator_forward.6} parent=0 // pred_check
    _
  $region19: #{discriminator_forward.6} parent=0 // pred_check_branch
    %2064 = sbr.rel (0) target = $region21
  $region20: #{discriminator_forward.6} parent=0 // pred_region
    _
  $region21: #{discriminator_forward.6} parent=0 // pred_fallthru
    _
  // Predicated region
  $region22: #{discriminator_forward.6} parent=0 // pred_check
    _
  $region23: #{discriminator_forward.6} parent=0 // pred_check_branch
    %2066 = sbr.rel (0) target = $region25
  $region24: #{discriminator_forward.6} parent=0 // pred_region
    _
  $region25: #{discriminator_forward.6} parent=0 // pred_fallthru
    _

// kernel: discriminator_forward.7
$region0: #{discriminator_forward.7}
  #allocation0 [shape = 'u32[]', space=smem, size = 0x4, offset = 0x4, fixed_abs, tag = 'smem constant byte address 0x4 - core index']
  #allocation1 [shape = 'u32[144,128]{1,0:T(1,128)}', space=vmem, size = 0x12000, scoped, tag = 'internal scratch']
  %s0 = inlined_call_operand.vmem [shape: bf16[24,3200], index: 0, kind: input, shape index: {}]
  %s1 = inlined_call_operand.vmem [shape: bf16[3200,128], index: 1, kind: input, shape index: {}]
  %s2 = inlined_call_operand.vmem [shape: f32[1,128], index: 2, kind: input, shape index: {}]
  %s3 = inlined_call_operand.vmem [shape: f32[24,128], index: 3, kind: output, shape index: {}]
  %s4 = sld [smem:[#allocation0]]
  $region22: #{discriminator_forward.7} parent=0
    _
  %s6 = ssub.s32 1, %s4
  %s7 = scalar_select 0, %s6, %s4
  // Predicated region
  $region2: #{discriminator_forward.7} parent=0 // pred_check
    _
  $region3: #{discriminator_forward.7} parent=0 // pred_check_branch
    %9 = sbr.rel (0) target = $region5
  $region4: #{discriminator_forward.7} parent=0 // pred_region
    _
  $region5: #{discriminator_forward.7} parent=0 // pred_fallthru
    _
  // Predicated region
  $region6: #{discriminator_forward.7} parent=0 // pred_check
    _
  $region7: #{discriminator_forward.7} parent=0 // pred_check_branch
    %11 = sbr.rel (0) target = $region9
  $region8: #{discriminator_forward.7} parent=0 // pred_region
    _
  $region9: #{discriminator_forward.7} parent=0 // pred_fallthru
    _
  // Predicated region
  $region10: #{discriminator_forward.7} parent=0 // pred_check
    _
  $region11: #{discriminator_forward.7} parent=0 // pred_check_branch
    %13 = sbr.rel (0) target = $region13
  $region12: #{discriminator_forward.7} parent=0 // pred_region
    _
  $region13: #{discriminator_forward.7} parent=0 // pred_fallthru
    _
  %v15 = vld [vmem:[%s0] sm:$0xff]
  %v16 = vld [vmem:[%s0 + $0x8] sm:$0xff]
  %v17 = vld [vmem:[%s0 + $0x10] sm:$0xff]
  %v18 = vld [vmem:[%s0 + $0x18] sm:$0xff]
  %v19 = vld [vmem:[%s0 + $0x20] sm:$0xff]
  %v20 = vld [vmem:[%s0 + $0x28] sm:$0xff]
  %v21 = vld [vmem:[%s0 + $0x30] sm:$0xff]
  %v22 = vld [vmem:[%s0 + $0x38] sm:$0xff]
  %v23 = vld [vmem:[%s0 + $0x40] sm:$0xff]
  %v24 = vld [vmem:[%s0 + $0x48] sm:$0xff]
  %v25 = vld [vmem:[%s0 + $0x50] sm:$0xff]
  %v26 = vld [vmem:[%s0 + $0x58] sm:$0xff]
  %v27 = vld [vmem:[%s0 + $0x60] sm:$0xf]
  %v28 = vld [vmem:[%s0 + $0x64] sm:$0xff]
  %v29 = vld [vmem:[%s0 + $0x6c] sm:$0xff]
  %v30 = vld [vmem:[%s0 + $0x74] sm:$0xff]
  %v31 = vld [vmem:[%s0 + $0x7c] sm:$0xff]
  %v32 = vld [vmem:[%s0 + $0x84] sm:$0xff]
  %v33 = vld [vmem:[%s0 + $0x8c] sm:$0xff]
  %v34 = vld [vmem:[%s0 + $0x94] sm:$0xff]
  %v35 = vld [vmem:[%s0 + $0x9c] sm:$0xff]
  %v36 = vld [vmem:[%s0 + $0xa4] sm:$0xff]
  %v37 = vld [vmem:[%s0 + $0xac] sm:$0xff]
  %v38 = vld [vmem:[%s0 + $0xb4] sm:$0xff]
  %v39 = vld [vmem:[%s0 + $0xbc] sm:$0xff]
  %v40 = vld [vmem:[%s0 + $0xc4] sm:$0xf]
  %v41 = vld [vmem:[%s0 + $0xc8] sm:$0xff]
  %v42 = vld [vmem:[%s0 + $0xd0] sm:$0xff]
  %v43 = vld [vmem:[%s0 + $0xd8] sm:$0xff]
  %v44 = vld [vmem:[%s0 + $0xe0] sm:$0xff]
  %v45 = vld [vmem:[%s0 + $0xe8] sm:$0xff]
  %v46 = vld [vmem:[%s0 + $0xf0] sm:$0xff]
  %v47 = vld [vmem:[%s0 + $0xf8] sm:$0xff]
  %v48 = vld [vmem:[%s0 + $0x100] sm:$0xff]
  %v49 = vld [vmem:[%s0 + $0x108] sm:$0xff]
  %v50 = vld [vmem:[%s0 + $0x110] sm:$0xff]
  %v51 = vld [vmem:[%s0 + $0x118] sm:$0xff]
  %v52 = vld [vmem:[%s0 + $0x120] sm:$0xff]
  %v53 = vld [vmem:[%s0 + $0x128] sm:$0xf]
  %v54 = vld [vmem:[%s1] sm:$0xf]
  %v55 = vld [vmem:[%s1 + $0x4] sm:$0xf]
  %v56 = vld [vmem:[%s1 + $0x8] sm:$0xf]
  %v57 = vld [vmem:[%s1 + $0xc] sm:$0xf]
  %v58 = vld [vmem:[%s1 + $0x10] sm:$0xf]
  %v59 = vld [vmem:[%s1 + $0x14] sm:$0xf]
  %v60 = vld [vmem:[%s1 + $0x18] sm:$0xf]
  %v61 = vld [vmem:[%s1 + $0x1c] sm:$0xf]
  %v62 = vld [vmem:[%s1 + $0x20] sm:$0xf]
  %v63 = vld [vmem:[%s1 + $0x24] sm:$0xf]
  %v64 = vld [vmem:[%s1 + $0x28] sm:$0xf]
  %v65 = vld [vmem:[%s1 + $0x2c] sm:$0xf]
  %v66 = vld [vmem:[%s1 + $0x30] sm:$0xf]
  %v67 = vld [vmem:[%s1 + $0x34] sm:$0xf]
  %v68 = vld [vmem:[%s1 + $0x38] sm:$0xf]
  %v69 = vld [vmem:[%s1 + $0x3c] sm:$0xf]
  %v70 = vld [vmem:[%s1 + $0x40] sm:$0xf]
  %v71 = vld [vmem:[%s1 + $0x44] sm:$0xf]
  %v72 = vld [vmem:[%s1 + $0x48] sm:$0xf]
  %v73 = vld [vmem:[%s1 + $0x4c] sm:$0xf]
  %v74 = vld [vmem:[%s1 + $0x50] sm:$0xf]
  %v75 = vld [vmem:[%s1 + $0x54] sm:$0xf]
  %v76 = vld [vmem:[%s1 + $0x58] sm:$0xf]
  %v77 = vld [vmem:[%s1 + $0x5c] sm:$0xf]
  %v78 = vld [vmem:[%s1 + $0x60] sm:$0xf]
  %v79 = vld [vmem:[%s1 + $0x64] sm:$0xf]
  %v80 = vld [vmem:[%s1 + $0x68] sm:$0xf]
  %v81 = vld [vmem:[%s1 + $0x6c] sm:$0xf]
  %v82 = vld [vmem:[%s1 + $0x70] sm:$0xf]
  %v83 = vld [vmem:[%s1 + $0x74] sm:$0xf]
  %v84 = vld [vmem:[%s1 + $0x78] sm:$0xf]
  %v85 = vld [vmem:[%s1 + $0x7c] sm:$0xf]
  %v86 = vld [vmem:[%s1 + $0x80] sm:$0xf]
  %v87 = vld [vmem:[%s1 + $0x84] sm:$0xf]
  %v88 = vld [vmem:[%s1 + $0x88] sm:$0xf]
  %v89 = vld [vmem:[%s1 + $0x8c] sm:$0xf]
  %v90 = vld [vmem:[%s1 + $0x90] sm:$0xf]
  %v91 = vld [vmem:[%s1 + $0x94] sm:$0xf]
  %v92 = vld [vmem:[%s1 + $0x98] sm:$0xf]
  %v93 = vld [vmem:[%s1 + $0x9c] sm:$0xf]
  %v94 = vld [vmem:[%s1 + $0xa0] sm:$0xf]
  %v95 = vld [vmem:[%s1 + $0xa4] sm:$0xf]
  %v96 = vld [vmem:[%s1 + $0xa8] sm:$0xf]
  %v97 = vld [vmem:[%s1 + $0xac] sm:$0xf]
  %v98 = vld [vmem:[%s1 + $0xb0] sm:$0xf]
  %v99 = vld [vmem:[%s1 + $0xb4] sm:$0xf]
  %v100 = vld [vmem:[%s1 + $0xb8] sm:$0xf]
  %v101 = vld [vmem:[%s1 + $0xbc] sm:$0xf]
  %v102 = vld [vmem:[%s1 + $0xc0] sm:$0xf]
  %v103 = vld [vmem:[%s1 + $0xc4] sm:$0xf]
  %v104 = vld [vmem:[%s1 + $0xc8] sm:$0xf]
  %v105 = vld [vmem:[%s1 + $0xcc] sm:$0xf]
  %v106 = vld [vmem:[%s1 + $0xd0] sm:$0xf]
  %v107 = vld [vmem:[%s1 + $0xd4] sm:$0xf]
  %v108 = vld [vmem:[%s1 + $0xd8] sm:$0xf]
  %v109 = vld [vmem:[%s1 + $0xdc] sm:$0xf]
  %v110 = vld [vmem:[%s1 + $0xe0] sm:$0xf]
  %v111 = vld [vmem:[%s1 + $0xe4] sm:$0xf]
  %v112 = vld [vmem:[%s1 + $0xe8] sm:$0xf]
  %v113 = vld [vmem:[%s1 + $0xec] sm:$0xf]
  %v114 = vld [vmem:[%s1 + $0xf0] sm:$0xf]
  %v115 = vld [vmem:[%s1 + $0xf4] sm:$0xf]
  %v116 = vld [vmem:[%s1 + $0xf8] sm:$0xf]
  %v117 = vld [vmem:[%s1 + $0xfc] sm:$0xf]
  %v118 = vld [vmem:[%s1 + $0x100] sm:$0xf]
  %v119 = vld [vmem:[%s1 + $0x104] sm:$0xf]
  %v120 = vld [vmem:[%s1 + $0x108] sm:$0xf]
  %v121 = vld [vmem:[%s1 + $0x10c] sm:$0xf]
  %v122 = vld [vmem:[%s1 + $0x110] sm:$0xf]
  %v123 = vld [vmem:[%s1 + $0x114] sm:$0xf]
  %v124 = vld [vmem:[%s1 + $0x118] sm:$0xf]
  %v125 = vld [vmem:[%s1 + $0x11c] sm:$0xf]
  %v126 = vld [vmem:[%s1 + $0x120] sm:$0xf]
  %v127 = vld [vmem:[%s1 + $0x124] sm:$0xf]
  %v128 = vld [vmem:[%s1 + $0x128] sm:$0xf]
  %v129 = vld [vmem:[%s1 + $0x12c] sm:$0xf]
  %v130 = vld [vmem:[%s1 + $0x130] sm:$0xf]
  %v131 = vld [vmem:[%s1 + $0x134] sm:$0xf]
  %v132 = vld [vmem:[%s1 + $0x138] sm:$0xf]
  %v133 = vld [vmem:[%s1 + $0x13c] sm:$0xf]
  %v134 = vld [vmem:[%s1 + $0x140] sm:$0xf]
  %v135 = vld [vmem:[%s1 + $0x144] sm:$0xf]
  %v136 = vld [vmem:[%s1 + $0x148] sm:$0xf]
  %v137 = vld [vmem:[%s1 + $0x14c] sm:$0xf]
  %v138 = vld [vmem:[%s1 + $0x150] sm:$0xf]
  %v139 = vld [vmem:[%s1 + $0x154] sm:$0xf]
  %v140 = vld [vmem:[%s1 + $0x158] sm:$0xf]
  %v141 = vld [vmem:[%s1 + $0x15c] sm:$0xf]
  %v142 = vld [vmem:[%s1 + $0x160] sm:$0xf]
  %v143 = vld [vmem:[%s1 + $0x164] sm:$0xf]
  %v144 = vld [vmem:[%s1 + $0x168] sm:$0xf]
  %v145 = vld [vmem:[%s1 + $0x16c] sm:$0xf]
  %v146 = vld [vmem:[%s1 + $0x170] sm:$0xf]
  %v147 = vld [vmem:[%s1 + $0x174] sm:$0xf]
  %v148 = vld [vmem:[%s1 + $0x178] sm:$0xf]
  %v149 = vld [vmem:[%s1 + $0x17c] sm:$0xf]
  %v150 = vld [vmem:[%s1 + $0x180] sm:$0xf]
  %v151 = vld [vmem:[%s1 + $0x184] sm:$0xf]
  %v152 = vld [vmem:[%s1 + $0x188] sm:$0xf]
  %v153 = vld [vmem:[%s1 + $0x18c] sm:$0xf]
  %v154 = vld [vmem:[%s1 + $0x190] sm:$0xf]
  %v155 = vld [vmem:[%s1 + $0x194] sm:$0xf]
  %v156 = vld [vmem:[%s1 + $0x198] sm:$0xf]
  %v157 = vld [vmem:[%s1 + $0x19c] sm:$0xf]
  %v158 = vld [vmem:[%s1 + $0x1a0] sm:$0xf]
  %v159 = vld [vmem:[%s1 + $0x1a4] sm:$0xf]
  %v160 = vld [vmem:[%s1 + $0x1a8] sm:$0xf]
  %v161 = vld [vmem:[%s1 + $0x1ac] sm:$0xf]
  %v162 = vld [vmem:[%s1 + $0x1b0] sm:$0xf]
  %v163 = vld [vmem:[%s1 + $0x1b4] sm:$0xf]
  %v164 = vld [vmem:[%s1 + $0x1b8] sm:$0xf]
  %v165 = vld [vmem:[%s1 + $0x1bc] sm:$0xf]
  %v166 = vld [vmem:[%s1 + $0x1c0] sm:$0xf]
  %v167 = vld [vmem:[%s1 + $0x1c4] sm:$0xf]
  %v168 = vld [vmem:[%s1 + $0x1c8] sm:$0xf]
  %v169 = vld [vmem:[%s1 + $0x1cc] sm:$0xf]
  %v170 = vld [vmem:[%s1 + $0x1d0] sm:$0xf]
  %v171 = vld [vmem:[%s1 + $0x1d4] sm:$0xf]
  %v172 = vld [vmem:[%s1 + $0x1d8] sm:$0xf]
  %v173 = vld [vmem:[%s1 + $0x1dc] sm:$0xf]
  %v174 = vld [vmem:[%s1 + $0x1e0] sm:$0xf]
  %v175 = vld [vmem:[%s1 + $0x1e4] sm:$0xf]
  %v176 = vld [vmem:[%s1 + $0x1e8] sm:$0xf]
  %v177 = vld [vmem:[%s1 + $0x1ec] sm:$0xf]
  %v178 = vld [vmem:[%s1 + $0x1f0] sm:$0xf]
  %v179 = vld [vmem:[%s1 + $0x1f4] sm:$0xf]
  %v180 = vld [vmem:[%s1 + $0x1f8] sm:$0xf]
  %v181 = vld [vmem:[%s1 + $0x1fc] sm:$0xf]
  %v182 = vld [vmem:[%s1 + $0x200] sm:$0xf]
  %v183 = vld [vmem:[%s1 + $0x204] sm:$0xf]
  %v184 = vld [vmem:[%s1 + $0x208] sm:$0xf]
  %v185 = vld [vmem:[%s1 + $0x20c] sm:$0xf]
  %v186 = vld [vmem:[%s1 + $0x210] sm:$0xf]
  %v187 = vld [vmem:[%s1 + $0x214] sm:$0xf]
  %v188 = vld [vmem:[%s1 + $0x218] sm:$0xf]
  %v189 = vld [vmem:[%s1 + $0x21c] sm:$0xf]
  %v190 = vld [vmem:[%s1 + $0x220] sm:$0xf]
  %v191 = vld [vmem:[%s1 + $0x224] sm:$0xf]
  %v192 = vld [vmem:[%s1 + $0x228] sm:$0xf]
  %v193 = vld [vmem:[%s1 + $0x22c] sm:$0xf]
  %v194 = vld [vmem:[%s1 + $0x230] sm:$0xf]
  %v195 = vld [vmem:[%s1 + $0x234] sm:$0xf]
  %v196 = vld [vmem:[%s1 + $0x238] sm:$0xf]
  %v197 = vld [vmem:[%s1 + $0x23c] sm:$0xf]
  %v198 = vld [vmem:[%s1 + $0x240] sm:$0xf]
  %v199 = vld [vmem:[%s1 + $0x244] sm:$0xf]
  %v200 = vld [vmem:[%s1 + $0x248] sm:$0xf]
  %v201 = vld [vmem:[%s1 + $0x24c] sm:$0xf]
  %v202 = vld [vmem:[%s1 + $0x250] sm:$0xf]
  %v203 = vld [vmem:[%s1 + $0x254] sm:$0xf]
  %v204 = vld [vmem:[%s1 + $0x258] sm:$0xf]
  %v205 = vld [vmem:[%s1 + $0x25c] sm:$0xf]
  %v206 = vld [vmem:[%s1 + $0x260] sm:$0xf]
  %v207 = vld [vmem:[%s1 + $0x264] sm:$0xf]
  %v208 = vld [vmem:[%s1 + $0x268] sm:$0xf]
  %v209 = vld [vmem:[%s1 + $0x26c] sm:$0xf]
  %v210 = vld [vmem:[%s1 + $0x270] sm:$0xf]
  %v211 = vld [vmem:[%s1 + $0x274] sm:$0xf]
  %v212 = vld [vmem:[%s1 + $0x278] sm:$0xf]
  %v213 = vld [vmem:[%s1 + $0x27c] sm:$0xf]
  %v214 = vld [vmem:[%s1 + $0x280] sm:$0xf]
  %v215 = vld [vmem:[%s1 + $0x284] sm:$0xf]
  %v216 = vld [vmem:[%s1 + $0x288] sm:$0xf]
  %v217 = vld [vmem:[%s1 + $0x28c] sm:$0xf]
  %v218 = vld [vmem:[%s1 + $0x290] sm:$0xf]
  %v219 = vld [vmem:[%s1 + $0x294] sm:$0xf]
  %v220 = vld [vmem:[%s1 + $0x298] sm:$0xf]
  %v221 = vld [vmem:[%s1 + $0x29c] sm:$0xf]
  %v222 = vld [vmem:[%s1 + $0x2a0] sm:$0xf]
  %v223 = vld [vmem:[%s1 + $0x2a4] sm:$0xf]
  %v224 = vld [vmem:[%s1 + $0x2a8] sm:$0xf]
  %v225 = vld [vmem:[%s1 + $0x2ac] sm:$0xf]
  %v226 = vld [vmem:[%s1 + $0x2b0] sm:$0xf]
  %v227 = vld [vmem:[%s1 + $0x2b4] sm:$0xf]
  %v228 = vld [vmem:[%s1 + $0x2b8] sm:$0xf]
  %v229 = vld [vmem:[%s1 + $0x2bc] sm:$0xf]
  %v230 = vld [vmem:[%s1 + $0x2c0] sm:$0xf]
  %v231 = vld [vmem:[%s1 + $0x2c4] sm:$0xf]
  %v232 = vld [vmem:[%s1 + $0x2c8] sm:$0xf]
  %v233 = vld [vmem:[%s1 + $0x2cc] sm:$0xf]
  %v234 = vld [vmem:[%s1 + $0x2d0] sm:$0xf]
  %v235 = vld [vmem:[%s1 + $0x2d4] sm:$0xf]
  %v236 = vld [vmem:[%s1 + $0x2d8] sm:$0xf]
  %v237 = vld [vmem:[%s1 + $0x2dc] sm:$0xf]
  %v238 = vld [vmem:[%s1 + $0x2e0] sm:$0xf]
  %v239 = vld [vmem:[%s1 + $0x2e4] sm:$0xf]
  %v240 = vld [vmem:[%s1 + $0x2e8] sm:$0xf]
  %v241 = vld [vmem:[%s1 + $0x2ec] sm:$0xf]
  %v242 = vld [vmem:[%s1 + $0x2f0] sm:$0xf]
  %v243 = vld [vmem:[%s1 + $0x2f4] sm:$0xf]
  %v244 = vld [vmem:[%s1 + $0x2f8] sm:$0xf]
  %v245 = vld [vmem:[%s1 + $0x2fc] sm:$0xf]
  %v246 = vld [vmem:[%s1 + $0x300] sm:$0xf]
  %v247 = vld [vmem:[%s1 + $0x304] sm:$0xf]
  %v248 = vld [vmem:[%s1 + $0x308] sm:$0xf]
  %v249 = vld [vmem:[%s1 + $0x30c] sm:$0xf]
  %v250 = vld [vmem:[%s1 + $0x310] sm:$0xf]
  %v251 = vld [vmem:[%s1 + $0x314] sm:$0xf]
  %v252 = vld [vmem:[%s1 + $0x318] sm:$0xf]
  %v253 = vld [vmem:[%s1 + $0x31c] sm:$0xf]
  %v254 = vld [vmem:[%s1 + $0x320] sm:$0xf]
  %v255 = vld [vmem:[%s1 + $0x324] sm:$0xf]
  %v256 = vld [vmem:[%s1 + $0x328] sm:$0xf]
  %v257 = vld [vmem:[%s1 + $0x32c] sm:$0xf]
  %v258 = vld [vmem:[%s1 + $0x330] sm:$0xf]
  %v259 = vld [vmem:[%s1 + $0x334] sm:$0xf]
  %v260 = vld [vmem:[%s1 + $0x338] sm:$0xf]
  %v261 = vld [vmem:[%s1 + $0x33c] sm:$0xf]
  %v262 = vld [vmem:[%s1 + $0x340] sm:$0xf]
  %v263 = vld [vmem:[%s1 + $0x344] sm:$0xf]
  %v264 = vld [vmem:[%s1 + $0x348] sm:$0xf]
  %v265 = vld [vmem:[%s1 + $0x34c] sm:$0xf]
  %v266 = vld [vmem:[%s1 + $0x350] sm:$0xf]
  %v267 = vld [vmem:[%s1 + $0x354] sm:$0xf]
  %v268 = vld [vmem:[%s1 + $0x358] sm:$0xf]
  %v269 = vld [vmem:[%s1 + $0x35c] sm:$0xf]
  %v270 = vld [vmem:[%s1 + $0x360] sm:$0xf]
  %v271 = vld [vmem:[%s1 + $0x364] sm:$0xf]
  %v272 = vld [vmem:[%s1 + $0x368] sm:$0xf]
  %v273 = vld [vmem:[%s1 + $0x36c] sm:$0xf]
  %v274 = vld [vmem:[%s1 + $0x370] sm:$0xf]
  %v275 = vld [vmem:[%s1 + $0x374] sm:$0xf]
  %v276 = vld [vmem:[%s1 + $0x378] sm:$0xf]
  %v277 = vld [vmem:[%s1 + $0x37c] sm:$0xf]
  %v278 = vld [vmem:[%s1 + $0x380] sm:$0xf]
  %v279 = vld [vmem:[%s1 + $0x384] sm:$0xf]
  %v280 = vld [vmem:[%s1 + $0x388] sm:$0xf]
  %v281 = vld [vmem:[%s1 + $0x38c] sm:$0xf]
  %v282 = vld [vmem:[%s1 + $0x390] sm:$0xf]
  %v283 = vld [vmem:[%s1 + $0x394] sm:$0xf]
  %v284 = vld [vmem:[%s1 + $0x398] sm:$0xf]
  %v285 = vld [vmem:[%s1 + $0x39c] sm:$0xf]
  %v286 = vld [vmem:[%s1 + $0x3a0] sm:$0xf]
  %v287 = vld [vmem:[%s1 + $0x3a4] sm:$0xf]
  %v288 = vld [vmem:[%s1 + $0x3a8] sm:$0xf]
  %v289 = vld [vmem:[%s1 + $0x3ac] sm:$0xf]
  %v290 = vld [vmem:[%s1 + $0x3b0] sm:$0xf]
  %v291 = vld [vmem:[%s1 + $0x3b4] sm:$0xf]
  %v292 = vld [vmem:[%s1 + $0x3b8] sm:$0xf]
  %v293 = vld [vmem:[%s1 + $0x3bc] sm:$0xf]
  %v294 = vld [vmem:[%s1 + $0x3c0] sm:$0xf]
  %v295 = vld [vmem:[%s1 + $0x3c4] sm:$0xf]
  %v296 = vld [vmem:[%s1 + $0x3c8] sm:$0xf]
  %v297 = vld [vmem:[%s1 + $0x3cc] sm:$0xf]
  %v298 = vld [vmem:[%s1 + $0x3d0] sm:$0xf]
  %v299 = vld [vmem:[%s1 + $0x3d4] sm:$0xf]
  %v300 = vld [vmem:[%s1 + $0x3d8] sm:$0xf]
  %v301 = vld [vmem:[%s1 + $0x3dc] sm:$0xf]
  %v302 = vld [vmem:[%s1 + $0x3e0] sm:$0xf]
  %v303 = vld [vmem:[%s1 + $0x3e4] sm:$0xf]
  %v304 = vld [vmem:[%s1 + $0x3e8] sm:$0xf]
  %v305 = vld [vmem:[%s1 + $0x3ec] sm:$0xf]
  %v306 = vld [vmem:[%s1 + $0x3f0] sm:$0xf]
  %v307 = vld [vmem:[%s1 + $0x3f4] sm:$0xf]
  %v308 = vld [vmem:[%s1 + $0x3f8] sm:$0xf]
  %v309 = vld [vmem:[%s1 + $0x3fc] sm:$0xf]
  %v310 = vld [vmem:[%s1 + $0x400] sm:$0xf]
  %v311 = vld [vmem:[%s1 + $0x404] sm:$0xf]
  %v312 = vld [vmem:[%s1 + $0x408] sm:$0xf]
  %v313 = vld [vmem:[%s1 + $0x40c] sm:$0xf]
  %v314 = vld [vmem:[%s1 + $0x410] sm:$0xf]
  %v315 = vld [vmem:[%s1 + $0x414] sm:$0xf]
  %v316 = vld [vmem:[%s1 + $0x418] sm:$0xf]
  %v317 = vld [vmem:[%s1 + $0x41c] sm:$0xf]
  %v318 = vld [vmem:[%s1 + $0x420] sm:$0xf]
  %v319 = vld [vmem:[%s1 + $0x424] sm:$0xf]
  %v320 = vld [vmem:[%s1 + $0x428] sm:$0xf]
  %v321 = vld [vmem:[%s1 + $0x42c] sm:$0xf]
  %v322 = vld [vmem:[%s1 + $0x430] sm:$0xf]
  %v323 = vld [vmem:[%s1 + $0x434] sm:$0xf]
  %v324 = vld [vmem:[%s1 + $0x438] sm:$0xf]
  %v325 = vld [vmem:[%s1 + $0x43c] sm:$0xf]
  %v326 = vld [vmem:[%s1 + $0x440] sm:$0xf]
  %v327 = vld [vmem:[%s1 + $0x444] sm:$0xf]
  %v328 = vld [vmem:[%s1 + $0x448] sm:$0xf]
  %v329 = vld [vmem:[%s1 + $0x44c] sm:$0xf]
  %v330 = vld [vmem:[%s1 + $0x450] sm:$0xf]
  %v331 = vld [vmem:[%s1 + $0x454] sm:$0xf]
  %v332 = vld [vmem:[%s1 + $0x458] sm:$0xf]
  %v333 = vld [vmem:[%s1 + $0x45c] sm:$0xf]
  %v334 = vld [vmem:[%s1 + $0x460] sm:$0xf]
  %v335 = vld [vmem:[%s1 + $0x464] sm:$0xf]
  %v336 = vld [vmem:[%s1 + $0x468] sm:$0xf]
  %v337 = vld [vmem:[%s1 + $0x46c] sm:$0xf]
  %v338 = vld [vmem:[%s1 + $0x470] sm:$0xf]
  %v339 = vld [vmem:[%s1 + $0x474] sm:$0xf]
  %v340 = vld [vmem:[%s1 + $0x478] sm:$0xf]
  %v341 = vld [vmem:[%s1 + $0x47c] sm:$0xf]
  %v342 = vld [vmem:[%s1 + $0x480] sm:$0xf]
  %v343 = vld [vmem:[%s1 + $0x484] sm:$0xf]
  %v344 = vld [vmem:[%s1 + $0x488] sm:$0xf]
  %v345 = vld [vmem:[%s1 + $0x48c] sm:$0xf]
  %v346 = vld [vmem:[%s1 + $0x490] sm:$0xf]
  %v347 = vld [vmem:[%s1 + $0x494] sm:$0xf]
  %v348 = vld [vmem:[%s1 + $0x498] sm:$0xf]
  %v349 = vld [vmem:[%s1 + $0x49c] sm:$0xf]
  %v350 = vld [vmem:[%s1 + $0x4a0] sm:$0xf]
  %v351 = vld [vmem:[%s1 + $0x4a4] sm:$0xf]
  %v352 = vld [vmem:[%s1 + $0x4a8] sm:$0xf]
  %v353 = vld [vmem:[%s1 + $0x4ac] sm:$0xf]
  %v354 = vld [vmem:[%s1 + $0x4b0] sm:$0xf]
  %v355 = vld [vmem:[%s1 + $0x4b4] sm:$0xf]
  %v356 = vld [vmem:[%s1 + $0x4b8] sm:$0xf]
  %v357 = vld [vmem:[%s1 + $0x4bc] sm:$0xf]
  %v358 = vld [vmem:[%s1 + $0x4c0] sm:$0xf]
  %v359 = vld [vmem:[%s1 + $0x4c4] sm:$0xf]
  %v360 = vld [vmem:[%s1 + $0x4c8] sm:$0xf]
  %v361 = vld [vmem:[%s1 + $0x4cc] sm:$0xf]
  %v362 = vld [vmem:[%s1 + $0x4d0] sm:$0xf]
  %v363 = vld [vmem:[%s1 + $0x4d4] sm:$0xf]
  %v364 = vld [vmem:[%s1 + $0x4d8] sm:$0xf]
  %v365 = vld [vmem:[%s1 + $0x4dc] sm:$0xf]
  %v366 = vld [vmem:[%s1 + $0x4e0] sm:$0xf]
  %v367 = vld [vmem:[%s1 + $0x4e4] sm:$0xf]
  %v368 = vld [vmem:[%s1 + $0x4e8] sm:$0xf]
  %v369 = vld [vmem:[%s1 + $0x4ec] sm:$0xf]
  %v370 = vld [vmem:[%s1 + $0x4f0] sm:$0xf]
  %v371 = vld [vmem:[%s1 + $0x4f4] sm:$0xf]
  %v372 = vld [vmem:[%s1 + $0x4f8] sm:$0xf]
  %v373 = vld [vmem:[%s1 + $0x4fc] sm:$0xf]
  %v374 = vld [vmem:[%s1 + $0x500] sm:$0xf]
  %v375 = vld [vmem:[%s1 + $0x504] sm:$0xf]
  %v376 = vld [vmem:[%s1 + $0x508] sm:$0xf]
  %v377 = vld [vmem:[%s1 + $0x50c] sm:$0xf]
  %v378 = vld [vmem:[%s1 + $0x510] sm:$0xf]
  %v379 = vld [vmem:[%s1 + $0x514] sm:$0xf]
  %v380 = vld [vmem:[%s1 + $0x518] sm:$0xf]
  %v381 = vld [vmem:[%s1 + $0x51c] sm:$0xf]
  %v382 = vld [vmem:[%s1 + $0x520] sm:$0xf]
  %v383 = vld [vmem:[%s1 + $0x524] sm:$0xf]
  %v384 = vld [vmem:[%s1 + $0x528] sm:$0xf]
  %v385 = vld [vmem:[%s1 + $0x52c] sm:$0xf]
  %v386 = vld [vmem:[%s1 + $0x530] sm:$0xf]
  %v387 = vld [vmem:[%s1 + $0x534] sm:$0xf]
  %v388 = vld [vmem:[%s1 + $0x538] sm:$0xf]
  %v389 = vld [vmem:[%s1 + $0x53c] sm:$0xf]
  %v390 = vld [vmem:[%s1 + $0x540] sm:$0xf]
  %v391 = vld [vmem:[%s1 + $0x544] sm:$0xf]
  %v392 = vld [vmem:[%s1 + $0x548] sm:$0xf]
  %v393 = vld [vmem:[%s1 + $0x54c] sm:$0xf]
  %v394 = vld [vmem:[%s1 + $0x550] sm:$0xf]
  %v395 = vld [vmem:[%s1 + $0x554] sm:$0xf]
  %v396 = vld [vmem:[%s1 + $0x558] sm:$0xf]
  %v397 = vld [vmem:[%s1 + $0x55c] sm:$0xf]
  %v398 = vld [vmem:[%s1 + $0x560] sm:$0xf]
  %v399 = vld [vmem:[%s1 + $0x564] sm:$0xf]
  %v400 = vld [vmem:[%s1 + $0x568] sm:$0xf]
  %v401 = vld [vmem:[%s1 + $0x56c] sm:$0xf]
  %v402 = vld [vmem:[%s1 + $0x570] sm:$0xf]
  %v403 = vld [vmem:[%s1 + $0x574] sm:$0xf]
  %v404 = vld [vmem:[%s1 + $0x578] sm:$0xf]
  %v405 = vld [vmem:[%s1 + $0x57c] sm:$0xf]
  %v406 = vld [vmem:[%s1 + $0x580] sm:$0xf]
  %v407 = vld [vmem:[%s1 + $0x584] sm:$0xf]
  %v408 = vld [vmem:[%s1 + $0x588] sm:$0xf]
  %v409 = vld [vmem:[%s1 + $0x58c] sm:$0xf]
  %v410 = vld [vmem:[%s1 + $0x590] sm:$0xf]
  %v411 = vld [vmem:[%s1 + $0x594] sm:$0xf]
  %v412 = vld [vmem:[%s1 + $0x598] sm:$0xf]
  %v413 = vld [vmem:[%s1 + $0x59c] sm:$0xf]
  %v414 = vld [vmem:[%s1 + $0x5a0] sm:$0xf]
  %v415 = vld [vmem:[%s1 + $0x5a4] sm:$0xf]
  %v416 = vld [vmem:[%s1 + $0x5a8] sm:$0xf]
  %v417 = vld [vmem:[%s1 + $0x5ac] sm:$0xf]
  %v418 = vld [vmem:[%s1 + $0x5b0] sm:$0xf]
  %v419 = vld [vmem:[%s1 + $0x5b4] sm:$0xf]
  %v420 = vld [vmem:[%s1 + $0x5b8] sm:$0xf]
  %v421 = vld [vmem:[%s1 + $0x5bc] sm:$0xf]
  %v422 = vld [vmem:[%s1 + $0x5c0] sm:$0xf]
  %v423 = vld [vmem:[%s1 + $0x5c4] sm:$0xf]
  %v424 = vld [vmem:[%s1 + $0x5c8] sm:$0xf]
  %v425 = vld [vmem:[%s1 + $0x5cc] sm:$0xf]
  %v426 = vld [vmem:[%s1 + $0x5d0] sm:$0xf]
  %v427 = vld [vmem:[%s1 + $0x5d4] sm:$0xf]
  %v428 = vld [vmem:[%s1 + $0x5d8] sm:$0xf]
  %v429 = vld [vmem:[%s1 + $0x5dc] sm:$0xf]
  %v430 = vld [vmem:[%s1 + $0x5e0] sm:$0xf]
  %v431 = vld [vmem:[%s1 + $0x5e4] sm:$0xf]
  %v432 = vld [vmem:[%s1 + $0x5e8] sm:$0xf]
  %v433 = vld [vmem:[%s1 + $0x5ec] sm:$0xf]
  %v434 = vld [vmem:[%s1 + $0x5f0] sm:$0xf]
  %v435 = vld [vmem:[%s1 + $0x5f4] sm:$0xf]
  %v436 = vld [vmem:[%s1 + $0x5f8] sm:$0xf]
  %v437 = vld [vmem:[%s1 + $0x5fc] sm:$0xf]
  %v438 = vld [vmem:[%s1 + $0x600] sm:$0xf]
  %v439 = vld [vmem:[%s1 + $0x604] sm:$0xf]
  %v440 = vld [vmem:[%s1 + $0x608] sm:$0xf]
  %v441 = vld [vmem:[%s1 + $0x60c] sm:$0xf]
  %v442 = vld [vmem:[%s1 + $0x610] sm:$0xf]
  %v443 = vld [vmem:[%s1 + $0x614] sm:$0xf]
  %v444 = vld [vmem:[%s1 + $0x618] sm:$0xf]
  %v445 = vld [vmem:[%s1 + $0x61c] sm:$0xf]
  %v446 = vld [vmem:[%s1 + $0x620] sm:$0xf]
  %v447 = vld [vmem:[%s1 + $0x624] sm:$0xf]
  %v448 = vld [vmem:[%s1 + $0x628] sm:$0xf]
  %v449 = vld [vmem:[%s1 + $0x62c] sm:$0xf]
  %v450 = vld [vmem:[%s1 + $0x630] sm:$0xf]
  %v451 = vld [vmem:[%s1 + $0x634] sm:$0xf]
  %v452 = vld [vmem:[%s1 + $0x638] sm:$0xf]
  %v453 = vld [vmem:[%s1 + $0x63c] sm:$0xf]
  %v454 = vld [vmem:[%s2] sm:$0x1]
  %v456 = vlaneseq
  %v457 = vshrl.u32 %v456, 7
  %v458 = vsub.s32 0, %v457
  %v459 = vrot.slane %v454, %v458
  %v500 = vunpack.c.l.b16 %v15
  %v501 = vunpack.c.h.b16 %v15
  %v502 = vunpack.c.l.b16 %v16
  %v503 = vunpack.c.h.b16 %v16
  %v504 = vunpack.c.l.b16 %v17
  %v505 = vunpack.c.h.b16 %v17
  %v506 = vunpack.c.l.b16 %v18
  %v507 = vunpack.c.h.b16 %v18
  %v508 = vunpack.c.l.b16 %v19
  %v509 = vunpack.c.h.b16 %v19
  %v510 = vunpack.c.l.b16 %v20
  %v511 = vunpack.c.h.b16 %v20
  %v512 = vunpack.c.l.b16 %v21
  %v513 = vunpack.c.h.b16 %v21
  %v514 = vunpack.c.l.b16 %v22
  %v515 = vunpack.c.h.b16 %v22
  %v516 = vunpack.c.l.b16 %v23
  %v517 = vunpack.c.h.b16 %v23
  %v518 = vunpack.c.l.b16 %v24
  %v519 = vunpack.c.h.b16 %v24
  %v520 = vunpack.c.l.b16 %v25
  %v521 = vunpack.c.h.b16 %v25
  %v522 = vunpack.c.l.b16 %v26
  %v523 = vunpack.c.h.b16 %v26
  %v524 = vunpack.c.l.b16 %v27
  %v525 = vunpack.c.l.b16 %v28
  %v526 = vunpack.c.h.b16 %v28
  %v527 = vunpack.c.l.b16 %v29
  %v528 = vunpack.c.h.b16 %v29
  %v529 = vunpack.c.l.b16 %v30
  %v530 = vunpack.c.h.b16 %v30
  %v531 = vunpack.c.l.b16 %v31
  %v532 = vunpack.c.h.b16 %v31
  %v533 = vunpack.c.l.b16 %v32
  %v534 = vunpack.c.h.b16 %v32
  %v535 = vunpack.c.l.b16 %v33
  %v536 = vunpack.c.h.b16 %v33
  %v537 = vunpack.c.l.b16 %v34
  %v538 = vunpack.c.h.b16 %v34
  %v539 = vunpack.c.l.b16 %v35
  %v540 = vunpack.c.h.b16 %v35
  %v541 = vunpack.c.l.b16 %v36
  %v542 = vunpack.c.h.b16 %v36
  %v543 = vunpack.c.l.b16 %v37
  %v544 = vunpack.c.h.b16 %v37
  %v545 = vunpack.c.l.b16 %v38
  %v546 = vunpack.c.h.b16 %v38
  %v547 = vunpack.c.l.b16 %v39
  %v548 = vunpack.c.h.b16 %v39
  %v549 = vunpack.c.l.b16 %v40
  %v550 = vunpack.c.l.b16 %v41
  %v551 = vunpack.c.h.b16 %v41
  %v552 = vunpack.c.l.b16 %v42
  %v553 = vunpack.c.h.b16 %v42
  %v554 = vunpack.c.l.b16 %v43
  %v555 = vunpack.c.h.b16 %v43
  %v556 = vunpack.c.l.b16 %v44
  %v557 = vunpack.c.h.b16 %v44
  %v558 = vunpack.c.l.b16 %v45
  %v559 = vunpack.c.h.b16 %v45
  %v560 = vunpack.c.l.b16 %v46
  %v561 = vunpack.c.h.b16 %v46
  %v562 = vunpack.c.l.b16 %v47
  %v563 = vunpack.c.h.b16 %v47
  %v564 = vunpack.c.l.b16 %v48
  %v565 = vunpack.c.h.b16 %v48
  %v566 = vunpack.c.l.b16 %v49
  %v567 = vunpack.c.h.b16 %v49
  %v568 = vunpack.c.l.b16 %v50
  %v569 = vunpack.c.h.b16 %v50
  %v570 = vunpack.c.l.b16 %v51
  %v571 = vunpack.c.h.b16 %v51
  %v572 = vunpack.c.l.b16 %v52
  %v573 = vunpack.c.h.b16 %v52
  %v574 = vunpack.c.l.b16 %v53
  %v575 = vpack.c.b16 %v525, %v500
  %v576 = vpack.c.b16 %v526, %v501
  %v577 = vpack.c.b16 %v527, %v502
  %v578 = vpack.c.b16 %v528, %v503
  %v579 = vpack.c.b16 %v529, %v504
  %v580 = vpack.c.b16 %v530, %v505
  %v581 = vpack.c.b16 %v531, %v506
  %v582 = vpack.c.b16 %v532, %v507
  %v583 = vpack.c.b16 %v533, %v508
  %v584 = vpack.c.b16 %v534, %v509
  %v585 = vpack.c.b16 %v535, %v510
  %v586 = vpack.c.b16 %v536, %v511
  %v587 = vpack.c.b16 %v537, %v512
  %v588 = vpack.c.b16 %v538, %v513
  %v589 = vpack.c.b16 %v539, %v514
  %v590 = vpack.c.b16 %v540, %v515
  %v591 = vpack.c.b16 %v541, %v516
  %v592 = vpack.c.b16 %v542, %v517
  %v593 = vpack.c.b16 %v543, %v518
  %v594 = vpack.c.b16 %v544, %v519
  %v595 = vpack.c.b16 %v545, %v520
  %v596 = vpack.c.b16 %v546, %v521
  %v597 = vpack.c.b16 %v547, %v522
  %v598 = vpack.c.b16 %v548, %v523
  %v599 = vpack.c.b16 %v549, %v524
  %v600 = vpack.c.b16 %v550, %v550
  %v601 = vpack.c.b16 %v551, %v551
  %v602 = vpack.c.b16 %v552, %v552
  %v603 = vpack.c.b16 %v553, %v553
  %v604 = vpack.c.b16 %v554, %v554
  %v605 = vpack.c.b16 %v555, %v555
  %v606 = vpack.c.b16 %v556, %v556
  %v607 = vpack.c.b16 %v557, %v557
  %v608 = vpack.c.b16 %v558, %v558
  %v609 = vpack.c.b16 %v559, %v559
  %v610 = vpack.c.b16 %v560, %v560
  %v611 = vpack.c.b16 %v561, %v561
  %v612 = vpack.c.b16 %v562, %v562
  %v613 = vpack.c.b16 %v563, %v563
  %v614 = vpack.c.b16 %v564, %v564
  %v615 = vpack.c.b16 %v565, %v565
  %v616 = vpack.c.b16 %v566, %v566
  %v617 = vpack.c.b16 %v567, %v567
  %v618 = vpack.c.b16 %v568, %v568
  %v619 = vpack.c.b16 %v569, %v569
  %v620 = vpack.c.b16 %v570, %v570
  %v621 = vpack.c.b16 %v571, %v571
  %v622 = vpack.c.b16 %v572, %v572
  %v623 = vpack.c.b16 %v573, %v573
  %v624 = vpack.c.b16 %v574, %v574
  %v1075 = vunpack.c.l.b16 %v54
  %v1076 = vunpack.c.l.b16 %v55
  %v1077 = vunpack.c.l.b16 %v56
  %v1078 = vunpack.c.l.b16 %v57
  %v1079 = vunpack.c.l.b16 %v58
  %v1080 = vunpack.c.l.b16 %v59
  %v1081 = vunpack.c.l.b16 %v60
  %v1082 = vunpack.c.l.b16 %v61
  %v1083 = vunpack.c.l.b16 %v62
  %v1084 = vunpack.c.l.b16 %v63
  %v1085 = vunpack.c.l.b16 %v64
  %v1086 = vunpack.c.l.b16 %v65
  %v1087 = vunpack.c.l.b16 %v66
  %v1088 = vunpack.c.l.b16 %v67
  %v1089 = vunpack.c.l.b16 %v68
  %v1090 = vunpack.c.l.b16 %v69
  %v1091 = vunpack.c.l.b16 %v70
  %v1092 = vunpack.c.l.b16 %v71
  %v1093 = vunpack.c.l.b16 %v72
  %v1094 = vunpack.c.l.b16 %v73
  %v1095 = vunpack.c.l.b16 %v74
  %v1096 = vunpack.c.l.b16 %v75
  %v1097 = vunpack.c.l.b16 %v76
  %v1098 = vunpack.c.l.b16 %v77
  %v1099 = vunpack.c.l.b16 %v78
  %v1100 = vunpack.c.l.b16 %v79
  %v1101 = vunpack.c.l.b16 %v80
  %v1102 = vunpack.c.l.b16 %v81
  %v1103 = vunpack.c.l.b16 %v82
  %v1104 = vunpack.c.l.b16 %v83
  %v1105 = vunpack.c.l.b16 %v84
  %v1106 = vunpack.c.l.b16 %v85
  %v1107 = vunpack.c.l.b16 %v86
  %v1108 = vunpack.c.l.b16 %v87
  %v1109 = vunpack.c.l.b16 %v88
  %v1110 = vunpack.c.l.b16 %v89
  %v1111 = vunpack.c.l.b16 %v90
  %v1112 = vunpack.c.l.b16 %v91
  %v1113 = vunpack.c.l.b16 %v92
  %v1114 = vunpack.c.l.b16 %v93
  %v1115 = vunpack.c.l.b16 %v94
  %v1116 = vunpack.c.l.b16 %v95
  %v1117 = vunpack.c.l.b16 %v96
  %v1118 = vunpack.c.l.b16 %v97
  %v1119 = vunpack.c.l.b16 %v98
  %v1120 = vunpack.c.l.b16 %v99
  %v1121 = vunpack.c.l.b16 %v100
  %v1122 = vunpack.c.l.b16 %v101
  %v1123 = vunpack.c.l.b16 %v102
  %v1124 = vunpack.c.l.b16 %v103
  %v1125 = vunpack.c.l.b16 %v104
  %v1126 = vunpack.c.l.b16 %v105
  %v1127 = vunpack.c.l.b16 %v106
  %v1128 = vunpack.c.l.b16 %v107
  %v1129 = vunpack.c.l.b16 %v108
  %v1130 = vunpack.c.l.b16 %v109
  %v1131 = vunpack.c.l.b16 %v110
  %v1132 = vunpack.c.l.b16 %v111
  %v1133 = vunpack.c.l.b16 %v112
  %v1134 = vunpack.c.l.b16 %v113
  %v1135 = vunpack.c.l.b16 %v114
  %v1136 = vunpack.c.l.b16 %v115
  %v1137 = vunpack.c.l.b16 %v116
  %v1138 = vunpack.c.l.b16 %v117
  %v1139 = vunpack.c.l.b16 %v118
  %v1140 = vunpack.c.l.b16 %v119
  %v1141 = vunpack.c.l.b16 %v120
  %v1142 = vunpack.c.l.b16 %v121
  %v1143 = vunpack.c.l.b16 %v122
  %v1144 = vunpack.c.l.b16 %v123
  %v1145 = vunpack.c.l.b16 %v124
  %v1146 = vunpack.c.l.b16 %v125
  %v1147 = vunpack.c.l.b16 %v126
  %v1148 = vunpack.c.l.b16 %v127
  %v1149 = vunpack.c.l.b16 %v128
  %v1150 = vunpack.c.l.b16 %v129
  %v1151 = vunpack.c.l.b16 %v130
  %v1152 = vunpack.c.l.b16 %v131
  %v1153 = vunpack.c.l.b16 %v132
  %v1154 = vunpack.c.l.b16 %v133
  %v1155 = vunpack.c.l.b16 %v134
  %v1156 = vunpack.c.l.b16 %v135
  %v1157 = vunpack.c.l.b16 %v136
  %v1158 = vunpack.c.l.b16 %v137
  %v1159 = vunpack.c.l.b16 %v138
  %v1160 = vunpack.c.l.b16 %v139
  %v1161 = vunpack.c.l.b16 %v140
  %v1162 = vunpack.c.l.b16 %v141
  %v1163 = vunpack.c.l.b16 %v142
  %v1164 = vunpack.c.l.b16 %v143
  %v1165 = vunpack.c.l.b16 %v144
  %v1166 = vunpack.c.l.b16 %v145
  %v1167 = vunpack.c.l.b16 %v146
  %v1168 = vunpack.c.l.b16 %v147
  %v1169 = vunpack.c.l.b16 %v148
  %v1170 = vunpack.c.l.b16 %v149
  %v1171 = vunpack.c.l.b16 %v150
  %v1172 = vunpack.c.l.b16 %v151
  %v1173 = vunpack.c.l.b16 %v152
  %v1174 = vunpack.c.l.b16 %v153
  %v1175 = vunpack.c.l.b16 %v154
  %v1176 = vunpack.c.l.b16 %v155
  %v1177 = vunpack.c.l.b16 %v156
  %v1178 = vunpack.c.l.b16 %v157
  %v1179 = vunpack.c.l.b16 %v158
  %v1180 = vunpack.c.l.b16 %v159
  %v1181 = vunpack.c.l.b16 %v160
  %v1182 = vunpack.c.l.b16 %v161
  %v1183 = vunpack.c.l.b16 %v162
  %v1184 = vunpack.c.l.b16 %v163
  %v1185 = vunpack.c.l.b16 %v164
  %v1186 = vunpack.c.l.b16 %v165
  %v1187 = vunpack.c.l.b16 %v166
  %v1188 = vunpack.c.l.b16 %v167
  %v1189 = vunpack.c.l.b16 %v168
  %v1190 = vunpack.c.l.b16 %v169
  %v1191 = vunpack.c.l.b16 %v170
  %v1192 = vunpack.c.l.b16 %v171
  %v1193 = vunpack.c.l.b16 %v172
  %v1194 = vunpack.c.l.b16 %v173
  %v1195 = vunpack.c.l.b16 %v174
  %v1196 = vunpack.c.l.b16 %v175
  %v1197 = vunpack.c.l.b16 %v176
  %v1198 = vunpack.c.l.b16 %v177
  %v1199 = vunpack.c.l.b16 %v178
  %v1200 = vunpack.c.l.b16 %v179
  %v1201 = vunpack.c.l.b16 %v180
  %v1202 = vunpack.c.l.b16 %v181
  %v1203 = vunpack.c.l.b16 %v182
  %v1204 = vunpack.c.l.b16 %v183
  %v1205 = vunpack.c.l.b16 %v184
  %v1206 = vunpack.c.l.b16 %v185
  %v1207 = vunpack.c.l.b16 %v186
  %v1208 = vunpack.c.l.b16 %v187
  %v1209 = vunpack.c.l.b16 %v188
  %v1210 = vunpack.c.l.b16 %v189
  %v1211 = vunpack.c.l.b16 %v190
  %v1212 = vunpack.c.l.b16 %v191
  %v1213 = vunpack.c.l.b16 %v192
  %v1214 = vunpack.c.l.b16 %v193
  %v1215 = vunpack.c.l.b16 %v194
  %v1216 = vunpack.c.l.b16 %v195
  %v1217 = vunpack.c.l.b16 %v196
  %v1218 = vunpack.c.l.b16 %v197
  %v1219 = vunpack.c.l.b16 %v198
  %v1220 = vunpack.c.l.b16 %v199
  %v1221 = vunpack.c.l.b16 %v200
  %v1222 = vunpack.c.l.b16 %v201
  %v1223 = vunpack.c.l.b16 %v202
  %v1224 = vunpack.c.l.b16 %v203
  %v1225 = vunpack.c.l.b16 %v204
  %v1226 = vunpack.c.l.b16 %v205
  %v1227 = vunpack.c.l.b16 %v206
  %v1228 = vunpack.c.l.b16 %v207
  %v1229 = vunpack.c.l.b16 %v208
  %v1230 = vunpack.c.l.b16 %v209
  %v1231 = vunpack.c.l.b16 %v210
  %v1232 = vunpack.c.l.b16 %v211
  %v1233 = vunpack.c.l.b16 %v212
  %v1234 = vunpack.c.l.b16 %v213
  %v1235 = vunpack.c.l.b16 %v214
  %v1236 = vunpack.c.l.b16 %v215
  %v1237 = vunpack.c.l.b16 %v216
  %v1238 = vunpack.c.l.b16 %v217
  %v1239 = vunpack.c.l.b16 %v218
  %v1240 = vunpack.c.l.b16 %v219
  %v1241 = vunpack.c.l.b16 %v220
  %v1242 = vunpack.c.l.b16 %v221
  %v1243 = vunpack.c.l.b16 %v222
  %v1244 = vunpack.c.l.b16 %v223
  %v1245 = vunpack.c.l.b16 %v224
  %v1246 = vunpack.c.l.b16 %v225
  %v1247 = vunpack.c.l.b16 %v226
  %v1248 = vunpack.c.l.b16 %v227
  %v1249 = vunpack.c.l.b16 %v228
  %v1250 = vunpack.c.l.b16 %v229
  %v1251 = vunpack.c.l.b16 %v230
  %v1252 = vunpack.c.l.b16 %v231
  %v1253 = vunpack.c.l.b16 %v232
  %v1254 = vunpack.c.l.b16 %v233
  %v1255 = vunpack.c.l.b16 %v234
  %v1256 = vunpack.c.l.b16 %v235
  %v1257 = vunpack.c.l.b16 %v236
  %v1258 = vunpack.c.l.b16 %v237
  %v1259 = vunpack.c.l.b16 %v238
  %v1260 = vunpack.c.l.b16 %v239
  %v1261 = vunpack.c.l.b16 %v240
  %v1262 = vunpack.c.l.b16 %v241
  %v1263 = vunpack.c.l.b16 %v242
  %v1264 = vunpack.c.l.b16 %v243
  %v1265 = vunpack.c.l.b16 %v244
  %v1266 = vunpack.c.l.b16 %v245
  %v1267 = vunpack.c.l.b16 %v246
  %v1268 = vunpack.c.l.b16 %v247
  %v1269 = vunpack.c.l.b16 %v248
  %v1270 = vunpack.c.l.b16 %v249
  %v1271 = vunpack.c.l.b16 %v250
  %v1272 = vunpack.c.l.b16 %v251
  %v1273 = vunpack.c.l.b16 %v252
  %v1274 = vunpack.c.l.b16 %v253
  %v1275 = vunpack.c.l.b16 %v254
  %v1276 = vunpack.c.l.b16 %v255
  %v1277 = vunpack.c.l.b16 %v256
  %v1278 = vunpack.c.l.b16 %v257
  %v1279 = vunpack.c.l.b16 %v258
  %v1280 = vunpack.c.l.b16 %v259
  %v1281 = vunpack.c.l.b16 %v260
  %v1282 = vunpack.c.l.b16 %v261
  %v1283 = vunpack.c.l.b16 %v262
  %v1284 = vunpack.c.l.b16 %v263
  %v1285 = vunpack.c.l.b16 %v264
  %v1286 = vunpack.c.l.b16 %v265
  %v1287 = vunpack.c.l.b16 %v266
  %v1288 = vunpack.c.l.b16 %v267
  %v1289 = vunpack.c.l.b16 %v268
  %v1290 = vunpack.c.l.b16 %v269
  %v1291 = vunpack.c.l.b16 %v270
  %v1292 = vunpack.c.l.b16 %v271
  %v1293 = vunpack.c.l.b16 %v272
  %v1294 = vunpack.c.l.b16 %v273
  %v1295 = vunpack.c.l.b16 %v274
  %v1296 = vunpack.c.l.b16 %v275
  %v1297 = vunpack.c.l.b16 %v276
  %v1298 = vunpack.c.l.b16 %v277
  %v1299 = vunpack.c.l.b16 %v278
  %v1300 = vunpack.c.l.b16 %v279
  %v1301 = vunpack.c.l.b16 %v280
  %v1302 = vunpack.c.l.b16 %v281
  %v1303 = vunpack.c.l.b16 %v282
  %v1304 = vunpack.c.l.b16 %v283
  %v1305 = vunpack.c.l.b16 %v284
  %v1306 = vunpack.c.l.b16 %v285
  %v1307 = vunpack.c.l.b16 %v286
  %v1308 = vunpack.c.l.b16 %v287
  %v1309 = vunpack.c.l.b16 %v288
  %v1310 = vunpack.c.l.b16 %v289
  %v1311 = vunpack.c.l.b16 %v290
  %v1312 = vunpack.c.l.b16 %v291
  %v1313 = vunpack.c.l.b16 %v292
  %v1314 = vunpack.c.l.b16 %v293
  %v1315 = vunpack.c.l.b16 %v294
  %v1316 = vunpack.c.l.b16 %v295
  %v1317 = vunpack.c.l.b16 %v296
  %v1318 = vunpack.c.l.b16 %v297
  %v1319 = vunpack.c.l.b16 %v298
  %v1320 = vunpack.c.l.b16 %v299
  %v1321 = vunpack.c.l.b16 %v300
  %v1322 = vunpack.c.l.b16 %v301
  %v1323 = vunpack.c.l.b16 %v302
  %v1324 = vunpack.c.l.b16 %v303
  %v1325 = vunpack.c.l.b16 %v304
  %v1326 = vunpack.c.l.b16 %v305
  %v1327 = vunpack.c.l.b16 %v306
  %v1328 = vunpack.c.l.b16 %v307
  %v1329 = vunpack.c.l.b16 %v308
  %v1330 = vunpack.c.l.b16 %v309
  %v1331 = vunpack.c.l.b16 %v310
  %v1332 = vunpack.c.l.b16 %v311
  %v1333 = vunpack.c.l.b16 %v312
  %v1334 = vunpack.c.l.b16 %v313
  %v1335 = vunpack.c.l.b16 %v314
  %v1336 = vunpack.c.l.b16 %v315
  %v1337 = vunpack.c.l.b16 %v316
  %v1338 = vunpack.c.l.b16 %v317
  %v1339 = vunpack.c.l.b16 %v318
  %v1340 = vunpack.c.l.b16 %v319
  %v1341 = vunpack.c.l.b16 %v320
  %v1342 = vunpack.c.l.b16 %v321
  %v1343 = vunpack.c.l.b16 %v322
  %v1344 = vunpack.c.l.b16 %v323
  %v1345 = vunpack.c.l.b16 %v324
  %v1346 = vunpack.c.l.b16 %v325
  %v1347 = vunpack.c.l.b16 %v326
  %v1348 = vunpack.c.l.b16 %v327
  %v1349 = vunpack.c.l.b16 %v328
  %v1350 = vunpack.c.l.b16 %v329
  %v1351 = vunpack.c.l.b16 %v330
  %v1352 = vunpack.c.l.b16 %v331
  %v1353 = vunpack.c.l.b16 %v332
  %v1354 = vunpack.c.l.b16 %v333
  %v1355 = vunpack.c.l.b16 %v334
  %v1356 = vunpack.c.l.b16 %v335
  %v1357 = vunpack.c.l.b16 %v336
  %v1358 = vunpack.c.l.b16 %v337
  %v1359 = vunpack.c.l.b16 %v338
  %v1360 = vunpack.c.l.b16 %v339
  %v1361 = vunpack.c.l.b16 %v340
  %v1362 = vunpack.c.l.b16 %v341
  %v1363 = vunpack.c.l.b16 %v342
  %v1364 = vunpack.c.l.b16 %v343
  %v1365 = vunpack.c.l.b16 %v344
  %v1366 = vunpack.c.l.b16 %v345
  %v1367 = vunpack.c.l.b16 %v346
  %v1368 = vunpack.c.l.b16 %v347
  %v1369 = vunpack.c.l.b16 %v348
  %v1370 = vunpack.c.l.b16 %v349
  %v1371 = vunpack.c.l.b16 %v350
  %v1372 = vunpack.c.l.b16 %v351
  %v1373 = vunpack.c.l.b16 %v352
  %v1374 = vunpack.c.l.b16 %v353
  %v1375 = vunpack.c.l.b16 %v354
  %v1376 = vunpack.c.l.b16 %v355
  %v1377 = vunpack.c.l.b16 %v356
  %v1378 = vunpack.c.l.b16 %v357
  %v1379 = vunpack.c.l.b16 %v358
  %v1380 = vunpack.c.l.b16 %v359
  %v1381 = vunpack.c.l.b16 %v360
  %v1382 = vunpack.c.l.b16 %v361
  %v1383 = vunpack.c.l.b16 %v362
  %v1384 = vunpack.c.l.b16 %v363
  %v1385 = vunpack.c.l.b16 %v364
  %v1386 = vunpack.c.l.b16 %v365
  %v1387 = vunpack.c.l.b16 %v366
  %v1388 = vunpack.c.l.b16 %v367
  %v1389 = vunpack.c.l.b16 %v368
  %v1390 = vunpack.c.l.b16 %v369
  %v1391 = vunpack.c.l.b16 %v370
  %v1392 = vunpack.c.l.b16 %v371
  %v1393 = vunpack.c.l.b16 %v372
  %v1394 = vunpack.c.l.b16 %v373
  %v1395 = vunpack.c.l.b16 %v374
  %v1396 = vunpack.c.l.b16 %v375
  %v1397 = vunpack.c.l.b16 %v376
  %v1398 = vunpack.c.l.b16 %v377
  %v1399 = vunpack.c.l.b16 %v378
  %v1400 = vunpack.c.l.b16 %v379
  %v1401 = vunpack.c.l.b16 %v380
  %v1402 = vunpack.c.l.b16 %v381
  %v1403 = vunpack.c.l.b16 %v382
  %v1404 = vunpack.c.l.b16 %v383
  %v1405 = vunpack.c.l.b16 %v384
  %v1406 = vunpack.c.l.b16 %v385
  %v1407 = vunpack.c.l.b16 %v386
  %v1408 = vunpack.c.l.b16 %v387
  %v1409 = vunpack.c.l.b16 %v388
  %v1410 = vunpack.c.l.b16 %v389
  %v1411 = vunpack.c.l.b16 %v390
  %v1412 = vunpack.c.l.b16 %v391
  %v1413 = vunpack.c.l.b16 %v392
  %v1414 = vunpack.c.l.b16 %v393
  %v1415 = vunpack.c.l.b16 %v394
  %v1416 = vunpack.c.l.b16 %v395
  %v1417 = vunpack.c.l.b16 %v396
  %v1418 = vunpack.c.l.b16 %v397
  %v1419 = vunpack.c.l.b16 %v398
  %v1420 = vunpack.c.l.b16 %v399
  %v1421 = vunpack.c.l.b16 %v400
  %v1422 = vunpack.c.l.b16 %v401
  %v1423 = vunpack.c.l.b16 %v402
  %v1424 = vunpack.c.l.b16 %v403
  %v1425 = vunpack.c.l.b16 %v404
  %v1426 = vunpack.c.l.b16 %v405
  %v1427 = vunpack.c.l.b16 %v406
  %v1428 = vunpack.c.l.b16 %v407
  %v1429 = vunpack.c.l.b16 %v408
  %v1430 = vunpack.c.l.b16 %v409
  %v1431 = vunpack.c.l.b16 %v410
  %v1432 = vunpack.c.l.b16 %v411
  %v1433 = vunpack.c.l.b16 %v412
  %v1434 = vunpack.c.l.b16 %v413
  %v1435 = vunpack.c.l.b16 %v414
  %v1436 = vunpack.c.l.b16 %v415
  %v1437 = vunpack.c.l.b16 %v416
  %v1438 = vunpack.c.l.b16 %v417
  %v1439 = vunpack.c.l.b16 %v418
  %v1440 = vunpack.c.l.b16 %v419
  %v1441 = vunpack.c.l.b16 %v420
  %v1442 = vunpack.c.l.b16 %v421
  %v1443 = vunpack.c.l.b16 %v422
  %v1444 = vunpack.c.l.b16 %v423
  %v1445 = vunpack.c.l.b16 %v424
  %v1446 = vunpack.c.l.b16 %v425
  %v1447 = vunpack.c.l.b16 %v426
  %v1448 = vunpack.c.l.b16 %v427
  %v1449 = vunpack.c.l.b16 %v428
  %v1450 = vunpack.c.l.b16 %v429
  %v1451 = vunpack.c.l.b16 %v430
  %v1452 = vunpack.c.l.b16 %v431
  %v1453 = vunpack.c.l.b16 %v432
  %v1454 = vunpack.c.l.b16 %v433
  %v1455 = vunpack.c.l.b16 %v434
  %v1456 = vunpack.c.l.b16 %v435
  %v1457 = vunpack.c.l.b16 %v436
  %v1458 = vunpack.c.l.b16 %v437
  %v1459 = vunpack.c.l.b16 %v438
  %v1460 = vunpack.c.l.b16 %v439
  %v1461 = vunpack.c.l.b16 %v440
  %v1462 = vunpack.c.l.b16 %v441
  %v1463 = vunpack.c.l.b16 %v442
  %v1464 = vunpack.c.l.b16 %v443
  %v1465 = vunpack.c.l.b16 %v444
  %v1466 = vunpack.c.l.b16 %v445
  %v1467 = vunpack.c.l.b16 %v446
  %v1468 = vunpack.c.l.b16 %v447
  %v1469 = vunpack.c.l.b16 %v448
  %v1470 = vunpack.c.l.b16 %v449
  %v1471 = vunpack.c.l.b16 %v450
  %v1472 = vunpack.c.l.b16 %v451
  %v1473 = vunpack.c.l.b16 %v452
  %v1474 = vunpack.c.l.b16 %v453
  %v1475 = vpack.c.b16 %v1076, %v1075
  %v1476 = vpack.c.b16 %v1078, %v1077
  %v1477 = vpack.c.b16 %v1080, %v1079
  %v1478 = vpack.c.b16 %v1082, %v1081
  %v1479 = vpack.c.b16 %v1084, %v1083
  %v1480 = vpack.c.b16 %v1086, %v1085
  %v1481 = vpack.c.b16 %v1088, %v1087
  %v1482 = vpack.c.b16 %v1090, %v1089
  %v1483 = vpack.c.b16 %v1092, %v1091
  %v1484 = vpack.c.b16 %v1094, %v1093
  %v1485 = vpack.c.b16 %v1096, %v1095
  %v1486 = vpack.c.b16 %v1098, %v1097
  %v1487 = vpack.c.b16 %v1100, %v1099
  %v1488 = vpack.c.b16 %v1102, %v1101
  %v1489 = vpack.c.b16 %v1104, %v1103
  %v1490 = vpack.c.b16 %v1106, %v1105
  %v1491 = vpack.c.b16 %v1108, %v1107
  %v1492 = vpack.c.b16 %v1110, %v1109
  %v1493 = vpack.c.b16 %v1112, %v1111
  %v1494 = vpack.c.b16 %v1114, %v1113
  %v1495 = vpack.c.b16 %v1116, %v1115
  %v1496 = vpack.c.b16 %v1118, %v1117
  %v1497 = vpack.c.b16 %v1120, %v1119
  %v1498 = vpack.c.b16 %v1122, %v1121
  %v1499 = vpack.c.b16 %v1124, %v1123
  %v1500 = vpack.c.b16 %v1126, %v1125
  %v1501 = vpack.c.b16 %v1128, %v1127
  %v1502 = vpack.c.b16 %v1130, %v1129
  %v1503 = vpack.c.b16 %v1132, %v1131
  %v1504 = vpack.c.b16 %v1134, %v1133
  %v1505 = vpack.c.b16 %v1136, %v1135
  %v1506 = vpack.c.b16 %v1138, %v1137
  %v1507 = vpack.c.b16 %v1140, %v1139
  %v1508 = vpack.c.b16 %v1142, %v1141
  %v1509 = vpack.c.b16 %v1144, %v1143
  %v1510 = vpack.c.b16 %v1146, %v1145
  %v1511 = vpack.c.b16 %v1148, %v1147
  %v1512 = vpack.c.b16 %v1150, %v1149
  %v1513 = vpack.c.b16 %v1152, %v1151
  %v1514 = vpack.c.b16 %v1154, %v1153
  %v1515 = vpack.c.b16 %v1156, %v1155
  %v1516 = vpack.c.b16 %v1158, %v1157
  %v1517 = vpack.c.b16 %v1160, %v1159
  %v1518 = vpack.c.b16 %v1162, %v1161
  %v1519 = vpack.c.b16 %v1164, %v1163
  %v1520 = vpack.c.b16 %v1166, %v1165
  %v1521 = vpack.c.b16 %v1168, %v1167
  %v1522 = vpack.c.b16 %v1170, %v1169
  %v1523 = vpack.c.b16 %v1172, %v1171
  %v1524 = vpack.c.b16 %v1174, %v1173
  %v1525 = vpack.c.b16 %v1176, %v1175
  %v1526 = vpack.c.b16 %v1178, %v1177
  %v1527 = vpack.c.b16 %v1180, %v1179
  %v1528 = vpack.c.b16 %v1182, %v1181
  %v1529 = vpack.c.b16 %v1184, %v1183
  %v1530 = vpack.c.b16 %v1186, %v1185
  %v1531 = vpack.c.b16 %v1188, %v1187
  %v1532 = vpack.c.b16 %v1190, %v1189
  %v1533 = vpack.c.b16 %v1192, %v1191
  %v1534 = vpack.c.b16 %v1194, %v1193
  %v1535 = vpack.c.b16 %v1196, %v1195
  %v1536 = vpack.c.b16 %v1198, %v1197
  %v1537 = vpack.c.b16 %v1200, %v1199
  %v1538 = vpack.c.b16 %v1202, %v1201
  %v1539 = vpack.c.b16 %v1204, %v1203
  %v1540 = vpack.c.b16 %v1206, %v1205
  %v1541 = vpack.c.b16 %v1208, %v1207
  %v1542 = vpack.c.b16 %v1210, %v1209
  %v1543 = vpack.c.b16 %v1212, %v1211
  %v1544 = vpack.c.b16 %v1214, %v1213
  %v1545 = vpack.c.b16 %v1216, %v1215
  %v1546 = vpack.c.b16 %v1218, %v1217
  %v1547 = vpack.c.b16 %v1220, %v1219
  %v1548 = vpack.c.b16 %v1222, %v1221
  %v1549 = vpack.c.b16 %v1224, %v1223
  %v1550 = vpack.c.b16 %v1226, %v1225
  %v1551 = vpack.c.b16 %v1228, %v1227
  %v1552 = vpack.c.b16 %v1230, %v1229
  %v1553 = vpack.c.b16 %v1232, %v1231
  %v1554 = vpack.c.b16 %v1234, %v1233
  %v1555 = vpack.c.b16 %v1236, %v1235
  %v1556 = vpack.c.b16 %v1238, %v1237
  %v1557 = vpack.c.b16 %v1240, %v1239
  %v1558 = vpack.c.b16 %v1242, %v1241
  %v1559 = vpack.c.b16 %v1244, %v1243
  %v1560 = vpack.c.b16 %v1246, %v1245
  %v1561 = vpack.c.b16 %v1248, %v1247
  %v1562 = vpack.c.b16 %v1250, %v1249
  %v1563 = vpack.c.b16 %v1252, %v1251
  %v1564 = vpack.c.b16 %v1254, %v1253
  %v1565 = vpack.c.b16 %v1256, %v1255
  %v1566 = vpack.c.b16 %v1258, %v1257
  %v1567 = vpack.c.b16 %v1260, %v1259
  %v1568 = vpack.c.b16 %v1262, %v1261
  %v1569 = vpack.c.b16 %v1264, %v1263
  %v1570 = vpack.c.b16 %v1266, %v1265
  %v1571 = vpack.c.b16 %v1268, %v1267
  %v1572 = vpack.c.b16 %v1270, %v1269
  %v1573 = vpack.c.b16 %v1272, %v1271
  %v1574 = vpack.c.b16 %v1274, %v1273
  %v1575 = vpack.c.b16 %v1276, %v1275
  %v1576 = vpack.c.b16 %v1278, %v1277
  %v1577 = vpack.c.b16 %v1280, %v1279
  %v1578 = vpack.c.b16 %v1282, %v1281
  %v1579 = vpack.c.b16 %v1284, %v1283
  %v1580 = vpack.c.b16 %v1286, %v1285
  %v1581 = vpack.c.b16 %v1288, %v1287
  %v1582 = vpack.c.b16 %v1290, %v1289
  %v1583 = vpack.c.b16 %v1292, %v1291
  %v1584 = vpack.c.b16 %v1294, %v1293
  %v1585 = vpack.c.b16 %v1296, %v1295
  %v1586 = vpack.c.b16 %v1298, %v1297
  %v1587 = vpack.c.b16 %v1300, %v1299
  %v1588 = vpack.c.b16 %v1302, %v1301
  %v1589 = vpack.c.b16 %v1304, %v1303
  %v1590 = vpack.c.b16 %v1306, %v1305
  %v1591 = vpack.c.b16 %v1308, %v1307
  %v1592 = vpack.c.b16 %v1310, %v1309
  %v1593 = vpack.c.b16 %v1312, %v1311
  %v1594 = vpack.c.b16 %v1314, %v1313
  %v1595 = vpack.c.b16 %v1316, %v1315
  %v1596 = vpack.c.b16 %v1318, %v1317
  %v1597 = vpack.c.b16 %v1320, %v1319
  %v1598 = vpack.c.b16 %v1322, %v1321
  %v1599 = vpack.c.b16 %v1324, %v1323
  %v1600 = vpack.c.b16 %v1326, %v1325
  %v1601 = vpack.c.b16 %v1328, %v1327
  %v1602 = vpack.c.b16 %v1330, %v1329
  %v1603 = vpack.c.b16 %v1332, %v1331
  %v1604 = vpack.c.b16 %v1334, %v1333
  %v1605 = vpack.c.b16 %v1336, %v1335
  %v1606 = vpack.c.b16 %v1338, %v1337
  %v1607 = vpack.c.b16 %v1340, %v1339
  %v1608 = vpack.c.b16 %v1342, %v1341
  %v1609 = vpack.c.b16 %v1344, %v1343
  %v1610 = vpack.c.b16 %v1346, %v1345
  %v1611 = vpack.c.b16 %v1348, %v1347
  %v1612 = vpack.c.b16 %v1350, %v1349
  %v1613 = vpack.c.b16 %v1352, %v1351
  %v1614 = vpack.c.b16 %v1354, %v1353
  %v1615 = vpack.c.b16 %v1356, %v1355
  %v1616 = vpack.c.b16 %v1358, %v1357
  %v1617 = vpack.c.b16 %v1360, %v1359
  %v1618 = vpack.c.b16 %v1362, %v1361
  %v1619 = vpack.c.b16 %v1364, %v1363
  %v1620 = vpack.c.b16 %v1366, %v1365
  %v1621 = vpack.c.b16 %v1368, %v1367
  %v1622 = vpack.c.b16 %v1370, %v1369
  %v1623 = vpack.c.b16 %v1372, %v1371
  %v1624 = vpack.c.b16 %v1374, %v1373
  %v1625 = vpack.c.b16 %v1376, %v1375
  %v1626 = vpack.c.b16 %v1378, %v1377
  %v1627 = vpack.c.b16 %v1380, %v1379
  %v1628 = vpack.c.b16 %v1382, %v1381
  %v1629 = vpack.c.b16 %v1384, %v1383
  %v1630 = vpack.c.b16 %v1386, %v1385
  %v1631 = vpack.c.b16 %v1388, %v1387
  %v1632 = vpack.c.b16 %v1390, %v1389
  %v1633 = vpack.c.b16 %v1392, %v1391
  %v1634 = vpack.c.b16 %v1394, %v1393
  %v1635 = vpack.c.b16 %v1396, %v1395
  %v1636 = vpack.c.b16 %v1398, %v1397
  %v1637 = vpack.c.b16 %v1400, %v1399
  %v1638 = vpack.c.b16 %v1402, %v1401
  %v1639 = vpack.c.b16 %v1404, %v1403
  %v1640 = vpack.c.b16 %v1406, %v1405
  %v1641 = vpack.c.b16 %v1408, %v1407
  %v1642 = vpack.c.b16 %v1410, %v1409
  %v1643 = vpack.c.b16 %v1412, %v1411
  %v1644 = vpack.c.b16 %v1414, %v1413
  %v1645 = vpack.c.b16 %v1416, %v1415
  %v1646 = vpack.c.b16 %v1418, %v1417
  %v1647 = vpack.c.b16 %v1420, %v1419
  %v1648 = vpack.c.b16 %v1422, %v1421
  %v1649 = vpack.c.b16 %v1424, %v1423
  %v1650 = vpack.c.b16 %v1426, %v1425
  %v1651 = vpack.c.b16 %v1428, %v1427
  %v1652 = vpack.c.b16 %v1430, %v1429
  %v1653 = vpack.c.b16 %v1432, %v1431
  %v1654 = vpack.c.b16 %v1434, %v1433
  %v1655 = vpack.c.b16 %v1436, %v1435
  %v1656 = vpack.c.b16 %v1438, %v1437
  %v1657 = vpack.c.b16 %v1440, %v1439
  %v1658 = vpack.c.b16 %v1442, %v1441
  %v1659 = vpack.c.b16 %v1444, %v1443
  %v1660 = vpack.c.b16 %v1446, %v1445
  %v1661 = vpack.c.b16 %v1448, %v1447
  %v1662 = vpack.c.b16 %v1450, %v1449
  %v1663 = vpack.c.b16 %v1452, %v1451
  %v1664 = vpack.c.b16 %v1454, %v1453
  %v1665 = vpack.c.b16 %v1456, %v1455
  %v1666 = vpack.c.b16 %v1458, %v1457
  %v1667 = vpack.c.b16 %v1460, %v1459
  %v1668 = vpack.c.b16 %v1462, %v1461
  %v1669 = vpack.c.b16 %v1464, %v1463
  %v1670 = vpack.c.b16 %v1466, %v1465
  %v1671 = vpack.c.b16 %v1468, %v1467
  %v1672 = vpack.c.b16 %v1470, %v1469
  %v1673 = vpack.c.b16 %v1472, %v1471
  %v1674 = vpack.c.b16 %v1474, %v1473
  %1875 = vmatprep.subr.bf16.mxu0 0
  %1876 = vmatpush1.bf16.msra.mxu0 %v1482
  %1877 = vmatprep.subr.bf16.mxu0 0
  %1878 = vmatpush1.bf16.msra.mxu0 %v1481
  %1879 = vmatprep.subr.bf16.mxu0 0
  %1880 = vmatpush1.bf16.msra.mxu0 %v1480
  %1881 = vmatprep.subr.bf16.mxu0 0
  %1882 = vmatpush1.bf16.msra.mxu0 %v1479
  %1883 = vmatprep.subr.bf16.mxu0 0
  %1884 = vmatpush1.bf16.msra.mxu0 %v1478
  %1885 = vmatprep.subr.bf16.mxu0 0
  %1886 = vmatpush1.bf16.msra.mxu0 %v1477
  %1887 = vmatprep.subr.bf16.mxu0 0
  %1888 = vmatpush1.bf16.msra.mxu0 %v1476
  %1889 = vmatprep.subr.bf16.mxu0 0
  %1890 = vmatpush1.bf16.msra.mxu0 %v1475
  %1891 = vmatprep.subr.bf16.mxu0 0
  %1892 = vmatpush2.bf16.msra.mxu0 %v1490
  %1893 = vmatprep.subr.bf16.mxu0 0
  %1894 = vmatpush2.bf16.msra.mxu0 %v1489
  %1895 = vmatprep.subr.bf16.mxu0 0
  %1896 = vmatpush2.bf16.msra.mxu0 %v1488
  %1897 = vmatprep.subr.bf16.mxu0 0
  %1898 = vmatpush2.bf16.msra.mxu0 %v1487
  %1899 = vmatprep.subr.bf16.mxu0 0
  %1900 = vmatpush2.bf16.msra.mxu0 %v1486
  %1901 = vmatprep.subr.bf16.mxu0 0
  %1902 = vmatpush2.bf16.msra.mxu0 %v1485
  %1903 = vmatprep.subr.bf16.mxu0 0
  %1904 = vmatpush2.bf16.msra.mxu0 %v1484
  %1905 = vmatprep.subr.bf16.mxu0 0
  %1906 = vmatpush2.bf16.msra.mxu0 %v1483
  %1907 = vmatprep.mubr.bf16.mxu0 %v576
  %1908 = vmatmul.mubr.bf16.gmra.mxu0 %v575
  %v1909 = vpop.f32.mrf.mxu0
  %v1910 = vadd.f32 %v459, %v1909
  %v1911 = vpop.f32.mrf.mxu0
  %v1912 = vpop.f32.mrf.mxu0
  %v1913 = vadd.f32 %v459, %v1912
  %v1914 = vpop.f32.mrf.mxu0
  %1915 = vmatprep.mubr.bf16.mxu0 %v601
  %1916 = vmatmul.mubr.bf16.gmra.mxu0 %v600
  %v1917 = vpop.f32.mrf.mxu0
  %v1918 = vadd.f32 %v459, %v1917
  %v1919 = vpop.f32.mrf.mxu0
  %v1920 = vpop.f32.mrf.mxu0
  %v1921 = vpop.f32.mrf.mxu0
  %1922 = vdwg.mxu0
  %1923 = vmatprep.subr.bf16.mxu0 0
  %1924 = vmatpush1.bf16.msra.mxu0 %v1498
  %1925 = vmatprep.subr.bf16.mxu0 0
  %1926 = vmatpush1.bf16.msra.mxu0 %v1497
  %1927 = vmatprep.subr.bf16.mxu0 0
  %1928 = vmatpush1.bf16.msra.mxu0 %v1496
  %1929 = vmatprep.subr.bf16.mxu0 0
  %1930 = vmatpush1.bf16.msra.mxu0 %v1495
  %1931 = vmatprep.subr.bf16.mxu0 0
  %1932 = vmatpush1.bf16.msra.mxu0 %v1494
  %1933 = vmatprep.subr.bf16.mxu0 0
  %1934 = vmatpush1.bf16.msra.mxu0 %v1493
  %1935 = vmatprep.subr.bf16.mxu0 0
  %1936 = vmatpush1.bf16.msra.mxu0 %v1492
  %1937 = vmatprep.subr.bf16.mxu0 0
  %1938 = vmatpush1.bf16.msra.mxu0 %v1491
  %1939 = vmatprep.subr.bf16.mxu0 0
  %1940 = vmatpush2.bf16.msra.mxu0 %v1506
  %1941 = vmatprep.subr.bf16.mxu0 0
  %1942 = vmatpush2.bf16.msra.mxu0 %v1505
  %1943 = vmatprep.subr.bf16.mxu0 0
  %1944 = vmatpush2.bf16.msra.mxu0 %v1504
  %1945 = vmatprep.subr.bf16.mxu0 0
  %1946 = vmatpush2.bf16.msra.mxu0 %v1503
  %1947 = vmatprep.subr.bf16.mxu0 0
  %1948 = vmatpush2.bf16.msra.mxu0 %v1502
  %1949 = vmatprep.subr.bf16.mxu0 0
  %1950 = vmatpush2.bf16.msra.mxu0 %v1501
  %1951 = vmatprep.subr.bf16.mxu0 0
  %1952 = vmatpush2.bf16.msra.mxu0 %v1500
  %1953 = vmatprep.subr.bf16.mxu0 0
  %1954 = vmatpush2.bf16.msra.mxu0 %v1499
  %1955 = vmatprep.mubr.bf16.mxu0 %v578
  %1956 = vmatmul.mubr.bf16.gmra.mxu0 %v577
  %v1957 = vpop.f32.mrf.mxu0
  %v1958 = vadd.f32 %v1910, %v1957
  %v1959 = vpop.f32.mrf.mxu0
  %v1960 = vpop.f32.mrf.mxu0
  %v1961 = vadd.f32 %v1913, %v1960
  %v1962 = vpop.f32.mrf.mxu0
  %1963 = vmatprep.mubr.bf16.mxu0 %v603
  %1964 = vmatmul.mubr.bf16.gmra.mxu0 %v602
  %v1965 = vpop.f32.mrf.mxu0
  %v1966 = vadd.f32 %v1918, %v1965
  %v1967 = vpop.f32.mrf.mxu0
  %v1968 = vpop.f32.mrf.mxu0
  %v1969 = vpop.f32.mrf.mxu0
  %1970 = vdwg.mxu0
  %1971 = vmatprep.subr.bf16.mxu0 0
  %1972 = vmatpush1.bf16.msra.mxu0 %v1514
  %1973 = vmatprep.subr.bf16.mxu0 0
  %1974 = vmatpush1.bf16.msra.mxu0 %v1513
  %1975 = vmatprep.subr.bf16.mxu0 0
  %1976 = vmatpush1.bf16.msra.mxu0 %v1512
  %1977 = vmatprep.subr.bf16.mxu0 0
  %1978 = vmatpush1.bf16.msra.mxu0 %v1511
  %1979 = vmatprep.subr.bf16.mxu0 0
  %1980 = vmatpush1.bf16.msra.mxu0 %v1510
  %1981 = vmatprep.subr.bf16.mxu0 0
  %1982 = vmatpush1.bf16.msra.mxu0 %v1509
  %1983 = vmatprep.subr.bf16.mxu0 0
  %1984 = vmatpush1.bf16.msra.mxu0 %v1508
  %1985 = vmatprep.subr.bf16.mxu0 0
  %1986 = vmatpush1.bf16.msra.mxu0 %v1507
  %1987 = vmatprep.subr.bf16.mxu0 0
  %1988 = vmatpush2.bf16.msra.mxu0 %v1522
  %1989 = vmatprep.subr.bf16.mxu0 0
  %1990 = vmatpush2.bf16.msra.mxu0 %v1521
  %1991 = vmatprep.subr.bf16.mxu0 0
  %1992 = vmatpush2.bf16.msra.mxu0 %v1520
  %1993 = vmatprep.subr.bf16.mxu0 0
  %1994 = vmatpush2.bf16.msra.mxu0 %v1519
  %1995 = vmatprep.subr.bf16.mxu0 0
  %1996 = vmatpush2.bf16.msra.mxu0 %v1518
  %1997 = vmatprep.subr.bf16.mxu0 0
  %1998 = vmatpush2.bf16.msra.mxu0 %v1517
  %1999 = vmatprep.subr.bf16.mxu0 0
  %2000 = vmatpush2.bf16.msra.mxu0 %v1516
  %2001 = vmatprep.subr.bf16.mxu0 0
  %2002 = vmatpush2.bf16.msra.mxu0 %v1515
  %2003 = vmatprep.mubr.bf16.mxu0 %v580
  %2004 = vmatmul.mubr.bf16.gmra.mxu0 %v579
  %v2005 = vpop.f32.mrf.mxu0
  %v2006 = vadd.f32 %v1958, %v2005
  %v2007 = vpop.f32.mrf.mxu0
  %v2008 = vpop.f32.mrf.mxu0
  %v2009 = vadd.f32 %v1961, %v2008
  %v2010 = vpop.f32.mrf.mxu0
  %2011 = vmatprep.mubr.bf16.mxu0 %v605
  %2012 = vmatmul.mubr.bf16.gmra.mxu0 %v604
  %v2013 = vpop.f32.mrf.mxu0
  %v2014 = vadd.f32 %v1966, %v2013
  %v2015 = vpop.f32.mrf.mxu0
  %v2016 = vpop.f32.mrf.mxu0
  %v2017 = vpop.f32.mrf.mxu0
  %2018 = vdwg.mxu0
  %2019 = vmatprep.subr.bf16.mxu0 0
  %2020 = vmatpush1.bf16.msra.mxu0 %v1530
  %2021 = vmatprep.subr.bf16.mxu0 0
  %2022 = vmatpush1.bf16.msra.mxu0 %v1529
  %2023 = vmatprep.subr.bf16.mxu0 0
  %2024 = vmatpush1.bf16.msra.mxu0 %v1528
  %2025 = vmatprep.subr.bf16.mxu0 0
  %2026 = vmatpush1.bf16.msra.mxu0 %v1527
  %2027 = vmatprep.subr.bf16.mxu0 0
  %2028 = vmatpush1.bf16.msra.mxu0 %v1526
  %2029 = vmatprep.subr.bf16.mxu0 0
  %2030 = vmatpush1.bf16.msra.mxu0 %v1525
  %2031 = vmatprep.subr.bf16.mxu0 0
  %2032 = vmatpush1.bf16.msra.mxu0 %v1524
  %2033 = vmatprep.subr.bf16.mxu0 0
  %2034 = vmatpush1.bf16.msra.mxu0 %v1523
  %2035 = vmatprep.subr.bf16.mxu0 0
  %2036 = vmatpush2.bf16.msra.mxu0 %v1538
  %2037 = vmatprep.subr.bf16.mxu0 0
  %2038 = vmatpush2.bf16.msra.mxu0 %v1537
  %2039 = vmatprep.subr.bf16.mxu0 0
  %2040 = vmatpush2.bf16.msra.mxu0 %v1536
  %2041 = vmatprep.subr.bf16.mxu0 0
  %2042 = vmatpush2.bf16.msra.mxu0 %v1535
  %2043 = vmatprep.subr.bf16.mxu0 0
  %2044 = vmatpush2.bf16.msra.mxu0 %v1534
  %2045 = vmatprep.subr.bf16.mxu0 0
  %2046 = vmatpush2.bf16.msra.mxu0 %v1533
  %2047 = vmatprep.subr.bf16.mxu0 0
  %2048 = vmatpush2.bf16.msra.mxu0 %v1532
  %2049 = vmatprep.subr.bf16.mxu0 0
  %2050 = vmatpush2.bf16.msra.mxu0 %v1531
  %2051 = vmatprep.mubr.bf16.mxu0 %v582
  %2052 = vmatmul.mubr.bf16.gmra.mxu0 %v581
  %v2053 = vpop.f32.mrf.mxu0
  %v2054 = vadd.f32 %v2006, %v2053
  %v2055 = vpop.f32.mrf.mxu0
  %v2056 = vpop.f32.mrf.mxu0
  %v2057 = vadd.f32 %v2009, %v2056
  %v2058 = vpop.f32.mrf.mxu0
  %2059 = vmatprep.mubr.bf16.mxu0 %v607
  %2060 = vmatmul.mubr.bf16.gmra.mxu0 %v606
  %v2061 = vpop.f32.mrf.mxu0
  %v2062 = vadd.f32 %v2014, %v2061
  %v2063 = vpop.f32.mrf.mxu0
  %v2064 = vpop.f32.mrf.mxu0
  %v2065 = vpop.f32.mrf.mxu0
  %2066 = vdwg.mxu0
  %2067 = vmatprep.subr.bf16.mxu0 0
  %2068 = vmatpush1.bf16.msra.mxu0 %v1546
  %2069 = vmatprep.subr.bf16.mxu0 0
  %2070 = vmatpush1.bf16.msra.mxu0 %v1545
  %2071 = vmatprep.subr.bf16.mxu0 0
  %2072 = vmatpush1.bf16.msra.mxu0 %v1544
  %2073 = vmatprep.subr.bf16.mxu0 0
  %2074 = vmatpush1.bf16.msra.mxu0 %v1543
  %2075 = vmatprep.subr.bf16.mxu0 0
  %2076 = vmatpush1.bf16.msra.mxu0 %v1542
  %2077 = vmatprep.subr.bf16.mxu0 0
  %2078 = vmatpush1.bf16.msra.mxu0 %v1541
  %2079 = vmatprep.subr.bf16.mxu0 0
  %2080 = vmatpush1.bf16.msra.mxu0 %v1540
  %2081 = vmatprep.subr.bf16.mxu0 0
  %2082 = vmatpush1.bf16.msra.mxu0 %v1539
  %2083 = vmatprep.subr.bf16.mxu0 0
  %2084 = vmatpush2.bf16.msra.mxu0 %v1554
  %2085 = vmatprep.subr.bf16.mxu0 0
  %2086 = vmatpush2.bf16.msra.mxu0 %v1553
  %2087 = vmatprep.subr.bf16.mxu0 0
  %2088 = vmatpush2.bf16.msra.mxu0 %v1552
  %2089 = vmatprep.subr.bf16.mxu0 0
  %2090 = vmatpush2.bf16.msra.mxu0 %v1551
  %2091 = vmatprep.subr.bf16.mxu0 0
  %2092 = vmatpush2.bf16.msra.mxu0 %v1550
  %2093 = vmatprep.subr.bf16.mxu0 0
  %2094 = vmatpush2.bf16.msra.mxu0 %v1549
  %2095 = vmatprep.subr.bf16.mxu0 0
  %2096 = vmatpush2.bf16.msra.mxu0 %v1548
  %2097 = vmatprep.subr.bf16.mxu0 0
  %2098 = vmatpush2.bf16.msra.mxu0 %v1547
  %2099 = vmatprep.mubr.bf16.mxu0 %v584
  %2100 = vmatmul.mubr.bf16.gmra.mxu0 %v583
  %v2101 = vpop.f32.mrf.mxu0
  %v2102 = vadd.f32 %v2054, %v2101
  %v2103 = vpop.f32.mrf.mxu0
  %v2104 = vpop.f32.mrf.mxu0
  %v2105 = vadd.f32 %v2057, %v2104
  %v2106 = vpop.f32.mrf.mxu0
  %2107 = vmatprep.mubr.bf16.mxu0 %v609
  %2108 = vmatmul.mubr.bf16.gmra.mxu0 %v608
  %v2109 = vpop.f32.mrf.mxu0
  %v2110 = vadd.f32 %v2062, %v2109
  %v2111 = vpop.f32.mrf.mxu0
  %v2112 = vpop.f32.mrf.mxu0
  %v2113 = vpop.f32.mrf.mxu0
  %2114 = vdwg.mxu0
  %2115 = vmatprep.subr.bf16.mxu0 0
  %2116 = vmatpush1.bf16.msra.mxu0 %v1562
  %2117 = vmatprep.subr.bf16.mxu0 0
  %2118 = vmatpush1.bf16.msra.mxu0 %v1561
  %2119 = vmatprep.subr.bf16.mxu0 0
  %2120 = vmatpush1.bf16.msra.mxu0 %v1560
  %2121 = vmatprep.subr.bf16.mxu0 0
  %2122 = vmatpush1.bf16.msra.mxu0 %v1559
  %2123 = vmatprep.subr.bf16.mxu0 0
  %2124 = vmatpush1.bf16.msra.mxu0 %v1558
  %2125 = vmatprep.subr.bf16.mxu0 0
  %2126 = vmatpush1.bf16.msra.mxu0 %v1557
  %2127 = vmatprep.subr.bf16.mxu0 0
  %2128 = vmatpush1.bf16.msra.mxu0 %v1556
  %2129 = vmatprep.subr.bf16.mxu0 0
  %2130 = vmatpush1.bf16.msra.mxu0 %v1555
  %2131 = vmatprep.subr.bf16.mxu0 0
  %2132 = vmatpush2.bf16.msra.mxu0 %v1570
  %2133 = vmatprep.subr.bf16.mxu0 0
  %2134 = vmatpush2.bf16.msra.mxu0 %v1569
  %2135 = vmatprep.subr.bf16.mxu0 0
  %2136 = vmatpush2.bf16.msra.mxu0 %v1568
  %2137 = vmatprep.subr.bf16.mxu0 0
  %2138 = vmatpush2.bf16.msra.mxu0 %v1567
  %2139 = vmatprep.subr.bf16.mxu0 0
  %2140 = vmatpush2.bf16.msra.mxu0 %v1566
  %2141 = vmatprep.subr.bf16.mxu0 0
  %2142 = vmatpush2.bf16.msra.mxu0 %v1565
  %2143 = vmatprep.subr.bf16.mxu0 0
  %2144 = vmatpush2.bf16.msra.mxu0 %v1564
  %2145 = vmatprep.subr.bf16.mxu0 0
  %2146 = vmatpush2.bf16.msra.mxu0 %v1563
  %2147 = vmatprep.mubr.bf16.mxu0 %v586
  %2148 = vmatmul.mubr.bf16.gmra.mxu0 %v585
  %v2149 = vpop.f32.mrf.mxu0
  %v2150 = vadd.f32 %v2102, %v2149
  %v2151 = vpop.f32.mrf.mxu0
  %v2152 = vpop.f32.mrf.mxu0
  %v2153 = vadd.f32 %v2105, %v2152
  %v2154 = vpop.f32.mrf.mxu0
  %2155 = vmatprep.mubr.bf16.mxu0 %v611
  %2156 = vmatmul.mubr.bf16.gmra.mxu0 %v610
  %v2157 = vpop.f32.mrf.mxu0
  %v2158 = vadd.f32 %v2110, %v2157
  %v2159 = vpop.f32.mrf.mxu0
  %v2160 = vpop.f32.mrf.mxu0
  %v2161 = vpop.f32.mrf.mxu0
  %2162 = vdwg.mxu0
  %2163 = vmatprep.subr.bf16.mxu0 0
  %2164 = vmatpush1.bf16.msra.mxu0 %v1578
  %2165 = vmatprep.subr.bf16.mxu0 0
  %2166 = vmatpush1.bf16.msra.mxu0 %v1577
  %2167 = vmatprep.subr.bf16.mxu0 0
  %2168 = vmatpush1.bf16.msra.mxu0 %v1576
  %2169 = vmatprep.subr.bf16.mxu0 0
  %2170 = vmatpush1.bf16.msra.mxu0 %v1575
  %2171 = vmatprep.subr.bf16.mxu0 0
  %2172 = vmatpush1.bf16.msra.mxu0 %v1574
  %2173 = vmatprep.subr.bf16.mxu0 0
  %2174 = vmatpush1.bf16.msra.mxu0 %v1573
  %2175 = vmatprep.subr.bf16.mxu0 0
  %2176 = vmatpush1.bf16.msra.mxu0 %v1572
  %2177 = vmatprep.subr.bf16.mxu0 0
  %2178 = vmatpush1.bf16.msra.mxu0 %v1571
  %2179 = vmatprep.subr.bf16.mxu0 0
  %2180 = vmatpush2.bf16.msra.mxu0 %v1586
  %2181 = vmatprep.subr.bf16.mxu0 0
  %2182 = vmatpush2.bf16.msra.mxu0 %v1585
  %2183 = vmatprep.subr.bf16.mxu0 0
  %2184 = vmatpush2.bf16.msra.mxu0 %v1584
  %2185 = vmatprep.subr.bf16.mxu0 0
  %2186 = vmatpush2.bf16.msra.mxu0 %v1583
  %2187 = vmatprep.subr.bf16.mxu0 0
  %2188 = vmatpush2.bf16.msra.mxu0 %v1582
  %2189 = vmatprep.subr.bf16.mxu0 0
  %2190 = vmatpush2.bf16.msra.mxu0 %v1581
  %2191 = vmatprep.subr.bf16.mxu0 0
  %2192 = vmatpush2.bf16.msra.mxu0 %v1580
  %2193 = vmatprep.subr.bf16.mxu0 0
  %2194 = vmatpush2.bf16.msra.mxu0 %v1579
  %2195 = vmatprep.mubr.bf16.mxu0 %v588
  %2196 = vmatmul.mubr.bf16.gmra.mxu0 %v587
  %v2197 = vpop.f32.mrf.mxu0
  %v2198 = vadd.f32 %v2150, %v2197
  %v2199 = vpop.f32.mrf.mxu0
  %v2200 = vpop.f32.mrf.mxu0
  %v2201 = vadd.f32 %v2153, %v2200
  %v2202 = vpop.f32.mrf.mxu0
  %2203 = vmatprep.mubr.bf16.mxu0 %v613
  %2204 = vmatmul.mubr.bf16.gmra.mxu0 %v612
  %v2205 = vpop.f32.mrf.mxu0
  %v2206 = vadd.f32 %v2158, %v2205
  %v2207 = vpop.f32.mrf.mxu0
  %v2208 = vpop.f32.mrf.mxu0
  %v2209 = vpop.f32.mrf.mxu0
  %2210 = vdwg.mxu0
  %2211 = vmatprep.subr.bf16.mxu0 0
  %2212 = vmatpush1.bf16.msra.mxu0 %v1594
  %2213 = vmatprep.subr.bf16.mxu0 0
  %2214 = vmatpush1.bf16.msra.mxu0 %v1593
  %2215 = vmatprep.subr.bf16.mxu0 0
  %2216 = vmatpush1.bf16.msra.mxu0 %v1592
  %2217 = vmatprep.subr.bf16.mxu0 0
  %2218 = vmatpush1.bf16.msra.mxu0 %v1591
  %2219 = vmatprep.subr.bf16.mxu0 0
  %2220 = vmatpush1.bf16.msra.mxu0 %v1590
  %2221 = vmatprep.subr.bf16.mxu0 0
  %2222 = vmatpush1.bf16.msra.mxu0 %v1589
  %2223 = vmatprep.subr.bf16.mxu0 0
  %2224 = vmatpush1.bf16.msra.mxu0 %v1588
  %2225 = vmatprep.subr.bf16.mxu0 0
  %2226 = vmatpush1.bf16.msra.mxu0 %v1587
  %2227 = vmatprep.subr.bf16.mxu0 0
  %2228 = vmatpush2.bf16.msra.mxu0 %v1602
  %2229 = vmatprep.subr.bf16.mxu0 0
  %2230 = vmatpush2.bf16.msra.mxu0 %v1601
  %2231 = vmatprep.subr.bf16.mxu0 0
  %2232 = vmatpush2.bf16.msra.mxu0 %v1600
  %2233 = vmatprep.subr.bf16.mxu0 0
  %2234 = vmatpush2.bf16.msra.mxu0 %v1599
  %2235 = vmatprep.subr.bf16.mxu0 0
  %2236 = vmatpush2.bf16.msra.mxu0 %v1598
  %2237 = vmatprep.subr.bf16.mxu0 0
  %2238 = vmatpush2.bf16.msra.mxu0 %v1597
  %2239 = vmatprep.subr.bf16.mxu0 0
  %2240 = vmatpush2.bf16.msra.mxu0 %v1596
  %2241 = vmatprep.subr.bf16.mxu0 0
  %2242 = vmatpush2.bf16.msra.mxu0 %v1595
  %2243 = vmatprep.mubr.bf16.mxu0 %v590
  %2244 = vmatmul.mubr.bf16.gmra.mxu0 %v589
  %v2245 = vpop.f32.mrf.mxu0
  %v2246 = vadd.f32 %v2198, %v2245
  %v2247 = vpop.f32.mrf.mxu0
  %v2248 = vpop.f32.mrf.mxu0
  %v2249 = vadd.f32 %v2201, %v2248
  %v2250 = vpop.f32.mrf.mxu0
  %2251 = vmatprep.mubr.bf16.mxu0 %v615
  %2252 = vmatmul.mubr.bf16.gmra.mxu0 %v614
  %v2253 = vpop.f32.mrf.mxu0
  %v2254 = vadd.f32 %v2206, %v2253
  %v2255 = vpop.f32.mrf.mxu0
  %v2256 = vpop.f32.mrf.mxu0
  %v2257 = vpop.f32.mrf.mxu0
  %2258 = vdwg.mxu0
  %2259 = vmatprep.subr.bf16.mxu0 0
  %2260 = vmatpush1.bf16.msra.mxu0 %v1610
  %2261 = vmatprep.subr.bf16.mxu0 0
  %2262 = vmatpush1.bf16.msra.mxu0 %v1609
  %2263 = vmatprep.subr.bf16.mxu0 0
  %2264 = vmatpush1.bf16.msra.mxu0 %v1608
  %2265 = vmatprep.subr.bf16.mxu0 0
  %2266 = vmatpush1.bf16.msra.mxu0 %v1607
  %2267 = vmatprep.subr.bf16.mxu0 0
  %2268 = vmatpush1.bf16.msra.mxu0 %v1606
  %2269 = vmatprep.subr.bf16.mxu0 0
  %2270 = vmatpush1.bf16.msra.mxu0 %v1605
  %2271 = vmatprep.subr.bf16.mxu0 0
  %2272 = vmatpush1.bf16.msra.mxu0 %v1604
  %2273 = vmatprep.subr.bf16.mxu0 0
  %2274 = vmatpush1.bf16.msra.mxu0 %v1603
  %2275 = vmatprep.subr.bf16.mxu0 0
  %2276 = vmatpush2.bf16.msra.mxu0 %v1618
  %2277 = vmatprep.subr.bf16.mxu0 0
  %2278 = vmatpush2.bf16.msra.mxu0 %v1617
  %2279 = vmatprep.subr.bf16.mxu0 0
  %2280 = vmatpush2.bf16.msra.mxu0 %v1616
  %2281 = vmatprep.subr.bf16.mxu0 0
  %2282 = vmatpush2.bf16.msra.mxu0 %v1615
  %2283 = vmatprep.subr.bf16.mxu0 0
  %2284 = vmatpush2.bf16.msra.mxu0 %v1614
  %2285 = vmatprep.subr.bf16.mxu0 0
  %2286 = vmatpush2.bf16.msra.mxu0 %v1613
  %2287 = vmatprep.subr.bf16.mxu0 0
  %2288 = vmatpush2.bf16.msra.mxu0 %v1612
  %2289 = vmatprep.subr.bf16.mxu0 0
  %2290 = vmatpush2.bf16.msra.mxu0 %v1611
  %2291 = vmatprep.mubr.bf16.mxu0 %v592
  %2292 = vmatmul.mubr.bf16.gmra.mxu0 %v591
  %v2293 = vpop.f32.mrf.mxu0
  %v2294 = vadd.f32 %v2246, %v2293
  %v2295 = vpop.f32.mrf.mxu0
  %v2296 = vpop.f32.mrf.mxu0
  %v2297 = vadd.f32 %v2249, %v2296
  %v2298 = vpop.f32.mrf.mxu0
  %2299 = vmatprep.mubr.bf16.mxu0 %v617
  %2300 = vmatmul.mubr.bf16.gmra.mxu0 %v616
  %v2301 = vpop.f32.mrf.mxu0
  %v2302 = vadd.f32 %v2254, %v2301
  %v2303 = vpop.f32.mrf.mxu0
  %v2304 = vpop.f32.mrf.mxu0
  %v2305 = vpop.f32.mrf.mxu0
  %2306 = vdwg.mxu0
  %2307 = vmatprep.subr.bf16.mxu0 0
  %2308 = vmatpush1.bf16.msra.mxu0 %v1626
  %2309 = vmatprep.subr.bf16.mxu0 0
  %2310 = vmatpush1.bf16.msra.mxu0 %v1625
  %2311 = vmatprep.subr.bf16.mxu0 0
  %2312 = vmatpush1.bf16.msra.mxu0 %v1624
  %2313 = vmatprep.subr.bf16.mxu0 0
  %2314 = vmatpush1.bf16.msra.mxu0 %v1623
  %2315 = vmatprep.subr.bf16.mxu0 0
  %2316 = vmatpush1.bf16.msra.mxu0 %v1622
  %2317 = vmatprep.subr.bf16.mxu0 0
  %2318 = vmatpush1.bf16.msra.mxu0 %v1621
  %2319 = vmatprep.subr.bf16.mxu0 0
  %2320 = vmatpush1.bf16.msra.mxu0 %v1620
  %2321 = vmatprep.subr.bf16.mxu0 0
  %2322 = vmatpush1.bf16.msra.mxu0 %v1619
  %2323 = vmatprep.subr.bf16.mxu0 0
  %2324 = vmatpush2.bf16.msra.mxu0 %v1634
  %2325 = vmatprep.subr.bf16.mxu0 0
  %2326 = vmatpush2.bf16.msra.mxu0 %v1633
  %2327 = vmatprep.subr.bf16.mxu0 0
  %2328 = vmatpush2.bf16.msra.mxu0 %v1632
  %2329 = vmatprep.subr.bf16.mxu0 0
  %2330 = vmatpush2.bf16.msra.mxu0 %v1631
  %2331 = vmatprep.subr.bf16.mxu0 0
  %2332 = vmatpush2.bf16.msra.mxu0 %v1630
  %2333 = vmatprep.subr.bf16.mxu0 0
  %2334 = vmatpush2.bf16.msra.mxu0 %v1629
  %2335 = vmatprep.subr.bf16.mxu0 0
  %2336 = vmatpush2.bf16.msra.mxu0 %v1628
  %2337 = vmatprep.subr.bf16.mxu0 0
  %2338 = vmatpush2.bf16.msra.mxu0 %v1627
  %2339 = vmatprep.mubr.bf16.mxu0 %v594
  %2340 = vmatmul.mubr.bf16.gmra.mxu0 %v593
  %v2341 = vpop.f32.mrf.mxu0
  %v2342 = vadd.f32 %v2294, %v2341
  %v2343 = vpop.f32.mrf.mxu0
  %v2344 = vpop.f32.mrf.mxu0
  %v2345 = vadd.f32 %v2297, %v2344
  %v2346 = vpop.f32.mrf.mxu0
  %2347 = vmatprep.mubr.bf16.mxu0 %v619
  %2348 = vmatmul.mubr.bf16.gmra.mxu0 %v618
  %v2349 = vpop.f32.mrf.mxu0
  %v2350 = vadd.f32 %v2302, %v2349
  %v2351 = vpop.f32.mrf.mxu0
  %v2352 = vpop.f32.mrf.mxu0
  %v2353 = vpop.f32.mrf.mxu0
  %2354 = vdwg.mxu0
  %2355 = vmatprep.subr.bf16.mxu0 0
  %2356 = vmatpush1.bf16.msra.mxu0 %v1642
  %2357 = vmatprep.subr.bf16.mxu0 0
  %2358 = vmatpush1.bf16.msra.mxu0 %v1641
  %2359 = vmatprep.subr.bf16.mxu0 0
  %2360 = vmatpush1.bf16.msra.mxu0 %v1640
  %2361 = vmatprep.subr.bf16.mxu0 0
  %2362 = vmatpush1.bf16.msra.mxu0 %v1639
  %2363 = vmatprep.subr.bf16.mxu0 0
  %2364 = vmatpush1.bf16.msra.mxu0 %v1638
  %2365 = vmatprep.subr.bf16.mxu0 0
  %2366 = vmatpush1.bf16.msra.mxu0 %v1637
  %2367 = vmatprep.subr.bf16.mxu0 0
  %2368 = vmatpush1.bf16.msra.mxu0 %v1636
  %2369 = vmatprep.subr.bf16.mxu0 0
  %2370 = vmatpush1.bf16.msra.mxu0 %v1635
  %2371 = vmatprep.subr.bf16.mxu0 0
  %2372 = vmatpush2.bf16.msra.mxu0 %v1650
  %2373 = vmatprep.subr.bf16.mxu0 0
  %2374 = vmatpush2.bf16.msra.mxu0 %v1649
  %2375 = vmatprep.subr.bf16.mxu0 0
  %2376 = vmatpush2.bf16.msra.mxu0 %v1648
  %2377 = vmatprep.subr.bf16.mxu0 0
  %2378 = vmatpush2.bf16.msra.mxu0 %v1647
  %2379 = vmatprep.subr.bf16.mxu0 0
  %2380 = vmatpush2.bf16.msra.mxu0 %v1646
  %2381 = vmatprep.subr.bf16.mxu0 0
  %2382 = vmatpush2.bf16.msra.mxu0 %v1645
  %2383 = vmatprep.subr.bf16.mxu0 0
  %2384 = vmatpush2.bf16.msra.mxu0 %v1644
  %2385 = vmatprep.subr.bf16.mxu0 0
  %2386 = vmatpush2.bf16.msra.mxu0 %v1643
  %2387 = vmatprep.mubr.bf16.mxu0 %v596
  %2388 = vmatmul.mubr.bf16.gmra.mxu0 %v595
  %v2389 = vpop.f32.mrf.mxu0
  %v2390 = vadd.f32 %v2342, %v2389
  %v2391 = vpop.f32.mrf.mxu0
  %v2392 = vpop.f32.mrf.mxu0
  %v2393 = vadd.f32 %v2345, %v2392
  %v2394 = vpop.f32.mrf.mxu0
  %2395 = vmatprep.mubr.bf16.mxu0 %v621
  %2396 = vmatmul.mubr.bf16.gmra.mxu0 %v620
  %v2397 = vpop.f32.mrf.mxu0
  %v2398 = vadd.f32 %v2350, %v2397
  %v2399 = vpop.f32.mrf.mxu0
  %v2400 = vpop.f32.mrf.mxu0
  %v2401 = vpop.f32.mrf.mxu0
  %2402 = vdwg.mxu0
  %2403 = vmatprep.subr.bf16.mxu0 0
  %2404 = vmatpush1.bf16.msra.mxu0 %v1658
  %2405 = vmatprep.subr.bf16.mxu0 0
  %2406 = vmatpush1.bf16.msra.mxu0 %v1657
  %2407 = vmatprep.subr.bf16.mxu0 0
  %2408 = vmatpush1.bf16.msra.mxu0 %v1656
  %2409 = vmatprep.subr.bf16.mxu0 0
  %2410 = vmatpush1.bf16.msra.mxu0 %v1655
  %2411 = vmatprep.subr.bf16.mxu0 0
  %2412 = vmatpush1.bf16.msra.mxu0 %v1654
  %2413 = vmatprep.subr.bf16.mxu0 0
  %2414 = vmatpush1.bf16.msra.mxu0 %v1653
  %2415 = vmatprep.subr.bf16.mxu0 0
  %2416 = vmatpush1.bf16.msra.mxu0 %v1652
  %2417 = vmatprep.subr.bf16.mxu0 0
  %2418 = vmatpush1.bf16.msra.mxu0 %v1651
  %2419 = vmatprep.subr.bf16.mxu0 0
  %2420 = vmatpush2.bf16.msra.mxu0 %v1666
  %2421 = vmatprep.subr.bf16.mxu0 0
  %2422 = vmatpush2.bf16.msra.mxu0 %v1665
  %2423 = vmatprep.subr.bf16.mxu0 0
  %2424 = vmatpush2.bf16.msra.mxu0 %v1664
  %2425 = vmatprep.subr.bf16.mxu0 0
  %2426 = vmatpush2.bf16.msra.mxu0 %v1663
  %2427 = vmatprep.subr.bf16.mxu0 0
  %2428 = vmatpush2.bf16.msra.mxu0 %v1662
  %2429 = vmatprep.subr.bf16.mxu0 0
  %2430 = vmatpush2.bf16.msra.mxu0 %v1661
  %2431 = vmatprep.subr.bf16.mxu0 0
  %2432 = vmatpush2.bf16.msra.mxu0 %v1660
  %2433 = vmatprep.subr.bf16.mxu0 0
  %2434 = vmatpush2.bf16.msra.mxu0 %v1659
  %2435 = vmatprep.mubr.bf16.mxu0 %v598
  %2436 = vmatmul.mubr.bf16.gmra.mxu0 %v597
  %v2437 = vpop.f32.mrf.mxu0
  %v2438 = vadd.f32 %v2390, %v2437
  %v2439 = vpop.f32.mrf.mxu0
  %v2440 = vpop.f32.mrf.mxu0
  %v2441 = vadd.f32 %v2393, %v2440
  %v2442 = vpop.f32.mrf.mxu0
  %2443 = vmatprep.mubr.bf16.mxu0 %v623
  %2444 = vmatmul.mubr.bf16.gmra.mxu0 %v622
  %v2445 = vpop.f32.mrf.mxu0
  %v2446 = vadd.f32 %v2398, %v2445
  %v2447 = vpop.f32.mrf.mxu0
  %v2448 = vpop.f32.mrf.mxu0
  %v2449 = vpop.f32.mrf.mxu0
  %2450 = vdwg.mxu0
  %2451 = vmatprep.subr.bf16.mxu0 0
  %2452 = vmatpush1.bf16.msra.mxu0 %v1674
  %2453 = vmatprep.subr.bf16.mxu0 0
  %2454 = vmatpush1.bf16.msra.mxu0 %v1673
  %2455 = vmatprep.subr.bf16.mxu0 0
  %2456 = vmatpush1.bf16.msra.mxu0 %v1672
  %2457 = vmatprep.subr.bf16.mxu0 0
  %2458 = vmatpush1.bf16.msra.mxu0 %v1671
  %2459 = vmatprep.subr.bf16.mxu0 0
  %2460 = vmatpush1.bf16.msra.mxu0 %v1670
  %2461 = vmatprep.subr.bf16.mxu0 0
  %2462 = vmatpush1.bf16.msra.mxu0 %v1669
  %2463 = vmatprep.subr.bf16.mxu0 0
  %2464 = vmatpush1.bf16.msra.mxu0 %v1668
  %2465 = vmatprep.subr.bf16.mxu0 0
  %2466 = vmatpush1.bf16.msra.mxu0 %v1667
  %2467 = vmatprep.subr.bf16.mxu0 0
  %2468 = vmatpush2.bf16.msra.mxu0 0
  %2469 = vmatprep.subr.bf16.mxu0 0
  %2470 = vmatpush2.bf16.msra.mxu0 0
  %2471 = vmatprep.subr.bf16.mxu0 0
  %2472 = vmatpush2.bf16.msra.mxu0 0
  %2473 = vmatprep.subr.bf16.mxu0 0
  %2474 = vmatpush2.bf16.msra.mxu0 0
  %2475 = vmatprep.subr.bf16.mxu0 0
  %2476 = vmatpush2.bf16.msra.mxu0 0
  %2477 = vmatprep.subr.bf16.mxu0 0
  %2478 = vmatpush2.bf16.msra.mxu0 0
  %2479 = vmatprep.subr.bf16.mxu0 0
  %2480 = vmatpush2.bf16.msra.mxu0 0
  %2481 = vmatprep.subr.bf16.mxu0 0
  %2482 = vmatpush2.bf16.msra.mxu0 0
  %2483 = vmatprep.mubr.bf16.mxu0 0
  %2484 = vmatmul.mubr.bf16.gmra.mxu0 %v599
  %v2485 = vpop.f32.mrf.mxu0
  %v2486 = vadd.f32 %v2438, %v2485
  %v2487 = vpop.f32.mrf.mxu0
  %v2488 = vpop.f32.mrf.mxu0
  %v2489 = vadd.f32 %v2441, %v2488
  %v2490 = vpop.f32.mrf.mxu0
  %2491 = vmatprep.mubr.bf16.mxu0 0
  %2492 = vmatmul.mubr.bf16.gmra.mxu0 %v624
  %v2493 = vpop.f32.mrf.mxu0
  %v2494 = vadd.f32 %v2446, %v2493
  %v2495 = vpop.f32.mrf.mxu0
  %v2496 = vpop.f32.mrf.mxu0
  %v2497 = vpop.f32.mrf.mxu0
  %2498 = vdwg.mxu0
  %2499 = vst [vmem:[%s3] sm:$0xff] %v2486
  %2500 = vst [vmem:[%s3 + $0x8] sm:$0xff] %v2489
  %2501 = vst [vmem:[%s3 + $0x10] sm:$0xff] %v2494
  // Predicated region
  $region14: #{discriminator_forward.7} parent=0 // pred_check
    _
  $region15: #{discriminator_forward.7} parent=0 // pred_check_branch
    %2503 = sbr.rel (0) target = $region17
  $region16: #{discriminator_forward.7} parent=0 // pred_region
    _
  $region17: #{discriminator_forward.7} parent=0 // pred_fallthru
    _
  // Predicated region
  $region18: #{discriminator_forward.7} parent=0 // pred_check
    _
  $region19: #{discriminator_forward.7} parent=0 // pred_check_branch
    %2505 = sbr.rel (0) target = $region21
  $region20: #{discriminator_forward.7} parent=0 // pred_region
    _
  $region21: #{discriminator_forward.7} parent=0 // pred_fallthru
    _

</llo_original>
